<compile_context>
chip_gen: v5e
topology: v5e:2x2
jax: 0.10.0
libtpu: 0.0.40
codegen_flags: <defaults>
</compile_context>

<pallas_src>
import jax
import jax.numpy as jnp
from jax.experimental import pallas as pl
from jax.experimental.pallas import tpu as pltpu

# Architecture constants implied by Linear(64*4*4, 20): 32x32 spatial input.
H1, W1, C1 = 32, 32, 64      # conv1 output spatial / channels
H2, W2, C2 = 16, 16, 128     # conv2 output spatial / channels
H3, W3, C3 = 8, 8, 64        # conv3 output spatial / channels
HP3, WP3 = 4, 4              # spatial after the final pool
FC_HID = 20

# Layer-1 strip tiling: 8 output image rows per strip -> 4 strips of M=256.
L1_STRIP_ROWS = 8
L1_STRIPS = H1 // L1_STRIP_ROWS

# Padded-activation scratch layout: interior starts at column PAD_C0 (sublane
# aligned) so halo writes/reads never need unaligned stores.
PAD_C0 = 8
PAD2_W = PAD_C0 + W2 + 8     # 32 columns (halo col is 7 on the left, 24 on the right)
PAD3_W = PAD_C0 + W3 + 8     # 24 columns


def _pool2x2(buf):
    """buf: VMEM ref (hp, 2, W, C) holding ReLU'd conv rows (image row = 2*a + b).
    Returns the 2x2 max-pooled value of shape (hp, W//2, C)."""
    hp, _, w, c = buf.shape
    m = jnp.maximum(buf[:, 0, :, :], buf[:, 1, :, :])   # H-pair max: pure VPU, no relayout
    m = m.reshape(hp, w // 2, 2, c)                      # pair adjacent W columns
    return jnp.max(m, axis=2)                            # (hp, W//2, C)


def fused_cnn_kernel(
    # inputs
    lhs1_ref,            # (1, H1*W1, 9*Cin)   im2col of one input image
    w1_ref, b1_ref,      # (9*Cin, C1), (1, C1)
    w2_ref, b2_ref,      # (9*C1, C2), (1, C2)
    w3_ref, b3_ref,      # (9*C2, C3), (1, C3)
    fw1_ref, fb1_ref,    # (HP3*WP3, C3, FC_HID) [HWC-permuted], (1, FC_HID)
    fw2_ref, fb2_ref,    # (FC_HID, n_classes), (1, n_classes)
    # output
    o_ref,               # (1, 1, n_classes)
    # scratch (VMEM, persists across grid steps)
    strip1_buf,          # (L1_STRIP_ROWS//2, 2, W1, C1)
    pad2_buf,            # (H2+2, PAD2_W, C1)   zero-haloed input of layer 2
    col2_buf,            # (H2, W2, 9*C1)       im2col LHS of layer 2
    conv2_buf,           # (H2//2, 2, W2, C2)
    pad3_buf,            # (H3+2, PAD3_W, C2)   zero-haloed input of layer 3
    col3_buf,            # (H3, W3, 9*C2)       im2col LHS of layer 3
    conv3_buf,           # (H3//2, 2, W3, C3)
):
    f32 = jnp.float32

    # --- zero only the halo regions of the padded buffers (the interiors are
    # fully rewritten every grid step; scratch is not zeroed by the runtime). ---
    zr2 = jnp.zeros((1, PAD2_W, C1), f32)
    pad2_buf[0:1, :, :] = zr2
    pad2_buf[H2 + 1:H2 + 2, :, :] = zr2
    zc2 = jnp.zeros((H2, 8, C1), f32)
    pad2_buf[1:H2 + 1, 0:PAD_C0, :] = zc2
    pad2_buf[1:H2 + 1, PAD_C0 + W2:PAD2_W, :] = zc2

    zr3 = jnp.zeros((1, PAD3_W, C2), f32)
    pad3_buf[0:1, :, :] = zr3
    pad3_buf[H3 + 1:H3 + 2, :, :] = zr3
    zc3 = jnp.zeros((H3, 8, C2), f32)
    pad3_buf[1:H3 + 1, 0:PAD_C0, :] = zc3
    pad3_buf[1:H3 + 1, PAD_C0 + W3:PAD3_W, :] = zc3

    # ---- Layer 1: conv3x3 + bias + ReLU + maxpool2, strip-tiled over rows ----
    w1 = w1_ref[...]
    b1 = b1_ref[...]
    m_strip = L1_STRIP_ROWS * W1          # im2col rows per strip (256)
    hp1 = L1_STRIP_ROWS // 2              # pooled rows per strip (4)
    for s in range(L1_STRIPS):
        lhs = lhs1_ref[0, s * m_strip:(s + 1) * m_strip, :]          # (256, 9*Cin)
        y = jnp.dot(lhs, w1, preferred_element_type=f32) + b1        # (256, C1)
        strip1_buf[...] = jnp.maximum(y, 0.0).reshape(hp1, 2, W1, C1)
        pooled = _pool2x2(strip1_buf)                                # (4, W1//2, C1)
        pad2_buf[1 + hp1 * s:1 + hp1 * (s + 1), PAD_C0:PAD_C0 + W2, :] = pooled

    # ---- Layer 2: im2col (K = 9*C1 = 576), conv + bias + ReLU + maxpool2 ----
    for dy in range(3):
        for dx in range(3):
            t = dy * 3 + dx
            col2_buf[:, :, t * C1:(t + 1) * C1] = pad2_buf[
                dy:dy + H2, PAD_C0 - 1 + dx:PAD_C0 - 1 + dx + W2, :]
    y2 = jnp.dot(col2_buf[...].reshape(H2 * W2, 9 * C1), w2_ref[...],
                 preferred_element_type=f32) + b2_ref[...]
    conv2_buf[...] = jnp.maximum(y2, 0.0).reshape(H2 // 2, 2, W2, C2)
    pooled2 = _pool2x2(conv2_buf)                                    # (8, 8, C2)
    pad3_buf[1:1 + H3, PAD_C0:PAD_C0 + W3, :] = pooled2

    # ---- Layer 3: im2col (K = 9*C2 = 1152), conv + bias + ReLU + maxpool2 ----
    for dy in range(3):
        for dx in range(3):
            t = dy * 3 + dx
            col3_buf[:, :, t * C2:(t + 1) * C2] = pad3_buf[
                dy:dy + H3, PAD_C0 - 1 + dx:PAD_C0 - 1 + dx + W3, :]
    y3 = jnp.dot(col3_buf[...].reshape(H3 * W3, 9 * C2), w3_ref[...],
                 preferred_element_type=f32) + b3_ref[...]
    conv3_buf[...] = jnp.maximum(y3, 0.0).reshape(H3 // 2, 2, W3, C3)
    act3 = _pool2x2(conv3_buf)                                       # (4, 4, C3)

    # ---- Head: Linear(64*4*4, 20) with HWC-permuted weights, then Linear(20,C) ----
    # out_fc1[j] = sum_{h,w,c} act3[h, w, c] * fw1_hwc[h*WP3 + w, c, j]
    h = fb1_ref[...].astype(f32)                                     # (1, FC_HID)
    for p in range(HP3 * WP3):
        hh, ww = p // WP3, p % WP3
        h = h + jnp.dot(act3[hh, ww:ww + 1, :], fw1_ref[p],
                        preferred_element_type=f32)
    out = jnp.dot(h, fw2_ref[...], preferred_element_type=f32) + fb2_ref[...]
    o_ref[0] = out.astype(o_ref.dtype)


# ----------------------------------------------------------------------------
# Parameter init (deterministic, synthetic) and full forward pass.
# ----------------------------------------------------------------------------
def init_params(key, in_channels, output_classes):
    ks = jax.random.split(key, 8)
    s = 0.05
    # fc1 is created in the PyTorch layout (rows in CHW-flatten order
    # c*16 + h*4 + w), then permuted ONCE to HWC order (h*4 + w, c) so the
    # fused kernel consumes the NHWC conv output with no runtime transpose.
    fw1_chw = jax.random.normal(ks[6], (C3 * HP3 * WP3, FC_HID), jnp.float32) * s
    fw1_hwc = fw1_chw.reshape(C3, HP3 * WP3, FC_HID).transpose(1, 0, 2)  # (16, 64, 20)
    return {
        # conv weights stored HWIO: (kh, kw, Cin, Cout); biases (Cout,)
        "w1": jax.random.normal(ks[0], (3, 3, in_channels, C1), jnp.float32) * s,
        "b1": jax.random.normal(ks[1], (C1,), jnp.float32) * s,
        "w2": jax.random.normal(ks[2], (3, 3, C1, C2), jnp.float32) * s,
        "b2": jax.random.normal(ks[3], (C2,), jnp.float32) * s,
        "w3": jax.random.normal(ks[4], (3, 3, C2, C3), jnp.float32) * s,
        "b3": jax.random.normal(ks[5], (C3,), jnp.float32) * s,
        "fw1_hwc": fw1_hwc,
        "fb1": jnp.zeros((FC_HID,), jnp.float32),
        "fw2": jax.random.normal(ks[7], (FC_HID, output_classes), jnp.float32) * s,
        "fb2": jnp.zeros((output_classes,), jnp.float32),
    }


@jax.jit
def cnn_forward(params, x_nchw):
    N, Cin, H, W = x_nchw.shape
    assert (H, W) == (H1, W1), "Linear(64*4*4, 20) implies a 32x32 spatial input"
    n_classes = params["fw2"].shape[1]

    # NCHW (torch) -> NHWC, then layer-1 im2col in the (tiny, cheap) wrapper so
    # the first conv is one dense (H*W, 9*Cin) @ (9*Cin, 64) matmul instead of
    # a lane-sparse Cin=1 contraction.
    x = jnp.transpose(x_nchw, (0, 2, 3, 1)).astype(jnp.float32)
    xp = jnp.pad(x, ((0, 0), (1, 1), (1, 1), (0, 0)))
    taps = [xp[:, dy:dy + H, dx:dx + W, :] for dy in range(3) for dx in range(3)]
    lhs1 = jnp.concatenate(taps, axis=-1).reshape(N, H * W, 9 * Cin)

    w1c = params["w1"].reshape(9 * Cin, C1)
    w2c = params["w2"].reshape(9 * C1, C2)
    w3c = params["w3"].reshape(9 * C2, C3)

    out = pl.pallas_call(
        fused_cnn_kernel,
        out_shape=jax.ShapeDtypeStruct((N, 1, n_classes), jnp.float32),
        grid_spec=pltpu.PrefetchScalarGridSpec(
            num_scalar_prefetch=0,
            grid=(N,),
            in_specs=[
                pl.BlockSpec((1, H * W, 9 * Cin), lambda n: (n, 0, 0)),
                pl.BlockSpec((9 * Cin, C1), lambda n: (0, 0)),
                pl.BlockSpec((1, C1), lambda n: (0, 0)),
                pl.BlockSpec((9 * C1, C2), lambda n: (0, 0)),
                pl.BlockSpec((1, C2), lambda n: (0, 0)),
                pl.BlockSpec((9 * C2, C3), lambda n: (0, 0)),
                pl.BlockSpec((1, C3), lambda n: (0, 0)),
                pl.BlockSpec((HP3 * WP3, C3, FC_HID), lambda n: (0, 0, 0)),
                pl.BlockSpec((1, FC_HID), lambda n: (0, 0)),
                pl.BlockSpec((FC_HID, n_classes), lambda n: (0, 0)),
                pl.BlockSpec((1, n_classes), lambda n: (0, 0)),
            ],
            out_specs=pl.BlockSpec((1, 1, n_classes), lambda n: (n, 0, 0)),
            scratch_shapes=[
                pltpu.VMEM((L1_STRIP_ROWS // 2, 2, W1, C1), jnp.float32),  # strip1
                pltpu.VMEM((H2 + 2, PAD2_W, C1), jnp.float32),             # pad2
                pltpu.VMEM((H2, W2, 9 * C1), jnp.float32),                 # col2
                pltpu.VMEM((H2 // 2, 2, W2, C2), jnp.float32),             # conv2
                pltpu.VMEM((H3 + 2, PAD3_W, C2), jnp.float32),             # pad3
                pltpu.VMEM((H3, W3, 9 * C2), jnp.float32),                 # col3
                pltpu.VMEM((H3 // 2, 2, W3, C3), jnp.float32),             # conv3
            ],
        ),
        compiler_params=pltpu.CompilerParams(
            dimension_semantics=("parallel",),
        ),
    )(
        lhs1,
        w1c, params["b1"].reshape(1, C1),
        w2c, params["b2"].reshape(1, C2),
        w3c, params["b3"].reshape(1, C3),
        params["fw1_hwc"], params["fb1"].reshape(1, FC_HID),
        params["fw2"], params["fb2"].reshape(1, n_classes),
    )
    return out.reshape(N, n_classes)


if __name__ == "__main__":
    # Linear(64*4*4, 20) implies 32x32 spatial input (3 pools of /2 -> 4x4).
    batch, in_channels, spatial, output_classes = 2, 1, 32, 10

    key = jax.random.PRNGKey(0)
    kx, kp = jax.random.split(key)
    x = jax.random.normal(kx, (batch, in_channels, spatial, spatial), jnp.float32)
    params = init_params(kp, in_channels, output_classes)

    out = cnn_forward(params, x)
    out = jax.block_until_ready(out)
    assert out.shape == (batch, output_classes), out.shape
    assert bool(jnp.all(jnp.isfinite(out)))
    print("KERNEL_OK")
</pallas_src>

<mosaic_0001>
module attributes {stable_mosaic.version = 11 : i64} {
  func.func @fused_cnn_kernel(%arg0: i32, %arg1: memref<1x1024x9xf32, #tpu.memory_space<vmem>>, %arg2: memref<9x64xf32, #tpu.memory_space<vmem>>, %arg3: memref<1x64xf32, #tpu.memory_space<vmem>>, %arg4: memref<576x128xf32, #tpu.memory_space<vmem>>, %arg5: memref<1x128xf32, #tpu.memory_space<vmem>>, %arg6: memref<1152x64xf32, #tpu.memory_space<vmem>>, %arg7: memref<1x64xf32, #tpu.memory_space<vmem>>, %arg8: memref<16x64x20xf32, #tpu.memory_space<vmem>>, %arg9: memref<1x20xf32, #tpu.memory_space<vmem>>, %arg10: memref<20x10xf32, #tpu.memory_space<vmem>>, %arg11: memref<1x10xf32, #tpu.memory_space<vmem>>, %arg12: memref<1x1x10xf32, #tpu.memory_space<vmem>>, %arg13: memref<4x2x32x64xf32, #tpu.memory_space<vmem>>, %arg14: memref<18x32x64xf32, #tpu.memory_space<vmem>>, %arg15: memref<16x16x576xf32, #tpu.memory_space<vmem>>, %arg16: memref<8x2x16x128xf32, #tpu.memory_space<vmem>>, %arg17: memref<10x24x128xf32, #tpu.memory_space<vmem>>, %arg18: memref<8x8x1152xf32, #tpu.memory_space<vmem>>, %arg19: memref<4x2x8x64xf32, #tpu.memory_space<vmem>>) attributes {dimension_semantics = [#tpu.dimension_semantics<parallel>], iteration_bounds = array<i64: 2>, scalar_prefetch = 0 : i64, scratch_operands = 7 : i64, tpu.core_type = #tpu.core_type<tc>, window_params = [{transform_indices = @transform_0, window_bounds = array<i64: 1, 1024, 9>}, {pipeline_mode = #tpu.pipeline_mode<synchronous>, transform_indices = @transform_1, window_bounds = array<i64: 9, 64>}, {pipeline_mode = #tpu.pipeline_mode<synchronous>, transform_indices = @transform_2, window_bounds = array<i64: 1, 64>}, {pipeline_mode = #tpu.pipeline_mode<synchronous>, transform_indices = @transform_3, window_bounds = array<i64: 576, 128>}, {pipeline_mode = #tpu.pipeline_mode<synchronous>, transform_indices = @transform_4, window_bounds = array<i64: 1, 128>}, {pipeline_mode = #tpu.pipeline_mode<synchronous>, transform_indices = @transform_5, window_bounds = array<i64: 1152, 64>}, {pipeline_mode = #tpu.pipeline_mode<synchronous>, transform_indices = @transform_6, window_bounds = array<i64: 1, 64>}, {pipeline_mode = #tpu.pipeline_mode<synchronous>, transform_indices = @transform_7, window_bounds = array<i64: 16, 64, 20>}, {pipeline_mode = #tpu.pipeline_mode<synchronous>, transform_indices = @transform_8, window_bounds = array<i64: 1, 20>}, {pipeline_mode = #tpu.pipeline_mode<synchronous>, transform_indices = @transform_9, window_bounds = array<i64: 20, 10>}, {pipeline_mode = #tpu.pipeline_mode<synchronous>, transform_indices = @transform_10, window_bounds = array<i64: 1, 10>}, {transform_indices = @transform_11, window_bounds = array<i64: 1, 1, 10>}]} {
    %cst = arith.constant 0.000000e+00 : f32
    %0 = vector.broadcast %cst : f32 to vector<1x32x64xf32>
    %c0 = arith.constant 0 : index
    %c0_0 = arith.constant 0 : index
    %c0_1 = arith.constant 0 : index
    %1 = vector.load %arg14[%c0, %c0_0, %c0_1] : memref<18x32x64xf32, #tpu.memory_space<vmem>>, vector<1x32x64xf32>
    tpu.vector_store %arg14[%c0, %c0_0, %c0_1], %0 {strides = array<i32>} : memref<18x32x64xf32, #tpu.memory_space<vmem>>, vector<1x32x64xf32>,
    %c17 = arith.constant 17 : index
    %c0_2 = arith.constant 0 : index
    %c0_3 = arith.constant 0 : index
    %2 = vector.load %arg14[%c17, %c0_2, %c0_3] : memref<18x32x64xf32, #tpu.memory_space<vmem>>, vector<1x32x64xf32>
    tpu.vector_store %arg14[%c17, %c0_2, %c0_3], %0 {strides = array<i32>} : memref<18x32x64xf32, #tpu.memory_space<vmem>>, vector<1x32x64xf32>,
    %cst_4 = arith.constant 0.000000e+00 : f32
    %3 = vector.broadcast %cst_4 : f32 to vector<16x8x64xf32>
    %c1 = arith.constant 1 : index
    %c0_5 = arith.constant 0 : index
    %c0_6 = arith.constant 0 : index
    %4 = vector.load %arg14[%c1, %c0_5, %c0_6] : memref<18x32x64xf32, #tpu.memory_space<vmem>>, vector<16x8x64xf32>
    tpu.vector_store %arg14[%c1, %c0_5, %c0_6], %3 {strides = array<i32>} : memref<18x32x64xf32, #tpu.memory_space<vmem>>, vector<16x8x64xf32>,
    %c1_7 = arith.constant 1 : index
    %c24 = arith.constant 24 : index
    %c0_8 = arith.constant 0 : index
    %5 = vector.load %arg14[%c1_7, %c24, %c0_8] : memref<18x32x64xf32, #tpu.memory_space<vmem>>, vector<16x8x64xf32>
    tpu.vector_store %arg14[%c1_7, %c24, %c0_8], %3 {strides = array<i32>} : memref<18x32x64xf32, #tpu.memory_space<vmem>>, vector<16x8x64xf32>,
    %cst_9 = arith.constant 0.000000e+00 : f32
    %6 = vector.broadcast %cst_9 : f32 to vector<1x24x128xf32>
    %c0_10 = arith.constant 0 : index
    %c0_11 = arith.constant 0 : index
    %c0_12 = arith.constant 0 : index
    %7 = vector.load %arg17[%c0_10, %c0_11, %c0_12] : memref<10x24x128xf32, #tpu.memory_space<vmem>>, vector<1x24x128xf32>
    tpu.vector_store %arg17[%c0_10, %c0_11, %c0_12], %6 {strides = array<i32>} : memref<10x24x128xf32, #tpu.memory_space<vmem>>, vector<1x24x128xf32>,
    %c9 = arith.constant 9 : index
    %c0_13 = arith.constant 0 : index
    %c0_14 = arith.constant 0 : index
    %8 = vector.load %arg17[%c9, %c0_13, %c0_14] : memref<10x24x128xf32, #tpu.memory_space<vmem>>, vector<1x24x128xf32>
    tpu.vector_store %arg17[%c9, %c0_13, %c0_14], %6 {strides = array<i32>} : memref<10x24x128xf32, #tpu.memory_space<vmem>>, vector<1x24x128xf32>,
    %cst_15 = arith.constant 0.000000e+00 : f32
    %9 = vector.broadcast %cst_15 : f32 to vector<8x8x128xf32>
    %c1_16 = arith.constant 1 : index
    %c0_17 = arith.constant 0 : index
    %c0_18 = arith.constant 0 : index
    %10 = vector.load %arg17[%c1_16, %c0_17, %c0_18] : memref<10x24x128xf32, #tpu.memory_space<vmem>>, vector<8x8x128xf32>
    tpu.vector_store %arg17[%c1_16, %c0_17, %c0_18], %9 {strides = array<i32>} : memref<10x24x128xf32, #tpu.memory_space<vmem>>, vector<8x8x128xf32>,
    %c1_19 = arith.constant 1 : index
    %c16 = arith.constant 16 : index
    %c0_20 = arith.constant 0 : index
    %11 = vector.load %arg17[%c1_19, %c16, %c0_20] : memref<10x24x128xf32, #tpu.memory_space<vmem>>, vector<8x8x128xf32>
    tpu.vector_store %arg17[%c1_19, %c16, %c0_20], %9 {strides = array<i32>} : memref<10x24x128xf32, #tpu.memory_space<vmem>>, vector<8x8x128xf32>,
    %c0_21 = arith.constant 0 : index
    %c0_22 = arith.constant 0 : index
    %12 = vector.load %arg2[%c0_21, %c0_22] : memref<9x64xf32, #tpu.memory_space<vmem>>, vector<9x64xf32>
    %c0_23 = arith.constant 0 : index
    %c0_24 = arith.constant 0 : index
    %13 = vector.load %arg3[%c0_23, %c0_24] : memref<1x64xf32, #tpu.memory_space<vmem>>, vector<1x64xf32>
    %c0_25 = arith.constant 0 : index
    %c0_26 = arith.constant 0 : index
    %c0_27 = arith.constant 0 : index
    %14 = vector.load %arg1[%c0_25, %c0_26, %c0_27] : memref<1x1024x9xf32, #tpu.memory_space<vmem>>, vector<1x256x9xf32>
    %15 = vector.shape_cast %14 : vector<1x256x9xf32> to vector<256x9xf32>
    %cst_28 = arith.constant dense<0.000000e+00> : vector<256x64xf32>
    %16 = tpu.matmul %15, %12, %cst_28 {dimension_numbers = #tpu.dot_dimension_numbers<[1], [0], [0], [1], [0, 0, 1, 1], [], []>} : vector<256x9xf32>, vector<9x64xf32>, vector<256x64xf32> -> vector<256x64xf32>
    %17 = vector.broadcast %13 : vector<1x64xf32> to vector<256x64xf32>
    %18 = arith.addf %16, %17 : vector<256x64xf32>
    %cst_29 = arith.constant 0.000000e+00 : f32
    %19 = vector.broadcast %cst_29 : f32 to vector<256x64xf32>
    %20 = arith.maximumf %18, %19 : vector<256x64xf32>
    %21 = vector.shape_cast %20 : vector<256x64xf32> to vector<4x2x32x64xf32>
    %c0_30 = arith.constant 0 : index
    %c0_31 = arith.constant 0 : index
    %c0_32 = arith.constant 0 : index
    %c0_33 = arith.constant 0 : index
    %22 = vector.load %arg13[%c0_30, %c0_31, %c0_32, %c0_33] : memref<4x2x32x64xf32, #tpu.memory_space<vmem>>, vector<4x2x32x64xf32>
    tpu.vector_store %arg13[%c0_30, %c0_31, %c0_32, %c0_33], %21 {strides = array<i32>} : memref<4x2x32x64xf32, #tpu.memory_space<vmem>>, vector<4x2x32x64xf32>,
    %c0_34 = arith.constant 0 : index
    %c0_35 = arith.constant 0 : index
    %c0_36 = arith.constant 0 : index
    %c0_37 = arith.constant 0 : index
    %23 = vector.load %arg13[%c0_34, %c0_35, %c0_36, %c0_37] : memref<4x2x32x64xf32, #tpu.memory_space<vmem>>, vector<4x1x32x64xf32>
    %24 = vector.shape_cast %23 : vector<4x1x32x64xf32> to vector<4x32x64xf32>
    %c0_38 = arith.constant 0 : index
    %c1_39 = arith.constant 1 : index
    %c0_40 = arith.constant 0 : index
    %c0_41 = arith.constant 0 : index
    %25 = vector.load %arg13[%c0_38, %c1_39, %c0_40, %c0_41] : memref<4x2x32x64xf32, #tpu.memory_space<vmem>>, vector<4x1x32x64xf32>
    %26 = vector.shape_cast %25 : vector<4x1x32x64xf32> to vector<4x32x64xf32>
    %27 = arith.maximumf %24, %26 : vector<4x32x64xf32>
    %28 = vector.shape_cast %27 : vector<4x32x64xf32> to vector<4x16x2x64xf32>
    %cst_42 = arith.constant dense<0xFF800000> : vector<4x16x64xf32>
    %29 = vector.multi_reduction <maximumf>, %28, %cst_42 [2] : vector<4x16x2x64xf32> to vector<4x16x64xf32>
    %c1_43 = arith.constant 1 : index
    %c8 = arith.constant 8 : index
    %c0_44 = arith.constant 0 : index
    %30 = vector.load %arg14[%c1_43, %c8, %c0_44] : memref<18x32x64xf32, #tpu.memory_space<vmem>>, vector<4x16x64xf32>
    tpu.vector_store %arg14[%c1_43, %c8, %c0_44], %29 {strides = array<i32>} : memref<18x32x64xf32, #tpu.memory_space<vmem>>, vector<4x16x64xf32>,
    %c0_45 = arith.constant 0 : index
    %c256 = arith.constant 256 : index
    %c0_46 = arith.constant 0 : index
    %31 = vector.load %arg1[%c0_45, %c256, %c0_46] : memref<1x1024x9xf32, #tpu.memory_space<vmem>>, vector<1x256x9xf32>
    %32 = vector.shape_cast %31 : vector<1x256x9xf32> to vector<256x9xf32>
    %cst_47 = arith.constant dense<0.000000e+00> : vector<256x64xf32>
    %33 = tpu.matmul %32, %12, %cst_47 {dimension_numbers = #tpu.dot_dimension_numbers<[1], [0], [0], [1], [0, 0, 1, 1], [], []>} : vector<256x9xf32>, vector<9x64xf32>, vector<256x64xf32> -> vector<256x64xf32>
    %34 = vector.broadcast %13 : vector<1x64xf32> to vector<256x64xf32>
    %35 = arith.addf %33, %34 : vector<256x64xf32>
    %cst_48 = arith.constant 0.000000e+00 : f32
    %36 = vector.broadcast %cst_48 : f32 to vector<256x64xf32>
    %37 = arith.maximumf %35, %36 : vector<256x64xf32>
    %38 = vector.shape_cast %37 : vector<256x64xf32> to vector<4x2x32x64xf32>
    %c0_49 = arith.constant 0 : index
    %c0_50 = arith.constant 0 : index
    %c0_51 = arith.constant 0 : index
    %c0_52 = arith.constant 0 : index
    %39 = vector.load %arg13[%c0_49, %c0_50, %c0_51, %c0_52] : memref<4x2x32x64xf32, #tpu.memory_space<vmem>>, vector<4x2x32x64xf32>
    tpu.vector_store %arg13[%c0_49, %c0_50, %c0_51, %c0_52], %38 {strides = array<i32>} : memref<4x2x32x64xf32, #tpu.memory_space<vmem>>, vector<4x2x32x64xf32>,
    %c0_53 = arith.constant 0 : index
    %c0_54 = arith.constant 0 : index
    %c0_55 = arith.constant 0 : index
    %c0_56 = arith.constant 0 : index
    %40 = vector.load %arg13[%c0_53, %c0_54, %c0_55, %c0_56] : memref<4x2x32x64xf32, #tpu.memory_space<vmem>>, vector<4x1x32x64xf32>
    %41 = vector.shape_cast %40 : vector<4x1x32x64xf32> to vector<4x32x64xf32>
    %c0_57 = arith.constant 0 : index
    %c1_58 = arith.constant 1 : index
    %c0_59 = arith.constant 0 : index
    %c0_60 = arith.constant 0 : index
    %42 = vector.load %arg13[%c0_57, %c1_58, %c0_59, %c0_60] : memref<4x2x32x64xf32, #tpu.memory_space<vmem>>, vector<4x1x32x64xf32>
    %43 = vector.shape_cast %42 : vector<4x1x32x64xf32> to vector<4x32x64xf32>
    %44 = arith.maximumf %41, %43 : vector<4x32x64xf32>
    %45 = vector.shape_cast %44 : vector<4x32x64xf32> to vector<4x16x2x64xf32>
    %cst_61 = arith.constant dense<0xFF800000> : vector<4x16x64xf32>
    %46 = vector.multi_reduction <maximumf>, %45, %cst_61 [2] : vector<4x16x2x64xf32> to vector<4x16x64xf32>
    %c5 = arith.constant 5 : index
    %c8_62 = arith.constant 8 : index
    %c0_63 = arith.constant 0 : index
    %47 = vector.load %arg14[%c5, %c8_62, %c0_63] : memref<18x32x64xf32, #tpu.memory_space<vmem>>, vector<4x16x64xf32>
    tpu.vector_store %arg14[%c5, %c8_62, %c0_63], %46 {strides = array<i32>} : memref<18x32x64xf32, #tpu.memory_space<vmem>>, vector<4x16x64xf32>,
    %c0_64 = arith.constant 0 : index
    %c512 = arith.constant 512 : index
    %c0_65 = arith.constant 0 : index
    %48 = vector.load %arg1[%c0_64, %c512, %c0_65] : memref<1x1024x9xf32, #tpu.memory_space<vmem>>, vector<1x256x9xf32>
    %49 = vector.shape_cast %48 : vector<1x256x9xf32> to vector<256x9xf32>
    %cst_66 = arith.constant dense<0.000000e+00> : vector<256x64xf32>
    %50 = tpu.matmul %49, %12, %cst_66 {dimension_numbers = #tpu.dot_dimension_numbers<[1], [0], [0], [1], [0, 0, 1, 1], [], []>} : vector<256x9xf32>, vector<9x64xf32>, vector<256x64xf32> -> vector<256x64xf32>
    %51 = vector.broadcast %13 : vector<1x64xf32> to vector<256x64xf32>
    %52 = arith.addf %50, %51 : vector<256x64xf32>
    %cst_67 = arith.constant 0.000000e+00 : f32
    %53 = vector.broadcast %cst_67 : f32 to vector<256x64xf32>
    %54 = arith.maximumf %52, %53 : vector<256x64xf32>
    %55 = vector.shape_cast %54 : vector<256x64xf32> to vector<4x2x32x64xf32>
    %c0_68 = arith.constant 0 : index
    %c0_69 = arith.constant 0 : index
    %c0_70 = arith.constant 0 : index
    %c0_71 = arith.constant 0 : index
    %56 = vector.load %arg13[%c0_68, %c0_69, %c0_70, %c0_71] : memref<4x2x32x64xf32, #tpu.memory_space<vmem>>, vector<4x2x32x64xf32>
    tpu.vector_store %arg13[%c0_68, %c0_69, %c0_70, %c0_71], %55 {strides = array<i32>} : memref<4x2x32x64xf32, #tpu.memory_space<vmem>>, vector<4x2x32x64xf32>,
    %c0_72 = arith.constant 0 : index
    %c0_73 = arith.constant 0 : index
    %c0_74 = arith.constant 0 : index
    %c0_75 = arith.constant 0 : index
    %57 = vector.load %arg13[%c0_72, %c0_73, %c0_74, %c0_75] : memref<4x2x32x64xf32, #tpu.memory_space<vmem>>, vector<4x1x32x64xf32>
    %58 = vector.shape_cast %57 : vector<4x1x32x64xf32> to vector<4x32x64xf32>
    %c0_76 = arith.constant 0 : index
    %c1_77 = arith.constant 1 : index
    %c0_78 = arith.constant 0 : index
    %c0_79 = arith.constant 0 : index
    %59 = vector.load %arg13[%c0_76, %c1_77, %c0_78, %c0_79] : memref<4x2x32x64xf32, #tpu.memory_space<vmem>>, vector<4x1x32x64xf32>
    %60 = vector.shape_cast %59 : vector<4x1x32x64xf32> to vector<4x32x64xf32>
    %61 = arith.maximumf %58, %60 : vector<4x32x64xf32>
    %62 = vector.shape_cast %61 : vector<4x32x64xf32> to vector<4x16x2x64xf32>
    %cst_80 = arith.constant dense<0xFF800000> : vector<4x16x64xf32>
    %63 = vector.multi_reduction <maximumf>, %62, %cst_80 [2] : vector<4x16x2x64xf32> to vector<4x16x64xf32>
    %c9_81 = arith.constant 9 : index
    %c8_82 = arith.constant 8 : index
    %c0_83 = arith.constant 0 : index
    %64 = vector.load %arg14[%c9_81, %c8_82, %c0_83] : memref<18x32x64xf32, #tpu.memory_space<vmem>>, vector<4x16x64xf32>
    tpu.vector_store %arg14[%c9_81, %c8_82, %c0_83], %63 {strides = array<i32>} : memref<18x32x64xf32, #tpu.memory_space<vmem>>, vector<4x16x64xf32>,
    %c0_84 = arith.constant 0 : index
    %c768 = arith.constant 768 : index
    %c0_85 = arith.constant 0 : index
    %65 = vector.load %arg1[%c0_84, %c768, %c0_85] : memref<1x1024x9xf32, #tpu.memory_space<vmem>>, vector<1x256x9xf32>
    %66 = vector.shape_cast %65 : vector<1x256x9xf32> to vector<256x9xf32>
    %cst_86 = arith.constant dense<0.000000e+00> : vector<256x64xf32>
    %67 = tpu.matmul %66, %12, %cst_86 {dimension_numbers = #tpu.dot_dimension_numbers<[1], [0], [0], [1], [0, 0, 1, 1], [], []>} : vector<256x9xf32>, vector<9x64xf32>, vector<256x64xf32> -> vector<256x64xf32>
    %68 = vector.broadcast %13 : vector<1x64xf32> to vector<256x64xf32>
    %69 = arith.addf %67, %68 : vector<256x64xf32>
    %cst_87 = arith.constant 0.000000e+00 : f32
    %70 = vector.broadcast %cst_87 : f32 to vector<256x64xf32>
    %71 = arith.maximumf %69, %70 : vector<256x64xf32>
    %72 = vector.shape_cast %71 : vector<256x64xf32> to vector<4x2x32x64xf32>
    %c0_88 = arith.constant 0 : index
    %c0_89 = arith.constant 0 : index
    %c0_90 = arith.constant 0 : index
    %c0_91 = arith.constant 0 : index
    %73 = vector.load %arg13[%c0_88, %c0_89, %c0_90, %c0_91] : memref<4x2x32x64xf32, #tpu.memory_space<vmem>>, vector<4x2x32x64xf32>
    tpu.vector_store %arg13[%c0_88, %c0_89, %c0_90, %c0_91], %72 {strides = array<i32>} : memref<4x2x32x64xf32, #tpu.memory_space<vmem>>, vector<4x2x32x64xf32>,
    %c0_92 = arith.constant 0 : index
    %c0_93 = arith.constant 0 : index
    %c0_94 = arith.constant 0 : index
    %c0_95 = arith.constant 0 : index
    %74 = vector.load %arg13[%c0_92, %c0_93, %c0_94, %c0_95] : memref<4x2x32x64xf32, #tpu.memory_space<vmem>>, vector<4x1x32x64xf32>
    %75 = vector.shape_cast %74 : vector<4x1x32x64xf32> to vector<4x32x64xf32>
    %c0_96 = arith.constant 0 : index
    %c1_97 = arith.constant 1 : index
    %c0_98 = arith.constant 0 : index
    %c0_99 = arith.constant 0 : index
    %76 = vector.load %arg13[%c0_96, %c1_97, %c0_98, %c0_99] : memref<4x2x32x64xf32, #tpu.memory_space<vmem>>, vector<4x1x32x64xf32>
    %77 = vector.shape_cast %76 : vector<4x1x32x64xf32> to vector<4x32x64xf32>
    %78 = arith.maximumf %75, %77 : vector<4x32x64xf32>
    %79 = vector.shape_cast %78 : vector<4x32x64xf32> to vector<4x16x2x64xf32>
    %cst_100 = arith.constant dense<0xFF800000> : vector<4x16x64xf32>
    %80 = vector.multi_reduction <maximumf>, %79, %cst_100 [2] : vector<4x16x2x64xf32> to vector<4x16x64xf32>
    %c13 = arith.constant 13 : index
    %c8_101 = arith.constant 8 : index
    %c0_102 = arith.constant 0 : index
    %81 = vector.load %arg14[%c13, %c8_101, %c0_102] : memref<18x32x64xf32, #tpu.memory_space<vmem>>, vector<4x16x64xf32>
    tpu.vector_store %arg14[%c13, %c8_101, %c0_102], %80 {strides = array<i32>} : memref<18x32x64xf32, #tpu.memory_space<vmem>>, vector<4x16x64xf32>,
    %c0_103 = arith.constant 0 : index
    %c7 = arith.constant 7 : index
    %c0_104 = arith.constant 0 : index
    %82 = vector.load %arg14[%c0_103, %c7, %c0_104] : memref<18x32x64xf32, #tpu.memory_space<vmem>>, vector<16x16x64xf32>
    %c0_105 = arith.constant 0 : index
    %c0_106 = arith.constant 0 : index
    %c0_107 = arith.constant 0 : index
    %83 = vector.load %arg15[%c0_105, %c0_106, %c0_107] : memref<16x16x576xf32, #tpu.memory_space<vmem>>, vector<16x16x64xf32>
    tpu.vector_store %arg15[%c0_105, %c0_106, %c0_107], %82 {strides = array<i32>} : memref<16x16x576xf32, #tpu.memory_space<vmem>>, vector<16x16x64xf32>,
    %c0_108 = arith.constant 0 : index
    %c8_109 = arith.constant 8 : index
    %c0_110 = arith.constant 0 : index
    %84 = vector.load %arg14[%c0_108, %c8_109, %c0_110] : memref<18x32x64xf32, #tpu.memory_space<vmem>>, vector<16x16x64xf32>
    %c0_111 = arith.constant 0 : index
    %c0_112 = arith.constant 0 : index
    %c64 = arith.constant 64 : index
    %85 = vector.load %arg15[%c0_111, %c0_112, %c64] : memref<16x16x576xf32, #tpu.memory_space<vmem>>, vector<16x16x64xf32>
    tpu.vector_store %arg15[%c0_111, %c0_112, %c64], %84 {strides = array<i32>} : memref<16x16x576xf32, #tpu.memory_space<vmem>>, vector<16x16x64xf32>,
    %c0_113 = arith.constant 0 : index
    %c9_114 = arith.constant 9 : index
    %c0_115 = arith.constant 0 : index
    %86 = vector.load %arg14[%c0_113, %c9_114, %c0_115] : memref<18x32x64xf32, #tpu.memory_space<vmem>>, vector<16x16x64xf32>
    %c0_116 = arith.constant 0 : index
    %c0_117 = arith.constant 0 : index
    %c128 = arith.constant 128 : index
    %87 = vector.load %arg15[%c0_116, %c0_117, %c128] : memref<16x16x576xf32, #tpu.memory_space<vmem>>, vector<16x16x64xf32>
    tpu.vector_store %arg15[%c0_116, %c0_117, %c128], %86 {strides = array<i32>} : memref<16x16x576xf32, #tpu.memory_space<vmem>>, vector<16x16x64xf32>,
    %c1_118 = arith.constant 1 : index
    %c7_119 = arith.constant 7 : index
    %c0_120 = arith.constant 0 : index
    %88 = vector.load %arg14[%c1_118, %c7_119, %c0_120] : memref<18x32x64xf32, #tpu.memory_space<vmem>>, vector<16x16x64xf32>
    %c0_121 = arith.constant 0 : index
    %c0_122 = arith.constant 0 : index
    %c192 = arith.constant 192 : index
    %89 = vector.load %arg15[%c0_121, %c0_122, %c192] : memref<16x16x576xf32, #tpu.memory_space<vmem>>, vector<16x16x64xf32>
    tpu.vector_store %arg15[%c0_121, %c0_122, %c192], %88 {strides = array<i32>} : memref<16x16x576xf32, #tpu.memory_space<vmem>>, vector<16x16x64xf32>,
    %c1_123 = arith.constant 1 : index
    %c8_124 = arith.constant 8 : index
    %c0_125 = arith.constant 0 : index
    %90 = vector.load %arg14[%c1_123, %c8_124, %c0_125] : memref<18x32x64xf32, #tpu.memory_space<vmem>>, vector<16x16x64xf32>
    %c0_126 = arith.constant 0 : index
    %c0_127 = arith.constant 0 : index
    %c256_128 = arith.constant 256 : index
    %91 = vector.load %arg15[%c0_126, %c0_127, %c256_128] : memref<16x16x576xf32, #tpu.memory_space<vmem>>, vector<16x16x64xf32>
    tpu.vector_store %arg15[%c0_126, %c0_127, %c256_128], %90 {strides = array<i32>} : memref<16x16x576xf32, #tpu.memory_space<vmem>>, vector<16x16x64xf32>,
    %c1_129 = arith.constant 1 : index
    %c9_130 = arith.constant 9 : index
    %c0_131 = arith.constant 0 : index
    %92 = vector.load %arg14[%c1_129, %c9_130, %c0_131] : memref<18x32x64xf32, #tpu.memory_space<vmem>>, vector<16x16x64xf32>
    %c0_132 = arith.constant 0 : index
    %c0_133 = arith.constant 0 : index
    %c320 = arith.constant 320 : index
    %93 = vector.load %arg15[%c0_132, %c0_133, %c320] : memref<16x16x576xf32, #tpu.memory_space<vmem>>, vector<16x16x64xf32>
    tpu.vector_store %arg15[%c0_132, %c0_133, %c320], %92 {strides = array<i32>} : memref<16x16x576xf32, #tpu.memory_space<vmem>>, vector<16x16x64xf32>,
    %c2 = arith.constant 2 : index
    %c7_134 = arith.constant 7 : index
    %c0_135 = arith.constant 0 : index
    %94 = vector.load %arg14[%c2, %c7_134, %c0_135] : memref<18x32x64xf32, #tpu.memory_space<vmem>>, vector<16x16x64xf32>
    %c0_136 = arith.constant 0 : index
    %c0_137 = arith.constant 0 : index
    %c384 = arith.constant 384 : index
    %95 = vector.load %arg15[%c0_136, %c0_137, %c384] : memref<16x16x576xf32, #tpu.memory_space<vmem>>, vector<16x16x64xf32>
    tpu.vector_store %arg15[%c0_136, %c0_137, %c384], %94 {strides = array<i32>} : memref<16x16x576xf32, #tpu.memory_space<vmem>>, vector<16x16x64xf32>,
    %c2_138 = arith.constant 2 : index
    %c8_139 = arith.constant 8 : index
    %c0_140 = arith.constant 0 : index
    %96 = vector.load %arg14[%c2_138, %c8_139, %c0_140] : memref<18x32x64xf32, #tpu.memory_space<vmem>>, vector<16x16x64xf32>
    %c0_141 = arith.constant 0 : index
    %c0_142 = arith.constant 0 : index
    %c448 = arith.constant 448 : index
    %97 = vector.load %arg15[%c0_141, %c0_142, %c448] : memref<16x16x576xf32, #tpu.memory_space<vmem>>, vector<16x16x64xf32>
    tpu.vector_store %arg15[%c0_141, %c0_142, %c448], %96 {strides = array<i32>} : memref<16x16x576xf32, #tpu.memory_space<vmem>>, vector<16x16x64xf32>,
    %c2_143 = arith.constant 2 : index
    %c9_144 = arith.constant 9 : index
    %c0_145 = arith.constant 0 : index
    %98 = vector.load %arg14[%c2_143, %c9_144, %c0_145] : memref<18x32x64xf32, #tpu.memory_space<vmem>>, vector<16x16x64xf32>
    %c0_146 = arith.constant 0 : index
    %c0_147 = arith.constant 0 : index
    %c512_148 = arith.constant 512 : index
    %99 = vector.load %arg15[%c0_146, %c0_147, %c512_148] : memref<16x16x576xf32, #tpu.memory_space<vmem>>, vector<16x16x64xf32>
    tpu.vector_store %arg15[%c0_146, %c0_147, %c512_148], %98 {strides = array<i32>} : memref<16x16x576xf32, #tpu.memory_space<vmem>>, vector<16x16x64xf32>,
    %c0_149 = arith.constant 0 : index
    %c0_150 = arith.constant 0 : index
    %c0_151 = arith.constant 0 : index
    %100 = vector.load %arg15[%c0_149, %c0_150, %c0_151] : memref<16x16x576xf32, #tpu.memory_space<vmem>>, vector<16x16x576xf32>
    %101 = vector.shape_cast %100 : vector<16x16x576xf32> to vector<256x576xf32>
    %c0_152 = arith.constant 0 : index
    %c0_153 = arith.constant 0 : index
    %102 = vector.load %arg4[%c0_152, %c0_153] : memref<576x128xf32, #tpu.memory_space<vmem>>, vector<576x128xf32>
    %cst_154 = arith.constant dense<0.000000e+00> : vector<256x128xf32>
    %103 = tpu.matmul %101, %102, %cst_154 {dimension_numbers = #tpu.dot_dimension_numbers<[1], [0], [0], [1], [0, 0, 1, 1], [], []>} : vector<256x576xf32>, vector<576x128xf32>, vector<256x128xf32> -> vector<256x128xf32>
    %c0_155 = arith.constant 0 : index
    %c0_156 = arith.constant 0 : index
    %104 = vector.load %arg5[%c0_155, %c0_156] : memref<1x128xf32, #tpu.memory_space<vmem>>, vector<1x128xf32>
    %105 = vector.broadcast %104 : vector<1x128xf32> to vector<256x128xf32>
    %106 = arith.addf %103, %105 : vector<256x128xf32>
    %cst_157 = arith.constant 0.000000e+00 : f32
    %107 = vector.broadcast %cst_157 : f32 to vector<256x128xf32>
    %108 = arith.maximumf %106, %107 : vector<256x128xf32>
    %109 = vector.shape_cast %108 : vector<256x128xf32> to vector<8x2x16x128xf32>
    %c0_158 = arith.constant 0 : index
    %c0_159 = arith.constant 0 : index
    %c0_160 = arith.constant 0 : index
    %c0_161 = arith.constant 0 : index
    %110 = vector.load %arg16[%c0_158, %c0_159, %c0_160, %c0_161] : memref<8x2x16x128xf32, #tpu.memory_space<vmem>>, vector<8x2x16x128xf32>
    tpu.vector_store %arg16[%c0_158, %c0_159, %c0_160, %c0_161], %109 {strides = array<i32>} : memref<8x2x16x128xf32, #tpu.memory_space<vmem>>, vector<8x2x16x128xf32>,
    %c0_162 = arith.constant 0 : index
    %c0_163 = arith.constant 0 : index
    %c0_164 = arith.constant 0 : index
    %c0_165 = arith.constant 0 : index
    %111 = vector.load %arg16[%c0_162, %c0_163, %c0_164, %c0_165] : memref<8x2x16x128xf32, #tpu.memory_space<vmem>>, vector<8x1x16x128xf32>
    %112 = vector.shape_cast %111 : vector<8x1x16x128xf32> to vector<8x16x128xf32>
    %c0_166 = arith.constant 0 : index
    %c1_167 = arith.constant 1 : index
    %c0_168 = arith.constant 0 : index
    %c0_169 = arith.constant 0 : index
    %113 = vector.load %arg16[%c0_166, %c1_167, %c0_168, %c0_169] : memref<8x2x16x128xf32, #tpu.memory_space<vmem>>, vector<8x1x16x128xf32>
    %114 = vector.shape_cast %113 : vector<8x1x16x128xf32> to vector<8x16x128xf32>
    %115 = arith.maximumf %112, %114 : vector<8x16x128xf32>
    %116 = vector.shape_cast %115 : vector<8x16x128xf32> to vector<8x8x2x128xf32>
    %cst_170 = arith.constant dense<0xFF800000> : vector<8x8x128xf32>
    %117 = vector.multi_reduction <maximumf>, %116, %cst_170 [2] : vector<8x8x2x128xf32> to vector<8x8x128xf32>
    %c1_171 = arith.constant 1 : index
    %c8_172 = arith.constant 8 : index
    %c0_173 = arith.constant 0 : index
    %118 = vector.load %arg17[%c1_171, %c8_172, %c0_173] : memref<10x24x128xf32, #tpu.memory_space<vmem>>, vector<8x8x128xf32>
    tpu.vector_store %arg17[%c1_171, %c8_172, %c0_173], %117 {strides = array<i32>} : memref<10x24x128xf32, #tpu.memory_space<vmem>>, vector<8x8x128xf32>,
    %c0_174 = arith.constant 0 : index
    %c7_175 = arith.constant 7 : index
    %c0_176 = arith.constant 0 : index
    %119 = vector.load %arg17[%c0_174, %c7_175, %c0_176] : memref<10x24x128xf32, #tpu.memory_space<vmem>>, vector<8x8x128xf32>
    %c0_177 = arith.constant 0 : index
    %c0_178 = arith.constant 0 : index
    %c0_179 = arith.constant 0 : index
    %120 = vector.load %arg18[%c0_177, %c0_178, %c0_179] : memref<8x8x1152xf32, #tpu.memory_space<vmem>>, vector<8x8x128xf32>
    tpu.vector_store %arg18[%c0_177, %c0_178, %c0_179], %119 {strides = array<i32>} : memref<8x8x1152xf32, #tpu.memory_space<vmem>>, vector<8x8x128xf32>,
    %c0_180 = arith.constant 0 : index
    %c8_181 = arith.constant 8 : index
    %c0_182 = arith.constant 0 : index
    %121 = vector.load %arg17[%c0_180, %c8_181, %c0_182] : memref<10x24x128xf32, #tpu.memory_space<vmem>>, vector<8x8x128xf32>
    %c0_183 = arith.constant 0 : index
    %c0_184 = arith.constant 0 : index
    %c128_185 = arith.constant 128 : index
    %122 = vector.load %arg18[%c0_183, %c0_184, %c128_185] : memref<8x8x1152xf32, #tpu.memory_space<vmem>>, vector<8x8x128xf32>
    tpu.vector_store %arg18[%c0_183, %c0_184, %c128_185], %121 {strides = array<i32>} : memref<8x8x1152xf32, #tpu.memory_space<vmem>>, vector<8x8x128xf32>,
    %c0_186 = arith.constant 0 : index
    %c9_187 = arith.constant 9 : index
    %c0_188 = arith.constant 0 : index
    %123 = vector.load %arg17[%c0_186, %c9_187, %c0_188] : memref<10x24x128xf32, #tpu.memory_space<vmem>>, vector<8x8x128xf32>
    %c0_189 = arith.constant 0 : index
    %c0_190 = arith.constant 0 : index
    %c256_191 = arith.constant 256 : index
    %124 = vector.load %arg18[%c0_189, %c0_190, %c256_191] : memref<8x8x1152xf32, #tpu.memory_space<vmem>>, vector<8x8x128xf32>
    tpu.vector_store %arg18[%c0_189, %c0_190, %c256_191], %123 {strides = array<i32>} : memref<8x8x1152xf32, #tpu.memory_space<vmem>>, vector<8x8x128xf32>,
    %c1_192 = arith.constant 1 : index
    %c7_193 = arith.constant 7 : index
    %c0_194 = arith.constant 0 : index
    %125 = vector.load %arg17[%c1_192, %c7_193, %c0_194] : memref<10x24x128xf32, #tpu.memory_space<vmem>>, vector<8x8x128xf32>
    %c0_195 = arith.constant 0 : index
    %c0_196 = arith.constant 0 : index
    %c384_197 = arith.constant 384 : index
    %126 = vector.load %arg18[%c0_195, %c0_196, %c384_197] : memref<8x8x1152xf32, #tpu.memory_space<vmem>>, vector<8x8x128xf32>
    tpu.vector_store %arg18[%c0_195, %c0_196, %c384_197], %125 {strides = array<i32>} : memref<8x8x1152xf32, #tpu.memory_space<vmem>>, vector<8x8x128xf32>,
    %c1_198 = arith.constant 1 : index
    %c8_199 = arith.constant 8 : index
    %c0_200 = arith.constant 0 : index
    %127 = vector.load %arg17[%c1_198, %c8_199, %c0_200] : memref<10x24x128xf32, #tpu.memory_space<vmem>>, vector<8x8x128xf32>
    %c0_201 = arith.constant 0 : index
    %c0_202 = arith.constant 0 : index
    %c512_203 = arith.constant 512 : index
    %128 = vector.load %arg18[%c0_201, %c0_202, %c512_203] : memref<8x8x1152xf32, #tpu.memory_space<vmem>>, vector<8x8x128xf32>
    tpu.vector_store %arg18[%c0_201, %c0_202, %c512_203], %127 {strides = array<i32>} : memref<8x8x1152xf32, #tpu.memory_space<vmem>>, vector<8x8x128xf32>,
    %c1_204 = arith.constant 1 : index
    %c9_205 = arith.constant 9 : index
    %c0_206 = arith.constant 0 : index
    %129 = vector.load %arg17[%c1_204, %c9_205, %c0_206] : memref<10x24x128xf32, #tpu.memory_space<vmem>>, vector<8x8x128xf32>
    %c0_207 = arith.constant 0 : index
    %c0_208 = arith.constant 0 : index
    %c640 = arith.constant 640 : index
    %130 = vector.load %arg18[%c0_207, %c0_208, %c640] : memref<8x8x1152xf32, #tpu.memory_space<vmem>>, vector<8x8x128xf32>
    tpu.vector_store %arg18[%c0_207, %c0_208, %c640], %129 {strides = array<i32>} : memref<8x8x1152xf32, #tpu.memory_space<vmem>>, vector<8x8x128xf32>,
    %c2_209 = arith.constant 2 : index
    %c7_210 = arith.constant 7 : index
    %c0_211 = arith.constant 0 : index
    %131 = vector.load %arg17[%c2_209, %c7_210, %c0_211] : memref<10x24x128xf32, #tpu.memory_space<vmem>>, vector<8x8x128xf32>
    %c0_212 = arith.constant 0 : index
    %c0_213 = arith.constant 0 : index
    %c768_214 = arith.constant 768 : index
    %132 = vector.load %arg18[%c0_212, %c0_213, %c768_214] : memref<8x8x1152xf32, #tpu.memory_space<vmem>>, vector<8x8x128xf32>
    tpu.vector_store %arg18[%c0_212, %c0_213, %c768_214], %131 {strides = array<i32>} : memref<8x8x1152xf32, #tpu.memory_space<vmem>>, vector<8x8x128xf32>,
    %c2_215 = arith.constant 2 : index
    %c8_216 = arith.constant 8 : index
    %c0_217 = arith.constant 0 : index
    %133 = vector.load %arg17[%c2_215, %c8_216, %c0_217] : memref<10x24x128xf32, #tpu.memory_space<vmem>>, vector<8x8x128xf32>
    %c0_218 = arith.constant 0 : index
    %c0_219 = arith.constant 0 : index
    %c896 = arith.constant 896 : index
    %134 = vector.load %arg18[%c0_218, %c0_219, %c896] : memref<8x8x1152xf32, #tpu.memory_space<vmem>>, vector<8x8x128xf32>
    tpu.vector_store %arg18[%c0_218, %c0_219, %c896], %133 {strides = array<i32>} : memref<8x8x1152xf32, #tpu.memory_space<vmem>>, vector<8x8x128xf32>,
    %c2_220 = arith.constant 2 : index
    %c9_221 = arith.constant 9 : index
    %c0_222 = arith.constant 0 : index
    %135 = vector.load %arg17[%c2_220, %c9_221, %c0_222] : memref<10x24x128xf32, #tpu.memory_space<vmem>>, vector<8x8x128xf32>
    %c0_223 = arith.constant 0 : index
    %c0_224 = arith.constant 0 : index
    %c1024 = arith.constant 1024 : index
    %136 = vector.load %arg18[%c0_223, %c0_224, %c1024] : memref<8x8x1152xf32, #tpu.memory_space<vmem>>, vector<8x8x128xf32>
    tpu.vector_store %arg18[%c0_223, %c0_224, %c1024], %135 {strides = array<i32>} : memref<8x8x1152xf32, #tpu.memory_space<vmem>>, vector<8x8x128xf32>,
    %c0_225 = arith.constant 0 : index
    %c0_226 = arith.constant 0 : index
    %c0_227 = arith.constant 0 : index
    %137 = vector.load %arg18[%c0_225, %c0_226, %c0_227] : memref<8x8x1152xf32, #tpu.memory_space<vmem>>, vector<8x8x1152xf32>
    %138 = vector.shape_cast %137 : vector<8x8x1152xf32> to vector<64x1152xf32>
    %c0_228 = arith.constant 0 : index
    %c0_229 = arith.constant 0 : index
    %139 = vector.load %arg6[%c0_228, %c0_229] : memref<1152x64xf32, #tpu.memory_space<vmem>>, vector<1152x64xf32>
    %cst_230 = arith.constant dense<0.000000e+00> : vector<64x64xf32>
    %140 = tpu.matmul %138, %139, %cst_230 {dimension_numbers = #tpu.dot_dimension_numbers<[1], [0], [0], [1], [0, 0, 1, 1], [], []>} : vector<64x1152xf32>, vector<1152x64xf32>, vector<64x64xf32> -> vector<64x64xf32>
    %c0_231 = arith.constant 0 : index
    %c0_232 = arith.constant 0 : index
    %141 = vector.load %arg7[%c0_231, %c0_232] : memref<1x64xf32, #tpu.memory_space<vmem>>, vector<1x64xf32>
    %142 = vector.broadcast %141 : vector<1x64xf32> to vector<64x64xf32>
    %143 = arith.addf %140, %142 : vector<64x64xf32>
    %cst_233 = arith.constant 0.000000e+00 : f32
    %144 = vector.broadcast %cst_233 : f32 to vector<64x64xf32>
    %145 = arith.maximumf %143, %144 : vector<64x64xf32>
    %146 = vector.shape_cast %145 : vector<64x64xf32> to vector<4x2x8x64xf32>
    %c0_234 = arith.constant 0 : index
    %c0_235 = arith.constant 0 : index
    %c0_236 = arith.constant 0 : index
    %c0_237 = arith.constant 0 : index
    %147 = vector.load %arg19[%c0_234, %c0_235, %c0_236, %c0_237] : memref<4x2x8x64xf32, #tpu.memory_space<vmem>>, vector<4x2x8x64xf32>
    tpu.vector_store %arg19[%c0_234, %c0_235, %c0_236, %c0_237], %146 {strides = array<i32>} : memref<4x2x8x64xf32, #tpu.memory_space<vmem>>, vector<4x2x8x64xf32>,
    %c0_238 = arith.constant 0 : index
    %c0_239 = arith.constant 0 : index
    %c0_240 = arith.constant 0 : index
    %c0_241 = arith.constant 0 : index
    %148 = vector.load %arg19[%c0_238, %c0_239, %c0_240, %c0_241] : memref<4x2x8x64xf32, #tpu.memory_space<vmem>>, vector<4x1x8x64xf32>
    %149 = vector.shape_cast %148 : vector<4x1x8x64xf32> to vector<4x8x64xf32>
    %c0_242 = arith.constant 0 : index
    %c1_243 = arith.constant 1 : index
    %c0_244 = arith.constant 0 : index
    %c0_245 = arith.constant 0 : index
    %150 = vector.load %arg19[%c0_242, %c1_243, %c0_244, %c0_245] : memref<4x2x8x64xf32, #tpu.memory_space<vmem>>, vector<4x1x8x64xf32>
    %151 = vector.shape_cast %150 : vector<4x1x8x64xf32> to vector<4x8x64xf32>
    %152 = arith.maximumf %149, %151 : vector<4x8x64xf32>
    %153 = vector.shape_cast %152 : vector<4x8x64xf32> to vector<4x4x2x64xf32>
    %cst_246 = arith.constant dense<0xFF800000> : vector<4x4x64xf32>
    %154 = vector.multi_reduction <maximumf>, %153, %cst_246 [2] : vector<4x4x2x64xf32> to vector<4x4x64xf32>
    %c0_247 = arith.constant 0 : index
    %c0_248 = arith.constant 0 : index
    %155 = vector.load %arg9[%c0_247, %c0_248] : memref<1x20xf32, #tpu.memory_space<vmem>>, vector<1x20xf32>
    %156 = vector.extract_strided_slice %154 {offsets = [0, 0, 0], sizes = [1, 1, 64], strides = [1, 1, 1]} : vector<4x4x64xf32> to vector<1x1x64xf32>
    %157 = vector.shape_cast %156 : vector<1x1x64xf32> to vector<1x64xf32>
    %c0_249 = arith.constant 0 : index
    %c0_250 = arith.constant 0 : index
    %c0_251 = arith.constant 0 : index
    %158 = vector.load %arg8[%c0_249, %c0_250, %c0_251] : memref<16x64x20xf32, #tpu.memory_space<vmem>>, vector<1x64x20xf32>
    %159 = vector.shape_cast %158 : vector<1x64x20xf32> to vector<64x20xf32>
    %cst_252 = arith.constant dense<0.000000e+00> : vector<1x20xf32>
    %160 = tpu.matmul %157, %159, %cst_252 {dimension_numbers = #tpu.dot_dimension_numbers<[1], [0], [0], [1], [0, 0, 1, 1], [], []>} : vector<1x64xf32>, vector<64x20xf32>, vector<1x20xf32> -> vector<1x20xf32>
    %161 = arith.addf %155, %160 : vector<1x20xf32>
    %162 = vector.extract_strided_slice %154 {offsets = [0, 1, 0], sizes = [1, 1, 64], strides = [1, 1, 1]} : vector<4x4x64xf32> to vector<1x1x64xf32>
    %163 = vector.shape_cast %162 : vector<1x1x64xf32> to vector<1x64xf32>
    %c1_253 = arith.constant 1 : index
    %c0_254 = arith.constant 0 : index
    %c0_255 = arith.constant 0 : index
    %164 = vector.load %arg8[%c1_253, %c0_254, %c0_255] : memref<16x64x20xf32, #tpu.memory_space<vmem>>, vector<1x64x20xf32>
    %165 = vector.shape_cast %164 : vector<1x64x20xf32> to vector<64x20xf32>
    %cst_256 = arith.constant dense<0.000000e+00> : vector<1x20xf32>
    %166 = tpu.matmul %163, %165, %cst_256 {dimension_numbers = #tpu.dot_dimension_numbers<[1], [0], [0], [1], [0, 0, 1, 1], [], []>} : vector<1x64xf32>, vector<64x20xf32>, vector<1x20xf32> -> vector<1x20xf32>
    %167 = arith.addf %161, %166 : vector<1x20xf32>
    %168 = vector.extract_strided_slice %154 {offsets = [0, 2, 0], sizes = [1, 1, 64], strides = [1, 1, 1]} : vector<4x4x64xf32> to vector<1x1x64xf32>
    %169 = vector.shape_cast %168 : vector<1x1x64xf32> to vector<1x64xf32>
    %c2_257 = arith.constant 2 : index
    %c0_258 = arith.constant 0 : index
    %c0_259 = arith.constant 0 : index
    %170 = vector.load %arg8[%c2_257, %c0_258, %c0_259] : memref<16x64x20xf32, #tpu.memory_space<vmem>>, vector<1x64x20xf32>
    %171 = vector.shape_cast %170 : vector<1x64x20xf32> to vector<64x20xf32>
    %cst_260 = arith.constant dense<0.000000e+00> : vector<1x20xf32>
    %172 = tpu.matmul %169, %171, %cst_260 {dimension_numbers = #tpu.dot_dimension_numbers<[1], [0], [0], [1], [0, 0, 1, 1], [], []>} : vector<1x64xf32>, vector<64x20xf32>, vector<1x20xf32> -> vector<1x20xf32>
    %173 = arith.addf %167, %172 : vector<1x20xf32>
    %174 = vector.extract_strided_slice %154 {offsets = [0, 3, 0], sizes = [1, 1, 64], strides = [1, 1, 1]} : vector<4x4x64xf32> to vector<1x1x64xf32>
    %175 = vector.shape_cast %174 : vector<1x1x64xf32> to vector<1x64xf32>
    %c3 = arith.constant 3 : index
    %c0_261 = arith.constant 0 : index
    %c0_262 = arith.constant 0 : index
    %176 = vector.load %arg8[%c3, %c0_261, %c0_262] : memref<16x64x20xf32, #tpu.memory_space<vmem>>, vector<1x64x20xf32>
    %177 = vector.shape_cast %176 : vector<1x64x20xf32> to vector<64x20xf32>
    %cst_263 = arith.constant dense<0.000000e+00> : vector<1x20xf32>
    %178 = tpu.matmul %175, %177, %cst_263 {dimension_numbers = #tpu.dot_dimension_numbers<[1], [0], [0], [1], [0, 0, 1, 1], [], []>} : vector<1x64xf32>, vector<64x20xf32>, vector<1x20xf32> -> vector<1x20xf32>
    %179 = arith.addf %173, %178 : vector<1x20xf32>
    %180 = vector.extract_strided_slice %154 {offsets = [1, 0, 0], sizes = [1, 1, 64], strides = [1, 1, 1]} : vector<4x4x64xf32> to vector<1x1x64xf32>
    %181 = vector.shape_cast %180 : vector<1x1x64xf32> to vector<1x64xf32>
    %c4 = arith.constant 4 : index
    %c0_264 = arith.constant 0 : index
    %c0_265 = arith.constant 0 : index
    %182 = vector.load %arg8[%c4, %c0_264, %c0_265] : memref<16x64x20xf32, #tpu.memory_space<vmem>>, vector<1x64x20xf32>
    %183 = vector.shape_cast %182 : vector<1x64x20xf32> to vector<64x20xf32>
    %cst_266 = arith.constant dense<0.000000e+00> : vector<1x20xf32>
    %184 = tpu.matmul %181, %183, %cst_266 {dimension_numbers = #tpu.dot_dimension_numbers<[1], [0], [0], [1], [0, 0, 1, 1], [], []>} : vector<1x64xf32>, vector<64x20xf32>, vector<1x20xf32> -> vector<1x20xf32>
    %185 = arith.addf %179, %184 : vector<1x20xf32>
    %186 = vector.extract_strided_slice %154 {offsets = [1, 1, 0], sizes = [1, 1, 64], strides = [1, 1, 1]} : vector<4x4x64xf32> to vector<1x1x64xf32>
    %187 = vector.shape_cast %186 : vector<1x1x64xf32> to vector<1x64xf32>
    %c5_267 = arith.constant 5 : index
    %c0_268 = arith.constant 0 : index
    %c0_269 = arith.constant 0 : index
    %188 = vector.load %arg8[%c5_267, %c0_268, %c0_269] : memref<16x64x20xf32, #tpu.memory_space<vmem>>, vector<1x64x20xf32>
    %189 = vector.shape_cast %188 : vector<1x64x20xf32> to vector<64x20xf32>
    %cst_270 = arith.constant dense<0.000000e+00> : vector<1x20xf32>
    %190 = tpu.matmul %187, %189, %cst_270 {dimension_numbers = #tpu.dot_dimension_numbers<[1], [0], [0], [1], [0, 0, 1, 1], [], []>} : vector<1x64xf32>, vector<64x20xf32>, vector<1x20xf32> -> vector<1x20xf32>
    %191 = arith.addf %185, %190 : vector<1x20xf32>
    %192 = vector.extract_strided_slice %154 {offsets = [1, 2, 0], sizes = [1, 1, 64], strides = [1, 1, 1]} : vector<4x4x64xf32> to vector<1x1x64xf32>
    %193 = vector.shape_cast %192 : vector<1x1x64xf32> to vector<1x64xf32>
    %c6 = arith.constant 6 : index
    %c0_271 = arith.constant 0 : index
    %c0_272 = arith.constant 0 : index
    %194 = vector.load %arg8[%c6, %c0_271, %c0_272] : memref<16x64x20xf32, #tpu.memory_space<vmem>>, vector<1x64x20xf32>
    %195 = vector.shape_cast %194 : vector<1x64x20xf32> to vector<64x20xf32>
    %cst_273 = arith.constant dense<0.000000e+00> : vector<1x20xf32>
    %196 = tpu.matmul %193, %195, %cst_273 {dimension_numbers = #tpu.dot_dimension_numbers<[1], [0], [0], [1], [0, 0, 1, 1], [], []>} : vector<1x64xf32>, vector<64x20xf32>, vector<1x20xf32> -> vector<1x20xf32>
    %197 = arith.addf %191, %196 : vector<1x20xf32>
    %198 = vector.extract_strided_slice %154 {offsets = [1, 3, 0], sizes = [1, 1, 64], strides = [1, 1, 1]} : vector<4x4x64xf32> to vector<1x1x64xf32>
    %199 = vector.shape_cast %198 : vector<1x1x64xf32> to vector<1x64xf32>
    %c7_274 = arith.constant 7 : index
    %c0_275 = arith.constant 0 : index
    %c0_276 = arith.constant 0 : index
    %200 = vector.load %arg8[%c7_274, %c0_275, %c0_276] : memref<16x64x20xf32, #tpu.memory_space<vmem>>, vector<1x64x20xf32>
    %201 = vector.shape_cast %200 : vector<1x64x20xf32> to vector<64x20xf32>
    %cst_277 = arith.constant dense<0.000000e+00> : vector<1x20xf32>
    %202 = tpu.matmul %199, %201, %cst_277 {dimension_numbers = #tpu.dot_dimension_numbers<[1], [0], [0], [1], [0, 0, 1, 1], [], []>} : vector<1x64xf32>, vector<64x20xf32>, vector<1x20xf32> -> vector<1x20xf32>
    %203 = arith.addf %197, %202 : vector<1x20xf32>
    %204 = vector.extract_strided_slice %154 {offsets = [2, 0, 0], sizes = [1, 1, 64], strides = [1, 1, 1]} : vector<4x4x64xf32> to vector<1x1x64xf32>
    %205 = vector.shape_cast %204 : vector<1x1x64xf32> to vector<1x64xf32>
    %c8_278 = arith.constant 8 : index
    %c0_279 = arith.constant 0 : index
    %c0_280 = arith.constant 0 : index
    %206 = vector.load %arg8[%c8_278, %c0_279, %c0_280] : memref<16x64x20xf32, #tpu.memory_space<vmem>>, vector<1x64x20xf32>
    %207 = vector.shape_cast %206 : vector<1x64x20xf32> to vector<64x20xf32>
    %cst_281 = arith.constant dense<0.000000e+00> : vector<1x20xf32>
    %208 = tpu.matmul %205, %207, %cst_281 {dimension_numbers = #tpu.dot_dimension_numbers<[1], [0], [0], [1], [0, 0, 1, 1], [], []>} : vector<1x64xf32>, vector<64x20xf32>, vector<1x20xf32> -> vector<1x20xf32>
    %209 = arith.addf %203, %208 : vector<1x20xf32>
    %210 = vector.extract_strided_slice %154 {offsets = [2, 1, 0], sizes = [1, 1, 64], strides = [1, 1, 1]} : vector<4x4x64xf32> to vector<1x1x64xf32>
    %211 = vector.shape_cast %210 : vector<1x1x64xf32> to vector<1x64xf32>
    %c9_282 = arith.constant 9 : index
    %c0_283 = arith.constant 0 : index
    %c0_284 = arith.constant 0 : index
    %212 = vector.load %arg8[%c9_282, %c0_283, %c0_284] : memref<16x64x20xf32, #tpu.memory_space<vmem>>, vector<1x64x20xf32>
    %213 = vector.shape_cast %212 : vector<1x64x20xf32> to vector<64x20xf32>
    %cst_285 = arith.constant dense<0.000000e+00> : vector<1x20xf32>
    %214 = tpu.matmul %211, %213, %cst_285 {dimension_numbers = #tpu.dot_dimension_numbers<[1], [0], [0], [1], [0, 0, 1, 1], [], []>} : vector<1x64xf32>, vector<64x20xf32>, vector<1x20xf32> -> vector<1x20xf32>
    %215 = arith.addf %209, %214 : vector<1x20xf32>
    %216 = vector.extract_strided_slice %154 {offsets = [2, 2, 0], sizes = [1, 1, 64], strides = [1, 1, 1]} : vector<4x4x64xf32> to vector<1x1x64xf32>
    %217 = vector.shape_cast %216 : vector<1x1x64xf32> to vector<1x64xf32>
    %c10 = arith.constant 10 : index
    %c0_286 = arith.constant 0 : index
    %c0_287 = arith.constant 0 : index
    %218 = vector.load %arg8[%c10, %c0_286, %c0_287] : memref<16x64x20xf32, #tpu.memory_space<vmem>>, vector<1x64x20xf32>
    %219 = vector.shape_cast %218 : vector<1x64x20xf32> to vector<64x20xf32>
    %cst_288 = arith.constant dense<0.000000e+00> : vector<1x20xf32>
    %220 = tpu.matmul %217, %219, %cst_288 {dimension_numbers = #tpu.dot_dimension_numbers<[1], [0], [0], [1], [0, 0, 1, 1], [], []>} : vector<1x64xf32>, vector<64x20xf32>, vector<1x20xf32> -> vector<1x20xf32>
    %221 = arith.addf %215, %220 : vector<1x20xf32>
    %222 = vector.extract_strided_slice %154 {offsets = [2, 3, 0], sizes = [1, 1, 64], strides = [1, 1, 1]} : vector<4x4x64xf32> to vector<1x1x64xf32>
    %223 = vector.shape_cast %222 : vector<1x1x64xf32> to vector<1x64xf32>
    %c11 = arith.constant 11 : index
    %c0_289 = arith.constant 0 : index
    %c0_290 = arith.constant 0 : index
    %224 = vector.load %arg8[%c11, %c0_289, %c0_290] : memref<16x64x20xf32, #tpu.memory_space<vmem>>, vector<1x64x20xf32>
    %225 = vector.shape_cast %224 : vector<1x64x20xf32> to vector<64x20xf32>
    %cst_291 = arith.constant dense<0.000000e+00> : vector<1x20xf32>
    %226 = tpu.matmul %223, %225, %cst_291 {dimension_numbers = #tpu.dot_dimension_numbers<[1], [0], [0], [1], [0, 0, 1, 1], [], []>} : vector<1x64xf32>, vector<64x20xf32>, vector<1x20xf32> -> vector<1x20xf32>
    %227 = arith.addf %221, %226 : vector<1x20xf32>
    %228 = vector.extract_strided_slice %154 {offsets = [3, 0, 0], sizes = [1, 1, 64], strides = [1, 1, 1]} : vector<4x4x64xf32> to vector<1x1x64xf32>
    %229 = vector.shape_cast %228 : vector<1x1x64xf32> to vector<1x64xf32>
    %c12 = arith.constant 12 : index
    %c0_292 = arith.constant 0 : index
    %c0_293 = arith.constant 0 : index
    %230 = vector.load %arg8[%c12, %c0_292, %c0_293] : memref<16x64x20xf32, #tpu.memory_space<vmem>>, vector<1x64x20xf32>
    %231 = vector.shape_cast %230 : vector<1x64x20xf32> to vector<64x20xf32>
    %cst_294 = arith.constant dense<0.000000e+00> : vector<1x20xf32>
    %232 = tpu.matmul %229, %231, %cst_294 {dimension_numbers = #tpu.dot_dimension_numbers<[1], [0], [0], [1], [0, 0, 1, 1], [], []>} : vector<1x64xf32>, vector<64x20xf32>, vector<1x20xf32> -> vector<1x20xf32>
    %233 = arith.addf %227, %232 : vector<1x20xf32>
    %234 = vector.extract_strided_slice %154 {offsets = [3, 1, 0], sizes = [1, 1, 64], strides = [1, 1, 1]} : vector<4x4x64xf32> to vector<1x1x64xf32>
    %235 = vector.shape_cast %234 : vector<1x1x64xf32> to vector<1x64xf32>
    %c13_295 = arith.constant 13 : index
    %c0_296 = arith.constant 0 : index
    %c0_297 = arith.constant 0 : index
    %236 = vector.load %arg8[%c13_295, %c0_296, %c0_297] : memref<16x64x20xf32, #tpu.memory_space<vmem>>, vector<1x64x20xf32>
    %237 = vector.shape_cast %236 : vector<1x64x20xf32> to vector<64x20xf32>
    %cst_298 = arith.constant dense<0.000000e+00> : vector<1x20xf32>
    %238 = tpu.matmul %235, %237, %cst_298 {dimension_numbers = #tpu.dot_dimension_numbers<[1], [0], [0], [1], [0, 0, 1, 1], [], []>} : vector<1x64xf32>, vector<64x20xf32>, vector<1x20xf32> -> vector<1x20xf32>
    %239 = arith.addf %233, %238 : vector<1x20xf32>
    %240 = vector.extract_strided_slice %154 {offsets = [3, 2, 0], sizes = [1, 1, 64], strides = [1, 1, 1]} : vector<4x4x64xf32> to vector<1x1x64xf32>
    %241 = vector.shape_cast %240 : vector<1x1x64xf32> to vector<1x64xf32>
    %c14 = arith.constant 14 : index
    %c0_299 = arith.constant 0 : index
    %c0_300 = arith.constant 0 : index
    %242 = vector.load %arg8[%c14, %c0_299, %c0_300] : memref<16x64x20xf32, #tpu.memory_space<vmem>>, vector<1x64x20xf32>
    %243 = vector.shape_cast %242 : vector<1x64x20xf32> to vector<64x20xf32>
    %cst_301 = arith.constant dense<0.000000e+00> : vector<1x20xf32>
    %244 = tpu.matmul %241, %243, %cst_301 {dimension_numbers = #tpu.dot_dimension_numbers<[1], [0], [0], [1], [0, 0, 1, 1], [], []>} : vector<1x64xf32>, vector<64x20xf32>, vector<1x20xf32> -> vector<1x20xf32>
    %245 = arith.addf %239, %244 : vector<1x20xf32>
    %246 = vector.extract_strided_slice %154 {offsets = [3, 3, 0], sizes = [1, 1, 64], strides = [1, 1, 1]} : vector<4x4x64xf32> to vector<1x1x64xf32>
    %247 = vector.shape_cast %246 : vector<1x1x64xf32> to vector<1x64xf32>
    %c15 = arith.constant 15 : index
    %c0_302 = arith.constant 0 : index
    %c0_303 = arith.constant 0 : index
    %248 = vector.load %arg8[%c15, %c0_302, %c0_303] : memref<16x64x20xf32, #tpu.memory_space<vmem>>, vector<1x64x20xf32>
    %249 = vector.shape_cast %248 : vector<1x64x20xf32> to vector<64x20xf32>
    %cst_304 = arith.constant dense<0.000000e+00> : vector<1x20xf32>
    %250 = tpu.matmul %247, %249, %cst_304 {dimension_numbers = #tpu.dot_dimension_numbers<[1], [0], [0], [1], [0, 0, 1, 1], [], []>} : vector<1x64xf32>, vector<64x20xf32>, vector<1x20xf32> -> vector<1x20xf32>
    %251 = arith.addf %245, %250 : vector<1x20xf32>
    %c0_305 = arith.constant 0 : index
    %c0_306 = arith.constant 0 : index
    %252 = vector.load %arg10[%c0_305, %c0_306] : memref<20x10xf32, #tpu.memory_space<vmem>>, vector<20x10xf32>
    %cst_307 = arith.constant dense<0.000000e+00> : vector<1x10xf32>
    %253 = tpu.matmul %251, %252, %cst_307 {dimension_numbers = #tpu.dot_dimension_numbers<[1], [0], [0], [1], [0, 0, 1, 1], [], []>} : vector<1x20xf32>, vector<20x10xf32>, vector<1x10xf32> -> vector<1x10xf32>
    %c0_308 = arith.constant 0 : index
    %c0_309 = arith.constant 0 : index
    %254 = vector.load %arg11[%c0_308, %c0_309] : memref<1x10xf32, #tpu.memory_space<vmem>>, vector<1x10xf32>
    %255 = arith.addf %253, %254 : vector<1x10xf32>
    %c0_310 = arith.constant 0 : index
    %c0_311 = arith.constant 0 : index
    %c0_312 = arith.constant 0 : index
    %256 = vector.load %arg12[%c0_310, %c0_311, %c0_312] : memref<1x1x10xf32, #tpu.memory_space<vmem>>, vector<1x1x10xf32>
    %257 = vector.shape_cast %256 : vector<1x1x10xf32> to vector<1x10xf32>
    %258 = vector.shape_cast %255 : vector<1x10xf32> to vector<1x1x10xf32>
    tpu.vector_store %arg12[%c0_310, %c0_311, %c0_312], %258 {strides = array<i32>} : memref<1x1x10xf32, #tpu.memory_space<vmem>>, vector<1x1x10xf32>,
    return
  }
  func.func @transform_0(%arg0: i32) -> (i32, i32, i32) {
    %c0_i32 = arith.constant 0 : i32
    %c0_i32_0 = arith.constant 0 : i32
    %c0_i32_1 = arith.constant 0 : i32
    return %arg0, %c0_i32, %c0_i32_0 : i32, i32, i32
  }
  func.func @transform_1(%arg0: i32) -> (i32, i32) {
    %c0_i32 = arith.constant 0 : i32
    %c0_i32_0 = arith.constant 0 : i32
    %c0_i32_1 = arith.constant 0 : i32
    return %c0_i32, %c0_i32_0 : i32, i32
  }
  func.func @transform_2(%arg0: i32) -> (i32, i32) {
    %c0_i32 = arith.constant 0 : i32
    %c0_i32_0 = arith.constant 0 : i32
    %c0_i32_1 = arith.constant 0 : i32
    return %c0_i32, %c0_i32_0 : i32, i32
  }
  func.func @transform_3(%arg0: i32) -> (i32, i32) {
    %c0_i32 = arith.constant 0 : i32
    %c0_i32_0 = arith.constant 0 : i32
    %c0_i32_1 = arith.constant 0 : i32
    return %c0_i32, %c0_i32_0 : i32, i32
  }
  func.func @transform_4(%arg0: i32) -> (i32, i32) {
    %c0_i32 = arith.constant 0 : i32
    %c0_i32_0 = arith.constant 0 : i32
    %c0_i32_1 = arith.constant 0 : i32
    return %c0_i32, %c0_i32_0 : i32, i32
  }
  func.func @transform_5(%arg0: i32) -> (i32, i32) {
    %c0_i32 = arith.constant 0 : i32
    %c0_i32_0 = arith.constant 0 : i32
    %c0_i32_1 = arith.constant 0 : i32
    return %c0_i32, %c0_i32_0 : i32, i32
  }
  func.func @transform_6(%arg0: i32) -> (i32, i32) {
    %c0_i32 = arith.constant 0 : i32
    %c0_i32_0 = arith.constant 0 : i32
    %c0_i32_1 = arith.constant 0 : i32
    return %c0_i32, %c0_i32_0 : i32, i32
  }
  func.func @transform_7(%arg0: i32) -> (i32, i32, i32) {
    %c0_i32 = arith.constant 0 : i32
    %c0_i32_0 = arith.constant 0 : i32
    %c0_i32_1 = arith.constant 0 : i32
    %c0_i32_2 = arith.constant 0 : i32
    return %c0_i32, %c0_i32_0, %c0_i32_1 : i32, i32, i32
  }
  func.func @transform_8(%arg0: i32) -> (i32, i32) {
    %c0_i32 = arith.constant 0 : i32
    %c0_i32_0 = arith.constant 0 : i32
    %c0_i32_1 = arith.constant 0 : i32
    return %c0_i32, %c0_i32_0 : i32, i32
  }
  func.func @transform_9(%arg0: i32) -> (i32, i32) {
    %c0_i32 = arith.constant 0 : i32
    %c0_i32_0 = arith.constant 0 : i32
    %c0_i32_1 = arith.constant 0 : i32
    return %c0_i32, %c0_i32_0 : i32, i32
  }
  func.func @transform_10(%arg0: i32) -> (i32, i32) {
    %c0_i32 = arith.constant 0 : i32
    %c0_i32_0 = arith.constant 0 : i32
    %c0_i32_1 = arith.constant 0 : i32
    return %c0_i32, %c0_i32_0 : i32, i32
  }
  func.func @transform_11(%arg0: i32) -> (i32, i32, i32) {
    %c0_i32 = arith.constant 0 : i32
    %c0_i32_0 = arith.constant 0 : i32
    %c0_i32_1 = arith.constant 0 : i32
    return %arg0, %c0_i32, %c0_i32_0 : i32, i32, i32
  }
}

</mosaic_0001>

<llo_original>
// kernel: cnn_forward.1
$region0: #{cnn_forward.1}
  #allocation0 [shape = 'u32[]', space=smem, size = 0x4, offset = 0x4, fixed_abs, tag = 'smem constant byte address 0x4 - core index']
  #allocation1 [shape = 'u32[72,128]{1,0:T(1,128)}', space=vmem, size = 0x9000, scoped, tag = 'internal scratch']
  #allocation2 [shape = 'f32[4,2,32,64]{3,2,1,0:T(8,128)}', space=vmem, size = 0x20000, scoped, tag = 'scratch operand']
  #allocation3 [shape = 'f32[18,32,64]{2,1,0:T(8,128)}', space=vmem, size = 0x48000, scoped, tag = 'scratch operand']
  #allocation4 [shape = 'f32[16,16,576]{2,1,0:T(8,128)}', space=vmem, size = 0xa0000, scoped, tag = 'scratch operand']
  #allocation5 [shape = 'f32[8,2,16,128]{3,2,1,0:T(8,128)}', space=vmem, size = 0x20000, scoped, tag = 'scratch operand']
  #allocation6 [shape = 'f32[10,24,128]{2,1,0:T(8,128)}', space=vmem, size = 0x1e000, scoped, tag = 'scratch operand']
  #allocation7 [shape = 'f32[8,8,1152]{2,1,0:T(8,128)}', space=vmem, size = 0x48000, scoped, tag = 'scratch operand']
  #allocation8 [shape = 'f32[4,2,8,64]{3,2,1,0:T(8,128)}', space=vmem, size = 0x8000, scoped, tag = 'scratch operand']
  %s0 = inlined_call_operand.vmem [shape: f32[2,1024,9], index: 0, kind: input, shape index: {}]
  %s1 = inlined_call_operand.vmem [shape: f32[9,64], index: 1, kind: input, shape index: {}]
  %s2 = inlined_call_operand.vmem [shape: f32[1,64], index: 2, kind: input, shape index: {}]
  %s3 = inlined_call_operand.vmem [shape: f32[576,128], index: 3, kind: input, shape index: {}]
  %s4 = inlined_call_operand.vmem [shape: f32[1,128], index: 4, kind: input, shape index: {}]
  %s5 = inlined_call_operand.vmem [shape: f32[1152,64], index: 5, kind: input, shape index: {}]
  %s6 = inlined_call_operand.vmem [shape: f32[1,64], index: 6, kind: input, shape index: {}]
  %s7 = inlined_call_operand.vmem [shape: f32[16,64,20], index: 7, kind: input, shape index: {}]
  %s8 = inlined_call_operand.vmem [shape: f32[1,20], index: 8, kind: input, shape index: {}]
  %s9 = inlined_call_operand.vmem [shape: f32[20,10], index: 9, kind: input, shape index: {}]
  %s10 = inlined_call_operand.vmem [shape: f32[1,10], index: 10, kind: input, shape index: {}]
  %s11 = inlined_call_operand.hbm [shape: f32[2,1,10], index: 11, kind: output, shape index: {}]
  %s12 = sld [smem:[#allocation0]]
  $region77: #{cnn_forward.1} parent=0
    _
  %s14 = ssub.s32 1, %s12
  %s15 = scalar_select 0, %s14, %s12
  $region1: #{cnn_forward.1} parent=0
    #allocation9 [shape = 'u8[1024]{0}', space=vmem, size = 0x400, scoped, tag = 'output window, operand 0']
    #allocation10 [shape = 's32[2]{0}', space=sflag, size = 0x8, scoped, tag = 'scoped memory for cnn_forward.1']
    %16 = vsyncpa [#allocation10], 0
    %s17 = scalar_lea.sflag [#allocation10], 1
    %18 = vsyncpa %s17, 0
    loop: start=0, step=1, limit=4
    $region2: #{cnn_forward.1} parent=1 // loop_pre_header
      _
    $region3: #{cnn_forward.1} parent=1 // loop_header
      %s20 = sphi 0, %s24
      %p21 = scmp.ge.s32.totalorder %s20, 4
      %s30 = sphi 0, %s32
      %s33 = sphi 0, %s30
      %s34 = sphi 0, %s33
      %s50 = sphi 0, %s34
      %s54 = sphi 0, %s54
      %s56 = sphi 0, %s54
      %s57 = sphi 0, %s56
      %s71 = sphi 0, %s57
      %s75 = sphi 0, %s75
      %s77 = sphi 0, %s75
      %s78 = sphi 0, %s77
      %s92 = sphi 0, %s78
      %s96 = sphi 0, %s96
      %s98 = sphi 0, %s96
      %s99 = sphi 0, %s98
      %s113 = sphi 0, %s99
      %s117 = sphi 0, %s117
      %s119 = sphi 0, %s117
      %s120 = sphi 0, %s119
      %s134 = sphi 0, %s120
      %s138 = sphi 0, %s138
      %s140 = sphi 0, %s138
      %s141 = sphi 0, %s140
      %s155 = sphi 0, %s141
      %s159 = sphi 0, %s159
      %s161 = sphi 0, %s159
      %s162 = sphi 0, %s161
      %s176 = sphi 0, %s162
      %s180 = sphi 0, %s180
      %s182 = sphi 0, %s180
      %s183 = sphi 0, %s182
      %s197 = sphi 0, %s183
      %s201 = sphi 0, %s201
      %s203 = sphi 0, %s201
      %s204 = sphi 0, %s203
      %s218 = sphi 0, %s204
      %s222 = sphi 0, %s222
      %s224 = sphi 0, %s222
      %s225 = sphi 0, %s224
      %s239 = sphi 0, %s225
      %s243 = sphi 0, %s243
      %s245 = sphi 0, %s243
      %s246 = sphi 0, %s245
      %s260 = sphi 0, %s246
      %s266 = sphi 0, %s268
      %s269 = sphi 0, %s266
      %s270 = sphi 0, %s269
      %s286 = sphi 0, %s270
    $region4: #{cnn_forward.1} parent=1 // loop_header_branch
      %23 = sbr.rel (%p21) target = $region8
    $region5: #{cnn_forward.1} parent=1 // loop_body
      %s25 = ssub.s32 %s20, 1
      %s26 = ssub.s32 %s20, 2
      %s27 = sadd.s32 %s20, 1
      %s28 = ssub.s32 %s20, %s27
      %p29 = scmp.eq.s32.totalorder %s28, 0
      %s31 = sadd.s32 %s30, 1
      %s32 = scalar_select %p29, %s30, %s31
      %p35 = pneg %p29
      %p36 = scmp.eq.s32.totalorder %s20, 1
      %p37 = por %p35, %p36
      %p38 = scmp.ne.s32.totalorder %s30, %s33
      %p39 = scmp.eq.s32.totalorder %s20, 0
      %p40 = por %p38, %p39
      %p41 = scmp.ne.s32.totalorder %s30, %s33
      %p42 = scmp.eq.s32.totalorder %s25, 1
      %p43 = por %p41, %p42
      %p44 = scmp.ne.s32.totalorder %s33, %s34
      %p45 = scmp.eq.s32.totalorder %s25, 0
      %p46 = por %p44, %p45
      %p47 = scmp.ne.s32.totalorder %s33, %s34
      %p48 = scmp.eq.s32.totalorder %s26, 1
      %p49 = por %p47, %p48
      %p51 = scmp.ne.s32.totalorder %s34, %s50
      %p52 = scmp.eq.s32.totalorder %s26, 0
      %p53 = por %p51, %p52
      %s55 = sadd.s32 %s54, 1
      %p58 = scmp.eq.s32.totalorder %s20, 1
      %p59 = scmp.ne.s32.totalorder %s54, %s56
      %p60 = scmp.eq.s32.totalorder %s20, 0
      %p61 = por %p59, %p60
      %p62 = scmp.ne.s32.totalorder %s54, %s56
      %p63 = scmp.eq.s32.totalorder %s25, 1
      %p64 = por %p62, %p63
      %p65 = scmp.ne.s32.totalorder %s56, %s57
      %p66 = scmp.eq.s32.totalorder %s25, 0
      %p67 = por %p65, %p66
      %p68 = scmp.ne.s32.totalorder %s56, %s57
      %p69 = scmp.eq.s32.totalorder %s26, 1
      %p70 = por %p68, %p69
      %p72 = scmp.ne.s32.totalorder %s57, %s71
      %p73 = scmp.eq.s32.totalorder %s26, 0
      %p74 = por %p72, %p73
      %s76 = sadd.s32 %s75, 1
      %p79 = scmp.eq.s32.totalorder %s20, 1
      %p80 = scmp.ne.s32.totalorder %s75, %s77
      %p81 = scmp.eq.s32.totalorder %s20, 0
      %p82 = por %p80, %p81
      %p83 = scmp.ne.s32.totalorder %s75, %s77
      %p84 = scmp.eq.s32.totalorder %s25, 1
      %p85 = por %p83, %p84
      %p86 = scmp.ne.s32.totalorder %s77, %s78
      %p87 = scmp.eq.s32.totalorder %s25, 0
      %p88 = por %p86, %p87
      %p89 = scmp.ne.s32.totalorder %s77, %s78
      %p90 = scmp.eq.s32.totalorder %s26, 1
      %p91 = por %p89, %p90
      %p93 = scmp.ne.s32.totalorder %s78, %s92
      %p94 = scmp.eq.s32.totalorder %s26, 0
      %p95 = por %p93, %p94
      %s97 = sadd.s32 %s96, 1
      %p100 = scmp.eq.s32.totalorder %s20, 1
      %p101 = scmp.ne.s32.totalorder %s96, %s98
      %p102 = scmp.eq.s32.totalorder %s20, 0
      %p103 = por %p101, %p102
      %p104 = scmp.ne.s32.totalorder %s96, %s98
      %p105 = scmp.eq.s32.totalorder %s25, 1
      %p106 = por %p104, %p105
      %p107 = scmp.ne.s32.totalorder %s98, %s99
      %p108 = scmp.eq.s32.totalorder %s25, 0
      %p109 = por %p107, %p108
      %p110 = scmp.ne.s32.totalorder %s98, %s99
      %p111 = scmp.eq.s32.totalorder %s26, 1
      %p112 = por %p110, %p111
      %p114 = scmp.ne.s32.totalorder %s99, %s113
      %p115 = scmp.eq.s32.totalorder %s26, 0
      %p116 = por %p114, %p115
      %s118 = sadd.s32 %s117, 1
      %p121 = scmp.eq.s32.totalorder %s20, 1
      %p122 = scmp.ne.s32.totalorder %s117, %s119
      %p123 = scmp.eq.s32.totalorder %s20, 0
      %p124 = por %p122, %p123
      %p125 = scmp.ne.s32.totalorder %s117, %s119
      %p126 = scmp.eq.s32.totalorder %s25, 1
      %p127 = por %p125, %p126
      %p128 = scmp.ne.s32.totalorder %s119, %s120
      %p129 = scmp.eq.s32.totalorder %s25, 0
      %p130 = por %p128, %p129
      %p131 = scmp.ne.s32.totalorder %s119, %s120
      %p132 = scmp.eq.s32.totalorder %s26, 1
      %p133 = por %p131, %p132
      %p135 = scmp.ne.s32.totalorder %s120, %s134
      %p136 = scmp.eq.s32.totalorder %s26, 0
      %p137 = por %p135, %p136
      %s139 = sadd.s32 %s138, 1
      %p142 = scmp.eq.s32.totalorder %s20, 1
      %p143 = scmp.ne.s32.totalorder %s138, %s140
      %p144 = scmp.eq.s32.totalorder %s20, 0
      %p145 = por %p143, %p144
      %p146 = scmp.ne.s32.totalorder %s138, %s140
      %p147 = scmp.eq.s32.totalorder %s25, 1
      %p148 = por %p146, %p147
      %p149 = scmp.ne.s32.totalorder %s140, %s141
      %p150 = scmp.eq.s32.totalorder %s25, 0
      %p151 = por %p149, %p150
      %p152 = scmp.ne.s32.totalorder %s140, %s141
      %p153 = scmp.eq.s32.totalorder %s26, 1
      %p154 = por %p152, %p153
      %p156 = scmp.ne.s32.totalorder %s141, %s155
      %p157 = scmp.eq.s32.totalorder %s26, 0
      %p158 = por %p156, %p157
      %s160 = sadd.s32 %s159, 1
      %p163 = scmp.eq.s32.totalorder %s20, 1
      %p164 = scmp.ne.s32.totalorder %s159, %s161
      %p165 = scmp.eq.s32.totalorder %s20, 0
      %p166 = por %p164, %p165
      %p167 = scmp.ne.s32.totalorder %s159, %s161
      %p168 = scmp.eq.s32.totalorder %s25, 1
      %p169 = por %p167, %p168
      %p170 = scmp.ne.s32.totalorder %s161, %s162
      %p171 = scmp.eq.s32.totalorder %s25, 0
      %p172 = por %p170, %p171
      %p173 = scmp.ne.s32.totalorder %s161, %s162
      %p174 = scmp.eq.s32.totalorder %s26, 1
      %p175 = por %p173, %p174
      %p177 = scmp.ne.s32.totalorder %s162, %s176
      %p178 = scmp.eq.s32.totalorder %s26, 0
      %p179 = por %p177, %p178
      %s181 = sadd.s32 %s180, 1
      %p184 = scmp.eq.s32.totalorder %s20, 1
      %p185 = scmp.ne.s32.totalorder %s180, %s182
      %p186 = scmp.eq.s32.totalorder %s20, 0
      %p187 = por %p185, %p186
      %p188 = scmp.ne.s32.totalorder %s180, %s182
      %p189 = scmp.eq.s32.totalorder %s25, 1
      %p190 = por %p188, %p189
      %p191 = scmp.ne.s32.totalorder %s182, %s183
      %p192 = scmp.eq.s32.totalorder %s25, 0
      %p193 = por %p191, %p192
      %p194 = scmp.ne.s32.totalorder %s182, %s183
      %p195 = scmp.eq.s32.totalorder %s26, 1
      %p196 = por %p194, %p195
      %p198 = scmp.ne.s32.totalorder %s183, %s197
      %p199 = scmp.eq.s32.totalorder %s26, 0
      %p200 = por %p198, %p199
      %s202 = sadd.s32 %s201, 1
      %p205 = scmp.eq.s32.totalorder %s20, 1
      %p206 = scmp.ne.s32.totalorder %s201, %s203
      %p207 = scmp.eq.s32.totalorder %s20, 0
      %p208 = por %p206, %p207
      %p209 = scmp.ne.s32.totalorder %s201, %s203
      %p210 = scmp.eq.s32.totalorder %s25, 1
      %p211 = por %p209, %p210
      %p212 = scmp.ne.s32.totalorder %s203, %s204
      %p213 = scmp.eq.s32.totalorder %s25, 0
      %p214 = por %p212, %p213
      %p215 = scmp.ne.s32.totalorder %s203, %s204
      %p216 = scmp.eq.s32.totalorder %s26, 1
      %p217 = por %p215, %p216
      %p219 = scmp.ne.s32.totalorder %s204, %s218
      %p220 = scmp.eq.s32.totalorder %s26, 0
      %p221 = por %p219, %p220
      %s223 = sadd.s32 %s222, 1
      %p226 = scmp.eq.s32.totalorder %s20, 1
      %p227 = scmp.ne.s32.totalorder %s222, %s224
      %p228 = scmp.eq.s32.totalorder %s20, 0
      %p229 = por %p227, %p228
      %p230 = scmp.ne.s32.totalorder %s222, %s224
      %p231 = scmp.eq.s32.totalorder %s25, 1
      %p232 = por %p230, %p231
      %p233 = scmp.ne.s32.totalorder %s224, %s225
      %p234 = scmp.eq.s32.totalorder %s25, 0
      %p235 = por %p233, %p234
      %p236 = scmp.ne.s32.totalorder %s224, %s225
      %p237 = scmp.eq.s32.totalorder %s26, 1
      %p238 = por %p236, %p237
      %p240 = scmp.ne.s32.totalorder %s225, %s239
      %p241 = scmp.eq.s32.totalorder %s26, 0
      %p242 = por %p240, %p241
      %s244 = sadd.s32 %s243, 1
      %p247 = scmp.eq.s32.totalorder %s20, 1
      %p248 = scmp.ne.s32.totalorder %s243, %s245
      %p249 = scmp.eq.s32.totalorder %s20, 0
      %p250 = por %p248, %p249
      %p251 = scmp.ne.s32.totalorder %s243, %s245
      %p252 = scmp.eq.s32.totalorder %s25, 1
      %p253 = por %p251, %p252
      %p254 = scmp.ne.s32.totalorder %s245, %s246
      %p255 = scmp.eq.s32.totalorder %s25, 0
      %p256 = por %p254, %p255
      %p257 = scmp.ne.s32.totalorder %s245, %s246
      %p258 = scmp.eq.s32.totalorder %s26, 1
      %p259 = por %p257, %p258
      %p261 = scmp.ne.s32.totalorder %s246, %s260
      %p262 = scmp.eq.s32.totalorder %s26, 0
      %p263 = por %p261, %p262
      %s264 = ssub.s32 %s20, %s27
      %p265 = scmp.eq.s32.totalorder %s264, 0
      %s267 = sadd.s32 %s266, 1
      %s268 = scalar_select %p265, %s266, %s267
      %p271 = pneg %p265
      %p272 = scmp.eq.s32.totalorder %s20, 1
      %p273 = por %p271, %p272
      %p274 = scmp.ne.s32.totalorder %s266, %s269
      %p275 = scmp.eq.s32.totalorder %s20, 0
      %p276 = por %p274, %p275
      %p277 = scmp.ne.s32.totalorder %s266, %s269
      %p278 = scmp.eq.s32.totalorder %s25, 1
      %p279 = por %p277, %p278
      %p280 = scmp.ne.s32.totalorder %s269, %s270
      %p281 = scmp.eq.s32.totalorder %s25, 0
      %p282 = por %p280, %p281
      %p283 = scmp.ne.s32.totalorder %s269, %s270
      %p284 = scmp.eq.s32.totalorder %s26, 1
      %p285 = por %p283, %p284
      %p287 = scmp.ne.s32.totalorder %s270, %s286
      %p288 = scmp.eq.s32.totalorder %s26, 0
      %p289 = por %p287, %p288
      %p290 = scmp.le.s32.totalorder 1, %s20
      %p291 = scmp.lt.s32.totalorder %s20, 3
      %p292 = pnand %p290, %p291
      %p293 = pneg %p292
      // Predicated region
      $region9: #{cnn_forward.1} parent=5 // pred_check
        _
      $region10: #{cnn_forward.1} parent=5 // pred_check_branch
        %295 = sbr.rel (%p292) target = $region12
      $region11: #{cnn_forward.1} parent=5 // pred_region
        %s296 = ssub.s32 %s20, 1
        // Predicated region
        $region13: #{cnn_forward.1} parent=11 // pred_check
          %p297 = pneg %p67
        $region14: #{cnn_forward.1} parent=11 // pred_check_branch
          %299 = sbr.rel (%p297) target = $region16
        $region15: #{cnn_forward.1} parent=11 // pred_region
          _
        $region16: #{cnn_forward.1} parent=11 // pred_fallthru
          _
        // Predicated region
        $region17: #{cnn_forward.1} parent=11 // pred_check
          %p300 = pneg %p88
        $region18: #{cnn_forward.1} parent=11 // pred_check_branch
          %302 = sbr.rel (%p300) target = $region20
        $region19: #{cnn_forward.1} parent=11 // pred_region
          _
        $region20: #{cnn_forward.1} parent=11 // pred_fallthru
          _
        // Predicated region
        $region21: #{cnn_forward.1} parent=11 // pred_check
          %p303 = pneg %p109
        $region22: #{cnn_forward.1} parent=11 // pred_check_branch
          %305 = sbr.rel (%p303) target = $region24
        $region23: #{cnn_forward.1} parent=11 // pred_region
          _
        $region24: #{cnn_forward.1} parent=11 // pred_fallthru
          _
        // Predicated region
        $region25: #{cnn_forward.1} parent=11 // pred_check
          %p306 = pneg %p130
        $region26: #{cnn_forward.1} parent=11 // pred_check_branch
          %308 = sbr.rel (%p306) target = $region28
        $region27: #{cnn_forward.1} parent=11 // pred_region
          _
        $region28: #{cnn_forward.1} parent=11 // pred_fallthru
          _
        // Predicated region
        $region29: #{cnn_forward.1} parent=11 // pred_check
          %p309 = pneg %p151
        $region30: #{cnn_forward.1} parent=11 // pred_check_branch
          %311 = sbr.rel (%p309) target = $region32
        $region31: #{cnn_forward.1} parent=11 // pred_region
          _
        $region32: #{cnn_forward.1} parent=11 // pred_fallthru
          _
        // Predicated region
        $region33: #{cnn_forward.1} parent=11 // pred_check
          %p312 = pneg %p172
        $region34: #{cnn_forward.1} parent=11 // pred_check_branch
          %314 = sbr.rel (%p312) target = $region36
        $region35: #{cnn_forward.1} parent=11 // pred_region
          _
        $region36: #{cnn_forward.1} parent=11 // pred_fallthru
          _
        // Predicated region
        $region37: #{cnn_forward.1} parent=11 // pred_check
          %p315 = pneg %p193
        $region38: #{cnn_forward.1} parent=11 // pred_check_branch
          %317 = sbr.rel (%p315) target = $region40
        $region39: #{cnn_forward.1} parent=11 // pred_region
          _
        $region40: #{cnn_forward.1} parent=11 // pred_fallthru
          _
        // Predicated region
        $region41: #{cnn_forward.1} parent=11 // pred_check
          %p318 = pneg %p214
        $region42: #{cnn_forward.1} parent=11 // pred_check_branch
          %320 = sbr.rel (%p318) target = $region44
        $region43: #{cnn_forward.1} parent=11 // pred_region
          _
        $region44: #{cnn_forward.1} parent=11 // pred_fallthru
          _
        // Predicated region
        $region45: #{cnn_forward.1} parent=11 // pred_check
          %p321 = pneg %p235
        $region46: #{cnn_forward.1} parent=11 // pred_check_branch
          %323 = sbr.rel (%p321) target = $region48
        $region47: #{cnn_forward.1} parent=11 // pred_region
          _
        $region48: #{cnn_forward.1} parent=11 // pred_fallthru
          _
        // Predicated region
        $region49: #{cnn_forward.1} parent=11 // pred_check
          %p324 = pneg %p256
        $region50: #{cnn_forward.1} parent=11 // pred_check_branch
          %326 = sbr.rel (%p324) target = $region52
        $region51: #{cnn_forward.1} parent=11 // pred_region
          _
        $region52: #{cnn_forward.1} parent=11 // pred_fallthru
          _
      $region12: #{cnn_forward.1} parent=5 // pred_fallthru
        _
      %p327 = scmp.lt.s32.totalorder %s20, 2
      // Predicated region
      $region53: #{cnn_forward.1} parent=5 // pred_check
        %p328 = pneg %p327
      $region54: #{cnn_forward.1} parent=5 // pred_check_branch
        %330 = sbr.rel (%p328) target = $region56
      $region55: #{cnn_forward.1} parent=5 // pred_region
        // Predicated region
        $region57: #{cnn_forward.1} parent=55 // pred_check
          %p331 = pneg %p40
        $region58: #{cnn_forward.1} parent=55 // pred_check_branch
          %333 = sbr.rel (%p331) target = $region60
        $region59: #{cnn_forward.1} parent=55 // pred_region
          %p334 = scmp.lt.s32.totalorder %s20, 1
          %s335 = scalar_select %p334, %s20, 1
          %s336 = smul.addr %s335, 128
          %s337 = smul.addr %s336, 8
          %s338 = scalar_lea.vmem %s0, %s337
        $region60: #{cnn_forward.1} parent=55 // pred_fallthru
          _
      $region56: #{cnn_forward.1} parent=5 // pred_fallthru
        _
      %p339 = scmp.le.s32.totalorder 1, %s20
      %p340 = scmp.lt.s32.totalorder %s20, 3
      %p341 = pnand %p339, %p340
      %p342 = pneg %p341
      // Predicated region
      $region61: #{cnn_forward.1} parent=5 // pred_check
        _
      $region62: #{cnn_forward.1} parent=5 // pred_check_branch
        %344 = sbr.rel (%p341) target = $region64
      $region63: #{cnn_forward.1} parent=5 // pred_region
        %s345 = ssub.s32 %s20, 1
        %p346 = scmp.lt.s32.totalorder %s25, 1
        %s347 = scalar_select %p346, %s25, 1
        %s348 = smul.addr %s347, 128
        %s349 = smul.addr %s348, 8
        %s350 = scalar_lea.vmem %s0, %s349
        %p351 = pneg %p46
        %p352 = pneg %p43
        %p353 = pneg %p67
        %p354 = pneg %p64
        %p355 = pneg %p88
        %p356 = pneg %p85
        %p357 = pneg %p109
        %p358 = pneg %p106
        %p359 = pneg %p130
        %p360 = pneg %p127
        %p361 = pneg %p151
        %p362 = pneg %p148
        %p363 = pneg %p172
        %p364 = pneg %p169
        %p365 = pneg %p193
        %p366 = pneg %p190
        %p367 = pneg %p214
        %p368 = pneg %p211
        %p369 = pneg %p235
        %p370 = pneg %p232
        %p371 = pneg %p256
        %p372 = pneg %p253
        %p373 = pneg %p282
        %p374 = pneg %p279
        %s375 = sand.u32 %s269, 1
        %s376 = scalar_lea.sflag [#allocation10], %s375
        %s377 = sand.u32 %s269, 1
        %s378 = scalar_lea.vmem [#allocation9], %s377
        %p379 = scmp.lt.s32.totalorder %s25, 1
        %s380 = scalar_select %p379, %s25, 1
        %s381 = smul.addr %s380, 128
        %s382 = smul.addr %s381, 8
        %s383 = scalar_lea.vmem %s0, %s382
        %vm384 = vcmask 523264
        %385 = vst.msk [vmem:[#allocation3] sm:$0xff] %vm384, 0.0
        %386 = vst.msk [vmem:[#allocation3 + $0x8] sm:$0xff] %vm384, 0.0
        %387 = vst.msk [vmem:[#allocation3 + $0x10] sm:$0xff] %vm384, 0.0
        %388 = vst.msk [vmem:[#allocation3 + $0x18] sm:$0xff] %vm384, 0.0
        %s389 = scalar_lea.vmem [#allocation3], 544
        %390 = vst.msk [vmem:[%s389] sm:$0xff] %vm384, 0.0
        %391 = vst.msk [vmem:[%s389 + $0x8] sm:$0xff] %vm384, 0.0
        %392 = vst.msk [vmem:[%s389 + $0x10] sm:$0xff] %vm384, 0.0
        %393 = vst.msk [vmem:[%s389 + $0x18] sm:$0xff] %vm384, 0.0
        %s394 = scalar_lea.vmem [#allocation3], 32
        %395 = vst.msk [vmem:[%s394] sm:$0xff] %vm384, 0.0
        %396 = vst.msk [vmem:[%s394 + $0x20] sm:$0xff] %vm384, 0.0
        %397 = vst.msk [vmem:[%s394 + $0x40] sm:$0xff] %vm384, 0.0
        %398 = vst.msk [vmem:[%s394 + $0x60] sm:$0xff] %vm384, 0.0
        %399 = vst.msk [vmem:[%s394 + $0x80] sm:$0xff] %vm384, 0.0
        %400 = vst.msk [vmem:[%s394 + $0xa0] sm:$0xff] %vm384, 0.0
        %401 = vst.msk [vmem:[%s394 + $0xc0] sm:$0xff] %vm384, 0.0
        %402 = vst.msk [vmem:[%s394 + $0xe0] sm:$0xff] %vm384, 0.0
        %403 = vst.msk [vmem:[%s394 + $0x100] sm:$0xff] %vm384, 0.0
        %404 = vst.msk [vmem:[%s394 + $0x120] sm:$0xff] %vm384, 0.0
        %405 = vst.msk [vmem:[%s394 + $0x140] sm:$0xff] %vm384, 0.0
        %406 = vst.msk [vmem:[%s394 + $0x160] sm:$0xff] %vm384, 0.0
        %407 = vst.msk [vmem:[%s394 + $0x180] sm:$0xff] %vm384, 0.0
        %408 = vst.msk [vmem:[%s394 + $0x1a0] sm:$0xff] %vm384, 0.0
        %409 = vst.msk [vmem:[%s394 + $0x1c0] sm:$0xff] %vm384, 0.0
        %410 = vst.msk [vmem:[%s394 + $0x1e0] sm:$0xff] %vm384, 0.0
        %411 = vst.msk [vmem:[%s394 + $0x18] sm:$0xff] %vm384, 0.0
        %412 = vst.msk [vmem:[%s394 + $0x38] sm:$0xff] %vm384, 0.0
        %413 = vst.msk [vmem:[%s394 + $0x58] sm:$0xff] %vm384, 0.0
        %414 = vst.msk [vmem:[%s394 + $0x78] sm:$0xff] %vm384, 0.0
        %415 = vst.msk [vmem:[%s394 + $0x98] sm:$0xff] %vm384, 0.0
        %416 = vst.msk [vmem:[%s394 + $0xb8] sm:$0xff] %vm384, 0.0
        %417 = vst.msk [vmem:[%s394 + $0xd8] sm:$0xff] %vm384, 0.0
        %418 = vst.msk [vmem:[%s394 + $0xf8] sm:$0xff] %vm384, 0.0
        %419 = vst.msk [vmem:[%s394 + $0x118] sm:$0xff] %vm384, 0.0
        %420 = vst.msk [vmem:[%s394 + $0x138] sm:$0xff] %vm384, 0.0
        %421 = vst.msk [vmem:[%s394 + $0x158] sm:$0xff] %vm384, 0.0
        %422 = vst.msk [vmem:[%s394 + $0x178] sm:$0xff] %vm384, 0.0
        %423 = vst.msk [vmem:[%s394 + $0x198] sm:$0xff] %vm384, 0.0
        %424 = vst.msk [vmem:[%s394 + $0x1b8] sm:$0xff] %vm384, 0.0
        %425 = vst.msk [vmem:[%s394 + $0x1d8] sm:$0xff] %vm384, 0.0
        %426 = vst.msk [vmem:[%s394 + $0x1f8] sm:$0xff] %vm384, 0.0
        %427 = vst [vmem:[#allocation6] sm:$0xff] 0.0
        %428 = vst [vmem:[#allocation6 + $0x8] sm:$0xff] 0.0
        %429 = vst [vmem:[#allocation6 + $0x10] sm:$0xff] 0.0
        %s430 = scalar_lea.vmem [#allocation6], 216
        %431 = vst [vmem:[%s430] sm:$0xff] 0.0
        %432 = vst [vmem:[%s430 + $0x8] sm:$0xff] 0.0
        %433 = vst [vmem:[%s430 + $0x10] sm:$0xff] 0.0
        %s434 = scalar_lea.vmem [#allocation6], 24
        %435 = vst [vmem:[%s434] sm:$0xff] 0.0
        %436 = vst [vmem:[%s434 + $0x18] sm:$0xff] 0.0
        %437 = vst [vmem:[%s434 + $0x30] sm:$0xff] 0.0
        %438 = vst [vmem:[%s434 + $0x48] sm:$0xff] 0.0
        %439 = vst [vmem:[%s434 + $0x60] sm:$0xff] 0.0
        %440 = vst [vmem:[%s434 + $0x78] sm:$0xff] 0.0
        %441 = vst [vmem:[%s434 + $0x90] sm:$0xff] 0.0
        %442 = vst [vmem:[%s434 + $0xa8] sm:$0xff] 0.0
        %443 = vst [vmem:[%s434 + $0x10] sm:$0xff] 0.0
        %444 = vst [vmem:[%s434 + $0x28] sm:$0xff] 0.0
        %445 = vst [vmem:[%s434 + $0x40] sm:$0xff] 0.0
        %446 = vst [vmem:[%s434 + $0x58] sm:$0xff] 0.0
        %447 = vst [vmem:[%s434 + $0x70] sm:$0xff] 0.0
        %448 = vst [vmem:[%s434 + $0x88] sm:$0xff] 0.0
        %449 = vst [vmem:[%s434 + $0xa0] sm:$0xff] 0.0
        %450 = vst [vmem:[%s434 + $0xb8] sm:$0xff] 0.0
        %v451 = vld [vmem:[%s1] sm:$0xff]
        %v452 = vld [vmem:[%s1 + $0x8] sm:$0x1]
        %v453 = vld [vmem:[%s2] sm:$0x1]
        %v454 = vld [vmem:[%s383] sm:$0xff]
        %v455 = vld [vmem:[%s383 + $0x8] sm:$0xff]
        %v456 = vld [vmem:[%s383 + $0x10] sm:$0xff]
        %v457 = vld [vmem:[%s383 + $0x18] sm:$0xff]
        %v458 = vld [vmem:[%s383 + $0x20] sm:$0xff]
        %v459 = vld [vmem:[%s383 + $0x28] sm:$0xff]
        %v460 = vld [vmem:[%s383 + $0x30] sm:$0xff]
        %v461 = vld [vmem:[%s383 + $0x38] sm:$0xff]
        %v462 = vld [vmem:[%s383 + $0x40] sm:$0xff]
        %v463 = vld [vmem:[%s383 + $0x48] sm:$0xff]
        %v464 = vld [vmem:[%s383 + $0x50] sm:$0xff]
        %v465 = vld [vmem:[%s383 + $0x58] sm:$0xff]
        %v466 = vld [vmem:[%s383 + $0x60] sm:$0xff]
        %v467 = vld [vmem:[%s383 + $0x68] sm:$0xff]
        %v468 = vld [vmem:[%s383 + $0x70] sm:$0xff]
        %v469 = vld [vmem:[%s383 + $0x78] sm:$0xff]
        %v470 = vld [vmem:[%s383 + $0x80] sm:$0xff]
        %v471 = vld [vmem:[%s383 + $0x88] sm:$0xff]
        %v472 = vld [vmem:[%s383 + $0x90] sm:$0xff]
        %v473 = vld [vmem:[%s383 + $0x98] sm:$0xff]
        %v474 = vld [vmem:[%s383 + $0xa0] sm:$0xff]
        %v475 = vld [vmem:[%s383 + $0xa8] sm:$0xff]
        %v476 = vld [vmem:[%s383 + $0xb0] sm:$0xff]
        %v477 = vld [vmem:[%s383 + $0xb8] sm:$0xff]
        %v478 = vld [vmem:[%s383 + $0xc0] sm:$0xff]
        %v479 = vld [vmem:[%s383 + $0xc8] sm:$0xff]
        %v480 = vld [vmem:[%s383 + $0xd0] sm:$0xff]
        %v481 = vld [vmem:[%s383 + $0xd8] sm:$0xff]
        %v482 = vld [vmem:[%s383 + $0xe0] sm:$0xff]
        %v483 = vld [vmem:[%s383 + $0xe8] sm:$0xff]
        %v484 = vld [vmem:[%s383 + $0xf0] sm:$0xff]
        %v485 = vld [vmem:[%s383 + $0xf8] sm:$0xff]
        %v487 = vperm.slane %v453, 0
        %vm489 = vcmask 72704
        %v491 = vsel %vm489, %v454, 0
        %v494 = vsel %vm489, %v455, 0
        %v497 = vsel %vm489, %v456, 0
        %v500 = vsel %vm489, %v457, 0
        %v503 = vsel %vm489, %v458, 0
        %v506 = vsel %vm489, %v459, 0
        %v509 = vsel %vm489, %v460, 0
        %v512 = vsel %vm489, %v461, 0
        %v515 = vsel %vm489, %v462, 0
        %v518 = vsel %vm489, %v463, 0
        %v521 = vsel %vm489, %v464, 0
        %v524 = vsel %vm489, %v465, 0
        %v527 = vsel %vm489, %v466, 0
        %v530 = vsel %vm489, %v467, 0
        %v533 = vsel %vm489, %v468, 0
        %v536 = vsel %vm489, %v469, 0
        %v539 = vsel %vm489, %v470, 0
        %v542 = vsel %vm489, %v471, 0
        %v545 = vsel %vm489, %v472, 0
        %v548 = vsel %vm489, %v473, 0
        %v551 = vsel %vm489, %v474, 0
        %v554 = vsel %vm489, %v475, 0
        %v557 = vsel %vm489, %v476, 0
        %v560 = vsel %vm489, %v477, 0
        %v563 = vsel %vm489, %v478, 0
        %v566 = vsel %vm489, %v479, 0
        %v569 = vsel %vm489, %v480, 0
        %v572 = vsel %vm489, %v481, 0
        %v575 = vsel %vm489, %v482, 0
        %v578 = vsel %vm489, %v483, 0
        %v581 = vsel %vm489, %v484, 0
        %v584 = vsel %vm489, %v485, 0
        %vm586 = vcmask 1040384
        %v588 = vsel %vm586, %v452, 0
        %590 = vmatpush.msra.mxu0 0.0
        %591 = vmatpush.msra.mxu0 0.0
        %592 = vmatpush.msra.mxu0 0.0
        %593 = vmatpush.msra.mxu0 0.0
        %594 = vmatpush.msra.mxu0 0.0
        %595 = vmatpush.msra.mxu0 0.0
        %596 = vmatpush.msra.mxu0 0.0
        %597 = vmatpush.msra.mxu0 0.0
        %598 = vmatpush.msra.mxu0 0.0
        %599 = vmatpush.msra.mxu0 0.0
        %600 = vmatpush.msra.mxu0 0.0
        %601 = vmatpush.msra.mxu0 0.0
        %602 = vmatpush.msra.mxu0 0.0
        %603 = vmatpush.msra.mxu0 0.0
        %604 = vmatpush.msra.mxu0 %v588
        %605 = vmatpush.msra.mxu0 %v451
        %606 = vmatmul.f32.gmra.mxu0 %v491
        %v607 = vpop.f32.mrf.mxu0
        %v608 = vadd.f32 %v487, %v607
        %609 = vmatmul.f32.gmra.mxu0 %v494
        %v610 = vpop.f32.mrf.mxu0
        %v611 = vadd.f32 %v487, %v610
        %612 = vmatmul.f32.gmra.mxu0 %v497
        %v613 = vpop.f32.mrf.mxu0
        %v614 = vadd.f32 %v487, %v613
        %615 = vmatmul.f32.gmra.mxu0 %v500
        %v616 = vpop.f32.mrf.mxu0
        %v617 = vadd.f32 %v487, %v616
        %618 = vmatmul.f32.gmra.mxu0 %v503
        %v619 = vpop.f32.mrf.mxu0
        %v620 = vadd.f32 %v487, %v619
        %621 = vmatmul.f32.gmra.mxu0 %v506
        %v622 = vpop.f32.mrf.mxu0
        %v623 = vadd.f32 %v487, %v622
        %624 = vmatmul.f32.gmra.mxu0 %v509
        %v625 = vpop.f32.mrf.mxu0
        %v626 = vadd.f32 %v487, %v625
        %627 = vmatmul.f32.gmra.mxu0 %v512
        %v628 = vpop.f32.mrf.mxu0
        %v629 = vadd.f32 %v487, %v628
        %630 = vmatmul.f32.gmra.mxu0 %v515
        %v631 = vpop.f32.mrf.mxu0
        %v632 = vadd.f32 %v487, %v631
        %633 = vmatmul.f32.gmra.mxu0 %v518
        %v634 = vpop.f32.mrf.mxu0
        %v635 = vadd.f32 %v487, %v634
        %636 = vmatmul.f32.gmra.mxu0 %v521
        %v637 = vpop.f32.mrf.mxu0
        %v638 = vadd.f32 %v487, %v637
        %639 = vmatmul.f32.gmra.mxu0 %v524
        %v640 = vpop.f32.mrf.mxu0
        %v641 = vadd.f32 %v487, %v640
        %642 = vmatmul.f32.gmra.mxu0 %v527
        %v643 = vpop.f32.mrf.mxu0
        %v644 = vadd.f32 %v487, %v643
        %645 = vmatmul.f32.gmra.mxu0 %v530
        %v646 = vpop.f32.mrf.mxu0
        %v647 = vadd.f32 %v487, %v646
        %648 = vmatmul.f32.gmra.mxu0 %v533
        %v649 = vpop.f32.mrf.mxu0
        %v650 = vadd.f32 %v487, %v649
        %651 = vmatmul.f32.gmra.mxu0 %v536
        %v652 = vpop.f32.mrf.mxu0
        %v653 = vadd.f32 %v487, %v652
        %654 = vmatmul.f32.gmra.mxu0 %v539
        %v655 = vpop.f32.mrf.mxu0
        %v656 = vadd.f32 %v487, %v655
        %657 = vmatmul.f32.gmra.mxu0 %v542
        %v658 = vpop.f32.mrf.mxu0
        %v659 = vadd.f32 %v487, %v658
        %660 = vmatmul.f32.gmra.mxu0 %v545
        %v661 = vpop.f32.mrf.mxu0
        %v662 = vadd.f32 %v487, %v661
        %663 = vmatmul.f32.gmra.mxu0 %v548
        %v664 = vpop.f32.mrf.mxu0
        %v665 = vadd.f32 %v487, %v664
        %666 = vmatmul.f32.gmra.mxu0 %v551
        %v667 = vpop.f32.mrf.mxu0
        %v668 = vadd.f32 %v487, %v667
        %669 = vmatmul.f32.gmra.mxu0 %v554
        %v670 = vpop.f32.mrf.mxu0
        %v671 = vadd.f32 %v487, %v670
        %672 = vmatmul.f32.gmra.mxu0 %v557
        %v673 = vpop.f32.mrf.mxu0
        %v674 = vadd.f32 %v487, %v673
        %675 = vmatmul.f32.gmra.mxu0 %v560
        %v676 = vpop.f32.mrf.mxu0
        %v677 = vadd.f32 %v487, %v676
        %678 = vmatmul.f32.gmra.mxu0 %v563
        %v679 = vpop.f32.mrf.mxu0
        %v680 = vadd.f32 %v487, %v679
        %681 = vmatmul.f32.gmra.mxu0 %v566
        %v682 = vpop.f32.mrf.mxu0
        %v683 = vadd.f32 %v487, %v682
        %684 = vmatmul.f32.gmra.mxu0 %v569
        %v685 = vpop.f32.mrf.mxu0
        %v686 = vadd.f32 %v487, %v685
        %687 = vmatmul.f32.gmra.mxu0 %v572
        %v688 = vpop.f32.mrf.mxu0
        %v689 = vadd.f32 %v487, %v688
        %690 = vmatmul.f32.gmra.mxu0 %v575
        %v691 = vpop.f32.mrf.mxu0
        %v692 = vadd.f32 %v487, %v691
        %693 = vmatmul.f32.gmra.mxu0 %v578
        %v694 = vpop.f32.mrf.mxu0
        %v695 = vadd.f32 %v487, %v694
        %696 = vmatmul.f32.gmra.mxu0 %v581
        %v697 = vpop.f32.mrf.mxu0
        %v698 = vadd.f32 %v487, %v697
        %699 = vmatmul.f32.gmra.mxu0 %v584
        %v700 = vpop.f32.mrf.mxu0
        %v701 = vadd.f32 %v487, %v700
        %702 = vdwg.mxu0
        %v703 = vmax.f32 %v608, 0.0
        %v704 = vmax.f32 %v611, 0.0
        %v705 = vmax.f32 %v614, 0.0
        %v706 = vmax.f32 %v617, 0.0
        %v707 = vmax.f32 %v620, 0.0
        %v708 = vmax.f32 %v623, 0.0
        %v709 = vmax.f32 %v626, 0.0
        %v710 = vmax.f32 %v629, 0.0
        %v711 = vmax.f32 %v632, 0.0
        %v712 = vmax.f32 %v635, 0.0
        %v713 = vmax.f32 %v638, 0.0
        %v714 = vmax.f32 %v641, 0.0
        %v715 = vmax.f32 %v644, 0.0
        %v716 = vmax.f32 %v647, 0.0
        %v717 = vmax.f32 %v650, 0.0
        %v718 = vmax.f32 %v653, 0.0
        %v719 = vmax.f32 %v656, 0.0
        %v720 = vmax.f32 %v659, 0.0
        %v721 = vmax.f32 %v662, 0.0
        %v722 = vmax.f32 %v665, 0.0
        %v723 = vmax.f32 %v668, 0.0
        %v724 = vmax.f32 %v671, 0.0
        %v725 = vmax.f32 %v674, 0.0
        %v726 = vmax.f32 %v677, 0.0
        %v727 = vmax.f32 %v680, 0.0
        %v728 = vmax.f32 %v683, 0.0
        %v729 = vmax.f32 %v686, 0.0
        %v730 = vmax.f32 %v689, 0.0
        %v731 = vmax.f32 %v692, 0.0
        %v732 = vmax.f32 %v695, 0.0
        %v733 = vmax.f32 %v698, 0.0
        %v734 = vmax.f32 %v701, 0.0
        %735 = vst.msk [vmem:[#allocation2] sm:$0xff] %vm384, %v703
        %736 = vst.msk [vmem:[#allocation2 + $0x8] sm:$0xff] %vm384, %v704
        %737 = vst.msk [vmem:[#allocation2 + $0x10] sm:$0xff] %vm384, %v705
        %738 = vst.msk [vmem:[#allocation2 + $0x18] sm:$0xff] %vm384, %v706
        %739 = vst.msk [vmem:[#allocation2 + $0x20] sm:$0xff] %vm384, %v707
        %740 = vst.msk [vmem:[#allocation2 + $0x28] sm:$0xff] %vm384, %v708
        %741 = vst.msk [vmem:[#allocation2 + $0x30] sm:$0xff] %vm384, %v709
        %742 = vst.msk [vmem:[#allocation2 + $0x38] sm:$0xff] %vm384, %v710
        %743 = vst.msk [vmem:[#allocation2 + $0x40] sm:$0xff] %vm384, %v711
        %744 = vst.msk [vmem:[#allocation2 + $0x48] sm:$0xff] %vm384, %v712
        %745 = vst.msk [vmem:[#allocation2 + $0x50] sm:$0xff] %vm384, %v713
        %746 = vst.msk [vmem:[#allocation2 + $0x58] sm:$0xff] %vm384, %v714
        %747 = vst.msk [vmem:[#allocation2 + $0x60] sm:$0xff] %vm384, %v715
        %748 = vst.msk [vmem:[#allocation2 + $0x68] sm:$0xff] %vm384, %v716
        %749 = vst.msk [vmem:[#allocation2 + $0x70] sm:$0xff] %vm384, %v717
        %750 = vst.msk [vmem:[#allocation2 + $0x78] sm:$0xff] %vm384, %v718
        %751 = vst.msk [vmem:[#allocation2 + $0x80] sm:$0xff] %vm384, %v719
        %752 = vst.msk [vmem:[#allocation2 + $0x88] sm:$0xff] %vm384, %v720
        %753 = vst.msk [vmem:[#allocation2 + $0x90] sm:$0xff] %vm384, %v721
        %754 = vst.msk [vmem:[#allocation2 + $0x98] sm:$0xff] %vm384, %v722
        %755 = vst.msk [vmem:[#allocation2 + $0xa0] sm:$0xff] %vm384, %v723
        %756 = vst.msk [vmem:[#allocation2 + $0xa8] sm:$0xff] %vm384, %v724
        %757 = vst.msk [vmem:[#allocation2 + $0xb0] sm:$0xff] %vm384, %v725
        %758 = vst.msk [vmem:[#allocation2 + $0xb8] sm:$0xff] %vm384, %v726
        %759 = vst.msk [vmem:[#allocation2 + $0xc0] sm:$0xff] %vm384, %v727
        %760 = vst.msk [vmem:[#allocation2 + $0xc8] sm:$0xff] %vm384, %v728
        %761 = vst.msk [vmem:[#allocation2 + $0xd0] sm:$0xff] %vm384, %v729
        %762 = vst.msk [vmem:[#allocation2 + $0xd8] sm:$0xff] %vm384, %v730
        %763 = vst.msk [vmem:[#allocation2 + $0xe0] sm:$0xff] %vm384, %v731
        %764 = vst.msk [vmem:[#allocation2 + $0xe8] sm:$0xff] %vm384, %v732
        %765 = vst.msk [vmem:[#allocation2 + $0xf0] sm:$0xff] %vm384, %v733
        %766 = vst.msk [vmem:[#allocation2 + $0xf8] sm:$0xff] %vm384, %v734
        %v767 = vld [vmem:[#allocation2] sm:$0xff]
        %v768 = vld [vmem:[#allocation2 + $0x8] sm:$0xff]
        %v769 = vld [vmem:[#allocation2 + $0x10] sm:$0xff]
        %v770 = vld [vmem:[#allocation2 + $0x18] sm:$0xff]
        %v771 = vld [vmem:[#allocation2 + $0x40] sm:$0xff]
        %v772 = vld [vmem:[#allocation2 + $0x48] sm:$0xff]
        %v773 = vld [vmem:[#allocation2 + $0x50] sm:$0xff]
        %v774 = vld [vmem:[#allocation2 + $0x58] sm:$0xff]
        %v775 = vld [vmem:[#allocation2 + $0x80] sm:$0xff]
        %v776 = vld [vmem:[#allocation2 + $0x88] sm:$0xff]
        %v777 = vld [vmem:[#allocation2 + $0x90] sm:$0xff]
        %v778 = vld [vmem:[#allocation2 + $0x98] sm:$0xff]
        %v779 = vld [vmem:[#allocation2 + $0xc0] sm:$0xff]
        %v780 = vld [vmem:[#allocation2 + $0xc8] sm:$0xff]
        %v781 = vld [vmem:[#allocation2 + $0xd0] sm:$0xff]
        %v782 = vld [vmem:[#allocation2 + $0xd8] sm:$0xff]
        %s783 = scalar_lea.vmem [#allocation2], 32
        %v784 = vld [vmem:[%s783] sm:$0xff]
        %v785 = vld [vmem:[%s783 + $0x8] sm:$0xff]
        %v786 = vld [vmem:[%s783 + $0x10] sm:$0xff]
        %v787 = vld [vmem:[%s783 + $0x18] sm:$0xff]
        %v788 = vld [vmem:[%s783 + $0x40] sm:$0xff]
        %v789 = vld [vmem:[%s783 + $0x48] sm:$0xff]
        %v790 = vld [vmem:[%s783 + $0x50] sm:$0xff]
        %v791 = vld [vmem:[%s783 + $0x58] sm:$0xff]
        %v792 = vld [vmem:[%s783 + $0x80] sm:$0xff]
        %v793 = vld [vmem:[%s783 + $0x88] sm:$0xff]
        %v794 = vld [vmem:[%s783 + $0x90] sm:$0xff]
        %v795 = vld [vmem:[%s783 + $0x98] sm:$0xff]
        %v796 = vld [vmem:[%s783 + $0xc0] sm:$0xff]
        %v797 = vld [vmem:[%s783 + $0xc8] sm:$0xff]
        %v798 = vld [vmem:[%s783 + $0xd0] sm:$0xff]
        %v799 = vld [vmem:[%s783 + $0xd8] sm:$0xff]
        %v800 = vmax.f32 %v767, %v784
        %v801 = vmax.f32 %v768, %v785
        %v802 = vmax.f32 %v769, %v786
        %v803 = vmax.f32 %v770, %v787
        %v804 = vmax.f32 %v771, %v788
        %v805 = vmax.f32 %v772, %v789
        %v806 = vmax.f32 %v773, %v790
        %v807 = vmax.f32 %v774, %v791
        %v808 = vmax.f32 %v775, %v792
        %v809 = vmax.f32 %v776, %v793
        %v810 = vmax.f32 %v777, %v794
        %v811 = vmax.f32 %v778, %v795
        %v812 = vmax.f32 %v779, %v796
        %v813 = vmax.f32 %v780, %v797
        %v814 = vmax.f32 %v781, %v798
        %v815 = vmax.f32 %v782, %v799
        %v832 = vrot.slane %v800, 2
        %v833 = vrot.slane %v800, 4
        %v834 = vrot.slane %v800, 6
        %v835 = vrot.slane %v801, 2
        %v836 = vrot.slane %v801, 4
        %v837 = vrot.slane %v801, 6
        %v838 = vrot.slane %v802, 2
        %v839 = vrot.slane %v802, 4
        %v840 = vrot.slane %v802, 6
        %v841 = vrot.slane %v803, 2
        %v842 = vrot.slane %v803, 4
        %v843 = vrot.slane %v803, 6
        %v844 = vrot.slane %v804, 2
        %v845 = vrot.slane %v804, 4
        %v846 = vrot.slane %v804, 6
        %v847 = vrot.slane %v805, 2
        %v848 = vrot.slane %v805, 4
        %v849 = vrot.slane %v805, 6
        %v850 = vrot.slane %v806, 2
        %v851 = vrot.slane %v806, 4
        %v852 = vrot.slane %v806, 6
        %v853 = vrot.slane %v807, 2
        %v854 = vrot.slane %v807, 4
        %v855 = vrot.slane %v807, 6
        %v856 = vrot.slane %v808, 2
        %v857 = vrot.slane %v808, 4
        %v858 = vrot.slane %v808, 6
        %v859 = vrot.slane %v809, 2
        %v860 = vrot.slane %v809, 4
        %v861 = vrot.slane %v809, 6
        %v862 = vrot.slane %v810, 2
        %v863 = vrot.slane %v810, 4
        %v864 = vrot.slane %v810, 6
        %v865 = vrot.slane %v811, 2
        %v866 = vrot.slane %v811, 4
        %v867 = vrot.slane %v811, 6
        %v868 = vrot.slane %v812, 2
        %v869 = vrot.slane %v812, 4
        %v870 = vrot.slane %v812, 6
        %v871 = vrot.slane %v813, 2
        %v872 = vrot.slane %v813, 4
        %v873 = vrot.slane %v813, 6
        %v874 = vrot.slane %v814, 2
        %v875 = vrot.slane %v814, 4
        %v876 = vrot.slane %v814, 6
        %v877 = vrot.slane %v815, 2
        %v878 = vrot.slane %v815, 4
        %v879 = vrot.slane %v815, 6
        %vm928 = vcmask 517120
        %v929 = vsel %vm928, %v800, -inf
        %v930 = vrot.slane %v929, 4
        %v931 = vmax.f32 %v929, %v930
        %v932 = vrot.slane %v931, 2
        %v933 = vmax.f32 %v931, %v932
        %v934 = vrot.slane %v933, 1
        %v935 = vmax.f32 %v933, %v934
        %v936 = vsel %vm928, %v832, -inf
        %v937 = vrot.slane %v936, 4
        %v938 = vmax.f32 %v936, %v937
        %v939 = vrot.slane %v938, 2
        %v940 = vmax.f32 %v938, %v939
        %v941 = vrot.slane %v940, 1
        %v942 = vmax.f32 %v940, %v941
        %v943 = vsel %vm928, %v833, -inf
        %v944 = vrot.slane %v943, 4
        %v945 = vmax.f32 %v943, %v944
        %v946 = vrot.slane %v945, 2
        %v947 = vmax.f32 %v945, %v946
        %v948 = vrot.slane %v947, 1
        %v949 = vmax.f32 %v947, %v948
        %v950 = vsel %vm928, %v834, -inf
        %v951 = vrot.slane %v950, 4
        %v952 = vmax.f32 %v950, %v951
        %v953 = vrot.slane %v952, 2
        %v954 = vmax.f32 %v952, %v953
        %v955 = vrot.slane %v954, 1
        %v956 = vmax.f32 %v954, %v955
        %v957 = vsel %vm928, %v801, -inf
        %v958 = vrot.slane %v957, 4
        %v959 = vmax.f32 %v957, %v958
        %v960 = vrot.slane %v959, 2
        %v961 = vmax.f32 %v959, %v960
        %v962 = vrot.slane %v961, 1
        %v963 = vmax.f32 %v961, %v962
        %v964 = vsel %vm928, %v835, -inf
        %v965 = vrot.slane %v964, 4
        %v966 = vmax.f32 %v964, %v965
        %v967 = vrot.slane %v966, 2
        %v968 = vmax.f32 %v966, %v967
        %v969 = vrot.slane %v968, 1
        %v970 = vmax.f32 %v968, %v969
        %v971 = vsel %vm928, %v836, -inf
        %v972 = vrot.slane %v971, 4
        %v973 = vmax.f32 %v971, %v972
        %v974 = vrot.slane %v973, 2
        %v975 = vmax.f32 %v973, %v974
        %v976 = vrot.slane %v975, 1
        %v977 = vmax.f32 %v975, %v976
        %v978 = vsel %vm928, %v837, -inf
        %v979 = vrot.slane %v978, 4
        %v980 = vmax.f32 %v978, %v979
        %v981 = vrot.slane %v980, 2
        %v982 = vmax.f32 %v980, %v981
        %v983 = vrot.slane %v982, 1
        %v984 = vmax.f32 %v982, %v983
        %v985 = vsel %vm928, %v802, -inf
        %v986 = vrot.slane %v985, 4
        %v987 = vmax.f32 %v985, %v986
        %v988 = vrot.slane %v987, 2
        %v989 = vmax.f32 %v987, %v988
        %v990 = vrot.slane %v989, 1
        %v991 = vmax.f32 %v989, %v990
        %v992 = vsel %vm928, %v838, -inf
        %v993 = vrot.slane %v992, 4
        %v994 = vmax.f32 %v992, %v993
        %v995 = vrot.slane %v994, 2
        %v996 = vmax.f32 %v994, %v995
        %v997 = vrot.slane %v996, 1
        %v998 = vmax.f32 %v996, %v997
        %v999 = vsel %vm928, %v839, -inf
        %v1000 = vrot.slane %v999, 4
        %v1001 = vmax.f32 %v999, %v1000
        %v1002 = vrot.slane %v1001, 2
        %v1003 = vmax.f32 %v1001, %v1002
        %v1004 = vrot.slane %v1003, 1
        %v1005 = vmax.f32 %v1003, %v1004
        %v1006 = vsel %vm928, %v840, -inf
        %v1007 = vrot.slane %v1006, 4
        %v1008 = vmax.f32 %v1006, %v1007
        %v1009 = vrot.slane %v1008, 2
        %v1010 = vmax.f32 %v1008, %v1009
        %v1011 = vrot.slane %v1010, 1
        %v1012 = vmax.f32 %v1010, %v1011
        %v1013 = vsel %vm928, %v803, -inf
        %v1014 = vrot.slane %v1013, 4
        %v1015 = vmax.f32 %v1013, %v1014
        %v1016 = vrot.slane %v1015, 2
        %v1017 = vmax.f32 %v1015, %v1016
        %v1018 = vrot.slane %v1017, 1
        %v1019 = vmax.f32 %v1017, %v1018
        %v1020 = vsel %vm928, %v841, -inf
        %v1021 = vrot.slane %v1020, 4
        %v1022 = vmax.f32 %v1020, %v1021
        %v1023 = vrot.slane %v1022, 2
        %v1024 = vmax.f32 %v1022, %v1023
        %v1025 = vrot.slane %v1024, 1
        %v1026 = vmax.f32 %v1024, %v1025
        %v1027 = vsel %vm928, %v842, -inf
        %v1028 = vrot.slane %v1027, 4
        %v1029 = vmax.f32 %v1027, %v1028
        %v1030 = vrot.slane %v1029, 2
        %v1031 = vmax.f32 %v1029, %v1030
        %v1032 = vrot.slane %v1031, 1
        %v1033 = vmax.f32 %v1031, %v1032
        %v1034 = vsel %vm928, %v843, -inf
        %v1035 = vrot.slane %v1034, 4
        %v1036 = vmax.f32 %v1034, %v1035
        %v1037 = vrot.slane %v1036, 2
        %v1038 = vmax.f32 %v1036, %v1037
        %v1039 = vrot.slane %v1038, 1
        %v1040 = vmax.f32 %v1038, %v1039
        %v1041 = vsel %vm928, %v804, -inf
        %v1042 = vrot.slane %v1041, 4
        %v1043 = vmax.f32 %v1041, %v1042
        %v1044 = vrot.slane %v1043, 2
        %v1045 = vmax.f32 %v1043, %v1044
        %v1046 = vrot.slane %v1045, 1
        %v1047 = vmax.f32 %v1045, %v1046
        %v1048 = vsel %vm928, %v844, -inf
        %v1049 = vrot.slane %v1048, 4
        %v1050 = vmax.f32 %v1048, %v1049
        %v1051 = vrot.slane %v1050, 2
        %v1052 = vmax.f32 %v1050, %v1051
        %v1053 = vrot.slane %v1052, 1
        %v1054 = vmax.f32 %v1052, %v1053
        %v1055 = vsel %vm928, %v845, -inf
        %v1056 = vrot.slane %v1055, 4
        %v1057 = vmax.f32 %v1055, %v1056
        %v1058 = vrot.slane %v1057, 2
        %v1059 = vmax.f32 %v1057, %v1058
        %v1060 = vrot.slane %v1059, 1
        %v1061 = vmax.f32 %v1059, %v1060
        %v1062 = vsel %vm928, %v846, -inf
        %v1063 = vrot.slane %v1062, 4
        %v1064 = vmax.f32 %v1062, %v1063
        %v1065 = vrot.slane %v1064, 2
        %v1066 = vmax.f32 %v1064, %v1065
        %v1067 = vrot.slane %v1066, 1
        %v1068 = vmax.f32 %v1066, %v1067
        %v1069 = vsel %vm928, %v805, -inf
        %v1070 = vrot.slane %v1069, 4
        %v1071 = vmax.f32 %v1069, %v1070
        %v1072 = vrot.slane %v1071, 2
        %v1073 = vmax.f32 %v1071, %v1072
        %v1074 = vrot.slane %v1073, 1
        %v1075 = vmax.f32 %v1073, %v1074
        %v1076 = vsel %vm928, %v847, -inf
        %v1077 = vrot.slane %v1076, 4
        %v1078 = vmax.f32 %v1076, %v1077
        %v1079 = vrot.slane %v1078, 2
        %v1080 = vmax.f32 %v1078, %v1079
        %v1081 = vrot.slane %v1080, 1
        %v1082 = vmax.f32 %v1080, %v1081
        %v1083 = vsel %vm928, %v848, -inf
        %v1084 = vrot.slane %v1083, 4
        %v1085 = vmax.f32 %v1083, %v1084
        %v1086 = vrot.slane %v1085, 2
        %v1087 = vmax.f32 %v1085, %v1086
        %v1088 = vrot.slane %v1087, 1
        %v1089 = vmax.f32 %v1087, %v1088
        %v1090 = vsel %vm928, %v849, -inf
        %v1091 = vrot.slane %v1090, 4
        %v1092 = vmax.f32 %v1090, %v1091
        %v1093 = vrot.slane %v1092, 2
        %v1094 = vmax.f32 %v1092, %v1093
        %v1095 = vrot.slane %v1094, 1
        %v1096 = vmax.f32 %v1094, %v1095
        %v1097 = vsel %vm928, %v806, -inf
        %v1098 = vrot.slane %v1097, 4
        %v1099 = vmax.f32 %v1097, %v1098
        %v1100 = vrot.slane %v1099, 2
        %v1101 = vmax.f32 %v1099, %v1100
        %v1102 = vrot.slane %v1101, 1
        %v1103 = vmax.f32 %v1101, %v1102
        %v1104 = vsel %vm928, %v850, -inf
        %v1105 = vrot.slane %v1104, 4
        %v1106 = vmax.f32 %v1104, %v1105
        %v1107 = vrot.slane %v1106, 2
        %v1108 = vmax.f32 %v1106, %v1107
        %v1109 = vrot.slane %v1108, 1
        %v1110 = vmax.f32 %v1108, %v1109
        %v1111 = vsel %vm928, %v851, -inf
        %v1112 = vrot.slane %v1111, 4
        %v1113 = vmax.f32 %v1111, %v1112
        %v1114 = vrot.slane %v1113, 2
        %v1115 = vmax.f32 %v1113, %v1114
        %v1116 = vrot.slane %v1115, 1
        %v1117 = vmax.f32 %v1115, %v1116
        %v1118 = vsel %vm928, %v852, -inf
        %v1119 = vrot.slane %v1118, 4
        %v1120 = vmax.f32 %v1118, %v1119
        %v1121 = vrot.slane %v1120, 2
        %v1122 = vmax.f32 %v1120, %v1121
        %v1123 = vrot.slane %v1122, 1
        %v1124 = vmax.f32 %v1122, %v1123
        %v1125 = vsel %vm928, %v807, -inf
        %v1126 = vrot.slane %v1125, 4
        %v1127 = vmax.f32 %v1125, %v1126
        %v1128 = vrot.slane %v1127, 2
        %v1129 = vmax.f32 %v1127, %v1128
        %v1130 = vrot.slane %v1129, 1
        %v1131 = vmax.f32 %v1129, %v1130
        %v1132 = vsel %vm928, %v853, -inf
        %v1133 = vrot.slane %v1132, 4
        %v1134 = vmax.f32 %v1132, %v1133
        %v1135 = vrot.slane %v1134, 2
        %v1136 = vmax.f32 %v1134, %v1135
        %v1137 = vrot.slane %v1136, 1
        %v1138 = vmax.f32 %v1136, %v1137
        %v1139 = vsel %vm928, %v854, -inf
        %v1140 = vrot.slane %v1139, 4
        %v1141 = vmax.f32 %v1139, %v1140
        %v1142 = vrot.slane %v1141, 2
        %v1143 = vmax.f32 %v1141, %v1142
        %v1144 = vrot.slane %v1143, 1
        %v1145 = vmax.f32 %v1143, %v1144
        %v1146 = vsel %vm928, %v855, -inf
        %v1147 = vrot.slane %v1146, 4
        %v1148 = vmax.f32 %v1146, %v1147
        %v1149 = vrot.slane %v1148, 2
        %v1150 = vmax.f32 %v1148, %v1149
        %v1151 = vrot.slane %v1150, 1
        %v1152 = vmax.f32 %v1150, %v1151
        %v1153 = vsel %vm928, %v808, -inf
        %v1154 = vrot.slane %v1153, 4
        %v1155 = vmax.f32 %v1153, %v1154
        %v1156 = vrot.slane %v1155, 2
        %v1157 = vmax.f32 %v1155, %v1156
        %v1158 = vrot.slane %v1157, 1
        %v1159 = vmax.f32 %v1157, %v1158
        %v1160 = vsel %vm928, %v856, -inf
        %v1161 = vrot.slane %v1160, 4
        %v1162 = vmax.f32 %v1160, %v1161
        %v1163 = vrot.slane %v1162, 2
        %v1164 = vmax.f32 %v1162, %v1163
        %v1165 = vrot.slane %v1164, 1
        %v1166 = vmax.f32 %v1164, %v1165
        %v1167 = vsel %vm928, %v857, -inf
        %v1168 = vrot.slane %v1167, 4
        %v1169 = vmax.f32 %v1167, %v1168
        %v1170 = vrot.slane %v1169, 2
        %v1171 = vmax.f32 %v1169, %v1170
        %v1172 = vrot.slane %v1171, 1
        %v1173 = vmax.f32 %v1171, %v1172
        %v1174 = vsel %vm928, %v858, -inf
        %v1175 = vrot.slane %v1174, 4
        %v1176 = vmax.f32 %v1174, %v1175
        %v1177 = vrot.slane %v1176, 2
        %v1178 = vmax.f32 %v1176, %v1177
        %v1179 = vrot.slane %v1178, 1
        %v1180 = vmax.f32 %v1178, %v1179
        %v1181 = vsel %vm928, %v809, -inf
        %v1182 = vrot.slane %v1181, 4
        %v1183 = vmax.f32 %v1181, %v1182
        %v1184 = vrot.slane %v1183, 2
        %v1185 = vmax.f32 %v1183, %v1184
        %v1186 = vrot.slane %v1185, 1
        %v1187 = vmax.f32 %v1185, %v1186
        %v1188 = vsel %vm928, %v859, -inf
        %v1189 = vrot.slane %v1188, 4
        %v1190 = vmax.f32 %v1188, %v1189
        %v1191 = vrot.slane %v1190, 2
        %v1192 = vmax.f32 %v1190, %v1191
        %v1193 = vrot.slane %v1192, 1
        %v1194 = vmax.f32 %v1192, %v1193
        %v1195 = vsel %vm928, %v860, -inf
        %v1196 = vrot.slane %v1195, 4
        %v1197 = vmax.f32 %v1195, %v1196
        %v1198 = vrot.slane %v1197, 2
        %v1199 = vmax.f32 %v1197, %v1198
        %v1200 = vrot.slane %v1199, 1
        %v1201 = vmax.f32 %v1199, %v1200
        %v1202 = vsel %vm928, %v861, -inf
        %v1203 = vrot.slane %v1202, 4
        %v1204 = vmax.f32 %v1202, %v1203
        %v1205 = vrot.slane %v1204, 2
        %v1206 = vmax.f32 %v1204, %v1205
        %v1207 = vrot.slane %v1206, 1
        %v1208 = vmax.f32 %v1206, %v1207
        %v1209 = vsel %vm928, %v810, -inf
        %v1210 = vrot.slane %v1209, 4
        %v1211 = vmax.f32 %v1209, %v1210
        %v1212 = vrot.slane %v1211, 2
        %v1213 = vmax.f32 %v1211, %v1212
        %v1214 = vrot.slane %v1213, 1
        %v1215 = vmax.f32 %v1213, %v1214
        %v1216 = vsel %vm928, %v862, -inf
        %v1217 = vrot.slane %v1216, 4
        %v1218 = vmax.f32 %v1216, %v1217
        %v1219 = vrot.slane %v1218, 2
        %v1220 = vmax.f32 %v1218, %v1219
        %v1221 = vrot.slane %v1220, 1
        %v1222 = vmax.f32 %v1220, %v1221
        %v1223 = vsel %vm928, %v863, -inf
        %v1224 = vrot.slane %v1223, 4
        %v1225 = vmax.f32 %v1223, %v1224
        %v1226 = vrot.slane %v1225, 2
        %v1227 = vmax.f32 %v1225, %v1226
        %v1228 = vrot.slane %v1227, 1
        %v1229 = vmax.f32 %v1227, %v1228
        %v1230 = vsel %vm928, %v864, -inf
        %v1231 = vrot.slane %v1230, 4
        %v1232 = vmax.f32 %v1230, %v1231
        %v1233 = vrot.slane %v1232, 2
        %v1234 = vmax.f32 %v1232, %v1233
        %v1235 = vrot.slane %v1234, 1
        %v1236 = vmax.f32 %v1234, %v1235
        %v1237 = vsel %vm928, %v811, -inf
        %v1238 = vrot.slane %v1237, 4
        %v1239 = vmax.f32 %v1237, %v1238
        %v1240 = vrot.slane %v1239, 2
        %v1241 = vmax.f32 %v1239, %v1240
        %v1242 = vrot.slane %v1241, 1
        %v1243 = vmax.f32 %v1241, %v1242
        %v1244 = vsel %vm928, %v865, -inf
        %v1245 = vrot.slane %v1244, 4
        %v1246 = vmax.f32 %v1244, %v1245
        %v1247 = vrot.slane %v1246, 2
        %v1248 = vmax.f32 %v1246, %v1247
        %v1249 = vrot.slane %v1248, 1
        %v1250 = vmax.f32 %v1248, %v1249
        %v1251 = vsel %vm928, %v866, -inf
        %v1252 = vrot.slane %v1251, 4
        %v1253 = vmax.f32 %v1251, %v1252
        %v1254 = vrot.slane %v1253, 2
        %v1255 = vmax.f32 %v1253, %v1254
        %v1256 = vrot.slane %v1255, 1
        %v1257 = vmax.f32 %v1255, %v1256
        %v1258 = vsel %vm928, %v867, -inf
        %v1259 = vrot.slane %v1258, 4
        %v1260 = vmax.f32 %v1258, %v1259
        %v1261 = vrot.slane %v1260, 2
        %v1262 = vmax.f32 %v1260, %v1261
        %v1263 = vrot.slane %v1262, 1
        %v1264 = vmax.f32 %v1262, %v1263
        %v1265 = vsel %vm928, %v812, -inf
        %v1266 = vrot.slane %v1265, 4
        %v1267 = vmax.f32 %v1265, %v1266
        %v1268 = vrot.slane %v1267, 2
        %v1269 = vmax.f32 %v1267, %v1268
        %v1270 = vrot.slane %v1269, 1
        %v1271 = vmax.f32 %v1269, %v1270
        %v1272 = vsel %vm928, %v868, -inf
        %v1273 = vrot.slane %v1272, 4
        %v1274 = vmax.f32 %v1272, %v1273
        %v1275 = vrot.slane %v1274, 2
        %v1276 = vmax.f32 %v1274, %v1275
        %v1277 = vrot.slane %v1276, 1
        %v1278 = vmax.f32 %v1276, %v1277
        %v1279 = vsel %vm928, %v869, -inf
        %v1280 = vrot.slane %v1279, 4
        %v1281 = vmax.f32 %v1279, %v1280
        %v1282 = vrot.slane %v1281, 2
        %v1283 = vmax.f32 %v1281, %v1282
        %v1284 = vrot.slane %v1283, 1
        %v1285 = vmax.f32 %v1283, %v1284
        %v1286 = vsel %vm928, %v870, -inf
        %v1287 = vrot.slane %v1286, 4
        %v1288 = vmax.f32 %v1286, %v1287
        %v1289 = vrot.slane %v1288, 2
        %v1290 = vmax.f32 %v1288, %v1289
        %v1291 = vrot.slane %v1290, 1
        %v1292 = vmax.f32 %v1290, %v1291
        %v1293 = vsel %vm928, %v813, -inf
        %v1294 = vrot.slane %v1293, 4
        %v1295 = vmax.f32 %v1293, %v1294
        %v1296 = vrot.slane %v1295, 2
        %v1297 = vmax.f32 %v1295, %v1296
        %v1298 = vrot.slane %v1297, 1
        %v1299 = vmax.f32 %v1297, %v1298
        %v1300 = vsel %vm928, %v871, -inf
        %v1301 = vrot.slane %v1300, 4
        %v1302 = vmax.f32 %v1300, %v1301
        %v1303 = vrot.slane %v1302, 2
        %v1304 = vmax.f32 %v1302, %v1303
        %v1305 = vrot.slane %v1304, 1
        %v1306 = vmax.f32 %v1304, %v1305
        %v1307 = vsel %vm928, %v872, -inf
        %v1308 = vrot.slane %v1307, 4
        %v1309 = vmax.f32 %v1307, %v1308
        %v1310 = vrot.slane %v1309, 2
        %v1311 = vmax.f32 %v1309, %v1310
        %v1312 = vrot.slane %v1311, 1
        %v1313 = vmax.f32 %v1311, %v1312
        %v1314 = vsel %vm928, %v873, -inf
        %v1315 = vrot.slane %v1314, 4
        %v1316 = vmax.f32 %v1314, %v1315
        %v1317 = vrot.slane %v1316, 2
        %v1318 = vmax.f32 %v1316, %v1317
        %v1319 = vrot.slane %v1318, 1
        %v1320 = vmax.f32 %v1318, %v1319
        %v1321 = vsel %vm928, %v814, -inf
        %v1322 = vrot.slane %v1321, 4
        %v1323 = vmax.f32 %v1321, %v1322
        %v1324 = vrot.slane %v1323, 2
        %v1325 = vmax.f32 %v1323, %v1324
        %v1326 = vrot.slane %v1325, 1
        %v1327 = vmax.f32 %v1325, %v1326
        %v1328 = vsel %vm928, %v874, -inf
        %v1329 = vrot.slane %v1328, 4
        %v1330 = vmax.f32 %v1328, %v1329
        %v1331 = vrot.slane %v1330, 2
        %v1332 = vmax.f32 %v1330, %v1331
        %v1333 = vrot.slane %v1332, 1
        %v1334 = vmax.f32 %v1332, %v1333
        %v1335 = vsel %vm928, %v875, -inf
        %v1336 = vrot.slane %v1335, 4
        %v1337 = vmax.f32 %v1335, %v1336
        %v1338 = vrot.slane %v1337, 2
        %v1339 = vmax.f32 %v1337, %v1338
        %v1340 = vrot.slane %v1339, 1
        %v1341 = vmax.f32 %v1339, %v1340
        %v1342 = vsel %vm928, %v876, -inf
        %v1343 = vrot.slane %v1342, 4
        %v1344 = vmax.f32 %v1342, %v1343
        %v1345 = vrot.slane %v1344, 2
        %v1346 = vmax.f32 %v1344, %v1345
        %v1347 = vrot.slane %v1346, 1
        %v1348 = vmax.f32 %v1346, %v1347
        %v1349 = vsel %vm928, %v815, -inf
        %v1350 = vrot.slane %v1349, 4
        %v1351 = vmax.f32 %v1349, %v1350
        %v1352 = vrot.slane %v1351, 2
        %v1353 = vmax.f32 %v1351, %v1352
        %v1354 = vrot.slane %v1353, 1
        %v1355 = vmax.f32 %v1353, %v1354
        %v1356 = vsel %vm928, %v877, -inf
        %v1357 = vrot.slane %v1356, 4
        %v1358 = vmax.f32 %v1356, %v1357
        %v1359 = vrot.slane %v1358, 2
        %v1360 = vmax.f32 %v1358, %v1359
        %v1361 = vrot.slane %v1360, 1
        %v1362 = vmax.f32 %v1360, %v1361
        %v1363 = vsel %vm928, %v878, -inf
        %v1364 = vrot.slane %v1363, 4
        %v1365 = vmax.f32 %v1363, %v1364
        %v1366 = vrot.slane %v1365, 2
        %v1367 = vmax.f32 %v1365, %v1366
        %v1368 = vrot.slane %v1367, 1
        %v1369 = vmax.f32 %v1367, %v1368
        %v1370 = vsel %vm928, %v879, -inf
        %v1371 = vrot.slane %v1370, 4
        %v1372 = vmax.f32 %v1370, %v1371
        %v1373 = vrot.slane %v1372, 2
        %v1374 = vmax.f32 %v1372, %v1373
        %v1375 = vrot.slane %v1374, 1
        %v1376 = vmax.f32 %v1374, %v1375
        %vm1441 = vcmask 1041409
        %v1442 = vsel %vm1441, %v942, %v935
        %vm1443 = vcmask 1042434
        %v1444 = vsel %vm1443, %v949, %v1442
        %vm1445 = vcmask 1043459
        %v1446 = vsel %vm1445, %v956, %v1444
        %vm1447 = vcmask 1044484
        %v1448 = vsel %vm1447, %v963, %v1446
        %vm1449 = vcmask 1045509
        %v1450 = vsel %vm1449, %v970, %v1448
        %vm1451 = vcmask 1046534
        %v1452 = vsel %vm1451, %v977, %v1450
        %vm1453 = vcmask 1047559
        %v1454 = vsel %vm1453, %v984, %v1452
        %v1455 = vsel %vm1441, %v998, %v991
        %v1456 = vsel %vm1443, %v1005, %v1455
        %v1457 = vsel %vm1445, %v1012, %v1456
        %v1458 = vsel %vm1447, %v1019, %v1457
        %v1459 = vsel %vm1449, %v1026, %v1458
        %v1460 = vsel %vm1451, %v1033, %v1459
        %v1461 = vsel %vm1453, %v1040, %v1460
        %v1462 = vsel %vm1441, %v1054, %v1047
        %v1463 = vsel %vm1443, %v1061, %v1462
        %v1464 = vsel %vm1445, %v1068, %v1463
        %v1465 = vsel %vm1447, %v1075, %v1464
        %v1466 = vsel %vm1449, %v1082, %v1465
        %v1467 = vsel %vm1451, %v1089, %v1466
        %v1468 = vsel %vm1453, %v1096, %v1467
        %v1469 = vsel %vm1441, %v1110, %v1103
        %v1470 = vsel %vm1443, %v1117, %v1469
        %v1471 = vsel %vm1445, %v1124, %v1470
        %v1472 = vsel %vm1447, %v1131, %v1471
        %v1473 = vsel %vm1449, %v1138, %v1472
        %v1474 = vsel %vm1451, %v1145, %v1473
        %v1475 = vsel %vm1453, %v1152, %v1474
        %v1476 = vsel %vm1441, %v1166, %v1159
        %v1477 = vsel %vm1443, %v1173, %v1476
        %v1478 = vsel %vm1445, %v1180, %v1477
        %v1479 = vsel %vm1447, %v1187, %v1478
        %v1480 = vsel %vm1449, %v1194, %v1479
        %v1481 = vsel %vm1451, %v1201, %v1480
        %v1482 = vsel %vm1453, %v1208, %v1481
        %v1483 = vsel %vm1441, %v1222, %v1215
        %v1484 = vsel %vm1443, %v1229, %v1483
        %v1485 = vsel %vm1445, %v1236, %v1484
        %v1486 = vsel %vm1447, %v1243, %v1485
        %v1487 = vsel %vm1449, %v1250, %v1486
        %v1488 = vsel %vm1451, %v1257, %v1487
        %v1489 = vsel %vm1453, %v1264, %v1488
        %v1490 = vsel %vm1441, %v1278, %v1271
        %v1491 = vsel %vm1443, %v1285, %v1490
        %v1492 = vsel %vm1445, %v1292, %v1491
        %v1493 = vsel %vm1447, %v1299, %v1492
        %v1494 = vsel %vm1449, %v1306, %v1493
        %v1495 = vsel %vm1451, %v1313, %v1494
        %v1496 = vsel %vm1453, %v1320, %v1495
        %v1497 = vsel %vm1441, %v1334, %v1327
        %v1498 = vsel %vm1443, %v1341, %v1497
        %v1499 = vsel %vm1445, %v1348, %v1498
        %v1500 = vsel %vm1447, %v1355, %v1499
        %v1501 = vsel %vm1449, %v1362, %v1500
        %v1502 = vsel %vm1451, %v1369, %v1501
        %v1503 = vsel %vm1453, %v1376, %v1502
        %1512 = vst.msk [vmem:[%s394 + $0x8] sm:$0xff] %vm384, %v1454
        %1513 = vst.msk [vmem:[%s394 + $0x10] sm:$0xff] %vm384, %v1461
        %1514 = vst.msk [vmem:[%s394 + $0x28] sm:$0xff] %vm384, %v1468
        %1515 = vst.msk [vmem:[%s394 + $0x30] sm:$0xff] %vm384, %v1475
        %1516 = vst.msk [vmem:[%s394 + $0x48] sm:$0xff] %vm384, %v1482
        %1517 = vst.msk [vmem:[%s394 + $0x50] sm:$0xff] %vm384, %v1489
        %1518 = vst.msk [vmem:[%s394 + $0x68] sm:$0xff] %vm384, %v1496
        %1519 = vst.msk [vmem:[%s394 + $0x70] sm:$0xff] %vm384, %v1503
        %v1520 = vld [vmem:[%s383 + $0x100] sm:$0xff]
        %v1521 = vld [vmem:[%s383 + $0x108] sm:$0xff]
        %v1522 = vld [vmem:[%s383 + $0x110] sm:$0xff]
        %v1523 = vld [vmem:[%s383 + $0x118] sm:$0xff]
        %v1524 = vld [vmem:[%s383 + $0x120] sm:$0xff]
        %v1525 = vld [vmem:[%s383 + $0x128] sm:$0xff]
        %v1526 = vld [vmem:[%s383 + $0x130] sm:$0xff]
        %v1527 = vld [vmem:[%s383 + $0x138] sm:$0xff]
        %v1528 = vld [vmem:[%s383 + $0x140] sm:$0xff]
        %v1529 = vld [vmem:[%s383 + $0x148] sm:$0xff]
        %v1530 = vld [vmem:[%s383 + $0x150] sm:$0xff]
        %v1531 = vld [vmem:[%s383 + $0x158] sm:$0xff]
        %v1532 = vld [vmem:[%s383 + $0x160] sm:$0xff]
        %v1533 = vld [vmem:[%s383 + $0x168] sm:$0xff]
        %v1534 = vld [vmem:[%s383 + $0x170] sm:$0xff]
        %v1535 = vld [vmem:[%s383 + $0x178] sm:$0xff]
        %v1536 = vld [vmem:[%s383 + $0x180] sm:$0xff]
        %v1537 = vld [vmem:[%s383 + $0x188] sm:$0xff]
        %v1538 = vld [vmem:[%s383 + $0x190] sm:$0xff]
        %v1539 = vld [vmem:[%s383 + $0x198] sm:$0xff]
        %v1540 = vld [vmem:[%s383 + $0x1a0] sm:$0xff]
        %v1541 = vld [vmem:[%s383 + $0x1a8] sm:$0xff]
        %v1542 = vld [vmem:[%s383 + $0x1b0] sm:$0xff]
        %v1543 = vld [vmem:[%s383 + $0x1b8] sm:$0xff]
        %v1544 = vld [vmem:[%s383 + $0x1c0] sm:$0xff]
        %v1545 = vld [vmem:[%s383 + $0x1c8] sm:$0xff]
        %v1546 = vld [vmem:[%s383 + $0x1d0] sm:$0xff]
        %v1547 = vld [vmem:[%s383 + $0x1d8] sm:$0xff]
        %v1548 = vld [vmem:[%s383 + $0x1e0] sm:$0xff]
        %v1549 = vld [vmem:[%s383 + $0x1e8] sm:$0xff]
        %v1550 = vld [vmem:[%s383 + $0x1f0] sm:$0xff]
        %v1551 = vld [vmem:[%s383 + $0x1f8] sm:$0xff]
        %v1553 = vsel %vm489, %v1520, 0
        %v1556 = vsel %vm489, %v1521, 0
        %v1559 = vsel %vm489, %v1522, 0
        %v1562 = vsel %vm489, %v1523, 0
        %v1565 = vsel %vm489, %v1524, 0
        %v1568 = vsel %vm489, %v1525, 0
        %v1571 = vsel %vm489, %v1526, 0
        %v1574 = vsel %vm489, %v1527, 0
        %v1577 = vsel %vm489, %v1528, 0
        %v1580 = vsel %vm489, %v1529, 0
        %v1583 = vsel %vm489, %v1530, 0
        %v1586 = vsel %vm489, %v1531, 0
        %v1589 = vsel %vm489, %v1532, 0
        %v1592 = vsel %vm489, %v1533, 0
        %v1595 = vsel %vm489, %v1534, 0
        %v1598 = vsel %vm489, %v1535, 0
        %v1601 = vsel %vm489, %v1536, 0
        %v1604 = vsel %vm489, %v1537, 0
        %v1607 = vsel %vm489, %v1538, 0
        %v1610 = vsel %vm489, %v1539, 0
        %v1613 = vsel %vm489, %v1540, 0
        %v1616 = vsel %vm489, %v1541, 0
        %v1619 = vsel %vm489, %v1542, 0
        %v1622 = vsel %vm489, %v1543, 0
        %v1625 = vsel %vm489, %v1544, 0
        %v1628 = vsel %vm489, %v1545, 0
        %v1631 = vsel %vm489, %v1546, 0
        %v1634 = vsel %vm489, %v1547, 0
        %v1637 = vsel %vm489, %v1548, 0
        %v1640 = vsel %vm489, %v1549, 0
        %v1643 = vsel %vm489, %v1550, 0
        %v1646 = vsel %vm489, %v1551, 0
        %1648 = vmatpush.msra.mxu0 0.0
        %1649 = vmatpush.msra.mxu0 0.0
        %1650 = vmatpush.msra.mxu0 0.0
        %1651 = vmatpush.msra.mxu0 0.0
        %1652 = vmatpush.msra.mxu0 0.0
        %1653 = vmatpush.msra.mxu0 0.0
        %1654 = vmatpush.msra.mxu0 0.0
        %1655 = vmatpush.msra.mxu0 0.0
        %1656 = vmatpush.msra.mxu0 0.0
        %1657 = vmatpush.msra.mxu0 0.0
        %1658 = vmatpush.msra.mxu0 0.0
        %1659 = vmatpush.msra.mxu0 0.0
        %1660 = vmatpush.msra.mxu0 0.0
        %1661 = vmatpush.msra.mxu0 0.0
        %1662 = vmatpush.msra.mxu0 %v588
        %1663 = vmatpush.msra.mxu0 %v451
        %1664 = vmatmul.f32.gmra.mxu0 %v1553
        %v1665 = vpop.f32.mrf.mxu0
        %v1666 = vadd.f32 %v487, %v1665
        %1667 = vmatmul.f32.gmra.mxu0 %v1556
        %v1668 = vpop.f32.mrf.mxu0
        %v1669 = vadd.f32 %v487, %v1668
        %1670 = vmatmul.f32.gmra.mxu0 %v1559
        %v1671 = vpop.f32.mrf.mxu0
        %v1672 = vadd.f32 %v487, %v1671
        %1673 = vmatmul.f32.gmra.mxu0 %v1562
        %v1674 = vpop.f32.mrf.mxu0
        %v1675 = vadd.f32 %v487, %v1674
        %1676 = vmatmul.f32.gmra.mxu0 %v1565
        %v1677 = vpop.f32.mrf.mxu0
        %v1678 = vadd.f32 %v487, %v1677
        %1679 = vmatmul.f32.gmra.mxu0 %v1568
        %v1680 = vpop.f32.mrf.mxu0
        %v1681 = vadd.f32 %v487, %v1680
        %1682 = vmatmul.f32.gmra.mxu0 %v1571
        %v1683 = vpop.f32.mrf.mxu0
        %v1684 = vadd.f32 %v487, %v1683
        %1685 = vmatmul.f32.gmra.mxu0 %v1574
        %v1686 = vpop.f32.mrf.mxu0
        %v1687 = vadd.f32 %v487, %v1686
        %1688 = vmatmul.f32.gmra.mxu0 %v1577
        %v1689 = vpop.f32.mrf.mxu0
        %v1690 = vadd.f32 %v487, %v1689
        %1691 = vmatmul.f32.gmra.mxu0 %v1580
        %v1692 = vpop.f32.mrf.mxu0
        %v1693 = vadd.f32 %v487, %v1692
        %1694 = vmatmul.f32.gmra.mxu0 %v1583
        %v1695 = vpop.f32.mrf.mxu0
        %v1696 = vadd.f32 %v487, %v1695
        %1697 = vmatmul.f32.gmra.mxu0 %v1586
        %v1698 = vpop.f32.mrf.mxu0
        %v1699 = vadd.f32 %v487, %v1698
        %1700 = vmatmul.f32.gmra.mxu0 %v1589
        %v1701 = vpop.f32.mrf.mxu0
        %v1702 = vadd.f32 %v487, %v1701
        %1703 = vmatmul.f32.gmra.mxu0 %v1592
        %v1704 = vpop.f32.mrf.mxu0
        %v1705 = vadd.f32 %v487, %v1704
        %1706 = vmatmul.f32.gmra.mxu0 %v1595
        %v1707 = vpop.f32.mrf.mxu0
        %v1708 = vadd.f32 %v487, %v1707
        %1709 = vmatmul.f32.gmra.mxu0 %v1598
        %v1710 = vpop.f32.mrf.mxu0
        %v1711 = vadd.f32 %v487, %v1710
        %1712 = vmatmul.f32.gmra.mxu0 %v1601
        %v1713 = vpop.f32.mrf.mxu0
        %v1714 = vadd.f32 %v487, %v1713
        %1715 = vmatmul.f32.gmra.mxu0 %v1604
        %v1716 = vpop.f32.mrf.mxu0
        %v1717 = vadd.f32 %v487, %v1716
        %1718 = vmatmul.f32.gmra.mxu0 %v1607
        %v1719 = vpop.f32.mrf.mxu0
        %v1720 = vadd.f32 %v487, %v1719
        %1721 = vmatmul.f32.gmra.mxu0 %v1610
        %v1722 = vpop.f32.mrf.mxu0
        %v1723 = vadd.f32 %v487, %v1722
        %1724 = vmatmul.f32.gmra.mxu0 %v1613
        %v1725 = vpop.f32.mrf.mxu0
        %v1726 = vadd.f32 %v487, %v1725
        %1727 = vmatmul.f32.gmra.mxu0 %v1616
        %v1728 = vpop.f32.mrf.mxu0
        %v1729 = vadd.f32 %v487, %v1728
        %1730 = vmatmul.f32.gmra.mxu0 %v1619
        %v1731 = vpop.f32.mrf.mxu0
        %v1732 = vadd.f32 %v487, %v1731
        %1733 = vmatmul.f32.gmra.mxu0 %v1622
        %v1734 = vpop.f32.mrf.mxu0
        %v1735 = vadd.f32 %v487, %v1734
        %1736 = vmatmul.f32.gmra.mxu0 %v1625
        %v1737 = vpop.f32.mrf.mxu0
        %v1738 = vadd.f32 %v487, %v1737
        %1739 = vmatmul.f32.gmra.mxu0 %v1628
        %v1740 = vpop.f32.mrf.mxu0
        %v1741 = vadd.f32 %v487, %v1740
        %1742 = vmatmul.f32.gmra.mxu0 %v1631
        %v1743 = vpop.f32.mrf.mxu0
        %v1744 = vadd.f32 %v487, %v1743
        %1745 = vmatmul.f32.gmra.mxu0 %v1634
        %v1746 = vpop.f32.mrf.mxu0
        %v1747 = vadd.f32 %v487, %v1746
        %1748 = vmatmul.f32.gmra.mxu0 %v1637
        %v1749 = vpop.f32.mrf.mxu0
        %v1750 = vadd.f32 %v487, %v1749
        %1751 = vmatmul.f32.gmra.mxu0 %v1640
        %v1752 = vpop.f32.mrf.mxu0
        %v1753 = vadd.f32 %v487, %v1752
        %1754 = vmatmul.f32.gmra.mxu0 %v1643
        %v1755 = vpop.f32.mrf.mxu0
        %v1756 = vadd.f32 %v487, %v1755
        %1757 = vmatmul.f32.gmra.mxu0 %v1646
        %v1758 = vpop.f32.mrf.mxu0
        %v1759 = vadd.f32 %v487, %v1758
        %1760 = vdwg.mxu0
        %v1761 = vmax.f32 %v1666, 0.0
        %v1762 = vmax.f32 %v1669, 0.0
        %v1763 = vmax.f32 %v1672, 0.0
        %v1764 = vmax.f32 %v1675, 0.0
        %v1765 = vmax.f32 %v1678, 0.0
        %v1766 = vmax.f32 %v1681, 0.0
        %v1767 = vmax.f32 %v1684, 0.0
        %v1768 = vmax.f32 %v1687, 0.0
        %v1769 = vmax.f32 %v1690, 0.0
        %v1770 = vmax.f32 %v1693, 0.0
        %v1771 = vmax.f32 %v1696, 0.0
        %v1772 = vmax.f32 %v1699, 0.0
        %v1773 = vmax.f32 %v1702, 0.0
        %v1774 = vmax.f32 %v1705, 0.0
        %v1775 = vmax.f32 %v1708, 0.0
        %v1776 = vmax.f32 %v1711, 0.0
        %v1777 = vmax.f32 %v1714, 0.0
        %v1778 = vmax.f32 %v1717, 0.0
        %v1779 = vmax.f32 %v1720, 0.0
        %v1780 = vmax.f32 %v1723, 0.0
        %v1781 = vmax.f32 %v1726, 0.0
        %v1782 = vmax.f32 %v1729, 0.0
        %v1783 = vmax.f32 %v1732, 0.0
        %v1784 = vmax.f32 %v1735, 0.0
        %v1785 = vmax.f32 %v1738, 0.0
        %v1786 = vmax.f32 %v1741, 0.0
        %v1787 = vmax.f32 %v1744, 0.0
        %v1788 = vmax.f32 %v1747, 0.0
        %v1789 = vmax.f32 %v1750, 0.0
        %v1790 = vmax.f32 %v1753, 0.0
        %v1791 = vmax.f32 %v1756, 0.0
        %v1792 = vmax.f32 %v1759, 0.0
        %1793 = vst.msk [vmem:[#allocation2] sm:$0xff] %vm384, %v1761
        %1794 = vst.msk [vmem:[#allocation2 + $0x8] sm:$0xff] %vm384, %v1762
        %1795 = vst.msk [vmem:[#allocation2 + $0x10] sm:$0xff] %vm384, %v1763
        %1796 = vst.msk [vmem:[#allocation2 + $0x18] sm:$0xff] %vm384, %v1764
        %1797 = vst.msk [vmem:[#allocation2 + $0x20] sm:$0xff] %vm384, %v1765
        %1798 = vst.msk [vmem:[#allocation2 + $0x28] sm:$0xff] %vm384, %v1766
        %1799 = vst.msk [vmem:[#allocation2 + $0x30] sm:$0xff] %vm384, %v1767
        %1800 = vst.msk [vmem:[#allocation2 + $0x38] sm:$0xff] %vm384, %v1768
        %1801 = vst.msk [vmem:[#allocation2 + $0x40] sm:$0xff] %vm384, %v1769
        %1802 = vst.msk [vmem:[#allocation2 + $0x48] sm:$0xff] %vm384, %v1770
        %1803 = vst.msk [vmem:[#allocation2 + $0x50] sm:$0xff] %vm384, %v1771
        %1804 = vst.msk [vmem:[#allocation2 + $0x58] sm:$0xff] %vm384, %v1772
        %1805 = vst.msk [vmem:[#allocation2 + $0x60] sm:$0xff] %vm384, %v1773
        %1806 = vst.msk [vmem:[#allocation2 + $0x68] sm:$0xff] %vm384, %v1774
        %1807 = vst.msk [vmem:[#allocation2 + $0x70] sm:$0xff] %vm384, %v1775
        %1808 = vst.msk [vmem:[#allocation2 + $0x78] sm:$0xff] %vm384, %v1776
        %1809 = vst.msk [vmem:[#allocation2 + $0x80] sm:$0xff] %vm384, %v1777
        %1810 = vst.msk [vmem:[#allocation2 + $0x88] sm:$0xff] %vm384, %v1778
        %1811 = vst.msk [vmem:[#allocation2 + $0x90] sm:$0xff] %vm384, %v1779
        %1812 = vst.msk [vmem:[#allocation2 + $0x98] sm:$0xff] %vm384, %v1780
        %1813 = vst.msk [vmem:[#allocation2 + $0xa0] sm:$0xff] %vm384, %v1781
        %1814 = vst.msk [vmem:[#allocation2 + $0xa8] sm:$0xff] %vm384, %v1782
        %1815 = vst.msk [vmem:[#allocation2 + $0xb0] sm:$0xff] %vm384, %v1783
        %1816 = vst.msk [vmem:[#allocation2 + $0xb8] sm:$0xff] %vm384, %v1784
        %1817 = vst.msk [vmem:[#allocation2 + $0xc0] sm:$0xff] %vm384, %v1785
        %1818 = vst.msk [vmem:[#allocation2 + $0xc8] sm:$0xff] %vm384, %v1786
        %1819 = vst.msk [vmem:[#allocation2 + $0xd0] sm:$0xff] %vm384, %v1787
        %1820 = vst.msk [vmem:[#allocation2 + $0xd8] sm:$0xff] %vm384, %v1788
        %1821 = vst.msk [vmem:[#allocation2 + $0xe0] sm:$0xff] %vm384, %v1789
        %1822 = vst.msk [vmem:[#allocation2 + $0xe8] sm:$0xff] %vm384, %v1790
        %1823 = vst.msk [vmem:[#allocation2 + $0xf0] sm:$0xff] %vm384, %v1791
        %1824 = vst.msk [vmem:[#allocation2 + $0xf8] sm:$0xff] %vm384, %v1792
        %v1825 = vld [vmem:[#allocation2] sm:$0xff]
        %v1826 = vld [vmem:[#allocation2 + $0x8] sm:$0xff]
        %v1827 = vld [vmem:[#allocation2 + $0x10] sm:$0xff]
        %v1828 = vld [vmem:[#allocation2 + $0x18] sm:$0xff]
        %v1829 = vld [vmem:[#allocation2 + $0x40] sm:$0xff]
        %v1830 = vld [vmem:[#allocation2 + $0x48] sm:$0xff]
        %v1831 = vld [vmem:[#allocation2 + $0x50] sm:$0xff]
        %v1832 = vld [vmem:[#allocation2 + $0x58] sm:$0xff]
        %v1833 = vld [vmem:[#allocation2 + $0x80] sm:$0xff]
        %v1834 = vld [vmem:[#allocation2 + $0x88] sm:$0xff]
        %v1835 = vld [vmem:[#allocation2 + $0x90] sm:$0xff]
        %v1836 = vld [vmem:[#allocation2 + $0x98] sm:$0xff]
        %v1837 = vld [vmem:[#allocation2 + $0xc0] sm:$0xff]
        %v1838 = vld [vmem:[#allocation2 + $0xc8] sm:$0xff]
        %v1839 = vld [vmem:[#allocation2 + $0xd0] sm:$0xff]
        %v1840 = vld [vmem:[#allocation2 + $0xd8] sm:$0xff]
        %v1841 = vld [vmem:[%s783] sm:$0xff]
        %v1842 = vld [vmem:[%s783 + $0x8] sm:$0xff]
        %v1843 = vld [vmem:[%s783 + $0x10] sm:$0xff]
        %v1844 = vld [vmem:[%s783 + $0x18] sm:$0xff]
        %v1845 = vld [vmem:[%s783 + $0x40] sm:$0xff]
        %v1846 = vld [vmem:[%s783 + $0x48] sm:$0xff]
        %v1847 = vld [vmem:[%s783 + $0x50] sm:$0xff]
        %v1848 = vld [vmem:[%s783 + $0x58] sm:$0xff]
        %v1849 = vld [vmem:[%s783 + $0x80] sm:$0xff]
        %v1850 = vld [vmem:[%s783 + $0x88] sm:$0xff]
        %v1851 = vld [vmem:[%s783 + $0x90] sm:$0xff]
        %v1852 = vld [vmem:[%s783 + $0x98] sm:$0xff]
        %v1853 = vld [vmem:[%s783 + $0xc0] sm:$0xff]
        %v1854 = vld [vmem:[%s783 + $0xc8] sm:$0xff]
        %v1855 = vld [vmem:[%s783 + $0xd0] sm:$0xff]
        %v1856 = vld [vmem:[%s783 + $0xd8] sm:$0xff]
        %v1857 = vmax.f32 %v1825, %v1841
        %v1858 = vmax.f32 %v1826, %v1842
        %v1859 = vmax.f32 %v1827, %v1843
        %v1860 = vmax.f32 %v1828, %v1844
        %v1861 = vmax.f32 %v1829, %v1845
        %v1862 = vmax.f32 %v1830, %v1846
        %v1863 = vmax.f32 %v1831, %v1847
        %v1864 = vmax.f32 %v1832, %v1848
        %v1865 = vmax.f32 %v1833, %v1849
        %v1866 = vmax.f32 %v1834, %v1850
        %v1867 = vmax.f32 %v1835, %v1851
        %v1868 = vmax.f32 %v1836, %v1852
        %v1869 = vmax.f32 %v1837, %v1853
        %v1870 = vmax.f32 %v1838, %v1854
        %v1871 = vmax.f32 %v1839, %v1855
        %v1872 = vmax.f32 %v1840, %v1856
        %v1889 = vrot.slane %v1857, 2
        %v1890 = vrot.slane %v1857, 4
        %v1891 = vrot.slane %v1857, 6
        %v1892 = vrot.slane %v1858, 2
        %v1893 = vrot.slane %v1858, 4
        %v1894 = vrot.slane %v1858, 6
        %v1895 = vrot.slane %v1859, 2
        %v1896 = vrot.slane %v1859, 4
        %v1897 = vrot.slane %v1859, 6
        %v1898 = vrot.slane %v1860, 2
        %v1899 = vrot.slane %v1860, 4
        %v1900 = vrot.slane %v1860, 6
        %v1901 = vrot.slane %v1861, 2
        %v1902 = vrot.slane %v1861, 4
        %v1903 = vrot.slane %v1861, 6
        %v1904 = vrot.slane %v1862, 2
        %v1905 = vrot.slane %v1862, 4
        %v1906 = vrot.slane %v1862, 6
        %v1907 = vrot.slane %v1863, 2
        %v1908 = vrot.slane %v1863, 4
        %v1909 = vrot.slane %v1863, 6
        %v1910 = vrot.slane %v1864, 2
        %v1911 = vrot.slane %v1864, 4
        %v1912 = vrot.slane %v1864, 6
        %v1913 = vrot.slane %v1865, 2
        %v1914 = vrot.slane %v1865, 4
        %v1915 = vrot.slane %v1865, 6
        %v1916 = vrot.slane %v1866, 2
        %v1917 = vrot.slane %v1866, 4
        %v1918 = vrot.slane %v1866, 6
        %v1919 = vrot.slane %v1867, 2
        %v1920 = vrot.slane %v1867, 4
        %v1921 = vrot.slane %v1867, 6
        %v1922 = vrot.slane %v1868, 2
        %v1923 = vrot.slane %v1868, 4
        %v1924 = vrot.slane %v1868, 6
        %v1925 = vrot.slane %v1869, 2
        %v1926 = vrot.slane %v1869, 4
        %v1927 = vrot.slane %v1869, 6
        %v1928 = vrot.slane %v1870, 2
        %v1929 = vrot.slane %v1870, 4
        %v1930 = vrot.slane %v1870, 6
        %v1931 = vrot.slane %v1871, 2
        %v1932 = vrot.slane %v1871, 4
        %v1933 = vrot.slane %v1871, 6
        %v1934 = vrot.slane %v1872, 2
        %v1935 = vrot.slane %v1872, 4
        %v1936 = vrot.slane %v1872, 6
        %v1985 = vsel %vm928, %v1857, -inf
        %v1986 = vrot.slane %v1985, 4
        %v1987 = vmax.f32 %v1985, %v1986
        %v1988 = vrot.slane %v1987, 2
        %v1989 = vmax.f32 %v1987, %v1988
        %v1990 = vrot.slane %v1989, 1
        %v1991 = vmax.f32 %v1989, %v1990
        %v1992 = vsel %vm928, %v1889, -inf
        %v1993 = vrot.slane %v1992, 4
        %v1994 = vmax.f32 %v1992, %v1993
        %v1995 = vrot.slane %v1994, 2
        %v1996 = vmax.f32 %v1994, %v1995
        %v1997 = vrot.slane %v1996, 1
        %v1998 = vmax.f32 %v1996, %v1997
        %v1999 = vsel %vm928, %v1890, -inf
        %v2000 = vrot.slane %v1999, 4
        %v2001 = vmax.f32 %v1999, %v2000
        %v2002 = vrot.slane %v2001, 2
        %v2003 = vmax.f32 %v2001, %v2002
        %v2004 = vrot.slane %v2003, 1
        %v2005 = vmax.f32 %v2003, %v2004
        %v2006 = vsel %vm928, %v1891, -inf
        %v2007 = vrot.slane %v2006, 4
        %v2008 = vmax.f32 %v2006, %v2007
        %v2009 = vrot.slane %v2008, 2
        %v2010 = vmax.f32 %v2008, %v2009
        %v2011 = vrot.slane %v2010, 1
        %v2012 = vmax.f32 %v2010, %v2011
        %v2013 = vsel %vm928, %v1858, -inf
        %v2014 = vrot.slane %v2013, 4
        %v2015 = vmax.f32 %v2013, %v2014
        %v2016 = vrot.slane %v2015, 2
        %v2017 = vmax.f32 %v2015, %v2016
        %v2018 = vrot.slane %v2017, 1
        %v2019 = vmax.f32 %v2017, %v2018
        %v2020 = vsel %vm928, %v1892, -inf
        %v2021 = vrot.slane %v2020, 4
        %v2022 = vmax.f32 %v2020, %v2021
        %v2023 = vrot.slane %v2022, 2
        %v2024 = vmax.f32 %v2022, %v2023
        %v2025 = vrot.slane %v2024, 1
        %v2026 = vmax.f32 %v2024, %v2025
        %v2027 = vsel %vm928, %v1893, -inf
        %v2028 = vrot.slane %v2027, 4
        %v2029 = vmax.f32 %v2027, %v2028
        %v2030 = vrot.slane %v2029, 2
        %v2031 = vmax.f32 %v2029, %v2030
        %v2032 = vrot.slane %v2031, 1
        %v2033 = vmax.f32 %v2031, %v2032
        %v2034 = vsel %vm928, %v1894, -inf
        %v2035 = vrot.slane %v2034, 4
        %v2036 = vmax.f32 %v2034, %v2035
        %v2037 = vrot.slane %v2036, 2
        %v2038 = vmax.f32 %v2036, %v2037
        %v2039 = vrot.slane %v2038, 1
        %v2040 = vmax.f32 %v2038, %v2039
        %v2041 = vsel %vm928, %v1859, -inf
        %v2042 = vrot.slane %v2041, 4
        %v2043 = vmax.f32 %v2041, %v2042
        %v2044 = vrot.slane %v2043, 2
        %v2045 = vmax.f32 %v2043, %v2044
        %v2046 = vrot.slane %v2045, 1
        %v2047 = vmax.f32 %v2045, %v2046
        %v2048 = vsel %vm928, %v1895, -inf
        %v2049 = vrot.slane %v2048, 4
        %v2050 = vmax.f32 %v2048, %v2049
        %v2051 = vrot.slane %v2050, 2
        %v2052 = vmax.f32 %v2050, %v2051
        %v2053 = vrot.slane %v2052, 1
        %v2054 = vmax.f32 %v2052, %v2053
        %v2055 = vsel %vm928, %v1896, -inf
        %v2056 = vrot.slane %v2055, 4
        %v2057 = vmax.f32 %v2055, %v2056
        %v2058 = vrot.slane %v2057, 2
        %v2059 = vmax.f32 %v2057, %v2058
        %v2060 = vrot.slane %v2059, 1
        %v2061 = vmax.f32 %v2059, %v2060
        %v2062 = vsel %vm928, %v1897, -inf
        %v2063 = vrot.slane %v2062, 4
        %v2064 = vmax.f32 %v2062, %v2063
        %v2065 = vrot.slane %v2064, 2
        %v2066 = vmax.f32 %v2064, %v2065
        %v2067 = vrot.slane %v2066, 1
        %v2068 = vmax.f32 %v2066, %v2067
        %v2069 = vsel %vm928, %v1860, -inf
        %v2070 = vrot.slane %v2069, 4
        %v2071 = vmax.f32 %v2069, %v2070
        %v2072 = vrot.slane %v2071, 2
        %v2073 = vmax.f32 %v2071, %v2072
        %v2074 = vrot.slane %v2073, 1
        %v2075 = vmax.f32 %v2073, %v2074
        %v2076 = vsel %vm928, %v1898, -inf
        %v2077 = vrot.slane %v2076, 4
        %v2078 = vmax.f32 %v2076, %v2077
        %v2079 = vrot.slane %v2078, 2
        %v2080 = vmax.f32 %v2078, %v2079
        %v2081 = vrot.slane %v2080, 1
        %v2082 = vmax.f32 %v2080, %v2081
        %v2083 = vsel %vm928, %v1899, -inf
        %v2084 = vrot.slane %v2083, 4
        %v2085 = vmax.f32 %v2083, %v2084
        %v2086 = vrot.slane %v2085, 2
        %v2087 = vmax.f32 %v2085, %v2086
        %v2088 = vrot.slane %v2087, 1
        %v2089 = vmax.f32 %v2087, %v2088
        %v2090 = vsel %vm928, %v1900, -inf
        %v2091 = vrot.slane %v2090, 4
        %v2092 = vmax.f32 %v2090, %v2091
        %v2093 = vrot.slane %v2092, 2
        %v2094 = vmax.f32 %v2092, %v2093
        %v2095 = vrot.slane %v2094, 1
        %v2096 = vmax.f32 %v2094, %v2095
        %v2097 = vsel %vm928, %v1861, -inf
        %v2098 = vrot.slane %v2097, 4
        %v2099 = vmax.f32 %v2097, %v2098
        %v2100 = vrot.slane %v2099, 2
        %v2101 = vmax.f32 %v2099, %v2100
        %v2102 = vrot.slane %v2101, 1
        %v2103 = vmax.f32 %v2101, %v2102
        %v2104 = vsel %vm928, %v1901, -inf
        %v2105 = vrot.slane %v2104, 4
        %v2106 = vmax.f32 %v2104, %v2105
        %v2107 = vrot.slane %v2106, 2
        %v2108 = vmax.f32 %v2106, %v2107
        %v2109 = vrot.slane %v2108, 1
        %v2110 = vmax.f32 %v2108, %v2109
        %v2111 = vsel %vm928, %v1902, -inf
        %v2112 = vrot.slane %v2111, 4
        %v2113 = vmax.f32 %v2111, %v2112
        %v2114 = vrot.slane %v2113, 2
        %v2115 = vmax.f32 %v2113, %v2114
        %v2116 = vrot.slane %v2115, 1
        %v2117 = vmax.f32 %v2115, %v2116
        %v2118 = vsel %vm928, %v1903, -inf
        %v2119 = vrot.slane %v2118, 4
        %v2120 = vmax.f32 %v2118, %v2119
        %v2121 = vrot.slane %v2120, 2
        %v2122 = vmax.f32 %v2120, %v2121
        %v2123 = vrot.slane %v2122, 1
        %v2124 = vmax.f32 %v2122, %v2123
        %v2125 = vsel %vm928, %v1862, -inf
        %v2126 = vrot.slane %v2125, 4
        %v2127 = vmax.f32 %v2125, %v2126
        %v2128 = vrot.slane %v2127, 2
        %v2129 = vmax.f32 %v2127, %v2128
        %v2130 = vrot.slane %v2129, 1
        %v2131 = vmax.f32 %v2129, %v2130
        %v2132 = vsel %vm928, %v1904, -inf
        %v2133 = vrot.slane %v2132, 4
        %v2134 = vmax.f32 %v2132, %v2133
        %v2135 = vrot.slane %v2134, 2
        %v2136 = vmax.f32 %v2134, %v2135
        %v2137 = vrot.slane %v2136, 1
        %v2138 = vmax.f32 %v2136, %v2137
        %v2139 = vsel %vm928, %v1905, -inf
        %v2140 = vrot.slane %v2139, 4
        %v2141 = vmax.f32 %v2139, %v2140
        %v2142 = vrot.slane %v2141, 2
        %v2143 = vmax.f32 %v2141, %v2142
        %v2144 = vrot.slane %v2143, 1
        %v2145 = vmax.f32 %v2143, %v2144
        %v2146 = vsel %vm928, %v1906, -inf
        %v2147 = vrot.slane %v2146, 4
        %v2148 = vmax.f32 %v2146, %v2147
        %v2149 = vrot.slane %v2148, 2
        %v2150 = vmax.f32 %v2148, %v2149
        %v2151 = vrot.slane %v2150, 1
        %v2152 = vmax.f32 %v2150, %v2151
        %v2153 = vsel %vm928, %v1863, -inf
        %v2154 = vrot.slane %v2153, 4
        %v2155 = vmax.f32 %v2153, %v2154
        %v2156 = vrot.slane %v2155, 2
        %v2157 = vmax.f32 %v2155, %v2156
        %v2158 = vrot.slane %v2157, 1
        %v2159 = vmax.f32 %v2157, %v2158
        %v2160 = vsel %vm928, %v1907, -inf
        %v2161 = vrot.slane %v2160, 4
        %v2162 = vmax.f32 %v2160, %v2161
        %v2163 = vrot.slane %v2162, 2
        %v2164 = vmax.f32 %v2162, %v2163
        %v2165 = vrot.slane %v2164, 1
        %v2166 = vmax.f32 %v2164, %v2165
        %v2167 = vsel %vm928, %v1908, -inf
        %v2168 = vrot.slane %v2167, 4
        %v2169 = vmax.f32 %v2167, %v2168
        %v2170 = vrot.slane %v2169, 2
        %v2171 = vmax.f32 %v2169, %v2170
        %v2172 = vrot.slane %v2171, 1
        %v2173 = vmax.f32 %v2171, %v2172
        %v2174 = vsel %vm928, %v1909, -inf
        %v2175 = vrot.slane %v2174, 4
        %v2176 = vmax.f32 %v2174, %v2175
        %v2177 = vrot.slane %v2176, 2
        %v2178 = vmax.f32 %v2176, %v2177
        %v2179 = vrot.slane %v2178, 1
        %v2180 = vmax.f32 %v2178, %v2179
        %v2181 = vsel %vm928, %v1864, -inf
        %v2182 = vrot.slane %v2181, 4
        %v2183 = vmax.f32 %v2181, %v2182
        %v2184 = vrot.slane %v2183, 2
        %v2185 = vmax.f32 %v2183, %v2184
        %v2186 = vrot.slane %v2185, 1
        %v2187 = vmax.f32 %v2185, %v2186
        %v2188 = vsel %vm928, %v1910, -inf
        %v2189 = vrot.slane %v2188, 4
        %v2190 = vmax.f32 %v2188, %v2189
        %v2191 = vrot.slane %v2190, 2
        %v2192 = vmax.f32 %v2190, %v2191
        %v2193 = vrot.slane %v2192, 1
        %v2194 = vmax.f32 %v2192, %v2193
        %v2195 = vsel %vm928, %v1911, -inf
        %v2196 = vrot.slane %v2195, 4
        %v2197 = vmax.f32 %v2195, %v2196
        %v2198 = vrot.slane %v2197, 2
        %v2199 = vmax.f32 %v2197, %v2198
        %v2200 = vrot.slane %v2199, 1
        %v2201 = vmax.f32 %v2199, %v2200
        %v2202 = vsel %vm928, %v1912, -inf
        %v2203 = vrot.slane %v2202, 4
        %v2204 = vmax.f32 %v2202, %v2203
        %v2205 = vrot.slane %v2204, 2
        %v2206 = vmax.f32 %v2204, %v2205
        %v2207 = vrot.slane %v2206, 1
        %v2208 = vmax.f32 %v2206, %v2207
        %v2209 = vsel %vm928, %v1865, -inf
        %v2210 = vrot.slane %v2209, 4
        %v2211 = vmax.f32 %v2209, %v2210
        %v2212 = vrot.slane %v2211, 2
        %v2213 = vmax.f32 %v2211, %v2212
        %v2214 = vrot.slane %v2213, 1
        %v2215 = vmax.f32 %v2213, %v2214
        %v2216 = vsel %vm928, %v1913, -inf
        %v2217 = vrot.slane %v2216, 4
        %v2218 = vmax.f32 %v2216, %v2217
        %v2219 = vrot.slane %v2218, 2
        %v2220 = vmax.f32 %v2218, %v2219
        %v2221 = vrot.slane %v2220, 1
        %v2222 = vmax.f32 %v2220, %v2221
        %v2223 = vsel %vm928, %v1914, -inf
        %v2224 = vrot.slane %v2223, 4
        %v2225 = vmax.f32 %v2223, %v2224
        %v2226 = vrot.slane %v2225, 2
        %v2227 = vmax.f32 %v2225, %v2226
        %v2228 = vrot.slane %v2227, 1
        %v2229 = vmax.f32 %v2227, %v2228
        %v2230 = vsel %vm928, %v1915, -inf
        %v2231 = vrot.slane %v2230, 4
        %v2232 = vmax.f32 %v2230, %v2231
        %v2233 = vrot.slane %v2232, 2
        %v2234 = vmax.f32 %v2232, %v2233
        %v2235 = vrot.slane %v2234, 1
        %v2236 = vmax.f32 %v2234, %v2235
        %v2237 = vsel %vm928, %v1866, -inf
        %v2238 = vrot.slane %v2237, 4
        %v2239 = vmax.f32 %v2237, %v2238
        %v2240 = vrot.slane %v2239, 2
        %v2241 = vmax.f32 %v2239, %v2240
        %v2242 = vrot.slane %v2241, 1
        %v2243 = vmax.f32 %v2241, %v2242
        %v2244 = vsel %vm928, %v1916, -inf
        %v2245 = vrot.slane %v2244, 4
        %v2246 = vmax.f32 %v2244, %v2245
        %v2247 = vrot.slane %v2246, 2
        %v2248 = vmax.f32 %v2246, %v2247
        %v2249 = vrot.slane %v2248, 1
        %v2250 = vmax.f32 %v2248, %v2249
        %v2251 = vsel %vm928, %v1917, -inf
        %v2252 = vrot.slane %v2251, 4
        %v2253 = vmax.f32 %v2251, %v2252
        %v2254 = vrot.slane %v2253, 2
        %v2255 = vmax.f32 %v2253, %v2254
        %v2256 = vrot.slane %v2255, 1
        %v2257 = vmax.f32 %v2255, %v2256
        %v2258 = vsel %vm928, %v1918, -inf
        %v2259 = vrot.slane %v2258, 4
        %v2260 = vmax.f32 %v2258, %v2259
        %v2261 = vrot.slane %v2260, 2
        %v2262 = vmax.f32 %v2260, %v2261
        %v2263 = vrot.slane %v2262, 1
        %v2264 = vmax.f32 %v2262, %v2263
        %v2265 = vsel %vm928, %v1867, -inf
        %v2266 = vrot.slane %v2265, 4
        %v2267 = vmax.f32 %v2265, %v2266
        %v2268 = vrot.slane %v2267, 2
        %v2269 = vmax.f32 %v2267, %v2268
        %v2270 = vrot.slane %v2269, 1
        %v2271 = vmax.f32 %v2269, %v2270
        %v2272 = vsel %vm928, %v1919, -inf
        %v2273 = vrot.slane %v2272, 4
        %v2274 = vmax.f32 %v2272, %v2273
        %v2275 = vrot.slane %v2274, 2
        %v2276 = vmax.f32 %v2274, %v2275
        %v2277 = vrot.slane %v2276, 1
        %v2278 = vmax.f32 %v2276, %v2277
        %v2279 = vsel %vm928, %v1920, -inf
        %v2280 = vrot.slane %v2279, 4
        %v2281 = vmax.f32 %v2279, %v2280
        %v2282 = vrot.slane %v2281, 2
        %v2283 = vmax.f32 %v2281, %v2282
        %v2284 = vrot.slane %v2283, 1
        %v2285 = vmax.f32 %v2283, %v2284
        %v2286 = vsel %vm928, %v1921, -inf
        %v2287 = vrot.slane %v2286, 4
        %v2288 = vmax.f32 %v2286, %v2287
        %v2289 = vrot.slane %v2288, 2
        %v2290 = vmax.f32 %v2288, %v2289
        %v2291 = vrot.slane %v2290, 1
        %v2292 = vmax.f32 %v2290, %v2291
        %v2293 = vsel %vm928, %v1868, -inf
        %v2294 = vrot.slane %v2293, 4
        %v2295 = vmax.f32 %v2293, %v2294
        %v2296 = vrot.slane %v2295, 2
        %v2297 = vmax.f32 %v2295, %v2296
        %v2298 = vrot.slane %v2297, 1
        %v2299 = vmax.f32 %v2297, %v2298
        %v2300 = vsel %vm928, %v1922, -inf
        %v2301 = vrot.slane %v2300, 4
        %v2302 = vmax.f32 %v2300, %v2301
        %v2303 = vrot.slane %v2302, 2
        %v2304 = vmax.f32 %v2302, %v2303
        %v2305 = vrot.slane %v2304, 1
        %v2306 = vmax.f32 %v2304, %v2305
        %v2307 = vsel %vm928, %v1923, -inf
        %v2308 = vrot.slane %v2307, 4
        %v2309 = vmax.f32 %v2307, %v2308
        %v2310 = vrot.slane %v2309, 2
        %v2311 = vmax.f32 %v2309, %v2310
        %v2312 = vrot.slane %v2311, 1
        %v2313 = vmax.f32 %v2311, %v2312
        %v2314 = vsel %vm928, %v1924, -inf
        %v2315 = vrot.slane %v2314, 4
        %v2316 = vmax.f32 %v2314, %v2315
        %v2317 = vrot.slane %v2316, 2
        %v2318 = vmax.f32 %v2316, %v2317
        %v2319 = vrot.slane %v2318, 1
        %v2320 = vmax.f32 %v2318, %v2319
        %v2321 = vsel %vm928, %v1869, -inf
        %v2322 = vrot.slane %v2321, 4
        %v2323 = vmax.f32 %v2321, %v2322
        %v2324 = vrot.slane %v2323, 2
        %v2325 = vmax.f32 %v2323, %v2324
        %v2326 = vrot.slane %v2325, 1
        %v2327 = vmax.f32 %v2325, %v2326
        %v2328 = vsel %vm928, %v1925, -inf
        %v2329 = vrot.slane %v2328, 4
        %v2330 = vmax.f32 %v2328, %v2329
        %v2331 = vrot.slane %v2330, 2
        %v2332 = vmax.f32 %v2330, %v2331
        %v2333 = vrot.slane %v2332, 1
        %v2334 = vmax.f32 %v2332, %v2333
        %v2335 = vsel %vm928, %v1926, -inf
        %v2336 = vrot.slane %v2335, 4
        %v2337 = vmax.f32 %v2335, %v2336
        %v2338 = vrot.slane %v2337, 2
        %v2339 = vmax.f32 %v2337, %v2338
        %v2340 = vrot.slane %v2339, 1
        %v2341 = vmax.f32 %v2339, %v2340
        %v2342 = vsel %vm928, %v1927, -inf
        %v2343 = vrot.slane %v2342, 4
        %v2344 = vmax.f32 %v2342, %v2343
        %v2345 = vrot.slane %v2344, 2
        %v2346 = vmax.f32 %v2344, %v2345
        %v2347 = vrot.slane %v2346, 1
        %v2348 = vmax.f32 %v2346, %v2347
        %v2349 = vsel %vm928, %v1870, -inf
        %v2350 = vrot.slane %v2349, 4
        %v2351 = vmax.f32 %v2349, %v2350
        %v2352 = vrot.slane %v2351, 2
        %v2353 = vmax.f32 %v2351, %v2352
        %v2354 = vrot.slane %v2353, 1
        %v2355 = vmax.f32 %v2353, %v2354
        %v2356 = vsel %vm928, %v1928, -inf
        %v2357 = vrot.slane %v2356, 4
        %v2358 = vmax.f32 %v2356, %v2357
        %v2359 = vrot.slane %v2358, 2
        %v2360 = vmax.f32 %v2358, %v2359
        %v2361 = vrot.slane %v2360, 1
        %v2362 = vmax.f32 %v2360, %v2361
        %v2363 = vsel %vm928, %v1929, -inf
        %v2364 = vrot.slane %v2363, 4
        %v2365 = vmax.f32 %v2363, %v2364
        %v2366 = vrot.slane %v2365, 2
        %v2367 = vmax.f32 %v2365, %v2366
        %v2368 = vrot.slane %v2367, 1
        %v2369 = vmax.f32 %v2367, %v2368
        %v2370 = vsel %vm928, %v1930, -inf
        %v2371 = vrot.slane %v2370, 4
        %v2372 = vmax.f32 %v2370, %v2371
        %v2373 = vrot.slane %v2372, 2
        %v2374 = vmax.f32 %v2372, %v2373
        %v2375 = vrot.slane %v2374, 1
        %v2376 = vmax.f32 %v2374, %v2375
        %v2377 = vsel %vm928, %v1871, -inf
        %v2378 = vrot.slane %v2377, 4
        %v2379 = vmax.f32 %v2377, %v2378
        %v2380 = vrot.slane %v2379, 2
        %v2381 = vmax.f32 %v2379, %v2380
        %v2382 = vrot.slane %v2381, 1
        %v2383 = vmax.f32 %v2381, %v2382
        %v2384 = vsel %vm928, %v1931, -inf
        %v2385 = vrot.slane %v2384, 4
        %v2386 = vmax.f32 %v2384, %v2385
        %v2387 = vrot.slane %v2386, 2
        %v2388 = vmax.f32 %v2386, %v2387
        %v2389 = vrot.slane %v2388, 1
        %v2390 = vmax.f32 %v2388, %v2389
        %v2391 = vsel %vm928, %v1932, -inf
        %v2392 = vrot.slane %v2391, 4
        %v2393 = vmax.f32 %v2391, %v2392
        %v2394 = vrot.slane %v2393, 2
        %v2395 = vmax.f32 %v2393, %v2394
        %v2396 = vrot.slane %v2395, 1
        %v2397 = vmax.f32 %v2395, %v2396
        %v2398 = vsel %vm928, %v1933, -inf
        %v2399 = vrot.slane %v2398, 4
        %v2400 = vmax.f32 %v2398, %v2399
        %v2401 = vrot.slane %v2400, 2
        %v2402 = vmax.f32 %v2400, %v2401
        %v2403 = vrot.slane %v2402, 1
        %v2404 = vmax.f32 %v2402, %v2403
        %v2405 = vsel %vm928, %v1872, -inf
        %v2406 = vrot.slane %v2405, 4
        %v2407 = vmax.f32 %v2405, %v2406
        %v2408 = vrot.slane %v2407, 2
        %v2409 = vmax.f32 %v2407, %v2408
        %v2410 = vrot.slane %v2409, 1
        %v2411 = vmax.f32 %v2409, %v2410
        %v2412 = vsel %vm928, %v1934, -inf
        %v2413 = vrot.slane %v2412, 4
        %v2414 = vmax.f32 %v2412, %v2413
        %v2415 = vrot.slane %v2414, 2
        %v2416 = vmax.f32 %v2414, %v2415
        %v2417 = vrot.slane %v2416, 1
        %v2418 = vmax.f32 %v2416, %v2417
        %v2419 = vsel %vm928, %v1935, -inf
        %v2420 = vrot.slane %v2419, 4
        %v2421 = vmax.f32 %v2419, %v2420
        %v2422 = vrot.slane %v2421, 2
        %v2423 = vmax.f32 %v2421, %v2422
        %v2424 = vrot.slane %v2423, 1
        %v2425 = vmax.f32 %v2423, %v2424
        %v2426 = vsel %vm928, %v1936, -inf
        %v2427 = vrot.slane %v2426, 4
        %v2428 = vmax.f32 %v2426, %v2427
        %v2429 = vrot.slane %v2428, 2
        %v2430 = vmax.f32 %v2428, %v2429
        %v2431 = vrot.slane %v2430, 1
        %v2432 = vmax.f32 %v2430, %v2431
        %v2497 = vsel %vm1441, %v1998, %v1991
        %v2498 = vsel %vm1443, %v2005, %v2497
        %v2499 = vsel %vm1445, %v2012, %v2498
        %v2500 = vsel %vm1447, %v2019, %v2499
        %v2501 = vsel %vm1449, %v2026, %v2500
        %v2502 = vsel %vm1451, %v2033, %v2501
        %v2503 = vsel %vm1453, %v2040, %v2502
        %v2504 = vsel %vm1441, %v2054, %v2047
        %v2505 = vsel %vm1443, %v2061, %v2504
        %v2506 = vsel %vm1445, %v2068, %v2505
        %v2507 = vsel %vm1447, %v2075, %v2506
        %v2508 = vsel %vm1449, %v2082, %v2507
        %v2509 = vsel %vm1451, %v2089, %v2508
        %v2510 = vsel %vm1453, %v2096, %v2509
        %v2511 = vsel %vm1441, %v2110, %v2103
        %v2512 = vsel %vm1443, %v2117, %v2511
        %v2513 = vsel %vm1445, %v2124, %v2512
        %v2514 = vsel %vm1447, %v2131, %v2513
        %v2515 = vsel %vm1449, %v2138, %v2514
        %v2516 = vsel %vm1451, %v2145, %v2515
        %v2517 = vsel %vm1453, %v2152, %v2516
        %v2518 = vsel %vm1441, %v2166, %v2159
        %v2519 = vsel %vm1443, %v2173, %v2518
        %v2520 = vsel %vm1445, %v2180, %v2519
        %v2521 = vsel %vm1447, %v2187, %v2520
        %v2522 = vsel %vm1449, %v2194, %v2521
        %v2523 = vsel %vm1451, %v2201, %v2522
        %v2524 = vsel %vm1453, %v2208, %v2523
        %v2525 = vsel %vm1441, %v2222, %v2215
        %v2526 = vsel %vm1443, %v2229, %v2525
        %v2527 = vsel %vm1445, %v2236, %v2526
        %v2528 = vsel %vm1447, %v2243, %v2527
        %v2529 = vsel %vm1449, %v2250, %v2528
        %v2530 = vsel %vm1451, %v2257, %v2529
        %v2531 = vsel %vm1453, %v2264, %v2530
        %v2532 = vsel %vm1441, %v2278, %v2271
        %v2533 = vsel %vm1443, %v2285, %v2532
        %v2534 = vsel %vm1445, %v2292, %v2533
        %v2535 = vsel %vm1447, %v2299, %v2534
        %v2536 = vsel %vm1449, %v2306, %v2535
        %v2537 = vsel %vm1451, %v2313, %v2536
        %v2538 = vsel %vm1453, %v2320, %v2537
        %v2539 = vsel %vm1441, %v2334, %v2327
        %v2540 = vsel %vm1443, %v2341, %v2539
        %v2541 = vsel %vm1445, %v2348, %v2540
        %v2542 = vsel %vm1447, %v2355, %v2541
        %v2543 = vsel %vm1449, %v2362, %v2542
        %v2544 = vsel %vm1451, %v2369, %v2543
        %v2545 = vsel %vm1453, %v2376, %v2544
        %v2546 = vsel %vm1441, %v2390, %v2383
        %v2547 = vsel %vm1443, %v2397, %v2546
        %v2548 = vsel %vm1445, %v2404, %v2547
        %v2549 = vsel %vm1447, %v2411, %v2548
        %v2550 = vsel %vm1449, %v2418, %v2549
        %v2551 = vsel %vm1451, %v2425, %v2550
        %v2552 = vsel %vm1453, %v2432, %v2551
        %s2561 = scalar_lea.vmem [#allocation3], 160
        %2562 = vst.msk [vmem:[%s2561 + $0x8] sm:$0xff] %vm384, %v2503
        %2563 = vst.msk [vmem:[%s2561 + $0x10] sm:$0xff] %vm384, %v2510
        %2564 = vst.msk [vmem:[%s2561 + $0x28] sm:$0xff] %vm384, %v2517
        %2565 = vst.msk [vmem:[%s2561 + $0x30] sm:$0xff] %vm384, %v2524
        %2566 = vst.msk [vmem:[%s2561 + $0x48] sm:$0xff] %vm384, %v2531
        %2567 = vst.msk [vmem:[%s2561 + $0x50] sm:$0xff] %vm384, %v2538
        %2568 = vst.msk [vmem:[%s2561 + $0x68] sm:$0xff] %vm384, %v2545
        %2569 = vst.msk [vmem:[%s2561 + $0x70] sm:$0xff] %vm384, %v2552
        %v2570 = vld [vmem:[%s383 + $0x200] sm:$0xff]
        %v2571 = vld [vmem:[%s383 + $0x208] sm:$0xff]
        %v2572 = vld [vmem:[%s383 + $0x210] sm:$0xff]
        %v2573 = vld [vmem:[%s383 + $0x218] sm:$0xff]
        %v2574 = vld [vmem:[%s383 + $0x220] sm:$0xff]
        %v2575 = vld [vmem:[%s383 + $0x228] sm:$0xff]
        %v2576 = vld [vmem:[%s383 + $0x230] sm:$0xff]
        %v2577 = vld [vmem:[%s383 + $0x238] sm:$0xff]
        %v2578 = vld [vmem:[%s383 + $0x240] sm:$0xff]
        %v2579 = vld [vmem:[%s383 + $0x248] sm:$0xff]
        %v2580 = vld [vmem:[%s383 + $0x250] sm:$0xff]
        %v2581 = vld [vmem:[%s383 + $0x258] sm:$0xff]
        %v2582 = vld [vmem:[%s383 + $0x260] sm:$0xff]
        %v2583 = vld [vmem:[%s383 + $0x268] sm:$0xff]
        %v2584 = vld [vmem:[%s383 + $0x270] sm:$0xff]
        %v2585 = vld [vmem:[%s383 + $0x278] sm:$0xff]
        %v2586 = vld [vmem:[%s383 + $0x280] sm:$0xff]
        %v2587 = vld [vmem:[%s383 + $0x288] sm:$0xff]
        %v2588 = vld [vmem:[%s383 + $0x290] sm:$0xff]
        %v2589 = vld [vmem:[%s383 + $0x298] sm:$0xff]
        %v2590 = vld [vmem:[%s383 + $0x2a0] sm:$0xff]
        %v2591 = vld [vmem:[%s383 + $0x2a8] sm:$0xff]
        %v2592 = vld [vmem:[%s383 + $0x2b0] sm:$0xff]
        %v2593 = vld [vmem:[%s383 + $0x2b8] sm:$0xff]
        %v2594 = vld [vmem:[%s383 + $0x2c0] sm:$0xff]
        %v2595 = vld [vmem:[%s383 + $0x2c8] sm:$0xff]
        %v2596 = vld [vmem:[%s383 + $0x2d0] sm:$0xff]
        %v2597 = vld [vmem:[%s383 + $0x2d8] sm:$0xff]
        %v2598 = vld [vmem:[%s383 + $0x2e0] sm:$0xff]
        %v2599 = vld [vmem:[%s383 + $0x2e8] sm:$0xff]
        %v2600 = vld [vmem:[%s383 + $0x2f0] sm:$0xff]
        %v2601 = vld [vmem:[%s383 + $0x2f8] sm:$0xff]
        %v2603 = vsel %vm489, %v2570, 0
        %v2606 = vsel %vm489, %v2571, 0
        %v2609 = vsel %vm489, %v2572, 0
        %v2612 = vsel %vm489, %v2573, 0
        %v2615 = vsel %vm489, %v2574, 0
        %v2618 = vsel %vm489, %v2575, 0
        %v2621 = vsel %vm489, %v2576, 0
        %v2624 = vsel %vm489, %v2577, 0
        %v2627 = vsel %vm489, %v2578, 0
        %v2630 = vsel %vm489, %v2579, 0
        %v2633 = vsel %vm489, %v2580, 0
        %v2636 = vsel %vm489, %v2581, 0
        %v2639 = vsel %vm489, %v2582, 0
        %v2642 = vsel %vm489, %v2583, 0
        %v2645 = vsel %vm489, %v2584, 0
        %v2648 = vsel %vm489, %v2585, 0
        %v2651 = vsel %vm489, %v2586, 0
        %v2654 = vsel %vm489, %v2587, 0
        %v2657 = vsel %vm489, %v2588, 0
        %v2660 = vsel %vm489, %v2589, 0
        %v2663 = vsel %vm489, %v2590, 0
        %v2666 = vsel %vm489, %v2591, 0
        %v2669 = vsel %vm489, %v2592, 0
        %v2672 = vsel %vm489, %v2593, 0
        %v2675 = vsel %vm489, %v2594, 0
        %v2678 = vsel %vm489, %v2595, 0
        %v2681 = vsel %vm489, %v2596, 0
        %v2684 = vsel %vm489, %v2597, 0
        %v2687 = vsel %vm489, %v2598, 0
        %v2690 = vsel %vm489, %v2599, 0
        %v2693 = vsel %vm489, %v2600, 0
        %v2696 = vsel %vm489, %v2601, 0
        %2698 = vmatpush.msra.mxu0 0.0
        %2699 = vmatpush.msra.mxu0 0.0
        %2700 = vmatpush.msra.mxu0 0.0
        %2701 = vmatpush.msra.mxu0 0.0
        %2702 = vmatpush.msra.mxu0 0.0
        %2703 = vmatpush.msra.mxu0 0.0
        %2704 = vmatpush.msra.mxu0 0.0
        %2705 = vmatpush.msra.mxu0 0.0
        %2706 = vmatpush.msra.mxu0 0.0
        %2707 = vmatpush.msra.mxu0 0.0
        %2708 = vmatpush.msra.mxu0 0.0
        %2709 = vmatpush.msra.mxu0 0.0
        %2710 = vmatpush.msra.mxu0 0.0
        %2711 = vmatpush.msra.mxu0 0.0
        %2712 = vmatpush.msra.mxu0 %v588
        %2713 = vmatpush.msra.mxu0 %v451
        %2714 = vmatmul.f32.gmra.mxu0 %v2603
        %v2715 = vpop.f32.mrf.mxu0
        %v2716 = vadd.f32 %v487, %v2715
        %2717 = vmatmul.f32.gmra.mxu0 %v2606
        %v2718 = vpop.f32.mrf.mxu0
        %v2719 = vadd.f32 %v487, %v2718
        %2720 = vmatmul.f32.gmra.mxu0 %v2609
        %v2721 = vpop.f32.mrf.mxu0
        %v2722 = vadd.f32 %v487, %v2721
        %2723 = vmatmul.f32.gmra.mxu0 %v2612
        %v2724 = vpop.f32.mrf.mxu0
        %v2725 = vadd.f32 %v487, %v2724
        %2726 = vmatmul.f32.gmra.mxu0 %v2615
        %v2727 = vpop.f32.mrf.mxu0
        %v2728 = vadd.f32 %v487, %v2727
        %2729 = vmatmul.f32.gmra.mxu0 %v2618
        %v2730 = vpop.f32.mrf.mxu0
        %v2731 = vadd.f32 %v487, %v2730
        %2732 = vmatmul.f32.gmra.mxu0 %v2621
        %v2733 = vpop.f32.mrf.mxu0
        %v2734 = vadd.f32 %v487, %v2733
        %2735 = vmatmul.f32.gmra.mxu0 %v2624
        %v2736 = vpop.f32.mrf.mxu0
        %v2737 = vadd.f32 %v487, %v2736
        %2738 = vmatmul.f32.gmra.mxu0 %v2627
        %v2739 = vpop.f32.mrf.mxu0
        %v2740 = vadd.f32 %v487, %v2739
        %2741 = vmatmul.f32.gmra.mxu0 %v2630
        %v2742 = vpop.f32.mrf.mxu0
        %v2743 = vadd.f32 %v487, %v2742
        %2744 = vmatmul.f32.gmra.mxu0 %v2633
        %v2745 = vpop.f32.mrf.mxu0
        %v2746 = vadd.f32 %v487, %v2745
        %2747 = vmatmul.f32.gmra.mxu0 %v2636
        %v2748 = vpop.f32.mrf.mxu0
        %v2749 = vadd.f32 %v487, %v2748
        %2750 = vmatmul.f32.gmra.mxu0 %v2639
        %v2751 = vpop.f32.mrf.mxu0
        %v2752 = vadd.f32 %v487, %v2751
        %2753 = vmatmul.f32.gmra.mxu0 %v2642
        %v2754 = vpop.f32.mrf.mxu0
        %v2755 = vadd.f32 %v487, %v2754
        %2756 = vmatmul.f32.gmra.mxu0 %v2645
        %v2757 = vpop.f32.mrf.mxu0
        %v2758 = vadd.f32 %v487, %v2757
        %2759 = vmatmul.f32.gmra.mxu0 %v2648
        %v2760 = vpop.f32.mrf.mxu0
        %v2761 = vadd.f32 %v487, %v2760
        %2762 = vmatmul.f32.gmra.mxu0 %v2651
        %v2763 = vpop.f32.mrf.mxu0
        %v2764 = vadd.f32 %v487, %v2763
        %2765 = vmatmul.f32.gmra.mxu0 %v2654
        %v2766 = vpop.f32.mrf.mxu0
        %v2767 = vadd.f32 %v487, %v2766
        %2768 = vmatmul.f32.gmra.mxu0 %v2657
        %v2769 = vpop.f32.mrf.mxu0
        %v2770 = vadd.f32 %v487, %v2769
        %2771 = vmatmul.f32.gmra.mxu0 %v2660
        %v2772 = vpop.f32.mrf.mxu0
        %v2773 = vadd.f32 %v487, %v2772
        %2774 = vmatmul.f32.gmra.mxu0 %v2663
        %v2775 = vpop.f32.mrf.mxu0
        %v2776 = vadd.f32 %v487, %v2775
        %2777 = vmatmul.f32.gmra.mxu0 %v2666
        %v2778 = vpop.f32.mrf.mxu0
        %v2779 = vadd.f32 %v487, %v2778
        %2780 = vmatmul.f32.gmra.mxu0 %v2669
        %v2781 = vpop.f32.mrf.mxu0
        %v2782 = vadd.f32 %v487, %v2781
        %2783 = vmatmul.f32.gmra.mxu0 %v2672
        %v2784 = vpop.f32.mrf.mxu0
        %v2785 = vadd.f32 %v487, %v2784
        %2786 = vmatmul.f32.gmra.mxu0 %v2675
        %v2787 = vpop.f32.mrf.mxu0
        %v2788 = vadd.f32 %v487, %v2787
        %2789 = vmatmul.f32.gmra.mxu0 %v2678
        %v2790 = vpop.f32.mrf.mxu0
        %v2791 = vadd.f32 %v487, %v2790
        %2792 = vmatmul.f32.gmra.mxu0 %v2681
        %v2793 = vpop.f32.mrf.mxu0
        %v2794 = vadd.f32 %v487, %v2793
        %2795 = vmatmul.f32.gmra.mxu0 %v2684
        %v2796 = vpop.f32.mrf.mxu0
        %v2797 = vadd.f32 %v487, %v2796
        %2798 = vmatmul.f32.gmra.mxu0 %v2687
        %v2799 = vpop.f32.mrf.mxu0
        %v2800 = vadd.f32 %v487, %v2799
        %2801 = vmatmul.f32.gmra.mxu0 %v2690
        %v2802 = vpop.f32.mrf.mxu0
        %v2803 = vadd.f32 %v487, %v2802
        %2804 = vmatmul.f32.gmra.mxu0 %v2693
        %v2805 = vpop.f32.mrf.mxu0
        %v2806 = vadd.f32 %v487, %v2805
        %2807 = vmatmul.f32.gmra.mxu0 %v2696
        %v2808 = vpop.f32.mrf.mxu0
        %v2809 = vadd.f32 %v487, %v2808
        %2810 = vdwg.mxu0
        %v2811 = vmax.f32 %v2716, 0.0
        %v2812 = vmax.f32 %v2719, 0.0
        %v2813 = vmax.f32 %v2722, 0.0
        %v2814 = vmax.f32 %v2725, 0.0
        %v2815 = vmax.f32 %v2728, 0.0
        %v2816 = vmax.f32 %v2731, 0.0
        %v2817 = vmax.f32 %v2734, 0.0
        %v2818 = vmax.f32 %v2737, 0.0
        %v2819 = vmax.f32 %v2740, 0.0
        %v2820 = vmax.f32 %v2743, 0.0
        %v2821 = vmax.f32 %v2746, 0.0
        %v2822 = vmax.f32 %v2749, 0.0
        %v2823 = vmax.f32 %v2752, 0.0
        %v2824 = vmax.f32 %v2755, 0.0
        %v2825 = vmax.f32 %v2758, 0.0
        %v2826 = vmax.f32 %v2761, 0.0
        %v2827 = vmax.f32 %v2764, 0.0
        %v2828 = vmax.f32 %v2767, 0.0
        %v2829 = vmax.f32 %v2770, 0.0
        %v2830 = vmax.f32 %v2773, 0.0
        %v2831 = vmax.f32 %v2776, 0.0
        %v2832 = vmax.f32 %v2779, 0.0
        %v2833 = vmax.f32 %v2782, 0.0
        %v2834 = vmax.f32 %v2785, 0.0
        %v2835 = vmax.f32 %v2788, 0.0
        %v2836 = vmax.f32 %v2791, 0.0
        %v2837 = vmax.f32 %v2794, 0.0
        %v2838 = vmax.f32 %v2797, 0.0
        %v2839 = vmax.f32 %v2800, 0.0
        %v2840 = vmax.f32 %v2803, 0.0
        %v2841 = vmax.f32 %v2806, 0.0
        %v2842 = vmax.f32 %v2809, 0.0
        %2843 = vst.msk [vmem:[#allocation2] sm:$0xff] %vm384, %v2811
        %2844 = vst.msk [vmem:[#allocation2 + $0x8] sm:$0xff] %vm384, %v2812
        %2845 = vst.msk [vmem:[#allocation2 + $0x10] sm:$0xff] %vm384, %v2813
        %2846 = vst.msk [vmem:[#allocation2 + $0x18] sm:$0xff] %vm384, %v2814
        %2847 = vst.msk [vmem:[#allocation2 + $0x20] sm:$0xff] %vm384, %v2815
        %2848 = vst.msk [vmem:[#allocation2 + $0x28] sm:$0xff] %vm384, %v2816
        %2849 = vst.msk [vmem:[#allocation2 + $0x30] sm:$0xff] %vm384, %v2817
        %2850 = vst.msk [vmem:[#allocation2 + $0x38] sm:$0xff] %vm384, %v2818
        %2851 = vst.msk [vmem:[#allocation2 + $0x40] sm:$0xff] %vm384, %v2819
        %2852 = vst.msk [vmem:[#allocation2 + $0x48] sm:$0xff] %vm384, %v2820
        %2853 = vst.msk [vmem:[#allocation2 + $0x50] sm:$0xff] %vm384, %v2821
        %2854 = vst.msk [vmem:[#allocation2 + $0x58] sm:$0xff] %vm384, %v2822
        %2855 = vst.msk [vmem:[#allocation2 + $0x60] sm:$0xff] %vm384, %v2823
        %2856 = vst.msk [vmem:[#allocation2 + $0x68] sm:$0xff] %vm384, %v2824
        %2857 = vst.msk [vmem:[#allocation2 + $0x70] sm:$0xff] %vm384, %v2825
        %2858 = vst.msk [vmem:[#allocation2 + $0x78] sm:$0xff] %vm384, %v2826
        %2859 = vst.msk [vmem:[#allocation2 + $0x80] sm:$0xff] %vm384, %v2827
        %2860 = vst.msk [vmem:[#allocation2 + $0x88] sm:$0xff] %vm384, %v2828
        %2861 = vst.msk [vmem:[#allocation2 + $0x90] sm:$0xff] %vm384, %v2829
        %2862 = vst.msk [vmem:[#allocation2 + $0x98] sm:$0xff] %vm384, %v2830
        %2863 = vst.msk [vmem:[#allocation2 + $0xa0] sm:$0xff] %vm384, %v2831
        %2864 = vst.msk [vmem:[#allocation2 + $0xa8] sm:$0xff] %vm384, %v2832
        %2865 = vst.msk [vmem:[#allocation2 + $0xb0] sm:$0xff] %vm384, %v2833
        %2866 = vst.msk [vmem:[#allocation2 + $0xb8] sm:$0xff] %vm384, %v2834
        %2867 = vst.msk [vmem:[#allocation2 + $0xc0] sm:$0xff] %vm384, %v2835
        %2868 = vst.msk [vmem:[#allocation2 + $0xc8] sm:$0xff] %vm384, %v2836
        %2869 = vst.msk [vmem:[#allocation2 + $0xd0] sm:$0xff] %vm384, %v2837
        %2870 = vst.msk [vmem:[#allocation2 + $0xd8] sm:$0xff] %vm384, %v2838
        %2871 = vst.msk [vmem:[#allocation2 + $0xe0] sm:$0xff] %vm384, %v2839
        %2872 = vst.msk [vmem:[#allocation2 + $0xe8] sm:$0xff] %vm384, %v2840
        %2873 = vst.msk [vmem:[#allocation2 + $0xf0] sm:$0xff] %vm384, %v2841
        %2874 = vst.msk [vmem:[#allocation2 + $0xf8] sm:$0xff] %vm384, %v2842
        %v2875 = vld [vmem:[#allocation2] sm:$0xff]
        %v2876 = vld [vmem:[#allocation2 + $0x8] sm:$0xff]
        %v2877 = vld [vmem:[#allocation2 + $0x10] sm:$0xff]
        %v2878 = vld [vmem:[#allocation2 + $0x18] sm:$0xff]
        %v2879 = vld [vmem:[#allocation2 + $0x40] sm:$0xff]
        %v2880 = vld [vmem:[#allocation2 + $0x48] sm:$0xff]
        %v2881 = vld [vmem:[#allocation2 + $0x50] sm:$0xff]
        %v2882 = vld [vmem:[#allocation2 + $0x58] sm:$0xff]
        %v2883 = vld [vmem:[#allocation2 + $0x80] sm:$0xff]
        %v2884 = vld [vmem:[#allocation2 + $0x88] sm:$0xff]
        %v2885 = vld [vmem:[#allocation2 + $0x90] sm:$0xff]
        %v2886 = vld [vmem:[#allocation2 + $0x98] sm:$0xff]
        %v2887 = vld [vmem:[#allocation2 + $0xc0] sm:$0xff]
        %v2888 = vld [vmem:[#allocation2 + $0xc8] sm:$0xff]
        %v2889 = vld [vmem:[#allocation2 + $0xd0] sm:$0xff]
        %v2890 = vld [vmem:[#allocation2 + $0xd8] sm:$0xff]
        %v2891 = vld [vmem:[%s783] sm:$0xff]
        %v2892 = vld [vmem:[%s783 + $0x8] sm:$0xff]
        %v2893 = vld [vmem:[%s783 + $0x10] sm:$0xff]
        %v2894 = vld [vmem:[%s783 + $0x18] sm:$0xff]
        %v2895 = vld [vmem:[%s783 + $0x40] sm:$0xff]
        %v2896 = vld [vmem:[%s783 + $0x48] sm:$0xff]
        %v2897 = vld [vmem:[%s783 + $0x50] sm:$0xff]
        %v2898 = vld [vmem:[%s783 + $0x58] sm:$0xff]
        %v2899 = vld [vmem:[%s783 + $0x80] sm:$0xff]
        %v2900 = vld [vmem:[%s783 + $0x88] sm:$0xff]
        %v2901 = vld [vmem:[%s783 + $0x90] sm:$0xff]
        %v2902 = vld [vmem:[%s783 + $0x98] sm:$0xff]
        %v2903 = vld [vmem:[%s783 + $0xc0] sm:$0xff]
        %v2904 = vld [vmem:[%s783 + $0xc8] sm:$0xff]
        %v2905 = vld [vmem:[%s783 + $0xd0] sm:$0xff]
        %v2906 = vld [vmem:[%s783 + $0xd8] sm:$0xff]
        %v2907 = vmax.f32 %v2875, %v2891
        %v2908 = vmax.f32 %v2876, %v2892
        %v2909 = vmax.f32 %v2877, %v2893
        %v2910 = vmax.f32 %v2878, %v2894
        %v2911 = vmax.f32 %v2879, %v2895
        %v2912 = vmax.f32 %v2880, %v2896
        %v2913 = vmax.f32 %v2881, %v2897
        %v2914 = vmax.f32 %v2882, %v2898
        %v2915 = vmax.f32 %v2883, %v2899
        %v2916 = vmax.f32 %v2884, %v2900
        %v2917 = vmax.f32 %v2885, %v2901
        %v2918 = vmax.f32 %v2886, %v2902
        %v2919 = vmax.f32 %v2887, %v2903
        %v2920 = vmax.f32 %v2888, %v2904
        %v2921 = vmax.f32 %v2889, %v2905
        %v2922 = vmax.f32 %v2890, %v2906
        %v2939 = vrot.slane %v2907, 2
        %v2940 = vrot.slane %v2907, 4
        %v2941 = vrot.slane %v2907, 6
        %v2942 = vrot.slane %v2908, 2
        %v2943 = vrot.slane %v2908, 4
        %v2944 = vrot.slane %v2908, 6
        %v2945 = vrot.slane %v2909, 2
        %v2946 = vrot.slane %v2909, 4
        %v2947 = vrot.slane %v2909, 6
        %v2948 = vrot.slane %v2910, 2
        %v2949 = vrot.slane %v2910, 4
        %v2950 = vrot.slane %v2910, 6
        %v2951 = vrot.slane %v2911, 2
        %v2952 = vrot.slane %v2911, 4
        %v2953 = vrot.slane %v2911, 6
        %v2954 = vrot.slane %v2912, 2
        %v2955 = vrot.slane %v2912, 4
        %v2956 = vrot.slane %v2912, 6
        %v2957 = vrot.slane %v2913, 2
        %v2958 = vrot.slane %v2913, 4
        %v2959 = vrot.slane %v2913, 6
        %v2960 = vrot.slane %v2914, 2
        %v2961 = vrot.slane %v2914, 4
        %v2962 = vrot.slane %v2914, 6
        %v2963 = vrot.slane %v2915, 2
        %v2964 = vrot.slane %v2915, 4
        %v2965 = vrot.slane %v2915, 6
        %v2966 = vrot.slane %v2916, 2
        %v2967 = vrot.slane %v2916, 4
        %v2968 = vrot.slane %v2916, 6
        %v2969 = vrot.slane %v2917, 2
        %v2970 = vrot.slane %v2917, 4
        %v2971 = vrot.slane %v2917, 6
        %v2972 = vrot.slane %v2918, 2
        %v2973 = vrot.slane %v2918, 4
        %v2974 = vrot.slane %v2918, 6
        %v2975 = vrot.slane %v2919, 2
        %v2976 = vrot.slane %v2919, 4
        %v2977 = vrot.slane %v2919, 6
        %v2978 = vrot.slane %v2920, 2
        %v2979 = vrot.slane %v2920, 4
        %v2980 = vrot.slane %v2920, 6
        %v2981 = vrot.slane %v2921, 2
        %v2982 = vrot.slane %v2921, 4
        %v2983 = vrot.slane %v2921, 6
        %v2984 = vrot.slane %v2922, 2
        %v2985 = vrot.slane %v2922, 4
        %v2986 = vrot.slane %v2922, 6
        %v3035 = vsel %vm928, %v2907, -inf
        %v3036 = vrot.slane %v3035, 4
        %v3037 = vmax.f32 %v3035, %v3036
        %v3038 = vrot.slane %v3037, 2
        %v3039 = vmax.f32 %v3037, %v3038
        %v3040 = vrot.slane %v3039, 1
        %v3041 = vmax.f32 %v3039, %v3040
        %v3042 = vsel %vm928, %v2939, -inf
        %v3043 = vrot.slane %v3042, 4
        %v3044 = vmax.f32 %v3042, %v3043
        %v3045 = vrot.slane %v3044, 2
        %v3046 = vmax.f32 %v3044, %v3045
        %v3047 = vrot.slane %v3046, 1
        %v3048 = vmax.f32 %v3046, %v3047
        %v3049 = vsel %vm928, %v2940, -inf
        %v3050 = vrot.slane %v3049, 4
        %v3051 = vmax.f32 %v3049, %v3050
        %v3052 = vrot.slane %v3051, 2
        %v3053 = vmax.f32 %v3051, %v3052
        %v3054 = vrot.slane %v3053, 1
        %v3055 = vmax.f32 %v3053, %v3054
        %v3056 = vsel %vm928, %v2941, -inf
        %v3057 = vrot.slane %v3056, 4
        %v3058 = vmax.f32 %v3056, %v3057
        %v3059 = vrot.slane %v3058, 2
        %v3060 = vmax.f32 %v3058, %v3059
        %v3061 = vrot.slane %v3060, 1
        %v3062 = vmax.f32 %v3060, %v3061
        %v3063 = vsel %vm928, %v2908, -inf
        %v3064 = vrot.slane %v3063, 4
        %v3065 = vmax.f32 %v3063, %v3064
        %v3066 = vrot.slane %v3065, 2
        %v3067 = vmax.f32 %v3065, %v3066
        %v3068 = vrot.slane %v3067, 1
        %v3069 = vmax.f32 %v3067, %v3068
        %v3070 = vsel %vm928, %v2942, -inf
        %v3071 = vrot.slane %v3070, 4
        %v3072 = vmax.f32 %v3070, %v3071
        %v3073 = vrot.slane %v3072, 2
        %v3074 = vmax.f32 %v3072, %v3073
        %v3075 = vrot.slane %v3074, 1
        %v3076 = vmax.f32 %v3074, %v3075
        %v3077 = vsel %vm928, %v2943, -inf
        %v3078 = vrot.slane %v3077, 4
        %v3079 = vmax.f32 %v3077, %v3078
        %v3080 = vrot.slane %v3079, 2
        %v3081 = vmax.f32 %v3079, %v3080
        %v3082 = vrot.slane %v3081, 1
        %v3083 = vmax.f32 %v3081, %v3082
        %v3084 = vsel %vm928, %v2944, -inf
        %v3085 = vrot.slane %v3084, 4
        %v3086 = vmax.f32 %v3084, %v3085
        %v3087 = vrot.slane %v3086, 2
        %v3088 = vmax.f32 %v3086, %v3087
        %v3089 = vrot.slane %v3088, 1
        %v3090 = vmax.f32 %v3088, %v3089
        %v3091 = vsel %vm928, %v2909, -inf
        %v3092 = vrot.slane %v3091, 4
        %v3093 = vmax.f32 %v3091, %v3092
        %v3094 = vrot.slane %v3093, 2
        %v3095 = vmax.f32 %v3093, %v3094
        %v3096 = vrot.slane %v3095, 1
        %v3097 = vmax.f32 %v3095, %v3096
        %v3098 = vsel %vm928, %v2945, -inf
        %v3099 = vrot.slane %v3098, 4
        %v3100 = vmax.f32 %v3098, %v3099
        %v3101 = vrot.slane %v3100, 2
        %v3102 = vmax.f32 %v3100, %v3101
        %v3103 = vrot.slane %v3102, 1
        %v3104 = vmax.f32 %v3102, %v3103
        %v3105 = vsel %vm928, %v2946, -inf
        %v3106 = vrot.slane %v3105, 4
        %v3107 = vmax.f32 %v3105, %v3106
        %v3108 = vrot.slane %v3107, 2
        %v3109 = vmax.f32 %v3107, %v3108
        %v3110 = vrot.slane %v3109, 1
        %v3111 = vmax.f32 %v3109, %v3110
        %v3112 = vsel %vm928, %v2947, -inf
        %v3113 = vrot.slane %v3112, 4
        %v3114 = vmax.f32 %v3112, %v3113
        %v3115 = vrot.slane %v3114, 2
        %v3116 = vmax.f32 %v3114, %v3115
        %v3117 = vrot.slane %v3116, 1
        %v3118 = vmax.f32 %v3116, %v3117
        %v3119 = vsel %vm928, %v2910, -inf
        %v3120 = vrot.slane %v3119, 4
        %v3121 = vmax.f32 %v3119, %v3120
        %v3122 = vrot.slane %v3121, 2
        %v3123 = vmax.f32 %v3121, %v3122
        %v3124 = vrot.slane %v3123, 1
        %v3125 = vmax.f32 %v3123, %v3124
        %v3126 = vsel %vm928, %v2948, -inf
        %v3127 = vrot.slane %v3126, 4
        %v3128 = vmax.f32 %v3126, %v3127
        %v3129 = vrot.slane %v3128, 2
        %v3130 = vmax.f32 %v3128, %v3129
        %v3131 = vrot.slane %v3130, 1
        %v3132 = vmax.f32 %v3130, %v3131
        %v3133 = vsel %vm928, %v2949, -inf
        %v3134 = vrot.slane %v3133, 4
        %v3135 = vmax.f32 %v3133, %v3134
        %v3136 = vrot.slane %v3135, 2
        %v3137 = vmax.f32 %v3135, %v3136
        %v3138 = vrot.slane %v3137, 1
        %v3139 = vmax.f32 %v3137, %v3138
        %v3140 = vsel %vm928, %v2950, -inf
        %v3141 = vrot.slane %v3140, 4
        %v3142 = vmax.f32 %v3140, %v3141
        %v3143 = vrot.slane %v3142, 2
        %v3144 = vmax.f32 %v3142, %v3143
        %v3145 = vrot.slane %v3144, 1
        %v3146 = vmax.f32 %v3144, %v3145
        %v3147 = vsel %vm928, %v2911, -inf
        %v3148 = vrot.slane %v3147, 4
        %v3149 = vmax.f32 %v3147, %v3148
        %v3150 = vrot.slane %v3149, 2
        %v3151 = vmax.f32 %v3149, %v3150
        %v3152 = vrot.slane %v3151, 1
        %v3153 = vmax.f32 %v3151, %v3152
        %v3154 = vsel %vm928, %v2951, -inf
        %v3155 = vrot.slane %v3154, 4
        %v3156 = vmax.f32 %v3154, %v3155
        %v3157 = vrot.slane %v3156, 2
        %v3158 = vmax.f32 %v3156, %v3157
        %v3159 = vrot.slane %v3158, 1
        %v3160 = vmax.f32 %v3158, %v3159
        %v3161 = vsel %vm928, %v2952, -inf
        %v3162 = vrot.slane %v3161, 4
        %v3163 = vmax.f32 %v3161, %v3162
        %v3164 = vrot.slane %v3163, 2
        %v3165 = vmax.f32 %v3163, %v3164
        %v3166 = vrot.slane %v3165, 1
        %v3167 = vmax.f32 %v3165, %v3166
        %v3168 = vsel %vm928, %v2953, -inf
        %v3169 = vrot.slane %v3168, 4
        %v3170 = vmax.f32 %v3168, %v3169
        %v3171 = vrot.slane %v3170, 2
        %v3172 = vmax.f32 %v3170, %v3171
        %v3173 = vrot.slane %v3172, 1
        %v3174 = vmax.f32 %v3172, %v3173
        %v3175 = vsel %vm928, %v2912, -inf
        %v3176 = vrot.slane %v3175, 4
        %v3177 = vmax.f32 %v3175, %v3176
        %v3178 = vrot.slane %v3177, 2
        %v3179 = vmax.f32 %v3177, %v3178
        %v3180 = vrot.slane %v3179, 1
        %v3181 = vmax.f32 %v3179, %v3180
        %v3182 = vsel %vm928, %v2954, -inf
        %v3183 = vrot.slane %v3182, 4
        %v3184 = vmax.f32 %v3182, %v3183
        %v3185 = vrot.slane %v3184, 2
        %v3186 = vmax.f32 %v3184, %v3185
        %v3187 = vrot.slane %v3186, 1
        %v3188 = vmax.f32 %v3186, %v3187
        %v3189 = vsel %vm928, %v2955, -inf
        %v3190 = vrot.slane %v3189, 4
        %v3191 = vmax.f32 %v3189, %v3190
        %v3192 = vrot.slane %v3191, 2
        %v3193 = vmax.f32 %v3191, %v3192
        %v3194 = vrot.slane %v3193, 1
        %v3195 = vmax.f32 %v3193, %v3194
        %v3196 = vsel %vm928, %v2956, -inf
        %v3197 = vrot.slane %v3196, 4
        %v3198 = vmax.f32 %v3196, %v3197
        %v3199 = vrot.slane %v3198, 2
        %v3200 = vmax.f32 %v3198, %v3199
        %v3201 = vrot.slane %v3200, 1
        %v3202 = vmax.f32 %v3200, %v3201
        %v3203 = vsel %vm928, %v2913, -inf
        %v3204 = vrot.slane %v3203, 4
        %v3205 = vmax.f32 %v3203, %v3204
        %v3206 = vrot.slane %v3205, 2
        %v3207 = vmax.f32 %v3205, %v3206
        %v3208 = vrot.slane %v3207, 1
        %v3209 = vmax.f32 %v3207, %v3208
        %v3210 = vsel %vm928, %v2957, -inf
        %v3211 = vrot.slane %v3210, 4
        %v3212 = vmax.f32 %v3210, %v3211
        %v3213 = vrot.slane %v3212, 2
        %v3214 = vmax.f32 %v3212, %v3213
        %v3215 = vrot.slane %v3214, 1
        %v3216 = vmax.f32 %v3214, %v3215
        %v3217 = vsel %vm928, %v2958, -inf
        %v3218 = vrot.slane %v3217, 4
        %v3219 = vmax.f32 %v3217, %v3218
        %v3220 = vrot.slane %v3219, 2
        %v3221 = vmax.f32 %v3219, %v3220
        %v3222 = vrot.slane %v3221, 1
        %v3223 = vmax.f32 %v3221, %v3222
        %v3224 = vsel %vm928, %v2959, -inf
        %v3225 = vrot.slane %v3224, 4
        %v3226 = vmax.f32 %v3224, %v3225
        %v3227 = vrot.slane %v3226, 2
        %v3228 = vmax.f32 %v3226, %v3227
        %v3229 = vrot.slane %v3228, 1
        %v3230 = vmax.f32 %v3228, %v3229
        %v3231 = vsel %vm928, %v2914, -inf
        %v3232 = vrot.slane %v3231, 4
        %v3233 = vmax.f32 %v3231, %v3232
        %v3234 = vrot.slane %v3233, 2
        %v3235 = vmax.f32 %v3233, %v3234
        %v3236 = vrot.slane %v3235, 1
        %v3237 = vmax.f32 %v3235, %v3236
        %v3238 = vsel %vm928, %v2960, -inf
        %v3239 = vrot.slane %v3238, 4
        %v3240 = vmax.f32 %v3238, %v3239
        %v3241 = vrot.slane %v3240, 2
        %v3242 = vmax.f32 %v3240, %v3241
        %v3243 = vrot.slane %v3242, 1
        %v3244 = vmax.f32 %v3242, %v3243
        %v3245 = vsel %vm928, %v2961, -inf
        %v3246 = vrot.slane %v3245, 4
        %v3247 = vmax.f32 %v3245, %v3246
        %v3248 = vrot.slane %v3247, 2
        %v3249 = vmax.f32 %v3247, %v3248
        %v3250 = vrot.slane %v3249, 1
        %v3251 = vmax.f32 %v3249, %v3250
        %v3252 = vsel %vm928, %v2962, -inf
        %v3253 = vrot.slane %v3252, 4
        %v3254 = vmax.f32 %v3252, %v3253
        %v3255 = vrot.slane %v3254, 2
        %v3256 = vmax.f32 %v3254, %v3255
        %v3257 = vrot.slane %v3256, 1
        %v3258 = vmax.f32 %v3256, %v3257
        %v3259 = vsel %vm928, %v2915, -inf
        %v3260 = vrot.slane %v3259, 4
        %v3261 = vmax.f32 %v3259, %v3260
        %v3262 = vrot.slane %v3261, 2
        %v3263 = vmax.f32 %v3261, %v3262
        %v3264 = vrot.slane %v3263, 1
        %v3265 = vmax.f32 %v3263, %v3264
        %v3266 = vsel %vm928, %v2963, -inf
        %v3267 = vrot.slane %v3266, 4
        %v3268 = vmax.f32 %v3266, %v3267
        %v3269 = vrot.slane %v3268, 2
        %v3270 = vmax.f32 %v3268, %v3269
        %v3271 = vrot.slane %v3270, 1
        %v3272 = vmax.f32 %v3270, %v3271
        %v3273 = vsel %vm928, %v2964, -inf
        %v3274 = vrot.slane %v3273, 4
        %v3275 = vmax.f32 %v3273, %v3274
        %v3276 = vrot.slane %v3275, 2
        %v3277 = vmax.f32 %v3275, %v3276
        %v3278 = vrot.slane %v3277, 1
        %v3279 = vmax.f32 %v3277, %v3278
        %v3280 = vsel %vm928, %v2965, -inf
        %v3281 = vrot.slane %v3280, 4
        %v3282 = vmax.f32 %v3280, %v3281
        %v3283 = vrot.slane %v3282, 2
        %v3284 = vmax.f32 %v3282, %v3283
        %v3285 = vrot.slane %v3284, 1
        %v3286 = vmax.f32 %v3284, %v3285
        %v3287 = vsel %vm928, %v2916, -inf
        %v3288 = vrot.slane %v3287, 4
        %v3289 = vmax.f32 %v3287, %v3288
        %v3290 = vrot.slane %v3289, 2
        %v3291 = vmax.f32 %v3289, %v3290
        %v3292 = vrot.slane %v3291, 1
        %v3293 = vmax.f32 %v3291, %v3292
        %v3294 = vsel %vm928, %v2966, -inf
        %v3295 = vrot.slane %v3294, 4
        %v3296 = vmax.f32 %v3294, %v3295
        %v3297 = vrot.slane %v3296, 2
        %v3298 = vmax.f32 %v3296, %v3297
        %v3299 = vrot.slane %v3298, 1
        %v3300 = vmax.f32 %v3298, %v3299
        %v3301 = vsel %vm928, %v2967, -inf
        %v3302 = vrot.slane %v3301, 4
        %v3303 = vmax.f32 %v3301, %v3302
        %v3304 = vrot.slane %v3303, 2
        %v3305 = vmax.f32 %v3303, %v3304
        %v3306 = vrot.slane %v3305, 1
        %v3307 = vmax.f32 %v3305, %v3306
        %v3308 = vsel %vm928, %v2968, -inf
        %v3309 = vrot.slane %v3308, 4
        %v3310 = vmax.f32 %v3308, %v3309
        %v3311 = vrot.slane %v3310, 2
        %v3312 = vmax.f32 %v3310, %v3311
        %v3313 = vrot.slane %v3312, 1
        %v3314 = vmax.f32 %v3312, %v3313
        %v3315 = vsel %vm928, %v2917, -inf
        %v3316 = vrot.slane %v3315, 4
        %v3317 = vmax.f32 %v3315, %v3316
        %v3318 = vrot.slane %v3317, 2
        %v3319 = vmax.f32 %v3317, %v3318
        %v3320 = vrot.slane %v3319, 1
        %v3321 = vmax.f32 %v3319, %v3320
        %v3322 = vsel %vm928, %v2969, -inf
        %v3323 = vrot.slane %v3322, 4
        %v3324 = vmax.f32 %v3322, %v3323
        %v3325 = vrot.slane %v3324, 2
        %v3326 = vmax.f32 %v3324, %v3325
        %v3327 = vrot.slane %v3326, 1
        %v3328 = vmax.f32 %v3326, %v3327
        %v3329 = vsel %vm928, %v2970, -inf
        %v3330 = vrot.slane %v3329, 4
        %v3331 = vmax.f32 %v3329, %v3330
        %v3332 = vrot.slane %v3331, 2
        %v3333 = vmax.f32 %v3331, %v3332
        %v3334 = vrot.slane %v3333, 1
        %v3335 = vmax.f32 %v3333, %v3334
        %v3336 = vsel %vm928, %v2971, -inf
        %v3337 = vrot.slane %v3336, 4
        %v3338 = vmax.f32 %v3336, %v3337
        %v3339 = vrot.slane %v3338, 2
        %v3340 = vmax.f32 %v3338, %v3339
        %v3341 = vrot.slane %v3340, 1
        %v3342 = vmax.f32 %v3340, %v3341
        %v3343 = vsel %vm928, %v2918, -inf
        %v3344 = vrot.slane %v3343, 4
        %v3345 = vmax.f32 %v3343, %v3344
        %v3346 = vrot.slane %v3345, 2
        %v3347 = vmax.f32 %v3345, %v3346
        %v3348 = vrot.slane %v3347, 1
        %v3349 = vmax.f32 %v3347, %v3348
        %v3350 = vsel %vm928, %v2972, -inf
        %v3351 = vrot.slane %v3350, 4
        %v3352 = vmax.f32 %v3350, %v3351
        %v3353 = vrot.slane %v3352, 2
        %v3354 = vmax.f32 %v3352, %v3353
        %v3355 = vrot.slane %v3354, 1
        %v3356 = vmax.f32 %v3354, %v3355
        %v3357 = vsel %vm928, %v2973, -inf
        %v3358 = vrot.slane %v3357, 4
        %v3359 = vmax.f32 %v3357, %v3358
        %v3360 = vrot.slane %v3359, 2
        %v3361 = vmax.f32 %v3359, %v3360
        %v3362 = vrot.slane %v3361, 1
        %v3363 = vmax.f32 %v3361, %v3362
        %v3364 = vsel %vm928, %v2974, -inf
        %v3365 = vrot.slane %v3364, 4
        %v3366 = vmax.f32 %v3364, %v3365
        %v3367 = vrot.slane %v3366, 2
        %v3368 = vmax.f32 %v3366, %v3367
        %v3369 = vrot.slane %v3368, 1
        %v3370 = vmax.f32 %v3368, %v3369
        %v3371 = vsel %vm928, %v2919, -inf
        %v3372 = vrot.slane %v3371, 4
        %v3373 = vmax.f32 %v3371, %v3372
        %v3374 = vrot.slane %v3373, 2
        %v3375 = vmax.f32 %v3373, %v3374
        %v3376 = vrot.slane %v3375, 1
        %v3377 = vmax.f32 %v3375, %v3376
        %v3378 = vsel %vm928, %v2975, -inf
        %v3379 = vrot.slane %v3378, 4
        %v3380 = vmax.f32 %v3378, %v3379
        %v3381 = vrot.slane %v3380, 2
        %v3382 = vmax.f32 %v3380, %v3381
        %v3383 = vrot.slane %v3382, 1
        %v3384 = vmax.f32 %v3382, %v3383
        %v3385 = vsel %vm928, %v2976, -inf
        %v3386 = vrot.slane %v3385, 4
        %v3387 = vmax.f32 %v3385, %v3386
        %v3388 = vrot.slane %v3387, 2
        %v3389 = vmax.f32 %v3387, %v3388
        %v3390 = vrot.slane %v3389, 1
        %v3391 = vmax.f32 %v3389, %v3390
        %v3392 = vsel %vm928, %v2977, -inf
        %v3393 = vrot.slane %v3392, 4
        %v3394 = vmax.f32 %v3392, %v3393
        %v3395 = vrot.slane %v3394, 2
        %v3396 = vmax.f32 %v3394, %v3395
        %v3397 = vrot.slane %v3396, 1
        %v3398 = vmax.f32 %v3396, %v3397
        %v3399 = vsel %vm928, %v2920, -inf
        %v3400 = vrot.slane %v3399, 4
        %v3401 = vmax.f32 %v3399, %v3400
        %v3402 = vrot.slane %v3401, 2
        %v3403 = vmax.f32 %v3401, %v3402
        %v3404 = vrot.slane %v3403, 1
        %v3405 = vmax.f32 %v3403, %v3404
        %v3406 = vsel %vm928, %v2978, -inf
        %v3407 = vrot.slane %v3406, 4
        %v3408 = vmax.f32 %v3406, %v3407
        %v3409 = vrot.slane %v3408, 2
        %v3410 = vmax.f32 %v3408, %v3409
        %v3411 = vrot.slane %v3410, 1
        %v3412 = vmax.f32 %v3410, %v3411
        %v3413 = vsel %vm928, %v2979, -inf
        %v3414 = vrot.slane %v3413, 4
        %v3415 = vmax.f32 %v3413, %v3414
        %v3416 = vrot.slane %v3415, 2
        %v3417 = vmax.f32 %v3415, %v3416
        %v3418 = vrot.slane %v3417, 1
        %v3419 = vmax.f32 %v3417, %v3418
        %v3420 = vsel %vm928, %v2980, -inf
        %v3421 = vrot.slane %v3420, 4
        %v3422 = vmax.f32 %v3420, %v3421
        %v3423 = vrot.slane %v3422, 2
        %v3424 = vmax.f32 %v3422, %v3423
        %v3425 = vrot.slane %v3424, 1
        %v3426 = vmax.f32 %v3424, %v3425
        %v3427 = vsel %vm928, %v2921, -inf
        %v3428 = vrot.slane %v3427, 4
        %v3429 = vmax.f32 %v3427, %v3428
        %v3430 = vrot.slane %v3429, 2
        %v3431 = vmax.f32 %v3429, %v3430
        %v3432 = vrot.slane %v3431, 1
        %v3433 = vmax.f32 %v3431, %v3432
        %v3434 = vsel %vm928, %v2981, -inf
        %v3435 = vrot.slane %v3434, 4
        %v3436 = vmax.f32 %v3434, %v3435
        %v3437 = vrot.slane %v3436, 2
        %v3438 = vmax.f32 %v3436, %v3437
        %v3439 = vrot.slane %v3438, 1
        %v3440 = vmax.f32 %v3438, %v3439
        %v3441 = vsel %vm928, %v2982, -inf
        %v3442 = vrot.slane %v3441, 4
        %v3443 = vmax.f32 %v3441, %v3442
        %v3444 = vrot.slane %v3443, 2
        %v3445 = vmax.f32 %v3443, %v3444
        %v3446 = vrot.slane %v3445, 1
        %v3447 = vmax.f32 %v3445, %v3446
        %v3448 = vsel %vm928, %v2983, -inf
        %v3449 = vrot.slane %v3448, 4
        %v3450 = vmax.f32 %v3448, %v3449
        %v3451 = vrot.slane %v3450, 2
        %v3452 = vmax.f32 %v3450, %v3451
        %v3453 = vrot.slane %v3452, 1
        %v3454 = vmax.f32 %v3452, %v3453
        %v3455 = vsel %vm928, %v2922, -inf
        %v3456 = vrot.slane %v3455, 4
        %v3457 = vmax.f32 %v3455, %v3456
        %v3458 = vrot.slane %v3457, 2
        %v3459 = vmax.f32 %v3457, %v3458
        %v3460 = vrot.slane %v3459, 1
        %v3461 = vmax.f32 %v3459, %v3460
        %v3462 = vsel %vm928, %v2984, -inf
        %v3463 = vrot.slane %v3462, 4
        %v3464 = vmax.f32 %v3462, %v3463
        %v3465 = vrot.slane %v3464, 2
        %v3466 = vmax.f32 %v3464, %v3465
        %v3467 = vrot.slane %v3466, 1
        %v3468 = vmax.f32 %v3466, %v3467
        %v3469 = vsel %vm928, %v2985, -inf
        %v3470 = vrot.slane %v3469, 4
        %v3471 = vmax.f32 %v3469, %v3470
        %v3472 = vrot.slane %v3471, 2
        %v3473 = vmax.f32 %v3471, %v3472
        %v3474 = vrot.slane %v3473, 1
        %v3475 = vmax.f32 %v3473, %v3474
        %v3476 = vsel %vm928, %v2986, -inf
        %v3477 = vrot.slane %v3476, 4
        %v3478 = vmax.f32 %v3476, %v3477
        %v3479 = vrot.slane %v3478, 2
        %v3480 = vmax.f32 %v3478, %v3479
        %v3481 = vrot.slane %v3480, 1
        %v3482 = vmax.f32 %v3480, %v3481
        %v3547 = vsel %vm1441, %v3048, %v3041
        %v3548 = vsel %vm1443, %v3055, %v3547
        %v3549 = vsel %vm1445, %v3062, %v3548
        %v3550 = vsel %vm1447, %v3069, %v3549
        %v3551 = vsel %vm1449, %v3076, %v3550
        %v3552 = vsel %vm1451, %v3083, %v3551
        %v3553 = vsel %vm1453, %v3090, %v3552
        %v3554 = vsel %vm1441, %v3104, %v3097
        %v3555 = vsel %vm1443, %v3111, %v3554
        %v3556 = vsel %vm1445, %v3118, %v3555
        %v3557 = vsel %vm1447, %v3125, %v3556
        %v3558 = vsel %vm1449, %v3132, %v3557
        %v3559 = vsel %vm1451, %v3139, %v3558
        %v3560 = vsel %vm1453, %v3146, %v3559
        %v3561 = vsel %vm1441, %v3160, %v3153
        %v3562 = vsel %vm1443, %v3167, %v3561
        %v3563 = vsel %vm1445, %v3174, %v3562
        %v3564 = vsel %vm1447, %v3181, %v3563
        %v3565 = vsel %vm1449, %v3188, %v3564
        %v3566 = vsel %vm1451, %v3195, %v3565
        %v3567 = vsel %vm1453, %v3202, %v3566
        %v3568 = vsel %vm1441, %v3216, %v3209
        %v3569 = vsel %vm1443, %v3223, %v3568
        %v3570 = vsel %vm1445, %v3230, %v3569
        %v3571 = vsel %vm1447, %v3237, %v3570
        %v3572 = vsel %vm1449, %v3244, %v3571
        %v3573 = vsel %vm1451, %v3251, %v3572
        %v3574 = vsel %vm1453, %v3258, %v3573
        %v3575 = vsel %vm1441, %v3272, %v3265
        %v3576 = vsel %vm1443, %v3279, %v3575
        %v3577 = vsel %vm1445, %v3286, %v3576
        %v3578 = vsel %vm1447, %v3293, %v3577
        %v3579 = vsel %vm1449, %v3300, %v3578
        %v3580 = vsel %vm1451, %v3307, %v3579
        %v3581 = vsel %vm1453, %v3314, %v3580
        %v3582 = vsel %vm1441, %v3328, %v3321
        %v3583 = vsel %vm1443, %v3335, %v3582
        %v3584 = vsel %vm1445, %v3342, %v3583
        %v3585 = vsel %vm1447, %v3349, %v3584
        %v3586 = vsel %vm1449, %v3356, %v3585
        %v3587 = vsel %vm1451, %v3363, %v3586
        %v3588 = vsel %vm1453, %v3370, %v3587
        %v3589 = vsel %vm1441, %v3384, %v3377
        %v3590 = vsel %vm1443, %v3391, %v3589
        %v3591 = vsel %vm1445, %v3398, %v3590
        %v3592 = vsel %vm1447, %v3405, %v3591
        %v3593 = vsel %vm1449, %v3412, %v3592
        %v3594 = vsel %vm1451, %v3419, %v3593
        %v3595 = vsel %vm1453, %v3426, %v3594
        %v3596 = vsel %vm1441, %v3440, %v3433
        %v3597 = vsel %vm1443, %v3447, %v3596
        %v3598 = vsel %vm1445, %v3454, %v3597
        %v3599 = vsel %vm1447, %v3461, %v3598
        %v3600 = vsel %vm1449, %v3468, %v3599
        %v3601 = vsel %vm1451, %v3475, %v3600
        %v3602 = vsel %vm1453, %v3482, %v3601
        %s3611 = scalar_lea.vmem [#allocation3], 288
        %3612 = vst.msk [vmem:[%s3611 + $0x8] sm:$0xff] %vm384, %v3553
        %3613 = vst.msk [vmem:[%s3611 + $0x10] sm:$0xff] %vm384, %v3560
        %3614 = vst.msk [vmem:[%s3611 + $0x28] sm:$0xff] %vm384, %v3567
        %3615 = vst.msk [vmem:[%s3611 + $0x30] sm:$0xff] %vm384, %v3574
        %3616 = vst.msk [vmem:[%s3611 + $0x48] sm:$0xff] %vm384, %v3581
        %3617 = vst.msk [vmem:[%s3611 + $0x50] sm:$0xff] %vm384, %v3588
        %3618 = vst.msk [vmem:[%s3611 + $0x68] sm:$0xff] %vm384, %v3595
        %3619 = vst.msk [vmem:[%s3611 + $0x70] sm:$0xff] %vm384, %v3602
        %v3620 = vld [vmem:[%s383 + $0x300] sm:$0xff]
        %v3621 = vld [vmem:[%s383 + $0x308] sm:$0xff]
        %v3622 = vld [vmem:[%s383 + $0x310] sm:$0xff]
        %v3623 = vld [vmem:[%s383 + $0x318] sm:$0xff]
        %v3624 = vld [vmem:[%s383 + $0x320] sm:$0xff]
        %v3625 = vld [vmem:[%s383 + $0x328] sm:$0xff]
        %v3626 = vld [vmem:[%s383 + $0x330] sm:$0xff]
        %v3627 = vld [vmem:[%s383 + $0x338] sm:$0xff]
        %v3628 = vld [vmem:[%s383 + $0x340] sm:$0xff]
        %v3629 = vld [vmem:[%s383 + $0x348] sm:$0xff]
        %v3630 = vld [vmem:[%s383 + $0x350] sm:$0xff]
        %v3631 = vld [vmem:[%s383 + $0x358] sm:$0xff]
        %v3632 = vld [vmem:[%s383 + $0x360] sm:$0xff]
        %v3633 = vld [vmem:[%s383 + $0x368] sm:$0xff]
        %v3634 = vld [vmem:[%s383 + $0x370] sm:$0xff]
        %v3635 = vld [vmem:[%s383 + $0x378] sm:$0xff]
        %v3636 = vld [vmem:[%s383 + $0x380] sm:$0xff]
        %v3637 = vld [vmem:[%s383 + $0x388] sm:$0xff]
        %v3638 = vld [vmem:[%s383 + $0x390] sm:$0xff]
        %v3639 = vld [vmem:[%s383 + $0x398] sm:$0xff]
        %v3640 = vld [vmem:[%s383 + $0x3a0] sm:$0xff]
        %v3641 = vld [vmem:[%s383 + $0x3a8] sm:$0xff]
        %v3642 = vld [vmem:[%s383 + $0x3b0] sm:$0xff]
        %v3643 = vld [vmem:[%s383 + $0x3b8] sm:$0xff]
        %v3644 = vld [vmem:[%s383 + $0x3c0] sm:$0xff]
        %v3645 = vld [vmem:[%s383 + $0x3c8] sm:$0xff]
        %v3646 = vld [vmem:[%s383 + $0x3d0] sm:$0xff]
        %v3647 = vld [vmem:[%s383 + $0x3d8] sm:$0xff]
        %v3648 = vld [vmem:[%s383 + $0x3e0] sm:$0xff]
        %v3649 = vld [vmem:[%s383 + $0x3e8] sm:$0xff]
        %v3650 = vld [vmem:[%s383 + $0x3f0] sm:$0xff]
        %v3651 = vld [vmem:[%s383 + $0x3f8] sm:$0xff]
        %v3653 = vsel %vm489, %v3620, 0
        %v3656 = vsel %vm489, %v3621, 0
        %v3659 = vsel %vm489, %v3622, 0
        %v3662 = vsel %vm489, %v3623, 0
        %v3665 = vsel %vm489, %v3624, 0
        %v3668 = vsel %vm489, %v3625, 0
        %v3671 = vsel %vm489, %v3626, 0
        %v3674 = vsel %vm489, %v3627, 0
        %v3677 = vsel %vm489, %v3628, 0
        %v3680 = vsel %vm489, %v3629, 0
        %v3683 = vsel %vm489, %v3630, 0
        %v3686 = vsel %vm489, %v3631, 0
        %v3689 = vsel %vm489, %v3632, 0
        %v3692 = vsel %vm489, %v3633, 0
        %v3695 = vsel %vm489, %v3634, 0
        %v3698 = vsel %vm489, %v3635, 0
        %v3701 = vsel %vm489, %v3636, 0
        %v3704 = vsel %vm489, %v3637, 0
        %v3707 = vsel %vm489, %v3638, 0
        %v3710 = vsel %vm489, %v3639, 0
        %v3713 = vsel %vm489, %v3640, 0
        %v3716 = vsel %vm489, %v3641, 0
        %v3719 = vsel %vm489, %v3642, 0
        %v3722 = vsel %vm489, %v3643, 0
        %v3725 = vsel %vm489, %v3644, 0
        %v3728 = vsel %vm489, %v3645, 0
        %v3731 = vsel %vm489, %v3646, 0
        %v3734 = vsel %vm489, %v3647, 0
        %v3737 = vsel %vm489, %v3648, 0
        %v3740 = vsel %vm489, %v3649, 0
        %v3743 = vsel %vm489, %v3650, 0
        %v3746 = vsel %vm489, %v3651, 0
        %3748 = vmatpush.msra.mxu0 0.0
        %3749 = vmatpush.msra.mxu0 0.0
        %3750 = vmatpush.msra.mxu0 0.0
        %3751 = vmatpush.msra.mxu0 0.0
        %3752 = vmatpush.msra.mxu0 0.0
        %3753 = vmatpush.msra.mxu0 0.0
        %3754 = vmatpush.msra.mxu0 0.0
        %3755 = vmatpush.msra.mxu0 0.0
        %3756 = vmatpush.msra.mxu0 0.0
        %3757 = vmatpush.msra.mxu0 0.0
        %3758 = vmatpush.msra.mxu0 0.0
        %3759 = vmatpush.msra.mxu0 0.0
        %3760 = vmatpush.msra.mxu0 0.0
        %3761 = vmatpush.msra.mxu0 0.0
        %3762 = vmatpush.msra.mxu0 %v588
        %3763 = vmatpush.msra.mxu0 %v451
        %3764 = vmatmul.f32.gmra.mxu0 %v3653
        %v3765 = vpop.f32.mrf.mxu0
        %v3766 = vadd.f32 %v487, %v3765
        %3767 = vmatmul.f32.gmra.mxu0 %v3656
        %v3768 = vpop.f32.mrf.mxu0
        %v3769 = vadd.f32 %v487, %v3768
        %3770 = vmatmul.f32.gmra.mxu0 %v3659
        %v3771 = vpop.f32.mrf.mxu0
        %v3772 = vadd.f32 %v487, %v3771
        %3773 = vmatmul.f32.gmra.mxu0 %v3662
        %v3774 = vpop.f32.mrf.mxu0
        %v3775 = vadd.f32 %v487, %v3774
        %3776 = vmatmul.f32.gmra.mxu0 %v3665
        %v3777 = vpop.f32.mrf.mxu0
        %v3778 = vadd.f32 %v487, %v3777
        %3779 = vmatmul.f32.gmra.mxu0 %v3668
        %v3780 = vpop.f32.mrf.mxu0
        %v3781 = vadd.f32 %v487, %v3780
        %3782 = vmatmul.f32.gmra.mxu0 %v3671
        %v3783 = vpop.f32.mrf.mxu0
        %v3784 = vadd.f32 %v487, %v3783
        %3785 = vmatmul.f32.gmra.mxu0 %v3674
        %v3786 = vpop.f32.mrf.mxu0
        %v3787 = vadd.f32 %v487, %v3786
        %3788 = vmatmul.f32.gmra.mxu0 %v3677
        %v3789 = vpop.f32.mrf.mxu0
        %v3790 = vadd.f32 %v487, %v3789
        %3791 = vmatmul.f32.gmra.mxu0 %v3680
        %v3792 = vpop.f32.mrf.mxu0
        %v3793 = vadd.f32 %v487, %v3792
        %3794 = vmatmul.f32.gmra.mxu0 %v3683
        %v3795 = vpop.f32.mrf.mxu0
        %v3796 = vadd.f32 %v487, %v3795
        %3797 = vmatmul.f32.gmra.mxu0 %v3686
        %v3798 = vpop.f32.mrf.mxu0
        %v3799 = vadd.f32 %v487, %v3798
        %3800 = vmatmul.f32.gmra.mxu0 %v3689
        %v3801 = vpop.f32.mrf.mxu0
        %v3802 = vadd.f32 %v487, %v3801
        %3803 = vmatmul.f32.gmra.mxu0 %v3692
        %v3804 = vpop.f32.mrf.mxu0
        %v3805 = vadd.f32 %v487, %v3804
        %3806 = vmatmul.f32.gmra.mxu0 %v3695
        %v3807 = vpop.f32.mrf.mxu0
        %v3808 = vadd.f32 %v487, %v3807
        %3809 = vmatmul.f32.gmra.mxu0 %v3698
        %v3810 = vpop.f32.mrf.mxu0
        %v3811 = vadd.f32 %v487, %v3810
        %3812 = vmatmul.f32.gmra.mxu0 %v3701
        %v3813 = vpop.f32.mrf.mxu0
        %v3814 = vadd.f32 %v487, %v3813
        %3815 = vmatmul.f32.gmra.mxu0 %v3704
        %v3816 = vpop.f32.mrf.mxu0
        %v3817 = vadd.f32 %v487, %v3816
        %3818 = vmatmul.f32.gmra.mxu0 %v3707
        %v3819 = vpop.f32.mrf.mxu0
        %v3820 = vadd.f32 %v487, %v3819
        %3821 = vmatmul.f32.gmra.mxu0 %v3710
        %v3822 = vpop.f32.mrf.mxu0
        %v3823 = vadd.f32 %v487, %v3822
        %3824 = vmatmul.f32.gmra.mxu0 %v3713
        %v3825 = vpop.f32.mrf.mxu0
        %v3826 = vadd.f32 %v487, %v3825
        %3827 = vmatmul.f32.gmra.mxu0 %v3716
        %v3828 = vpop.f32.mrf.mxu0
        %v3829 = vadd.f32 %v487, %v3828
        %3830 = vmatmul.f32.gmra.mxu0 %v3719
        %v3831 = vpop.f32.mrf.mxu0
        %v3832 = vadd.f32 %v487, %v3831
        %3833 = vmatmul.f32.gmra.mxu0 %v3722
        %v3834 = vpop.f32.mrf.mxu0
        %v3835 = vadd.f32 %v487, %v3834
        %3836 = vmatmul.f32.gmra.mxu0 %v3725
        %v3837 = vpop.f32.mrf.mxu0
        %v3838 = vadd.f32 %v487, %v3837
        %3839 = vmatmul.f32.gmra.mxu0 %v3728
        %v3840 = vpop.f32.mrf.mxu0
        %v3841 = vadd.f32 %v487, %v3840
        %3842 = vmatmul.f32.gmra.mxu0 %v3731
        %v3843 = vpop.f32.mrf.mxu0
        %v3844 = vadd.f32 %v487, %v3843
        %3845 = vmatmul.f32.gmra.mxu0 %v3734
        %v3846 = vpop.f32.mrf.mxu0
        %v3847 = vadd.f32 %v487, %v3846
        %3848 = vmatmul.f32.gmra.mxu0 %v3737
        %v3849 = vpop.f32.mrf.mxu0
        %v3850 = vadd.f32 %v487, %v3849
        %3851 = vmatmul.f32.gmra.mxu0 %v3740
        %v3852 = vpop.f32.mrf.mxu0
        %v3853 = vadd.f32 %v487, %v3852
        %3854 = vmatmul.f32.gmra.mxu0 %v3743
        %v3855 = vpop.f32.mrf.mxu0
        %v3856 = vadd.f32 %v487, %v3855
        %3857 = vmatmul.f32.gmra.mxu0 %v3746
        %v3858 = vpop.f32.mrf.mxu0
        %v3859 = vadd.f32 %v487, %v3858
        %3860 = vdwg.mxu0
        %v3861 = vmax.f32 %v3766, 0.0
        %v3862 = vmax.f32 %v3769, 0.0
        %v3863 = vmax.f32 %v3772, 0.0
        %v3864 = vmax.f32 %v3775, 0.0
        %v3865 = vmax.f32 %v3778, 0.0
        %v3866 = vmax.f32 %v3781, 0.0
        %v3867 = vmax.f32 %v3784, 0.0
        %v3868 = vmax.f32 %v3787, 0.0
        %v3869 = vmax.f32 %v3790, 0.0
        %v3870 = vmax.f32 %v3793, 0.0
        %v3871 = vmax.f32 %v3796, 0.0
        %v3872 = vmax.f32 %v3799, 0.0
        %v3873 = vmax.f32 %v3802, 0.0
        %v3874 = vmax.f32 %v3805, 0.0
        %v3875 = vmax.f32 %v3808, 0.0
        %v3876 = vmax.f32 %v3811, 0.0
        %v3877 = vmax.f32 %v3814, 0.0
        %v3878 = vmax.f32 %v3817, 0.0
        %v3879 = vmax.f32 %v3820, 0.0
        %v3880 = vmax.f32 %v3823, 0.0
        %v3881 = vmax.f32 %v3826, 0.0
        %v3882 = vmax.f32 %v3829, 0.0
        %v3883 = vmax.f32 %v3832, 0.0
        %v3884 = vmax.f32 %v3835, 0.0
        %v3885 = vmax.f32 %v3838, 0.0
        %v3886 = vmax.f32 %v3841, 0.0
        %v3887 = vmax.f32 %v3844, 0.0
        %v3888 = vmax.f32 %v3847, 0.0
        %v3889 = vmax.f32 %v3850, 0.0
        %v3890 = vmax.f32 %v3853, 0.0
        %v3891 = vmax.f32 %v3856, 0.0
        %v3892 = vmax.f32 %v3859, 0.0
        %3893 = vst.msk [vmem:[#allocation2] sm:$0xff] %vm384, %v3861
        %3894 = vst.msk [vmem:[#allocation2 + $0x8] sm:$0xff] %vm384, %v3862
        %3895 = vst.msk [vmem:[#allocation2 + $0x10] sm:$0xff] %vm384, %v3863
        %3896 = vst.msk [vmem:[#allocation2 + $0x18] sm:$0xff] %vm384, %v3864
        %3897 = vst.msk [vmem:[#allocation2 + $0x20] sm:$0xff] %vm384, %v3865
        %3898 = vst.msk [vmem:[#allocation2 + $0x28] sm:$0xff] %vm384, %v3866
        %3899 = vst.msk [vmem:[#allocation2 + $0x30] sm:$0xff] %vm384, %v3867
        %3900 = vst.msk [vmem:[#allocation2 + $0x38] sm:$0xff] %vm384, %v3868
        %3901 = vst.msk [vmem:[#allocation2 + $0x40] sm:$0xff] %vm384, %v3869
        %3902 = vst.msk [vmem:[#allocation2 + $0x48] sm:$0xff] %vm384, %v3870
        %3903 = vst.msk [vmem:[#allocation2 + $0x50] sm:$0xff] %vm384, %v3871
        %3904 = vst.msk [vmem:[#allocation2 + $0x58] sm:$0xff] %vm384, %v3872
        %3905 = vst.msk [vmem:[#allocation2 + $0x60] sm:$0xff] %vm384, %v3873
        %3906 = vst.msk [vmem:[#allocation2 + $0x68] sm:$0xff] %vm384, %v3874
        %3907 = vst.msk [vmem:[#allocation2 + $0x70] sm:$0xff] %vm384, %v3875
        %3908 = vst.msk [vmem:[#allocation2 + $0x78] sm:$0xff] %vm384, %v3876
        %3909 = vst.msk [vmem:[#allocation2 + $0x80] sm:$0xff] %vm384, %v3877
        %3910 = vst.msk [vmem:[#allocation2 + $0x88] sm:$0xff] %vm384, %v3878
        %3911 = vst.msk [vmem:[#allocation2 + $0x90] sm:$0xff] %vm384, %v3879
        %3912 = vst.msk [vmem:[#allocation2 + $0x98] sm:$0xff] %vm384, %v3880
        %3913 = vst.msk [vmem:[#allocation2 + $0xa0] sm:$0xff] %vm384, %v3881
        %3914 = vst.msk [vmem:[#allocation2 + $0xa8] sm:$0xff] %vm384, %v3882
        %3915 = vst.msk [vmem:[#allocation2 + $0xb0] sm:$0xff] %vm384, %v3883
        %3916 = vst.msk [vmem:[#allocation2 + $0xb8] sm:$0xff] %vm384, %v3884
        %3917 = vst.msk [vmem:[#allocation2 + $0xc0] sm:$0xff] %vm384, %v3885
        %3918 = vst.msk [vmem:[#allocation2 + $0xc8] sm:$0xff] %vm384, %v3886
        %3919 = vst.msk [vmem:[#allocation2 + $0xd0] sm:$0xff] %vm384, %v3887
        %3920 = vst.msk [vmem:[#allocation2 + $0xd8] sm:$0xff] %vm384, %v3888
        %3921 = vst.msk [vmem:[#allocation2 + $0xe0] sm:$0xff] %vm384, %v3889
        %3922 = vst.msk [vmem:[#allocation2 + $0xe8] sm:$0xff] %vm384, %v3890
        %3923 = vst.msk [vmem:[#allocation2 + $0xf0] sm:$0xff] %vm384, %v3891
        %3924 = vst.msk [vmem:[#allocation2 + $0xf8] sm:$0xff] %vm384, %v3892
        %v3925 = vld [vmem:[#allocation2] sm:$0xff]
        %v3926 = vld [vmem:[#allocation2 + $0x8] sm:$0xff]
        %v3927 = vld [vmem:[#allocation2 + $0x10] sm:$0xff]
        %v3928 = vld [vmem:[#allocation2 + $0x18] sm:$0xff]
        %v3929 = vld [vmem:[#allocation2 + $0x40] sm:$0xff]
        %v3930 = vld [vmem:[#allocation2 + $0x48] sm:$0xff]
        %v3931 = vld [vmem:[#allocation2 + $0x50] sm:$0xff]
        %v3932 = vld [vmem:[#allocation2 + $0x58] sm:$0xff]
        %v3933 = vld [vmem:[#allocation2 + $0x80] sm:$0xff]
        %v3934 = vld [vmem:[#allocation2 + $0x88] sm:$0xff]
        %v3935 = vld [vmem:[#allocation2 + $0x90] sm:$0xff]
        %v3936 = vld [vmem:[#allocation2 + $0x98] sm:$0xff]
        %v3937 = vld [vmem:[#allocation2 + $0xc0] sm:$0xff]
        %v3938 = vld [vmem:[#allocation2 + $0xc8] sm:$0xff]
        %v3939 = vld [vmem:[#allocation2 + $0xd0] sm:$0xff]
        %v3940 = vld [vmem:[#allocation2 + $0xd8] sm:$0xff]
        %v3941 = vld [vmem:[%s783] sm:$0xff]
        %v3942 = vld [vmem:[%s783 + $0x8] sm:$0xff]
        %v3943 = vld [vmem:[%s783 + $0x10] sm:$0xff]
        %v3944 = vld [vmem:[%s783 + $0x18] sm:$0xff]
        %v3945 = vld [vmem:[%s783 + $0x40] sm:$0xff]
        %v3946 = vld [vmem:[%s783 + $0x48] sm:$0xff]
        %v3947 = vld [vmem:[%s783 + $0x50] sm:$0xff]
        %v3948 = vld [vmem:[%s783 + $0x58] sm:$0xff]
        %v3949 = vld [vmem:[%s783 + $0x80] sm:$0xff]
        %v3950 = vld [vmem:[%s783 + $0x88] sm:$0xff]
        %v3951 = vld [vmem:[%s783 + $0x90] sm:$0xff]
        %v3952 = vld [vmem:[%s783 + $0x98] sm:$0xff]
        %v3953 = vld [vmem:[%s783 + $0xc0] sm:$0xff]
        %v3954 = vld [vmem:[%s783 + $0xc8] sm:$0xff]
        %v3955 = vld [vmem:[%s783 + $0xd0] sm:$0xff]
        %v3956 = vld [vmem:[%s783 + $0xd8] sm:$0xff]
        %v3957 = vmax.f32 %v3925, %v3941
        %v3958 = vmax.f32 %v3926, %v3942
        %v3959 = vmax.f32 %v3927, %v3943
        %v3960 = vmax.f32 %v3928, %v3944
        %v3961 = vmax.f32 %v3929, %v3945
        %v3962 = vmax.f32 %v3930, %v3946
        %v3963 = vmax.f32 %v3931, %v3947
        %v3964 = vmax.f32 %v3932, %v3948
        %v3965 = vmax.f32 %v3933, %v3949
        %v3966 = vmax.f32 %v3934, %v3950
        %v3967 = vmax.f32 %v3935, %v3951
        %v3968 = vmax.f32 %v3936, %v3952
        %v3969 = vmax.f32 %v3937, %v3953
        %v3970 = vmax.f32 %v3938, %v3954
        %v3971 = vmax.f32 %v3939, %v3955
        %v3972 = vmax.f32 %v3940, %v3956
        %v3989 = vrot.slane %v3957, 2
        %v3990 = vrot.slane %v3957, 4
        %v3991 = vrot.slane %v3957, 6
        %v3992 = vrot.slane %v3958, 2
        %v3993 = vrot.slane %v3958, 4
        %v3994 = vrot.slane %v3958, 6
        %v3995 = vrot.slane %v3959, 2
        %v3996 = vrot.slane %v3959, 4
        %v3997 = vrot.slane %v3959, 6
        %v3998 = vrot.slane %v3960, 2
        %v3999 = vrot.slane %v3960, 4
        %v4000 = vrot.slane %v3960, 6
        %v4001 = vrot.slane %v3961, 2
        %v4002 = vrot.slane %v3961, 4
        %v4003 = vrot.slane %v3961, 6
        %v4004 = vrot.slane %v3962, 2
        %v4005 = vrot.slane %v3962, 4
        %v4006 = vrot.slane %v3962, 6
        %v4007 = vrot.slane %v3963, 2
        %v4008 = vrot.slane %v3963, 4
        %v4009 = vrot.slane %v3963, 6
        %v4010 = vrot.slane %v3964, 2
        %v4011 = vrot.slane %v3964, 4
        %v4012 = vrot.slane %v3964, 6
        %v4013 = vrot.slane %v3965, 2
        %v4014 = vrot.slane %v3965, 4
        %v4015 = vrot.slane %v3965, 6
        %v4016 = vrot.slane %v3966, 2
        %v4017 = vrot.slane %v3966, 4
        %v4018 = vrot.slane %v3966, 6
        %v4019 = vrot.slane %v3967, 2
        %v4020 = vrot.slane %v3967, 4
        %v4021 = vrot.slane %v3967, 6
        %v4022 = vrot.slane %v3968, 2
        %v4023 = vrot.slane %v3968, 4
        %v4024 = vrot.slane %v3968, 6
        %v4025 = vrot.slane %v3969, 2
        %v4026 = vrot.slane %v3969, 4
        %v4027 = vrot.slane %v3969, 6
        %v4028 = vrot.slane %v3970, 2
        %v4029 = vrot.slane %v3970, 4
        %v4030 = vrot.slane %v3970, 6
        %v4031 = vrot.slane %v3971, 2
        %v4032 = vrot.slane %v3971, 4
        %v4033 = vrot.slane %v3971, 6
        %v4034 = vrot.slane %v3972, 2
        %v4035 = vrot.slane %v3972, 4
        %v4036 = vrot.slane %v3972, 6
        %v4085 = vsel %vm928, %v3957, -inf
        %v4086 = vrot.slane %v4085, 4
        %v4087 = vmax.f32 %v4085, %v4086
        %v4088 = vrot.slane %v4087, 2
        %v4089 = vmax.f32 %v4087, %v4088
        %v4090 = vrot.slane %v4089, 1
        %v4091 = vmax.f32 %v4089, %v4090
        %v4092 = vsel %vm928, %v3989, -inf
        %v4093 = vrot.slane %v4092, 4
        %v4094 = vmax.f32 %v4092, %v4093
        %v4095 = vrot.slane %v4094, 2
        %v4096 = vmax.f32 %v4094, %v4095
        %v4097 = vrot.slane %v4096, 1
        %v4098 = vmax.f32 %v4096, %v4097
        %v4099 = vsel %vm928, %v3990, -inf
        %v4100 = vrot.slane %v4099, 4
        %v4101 = vmax.f32 %v4099, %v4100
        %v4102 = vrot.slane %v4101, 2
        %v4103 = vmax.f32 %v4101, %v4102
        %v4104 = vrot.slane %v4103, 1
        %v4105 = vmax.f32 %v4103, %v4104
        %v4106 = vsel %vm928, %v3991, -inf
        %v4107 = vrot.slane %v4106, 4
        %v4108 = vmax.f32 %v4106, %v4107
        %v4109 = vrot.slane %v4108, 2
        %v4110 = vmax.f32 %v4108, %v4109
        %v4111 = vrot.slane %v4110, 1
        %v4112 = vmax.f32 %v4110, %v4111
        %v4113 = vsel %vm928, %v3958, -inf
        %v4114 = vrot.slane %v4113, 4
        %v4115 = vmax.f32 %v4113, %v4114
        %v4116 = vrot.slane %v4115, 2
        %v4117 = vmax.f32 %v4115, %v4116
        %v4118 = vrot.slane %v4117, 1
        %v4119 = vmax.f32 %v4117, %v4118
        %v4120 = vsel %vm928, %v3992, -inf
        %v4121 = vrot.slane %v4120, 4
        %v4122 = vmax.f32 %v4120, %v4121
        %v4123 = vrot.slane %v4122, 2
        %v4124 = vmax.f32 %v4122, %v4123
        %v4125 = vrot.slane %v4124, 1
        %v4126 = vmax.f32 %v4124, %v4125
        %v4127 = vsel %vm928, %v3993, -inf
        %v4128 = vrot.slane %v4127, 4
        %v4129 = vmax.f32 %v4127, %v4128
        %v4130 = vrot.slane %v4129, 2
        %v4131 = vmax.f32 %v4129, %v4130
        %v4132 = vrot.slane %v4131, 1
        %v4133 = vmax.f32 %v4131, %v4132
        %v4134 = vsel %vm928, %v3994, -inf
        %v4135 = vrot.slane %v4134, 4
        %v4136 = vmax.f32 %v4134, %v4135
        %v4137 = vrot.slane %v4136, 2
        %v4138 = vmax.f32 %v4136, %v4137
        %v4139 = vrot.slane %v4138, 1
        %v4140 = vmax.f32 %v4138, %v4139
        %v4141 = vsel %vm928, %v3959, -inf
        %v4142 = vrot.slane %v4141, 4
        %v4143 = vmax.f32 %v4141, %v4142
        %v4144 = vrot.slane %v4143, 2
        %v4145 = vmax.f32 %v4143, %v4144
        %v4146 = vrot.slane %v4145, 1
        %v4147 = vmax.f32 %v4145, %v4146
        %v4148 = vsel %vm928, %v3995, -inf
        %v4149 = vrot.slane %v4148, 4
        %v4150 = vmax.f32 %v4148, %v4149
        %v4151 = vrot.slane %v4150, 2
        %v4152 = vmax.f32 %v4150, %v4151
        %v4153 = vrot.slane %v4152, 1
        %v4154 = vmax.f32 %v4152, %v4153
        %v4155 = vsel %vm928, %v3996, -inf
        %v4156 = vrot.slane %v4155, 4
        %v4157 = vmax.f32 %v4155, %v4156
        %v4158 = vrot.slane %v4157, 2
        %v4159 = vmax.f32 %v4157, %v4158
        %v4160 = vrot.slane %v4159, 1
        %v4161 = vmax.f32 %v4159, %v4160
        %v4162 = vsel %vm928, %v3997, -inf
        %v4163 = vrot.slane %v4162, 4
        %v4164 = vmax.f32 %v4162, %v4163
        %v4165 = vrot.slane %v4164, 2
        %v4166 = vmax.f32 %v4164, %v4165
        %v4167 = vrot.slane %v4166, 1
        %v4168 = vmax.f32 %v4166, %v4167
        %v4169 = vsel %vm928, %v3960, -inf
        %v4170 = vrot.slane %v4169, 4
        %v4171 = vmax.f32 %v4169, %v4170
        %v4172 = vrot.slane %v4171, 2
        %v4173 = vmax.f32 %v4171, %v4172
        %v4174 = vrot.slane %v4173, 1
        %v4175 = vmax.f32 %v4173, %v4174
        %v4176 = vsel %vm928, %v3998, -inf
        %v4177 = vrot.slane %v4176, 4
        %v4178 = vmax.f32 %v4176, %v4177
        %v4179 = vrot.slane %v4178, 2
        %v4180 = vmax.f32 %v4178, %v4179
        %v4181 = vrot.slane %v4180, 1
        %v4182 = vmax.f32 %v4180, %v4181
        %v4183 = vsel %vm928, %v3999, -inf
        %v4184 = vrot.slane %v4183, 4
        %v4185 = vmax.f32 %v4183, %v4184
        %v4186 = vrot.slane %v4185, 2
        %v4187 = vmax.f32 %v4185, %v4186
        %v4188 = vrot.slane %v4187, 1
        %v4189 = vmax.f32 %v4187, %v4188
        %v4190 = vsel %vm928, %v4000, -inf
        %v4191 = vrot.slane %v4190, 4
        %v4192 = vmax.f32 %v4190, %v4191
        %v4193 = vrot.slane %v4192, 2
        %v4194 = vmax.f32 %v4192, %v4193
        %v4195 = vrot.slane %v4194, 1
        %v4196 = vmax.f32 %v4194, %v4195
        %v4197 = vsel %vm928, %v3961, -inf
        %v4198 = vrot.slane %v4197, 4
        %v4199 = vmax.f32 %v4197, %v4198
        %v4200 = vrot.slane %v4199, 2
        %v4201 = vmax.f32 %v4199, %v4200
        %v4202 = vrot.slane %v4201, 1
        %v4203 = vmax.f32 %v4201, %v4202
        %v4204 = vsel %vm928, %v4001, -inf
        %v4205 = vrot.slane %v4204, 4
        %v4206 = vmax.f32 %v4204, %v4205
        %v4207 = vrot.slane %v4206, 2
        %v4208 = vmax.f32 %v4206, %v4207
        %v4209 = vrot.slane %v4208, 1
        %v4210 = vmax.f32 %v4208, %v4209
        %v4211 = vsel %vm928, %v4002, -inf
        %v4212 = vrot.slane %v4211, 4
        %v4213 = vmax.f32 %v4211, %v4212
        %v4214 = vrot.slane %v4213, 2
        %v4215 = vmax.f32 %v4213, %v4214
        %v4216 = vrot.slane %v4215, 1
        %v4217 = vmax.f32 %v4215, %v4216
        %v4218 = vsel %vm928, %v4003, -inf
        %v4219 = vrot.slane %v4218, 4
        %v4220 = vmax.f32 %v4218, %v4219
        %v4221 = vrot.slane %v4220, 2
        %v4222 = vmax.f32 %v4220, %v4221
        %v4223 = vrot.slane %v4222, 1
        %v4224 = vmax.f32 %v4222, %v4223
        %v4225 = vsel %vm928, %v3962, -inf
        %v4226 = vrot.slane %v4225, 4
        %v4227 = vmax.f32 %v4225, %v4226
        %v4228 = vrot.slane %v4227, 2
        %v4229 = vmax.f32 %v4227, %v4228
        %v4230 = vrot.slane %v4229, 1
        %v4231 = vmax.f32 %v4229, %v4230
        %v4232 = vsel %vm928, %v4004, -inf
        %v4233 = vrot.slane %v4232, 4
        %v4234 = vmax.f32 %v4232, %v4233
        %v4235 = vrot.slane %v4234, 2
        %v4236 = vmax.f32 %v4234, %v4235
        %v4237 = vrot.slane %v4236, 1
        %v4238 = vmax.f32 %v4236, %v4237
        %v4239 = vsel %vm928, %v4005, -inf
        %v4240 = vrot.slane %v4239, 4
        %v4241 = vmax.f32 %v4239, %v4240
        %v4242 = vrot.slane %v4241, 2
        %v4243 = vmax.f32 %v4241, %v4242
        %v4244 = vrot.slane %v4243, 1
        %v4245 = vmax.f32 %v4243, %v4244
        %v4246 = vsel %vm928, %v4006, -inf
        %v4247 = vrot.slane %v4246, 4
        %v4248 = vmax.f32 %v4246, %v4247
        %v4249 = vrot.slane %v4248, 2
        %v4250 = vmax.f32 %v4248, %v4249
        %v4251 = vrot.slane %v4250, 1
        %v4252 = vmax.f32 %v4250, %v4251
        %v4253 = vsel %vm928, %v3963, -inf
        %v4254 = vrot.slane %v4253, 4
        %v4255 = vmax.f32 %v4253, %v4254
        %v4256 = vrot.slane %v4255, 2
        %v4257 = vmax.f32 %v4255, %v4256
        %v4258 = vrot.slane %v4257, 1
        %v4259 = vmax.f32 %v4257, %v4258
        %v4260 = vsel %vm928, %v4007, -inf
        %v4261 = vrot.slane %v4260, 4
        %v4262 = vmax.f32 %v4260, %v4261
        %v4263 = vrot.slane %v4262, 2
        %v4264 = vmax.f32 %v4262, %v4263
        %v4265 = vrot.slane %v4264, 1
        %v4266 = vmax.f32 %v4264, %v4265
        %v4267 = vsel %vm928, %v4008, -inf
        %v4268 = vrot.slane %v4267, 4
        %v4269 = vmax.f32 %v4267, %v4268
        %v4270 = vrot.slane %v4269, 2
        %v4271 = vmax.f32 %v4269, %v4270
        %v4272 = vrot.slane %v4271, 1
        %v4273 = vmax.f32 %v4271, %v4272
        %v4274 = vsel %vm928, %v4009, -inf
        %v4275 = vrot.slane %v4274, 4
        %v4276 = vmax.f32 %v4274, %v4275
        %v4277 = vrot.slane %v4276, 2
        %v4278 = vmax.f32 %v4276, %v4277
        %v4279 = vrot.slane %v4278, 1
        %v4280 = vmax.f32 %v4278, %v4279
        %v4281 = vsel %vm928, %v3964, -inf
        %v4282 = vrot.slane %v4281, 4
        %v4283 = vmax.f32 %v4281, %v4282
        %v4284 = vrot.slane %v4283, 2
        %v4285 = vmax.f32 %v4283, %v4284
        %v4286 = vrot.slane %v4285, 1
        %v4287 = vmax.f32 %v4285, %v4286
        %v4288 = vsel %vm928, %v4010, -inf
        %v4289 = vrot.slane %v4288, 4
        %v4290 = vmax.f32 %v4288, %v4289
        %v4291 = vrot.slane %v4290, 2
        %v4292 = vmax.f32 %v4290, %v4291
        %v4293 = vrot.slane %v4292, 1
        %v4294 = vmax.f32 %v4292, %v4293
        %v4295 = vsel %vm928, %v4011, -inf
        %v4296 = vrot.slane %v4295, 4
        %v4297 = vmax.f32 %v4295, %v4296
        %v4298 = vrot.slane %v4297, 2
        %v4299 = vmax.f32 %v4297, %v4298
        %v4300 = vrot.slane %v4299, 1
        %v4301 = vmax.f32 %v4299, %v4300
        %v4302 = vsel %vm928, %v4012, -inf
        %v4303 = vrot.slane %v4302, 4
        %v4304 = vmax.f32 %v4302, %v4303
        %v4305 = vrot.slane %v4304, 2
        %v4306 = vmax.f32 %v4304, %v4305
        %v4307 = vrot.slane %v4306, 1
        %v4308 = vmax.f32 %v4306, %v4307
        %v4309 = vsel %vm928, %v3965, -inf
        %v4310 = vrot.slane %v4309, 4
        %v4311 = vmax.f32 %v4309, %v4310
        %v4312 = vrot.slane %v4311, 2
        %v4313 = vmax.f32 %v4311, %v4312
        %v4314 = vrot.slane %v4313, 1
        %v4315 = vmax.f32 %v4313, %v4314
        %v4316 = vsel %vm928, %v4013, -inf
        %v4317 = vrot.slane %v4316, 4
        %v4318 = vmax.f32 %v4316, %v4317
        %v4319 = vrot.slane %v4318, 2
        %v4320 = vmax.f32 %v4318, %v4319
        %v4321 = vrot.slane %v4320, 1
        %v4322 = vmax.f32 %v4320, %v4321
        %v4323 = vsel %vm928, %v4014, -inf
        %v4324 = vrot.slane %v4323, 4
        %v4325 = vmax.f32 %v4323, %v4324
        %v4326 = vrot.slane %v4325, 2
        %v4327 = vmax.f32 %v4325, %v4326
        %v4328 = vrot.slane %v4327, 1
        %v4329 = vmax.f32 %v4327, %v4328
        %v4330 = vsel %vm928, %v4015, -inf
        %v4331 = vrot.slane %v4330, 4
        %v4332 = vmax.f32 %v4330, %v4331
        %v4333 = vrot.slane %v4332, 2
        %v4334 = vmax.f32 %v4332, %v4333
        %v4335 = vrot.slane %v4334, 1
        %v4336 = vmax.f32 %v4334, %v4335
        %v4337 = vsel %vm928, %v3966, -inf
        %v4338 = vrot.slane %v4337, 4
        %v4339 = vmax.f32 %v4337, %v4338
        %v4340 = vrot.slane %v4339, 2
        %v4341 = vmax.f32 %v4339, %v4340
        %v4342 = vrot.slane %v4341, 1
        %v4343 = vmax.f32 %v4341, %v4342
        %v4344 = vsel %vm928, %v4016, -inf
        %v4345 = vrot.slane %v4344, 4
        %v4346 = vmax.f32 %v4344, %v4345
        %v4347 = vrot.slane %v4346, 2
        %v4348 = vmax.f32 %v4346, %v4347
        %v4349 = vrot.slane %v4348, 1
        %v4350 = vmax.f32 %v4348, %v4349
        %v4351 = vsel %vm928, %v4017, -inf
        %v4352 = vrot.slane %v4351, 4
        %v4353 = vmax.f32 %v4351, %v4352
        %v4354 = vrot.slane %v4353, 2
        %v4355 = vmax.f32 %v4353, %v4354
        %v4356 = vrot.slane %v4355, 1
        %v4357 = vmax.f32 %v4355, %v4356
        %v4358 = vsel %vm928, %v4018, -inf
        %v4359 = vrot.slane %v4358, 4
        %v4360 = vmax.f32 %v4358, %v4359
        %v4361 = vrot.slane %v4360, 2
        %v4362 = vmax.f32 %v4360, %v4361
        %v4363 = vrot.slane %v4362, 1
        %v4364 = vmax.f32 %v4362, %v4363
        %v4365 = vsel %vm928, %v3967, -inf
        %v4366 = vrot.slane %v4365, 4
        %v4367 = vmax.f32 %v4365, %v4366
        %v4368 = vrot.slane %v4367, 2
        %v4369 = vmax.f32 %v4367, %v4368
        %v4370 = vrot.slane %v4369, 1
        %v4371 = vmax.f32 %v4369, %v4370
        %v4372 = vsel %vm928, %v4019, -inf
        %v4373 = vrot.slane %v4372, 4
        %v4374 = vmax.f32 %v4372, %v4373
        %v4375 = vrot.slane %v4374, 2
        %v4376 = vmax.f32 %v4374, %v4375
        %v4377 = vrot.slane %v4376, 1
        %v4378 = vmax.f32 %v4376, %v4377
        %v4379 = vsel %vm928, %v4020, -inf
        %v4380 = vrot.slane %v4379, 4
        %v4381 = vmax.f32 %v4379, %v4380
        %v4382 = vrot.slane %v4381, 2
        %v4383 = vmax.f32 %v4381, %v4382
        %v4384 = vrot.slane %v4383, 1
        %v4385 = vmax.f32 %v4383, %v4384
        %v4386 = vsel %vm928, %v4021, -inf
        %v4387 = vrot.slane %v4386, 4
        %v4388 = vmax.f32 %v4386, %v4387
        %v4389 = vrot.slane %v4388, 2
        %v4390 = vmax.f32 %v4388, %v4389
        %v4391 = vrot.slane %v4390, 1
        %v4392 = vmax.f32 %v4390, %v4391
        %v4393 = vsel %vm928, %v3968, -inf
        %v4394 = vrot.slane %v4393, 4
        %v4395 = vmax.f32 %v4393, %v4394
        %v4396 = vrot.slane %v4395, 2
        %v4397 = vmax.f32 %v4395, %v4396
        %v4398 = vrot.slane %v4397, 1
        %v4399 = vmax.f32 %v4397, %v4398
        %v4400 = vsel %vm928, %v4022, -inf
        %v4401 = vrot.slane %v4400, 4
        %v4402 = vmax.f32 %v4400, %v4401
        %v4403 = vrot.slane %v4402, 2
        %v4404 = vmax.f32 %v4402, %v4403
        %v4405 = vrot.slane %v4404, 1
        %v4406 = vmax.f32 %v4404, %v4405
        %v4407 = vsel %vm928, %v4023, -inf
        %v4408 = vrot.slane %v4407, 4
        %v4409 = vmax.f32 %v4407, %v4408
        %v4410 = vrot.slane %v4409, 2
        %v4411 = vmax.f32 %v4409, %v4410
        %v4412 = vrot.slane %v4411, 1
        %v4413 = vmax.f32 %v4411, %v4412
        %v4414 = vsel %vm928, %v4024, -inf
        %v4415 = vrot.slane %v4414, 4
        %v4416 = vmax.f32 %v4414, %v4415
        %v4417 = vrot.slane %v4416, 2
        %v4418 = vmax.f32 %v4416, %v4417
        %v4419 = vrot.slane %v4418, 1
        %v4420 = vmax.f32 %v4418, %v4419
        %v4421 = vsel %vm928, %v3969, -inf
        %v4422 = vrot.slane %v4421, 4
        %v4423 = vmax.f32 %v4421, %v4422
        %v4424 = vrot.slane %v4423, 2
        %v4425 = vmax.f32 %v4423, %v4424
        %v4426 = vrot.slane %v4425, 1
        %v4427 = vmax.f32 %v4425, %v4426
        %v4428 = vsel %vm928, %v4025, -inf
        %v4429 = vrot.slane %v4428, 4
        %v4430 = vmax.f32 %v4428, %v4429
        %v4431 = vrot.slane %v4430, 2
        %v4432 = vmax.f32 %v4430, %v4431
        %v4433 = vrot.slane %v4432, 1
        %v4434 = vmax.f32 %v4432, %v4433
        %v4435 = vsel %vm928, %v4026, -inf
        %v4436 = vrot.slane %v4435, 4
        %v4437 = vmax.f32 %v4435, %v4436
        %v4438 = vrot.slane %v4437, 2
        %v4439 = vmax.f32 %v4437, %v4438
        %v4440 = vrot.slane %v4439, 1
        %v4441 = vmax.f32 %v4439, %v4440
        %v4442 = vsel %vm928, %v4027, -inf
        %v4443 = vrot.slane %v4442, 4
        %v4444 = vmax.f32 %v4442, %v4443
        %v4445 = vrot.slane %v4444, 2
        %v4446 = vmax.f32 %v4444, %v4445
        %v4447 = vrot.slane %v4446, 1
        %v4448 = vmax.f32 %v4446, %v4447
        %v4449 = vsel %vm928, %v3970, -inf
        %v4450 = vrot.slane %v4449, 4
        %v4451 = vmax.f32 %v4449, %v4450
        %v4452 = vrot.slane %v4451, 2
        %v4453 = vmax.f32 %v4451, %v4452
        %v4454 = vrot.slane %v4453, 1
        %v4455 = vmax.f32 %v4453, %v4454
        %v4456 = vsel %vm928, %v4028, -inf
        %v4457 = vrot.slane %v4456, 4
        %v4458 = vmax.f32 %v4456, %v4457
        %v4459 = vrot.slane %v4458, 2
        %v4460 = vmax.f32 %v4458, %v4459
        %v4461 = vrot.slane %v4460, 1
        %v4462 = vmax.f32 %v4460, %v4461
        %v4463 = vsel %vm928, %v4029, -inf
        %v4464 = vrot.slane %v4463, 4
        %v4465 = vmax.f32 %v4463, %v4464
        %v4466 = vrot.slane %v4465, 2
        %v4467 = vmax.f32 %v4465, %v4466
        %v4468 = vrot.slane %v4467, 1
        %v4469 = vmax.f32 %v4467, %v4468
        %v4470 = vsel %vm928, %v4030, -inf
        %v4471 = vrot.slane %v4470, 4
        %v4472 = vmax.f32 %v4470, %v4471
        %v4473 = vrot.slane %v4472, 2
        %v4474 = vmax.f32 %v4472, %v4473
        %v4475 = vrot.slane %v4474, 1
        %v4476 = vmax.f32 %v4474, %v4475
        %v4477 = vsel %vm928, %v3971, -inf
        %v4478 = vrot.slane %v4477, 4
        %v4479 = vmax.f32 %v4477, %v4478
        %v4480 = vrot.slane %v4479, 2
        %v4481 = vmax.f32 %v4479, %v4480
        %v4482 = vrot.slane %v4481, 1
        %v4483 = vmax.f32 %v4481, %v4482
        %v4484 = vsel %vm928, %v4031, -inf
        %v4485 = vrot.slane %v4484, 4
        %v4486 = vmax.f32 %v4484, %v4485
        %v4487 = vrot.slane %v4486, 2
        %v4488 = vmax.f32 %v4486, %v4487
        %v4489 = vrot.slane %v4488, 1
        %v4490 = vmax.f32 %v4488, %v4489
        %v4491 = vsel %vm928, %v4032, -inf
        %v4492 = vrot.slane %v4491, 4
        %v4493 = vmax.f32 %v4491, %v4492
        %v4494 = vrot.slane %v4493, 2
        %v4495 = vmax.f32 %v4493, %v4494
        %v4496 = vrot.slane %v4495, 1
        %v4497 = vmax.f32 %v4495, %v4496
        %v4498 = vsel %vm928, %v4033, -inf
        %v4499 = vrot.slane %v4498, 4
        %v4500 = vmax.f32 %v4498, %v4499
        %v4501 = vrot.slane %v4500, 2
        %v4502 = vmax.f32 %v4500, %v4501
        %v4503 = vrot.slane %v4502, 1
        %v4504 = vmax.f32 %v4502, %v4503
        %v4505 = vsel %vm928, %v3972, -inf
        %v4506 = vrot.slane %v4505, 4
        %v4507 = vmax.f32 %v4505, %v4506
        %v4508 = vrot.slane %v4507, 2
        %v4509 = vmax.f32 %v4507, %v4508
        %v4510 = vrot.slane %v4509, 1
        %v4511 = vmax.f32 %v4509, %v4510
        %v4512 = vsel %vm928, %v4034, -inf
        %v4513 = vrot.slane %v4512, 4
        %v4514 = vmax.f32 %v4512, %v4513
        %v4515 = vrot.slane %v4514, 2
        %v4516 = vmax.f32 %v4514, %v4515
        %v4517 = vrot.slane %v4516, 1
        %v4518 = vmax.f32 %v4516, %v4517
        %v4519 = vsel %vm928, %v4035, -inf
        %v4520 = vrot.slane %v4519, 4
        %v4521 = vmax.f32 %v4519, %v4520
        %v4522 = vrot.slane %v4521, 2
        %v4523 = vmax.f32 %v4521, %v4522
        %v4524 = vrot.slane %v4523, 1
        %v4525 = vmax.f32 %v4523, %v4524
        %v4526 = vsel %vm928, %v4036, -inf
        %v4527 = vrot.slane %v4526, 4
        %v4528 = vmax.f32 %v4526, %v4527
        %v4529 = vrot.slane %v4528, 2
        %v4530 = vmax.f32 %v4528, %v4529
        %v4531 = vrot.slane %v4530, 1
        %v4532 = vmax.f32 %v4530, %v4531
        %v4597 = vsel %vm1441, %v4098, %v4091
        %v4598 = vsel %vm1443, %v4105, %v4597
        %v4599 = vsel %vm1445, %v4112, %v4598
        %v4600 = vsel %vm1447, %v4119, %v4599
        %v4601 = vsel %vm1449, %v4126, %v4600
        %v4602 = vsel %vm1451, %v4133, %v4601
        %v4603 = vsel %vm1453, %v4140, %v4602
        %v4604 = vsel %vm1441, %v4154, %v4147
        %v4605 = vsel %vm1443, %v4161, %v4604
        %v4606 = vsel %vm1445, %v4168, %v4605
        %v4607 = vsel %vm1447, %v4175, %v4606
        %v4608 = vsel %vm1449, %v4182, %v4607
        %v4609 = vsel %vm1451, %v4189, %v4608
        %v4610 = vsel %vm1453, %v4196, %v4609
        %v4611 = vsel %vm1441, %v4210, %v4203
        %v4612 = vsel %vm1443, %v4217, %v4611
        %v4613 = vsel %vm1445, %v4224, %v4612
        %v4614 = vsel %vm1447, %v4231, %v4613
        %v4615 = vsel %vm1449, %v4238, %v4614
        %v4616 = vsel %vm1451, %v4245, %v4615
        %v4617 = vsel %vm1453, %v4252, %v4616
        %v4618 = vsel %vm1441, %v4266, %v4259
        %v4619 = vsel %vm1443, %v4273, %v4618
        %v4620 = vsel %vm1445, %v4280, %v4619
        %v4621 = vsel %vm1447, %v4287, %v4620
        %v4622 = vsel %vm1449, %v4294, %v4621
        %v4623 = vsel %vm1451, %v4301, %v4622
        %v4624 = vsel %vm1453, %v4308, %v4623
        %v4625 = vsel %vm1441, %v4322, %v4315
        %v4626 = vsel %vm1443, %v4329, %v4625
        %v4627 = vsel %vm1445, %v4336, %v4626
        %v4628 = vsel %vm1447, %v4343, %v4627
        %v4629 = vsel %vm1449, %v4350, %v4628
        %v4630 = vsel %vm1451, %v4357, %v4629
        %v4631 = vsel %vm1453, %v4364, %v4630
        %v4632 = vsel %vm1441, %v4378, %v4371
        %v4633 = vsel %vm1443, %v4385, %v4632
        %v4634 = vsel %vm1445, %v4392, %v4633
        %v4635 = vsel %vm1447, %v4399, %v4634
        %v4636 = vsel %vm1449, %v4406, %v4635
        %v4637 = vsel %vm1451, %v4413, %v4636
        %v4638 = vsel %vm1453, %v4420, %v4637
        %v4639 = vsel %vm1441, %v4434, %v4427
        %v4640 = vsel %vm1443, %v4441, %v4639
        %v4641 = vsel %vm1445, %v4448, %v4640
        %v4642 = vsel %vm1447, %v4455, %v4641
        %v4643 = vsel %vm1449, %v4462, %v4642
        %v4644 = vsel %vm1451, %v4469, %v4643
        %v4645 = vsel %vm1453, %v4476, %v4644
        %v4646 = vsel %vm1441, %v4490, %v4483
        %v4647 = vsel %vm1443, %v4497, %v4646
        %v4648 = vsel %vm1445, %v4504, %v4647
        %v4649 = vsel %vm1447, %v4511, %v4648
        %v4650 = vsel %vm1449, %v4518, %v4649
        %v4651 = vsel %vm1451, %v4525, %v4650
        %v4652 = vsel %vm1453, %v4532, %v4651
        %s4661 = scalar_lea.vmem [#allocation3], 416
        %4662 = vst.msk [vmem:[%s4661 + $0x8] sm:$0xff] %vm384, %v4603
        %4663 = vst.msk [vmem:[%s4661 + $0x10] sm:$0xff] %vm384, %v4610
        %4664 = vst.msk [vmem:[%s4661 + $0x28] sm:$0xff] %vm384, %v4617
        %4665 = vst.msk [vmem:[%s4661 + $0x30] sm:$0xff] %vm384, %v4624
        %4666 = vst.msk [vmem:[%s4661 + $0x48] sm:$0xff] %vm384, %v4631
        %4667 = vst.msk [vmem:[%s4661 + $0x50] sm:$0xff] %vm384, %v4638
        %4668 = vst.msk [vmem:[%s4661 + $0x68] sm:$0xff] %vm384, %v4645
        %4669 = vst.msk [vmem:[%s4661 + $0x70] sm:$0xff] %vm384, %v4652
        %v4670 = vld [vmem:[#allocation3 + $0x7] sm:$0xff]
        %v4671 = vld [vmem:[#allocation3 + $0xf] sm:$0xff]
        %v4672 = vld [vmem:[#allocation3 + $0x27] sm:$0xff]
        %v4673 = vld [vmem:[#allocation3 + $0x2f] sm:$0xff]
        %v4674 = vld [vmem:[#allocation3 + $0x47] sm:$0xff]
        %v4675 = vld [vmem:[#allocation3 + $0x4f] sm:$0xff]
        %v4676 = vld [vmem:[#allocation3 + $0x67] sm:$0xff]
        %v4677 = vld [vmem:[#allocation3 + $0x6f] sm:$0xff]
        %v4678 = vld [vmem:[#allocation3 + $0x87] sm:$0xff]
        %v4679 = vld [vmem:[#allocation3 + $0x8f] sm:$0xff]
        %v4680 = vld [vmem:[#allocation3 + $0xa7] sm:$0xff]
        %v4681 = vld [vmem:[#allocation3 + $0xaf] sm:$0xff]
        %v4682 = vld [vmem:[#allocation3 + $0xc7] sm:$0xff]
        %v4683 = vld [vmem:[#allocation3 + $0xcf] sm:$0xff]
        %v4684 = vld [vmem:[#allocation3 + $0xe7] sm:$0xff]
        %v4685 = vld [vmem:[#allocation3 + $0xef] sm:$0xff]
        %v4686 = vld [vmem:[#allocation3 + $0x107] sm:$0xff]
        %v4687 = vld [vmem:[#allocation3 + $0x10f] sm:$0xff]
        %v4688 = vld [vmem:[#allocation3 + $0x127] sm:$0xff]
        %v4689 = vld [vmem:[#allocation3 + $0x12f] sm:$0xff]
        %v4690 = vld [vmem:[#allocation3 + $0x147] sm:$0xff]
        %v4691 = vld [vmem:[#allocation3 + $0x14f] sm:$0xff]
        %v4692 = vld [vmem:[#allocation3 + $0x167] sm:$0xff]
        %v4693 = vld [vmem:[#allocation3 + $0x16f] sm:$0xff]
        %v4694 = vld [vmem:[#allocation3 + $0x187] sm:$0xff]
        %v4695 = vld [vmem:[#allocation3 + $0x18f] sm:$0xff]
        %v4696 = vld [vmem:[#allocation3 + $0x1a7] sm:$0xff]
        %v4697 = vld [vmem:[#allocation3 + $0x1af] sm:$0xff]
        %v4698 = vld [vmem:[#allocation3 + $0x1c7] sm:$0xff]
        %v4699 = vld [vmem:[#allocation3 + $0x1cf] sm:$0xff]
        %v4700 = vld [vmem:[#allocation3 + $0x1e7] sm:$0xff]
        %v4701 = vld [vmem:[#allocation3 + $0x1ef] sm:$0xff]
        %4702 = vst.msk [vmem:[#allocation4] sm:$0xff] %vm384, %v4670
        %4703 = vst.msk [vmem:[#allocation4 + $0x28] sm:$0xff] %vm384, %v4671
        %4704 = vst.msk [vmem:[#allocation4 + $0x50] sm:$0xff] %vm384, %v4672
        %4705 = vst.msk [vmem:[#allocation4 + $0x78] sm:$0xff] %vm384, %v4673
        %4706 = vst.msk [vmem:[#allocation4 + $0xa0] sm:$0xff] %vm384, %v4674
        %4707 = vst.msk [vmem:[#allocation4 + $0xc8] sm:$0xff] %vm384, %v4675
        %4708 = vst.msk [vmem:[#allocation4 + $0xf0] sm:$0xff] %vm384, %v4676
        %4709 = vst.msk [vmem:[#allocation4 + $0x118] sm:$0xff] %vm384, %v4677
        %4710 = vst.msk [vmem:[#allocation4 + $0x140] sm:$0xff] %vm384, %v4678
        %4711 = vst.msk [vmem:[#allocation4 + $0x168] sm:$0xff] %vm384, %v4679
        %4712 = vst.msk [vmem:[#allocation4 + $0x190] sm:$0xff] %vm384, %v4680
        %4713 = vst.msk [vmem:[#allocation4 + $0x1b8] sm:$0xff] %vm384, %v4681
        %4714 = vst.msk [vmem:[#allocation4 + $0x1e0] sm:$0xff] %vm384, %v4682
        %4715 = vst.msk [vmem:[#allocation4 + $0x208] sm:$0xff] %vm384, %v4683
        %4716 = vst.msk [vmem:[#allocation4 + $0x230] sm:$0xff] %vm384, %v4684
        %4717 = vst.msk [vmem:[#allocation4 + $0x258] sm:$0xff] %vm384, %v4685
        %4718 = vst.msk [vmem:[#allocation4 + $0x280] sm:$0xff] %vm384, %v4686
        %4719 = vst.msk [vmem:[#allocation4 + $0x2a8] sm:$0xff] %vm384, %v4687
        %4720 = vst.msk [vmem:[#allocation4 + $0x2d0] sm:$0xff] %vm384, %v4688
        %4721 = vst.msk [vmem:[#allocation4 + $0x2f8] sm:$0xff] %vm384, %v4689
        %4722 = vst.msk [vmem:[#allocation4 + $0x320] sm:$0xff] %vm384, %v4690
        %4723 = vst.msk [vmem:[#allocation4 + $0x348] sm:$0xff] %vm384, %v4691
        %4724 = vst.msk [vmem:[#allocation4 + $0x370] sm:$0xff] %vm384, %v4692
        %4725 = vst.msk [vmem:[#allocation4 + $0x398] sm:$0xff] %vm384, %v4693
        %4726 = vst.msk [vmem:[#allocation4 + $0x3c0] sm:$0xff] %vm384, %v4694
        %4727 = vst.msk [vmem:[#allocation4 + $0x3e8] sm:$0xff] %vm384, %v4695
        %4728 = vst.msk [vmem:[#allocation4 + $0x410] sm:$0xff] %vm384, %v4696
        %4729 = vst.msk [vmem:[#allocation4 + $0x438] sm:$0xff] %vm384, %v4697
        %4730 = vst.msk [vmem:[#allocation4 + $0x460] sm:$0xff] %vm384, %v4698
        %4731 = vst.msk [vmem:[#allocation4 + $0x488] sm:$0xff] %vm384, %v4699
        %4732 = vst.msk [vmem:[#allocation4 + $0x4b0] sm:$0xff] %vm384, %v4700
        %4733 = vst.msk [vmem:[#allocation4 + $0x4d8] sm:$0xff] %vm384, %v4701
        %v4734 = vld [vmem:[#allocation3 + $0x8] sm:$0xff]
        %v4735 = vld [vmem:[#allocation3 + $0x10] sm:$0xff]
        %v4736 = vld [vmem:[#allocation3 + $0x28] sm:$0xff]
        %v4737 = vld [vmem:[#allocation3 + $0x30] sm:$0xff]
        %v4738 = vld [vmem:[#allocation3 + $0x48] sm:$0xff]
        %v4739 = vld [vmem:[#allocation3 + $0x50] sm:$0xff]
        %v4740 = vld [vmem:[#allocation3 + $0x68] sm:$0xff]
        %v4741 = vld [vmem:[#allocation3 + $0x70] sm:$0xff]
        %v4742 = vld [vmem:[#allocation3 + $0x88] sm:$0xff]
        %v4743 = vld [vmem:[#allocation3 + $0x90] sm:$0xff]
        %v4744 = vld [vmem:[#allocation3 + $0xa8] sm:$0xff]
        %v4745 = vld [vmem:[#allocation3 + $0xb0] sm:$0xff]
        %v4746 = vld [vmem:[#allocation3 + $0xc8] sm:$0xff]
        %v4747 = vld [vmem:[#allocation3 + $0xd0] sm:$0xff]
        %v4748 = vld [vmem:[#allocation3 + $0xe8] sm:$0xff]
        %v4749 = vld [vmem:[#allocation3 + $0xf0] sm:$0xff]
        %v4750 = vld [vmem:[#allocation3 + $0x108] sm:$0xff]
        %v4751 = vld [vmem:[#allocation3 + $0x110] sm:$0xff]
        %v4752 = vld [vmem:[#allocation3 + $0x128] sm:$0xff]
        %v4753 = vld [vmem:[#allocation3 + $0x130] sm:$0xff]
        %v4754 = vld [vmem:[#allocation3 + $0x148] sm:$0xff]
        %v4755 = vld [vmem:[#allocation3 + $0x150] sm:$0xff]
        %v4756 = vld [vmem:[#allocation3 + $0x168] sm:$0xff]
        %v4757 = vld [vmem:[#allocation3 + $0x170] sm:$0xff]
        %v4758 = vld [vmem:[#allocation3 + $0x188] sm:$0xff]
        %v4759 = vld [vmem:[#allocation3 + $0x190] sm:$0xff]
        %v4760 = vld [vmem:[#allocation3 + $0x1a8] sm:$0xff]
        %v4761 = vld [vmem:[#allocation3 + $0x1b0] sm:$0xff]
        %v4762 = vld [vmem:[#allocation3 + $0x1c8] sm:$0xff]
        %v4763 = vld [vmem:[#allocation3 + $0x1d0] sm:$0xff]
        %v4764 = vld [vmem:[#allocation3 + $0x1e8] sm:$0xff]
        %v4765 = vld [vmem:[#allocation3 + $0x1f0] sm:$0xff]
        %4798 = vrot.lane.b32.xlu0 %v4734, 64
        %v4799 = vpop.permute.xlu0 %4798
        %4800 = vrot.lane.b32.xlu0 %v4735, 64
        %v4801 = vpop.permute.xlu0 %4800
        %4802 = vrot.lane.b32.xlu0 %v4736, 64
        %v4803 = vpop.permute.xlu0 %4802
        %4804 = vrot.lane.b32.xlu0 %v4737, 64
        %v4805 = vpop.permute.xlu0 %4804
        %4806 = vrot.lane.b32.xlu0 %v4738, 64
        %v4807 = vpop.permute.xlu0 %4806
        %4808 = vrot.lane.b32.xlu0 %v4739, 64
        %v4809 = vpop.permute.xlu0 %4808
        %4810 = vrot.lane.b32.xlu0 %v4740, 64
        %v4811 = vpop.permute.xlu0 %4810
        %4812 = vrot.lane.b32.xlu0 %v4741, 64
        %v4813 = vpop.permute.xlu0 %4812
        %4814 = vrot.lane.b32.xlu0 %v4742, 64
        %v4815 = vpop.permute.xlu0 %4814
        %4816 = vrot.lane.b32.xlu0 %v4743, 64
        %v4817 = vpop.permute.xlu0 %4816
        %4818 = vrot.lane.b32.xlu0 %v4744, 64
        %v4819 = vpop.permute.xlu0 %4818
        %4820 = vrot.lane.b32.xlu0 %v4745, 64
        %v4821 = vpop.permute.xlu0 %4820
        %4822 = vrot.lane.b32.xlu0 %v4746, 64
        %v4823 = vpop.permute.xlu0 %4822
        %4824 = vrot.lane.b32.xlu0 %v4747, 64
        %v4825 = vpop.permute.xlu0 %4824
        %4826 = vrot.lane.b32.xlu0 %v4748, 64
        %v4827 = vpop.permute.xlu0 %4826
        %4828 = vrot.lane.b32.xlu0 %v4749, 64
        %v4829 = vpop.permute.xlu0 %4828
        %4830 = vrot.lane.b32.xlu0 %v4750, 64
        %v4831 = vpop.permute.xlu0 %4830
        %4832 = vrot.lane.b32.xlu0 %v4751, 64
        %v4833 = vpop.permute.xlu0 %4832
        %4834 = vrot.lane.b32.xlu0 %v4752, 64
        %v4835 = vpop.permute.xlu0 %4834
        %4836 = vrot.lane.b32.xlu0 %v4753, 64
        %v4837 = vpop.permute.xlu0 %4836
        %4838 = vrot.lane.b32.xlu0 %v4754, 64
        %v4839 = vpop.permute.xlu0 %4838
        %4840 = vrot.lane.b32.xlu0 %v4755, 64
        %v4841 = vpop.permute.xlu0 %4840
        %4842 = vrot.lane.b32.xlu0 %v4756, 64
        %v4843 = vpop.permute.xlu0 %4842
        %4844 = vrot.lane.b32.xlu0 %v4757, 64
        %v4845 = vpop.permute.xlu0 %4844
        %4846 = vrot.lane.b32.xlu0 %v4758, 64
        %v4847 = vpop.permute.xlu0 %4846
        %4848 = vrot.lane.b32.xlu0 %v4759, 64
        %v4849 = vpop.permute.xlu0 %4848
        %4850 = vrot.lane.b32.xlu0 %v4760, 64
        %v4851 = vpop.permute.xlu0 %4850
        %4852 = vrot.lane.b32.xlu0 %v4761, 64
        %v4853 = vpop.permute.xlu0 %4852
        %4854 = vrot.lane.b32.xlu0 %v4762, 64
        %v4855 = vpop.permute.xlu0 %4854
        %4856 = vrot.lane.b32.xlu0 %v4763, 64
        %v4857 = vpop.permute.xlu0 %4856
        %4858 = vrot.lane.b32.xlu0 %v4764, 64
        %v4859 = vpop.permute.xlu0 %4858
        %4860 = vrot.lane.b32.xlu0 %v4765, 64
        %v4861 = vpop.permute.xlu0 %4860
        %vm4894 = vcmask 1048064
        %4895 = vst.msk [vmem:[#allocation4] sm:$0xff] %vm4894, %v4799
        %4896 = vst.msk [vmem:[#allocation4 + $0x28] sm:$0xff] %vm4894, %v4801
        %4897 = vst.msk [vmem:[#allocation4 + $0x50] sm:$0xff] %vm4894, %v4803
        %4898 = vst.msk [vmem:[#allocation4 + $0x78] sm:$0xff] %vm4894, %v4805
        %4899 = vst.msk [vmem:[#allocation4 + $0xa0] sm:$0xff] %vm4894, %v4807
        %4900 = vst.msk [vmem:[#allocation4 + $0xc8] sm:$0xff] %vm4894, %v4809
        %4901 = vst.msk [vmem:[#allocation4 + $0xf0] sm:$0xff] %vm4894, %v4811
        %4902 = vst.msk [vmem:[#allocation4 + $0x118] sm:$0xff] %vm4894, %v4813
        %4903 = vst.msk [vmem:[#allocation4 + $0x140] sm:$0xff] %vm4894, %v4815
        %4904 = vst.msk [vmem:[#allocation4 + $0x168] sm:$0xff] %vm4894, %v4817
        %4905 = vst.msk [vmem:[#allocation4 + $0x190] sm:$0xff] %vm4894, %v4819
        %4906 = vst.msk [vmem:[#allocation4 + $0x1b8] sm:$0xff] %vm4894, %v4821
        %4907 = vst.msk [vmem:[#allocation4 + $0x1e0] sm:$0xff] %vm4894, %v4823
        %4908 = vst.msk [vmem:[#allocation4 + $0x208] sm:$0xff] %vm4894, %v4825
        %4909 = vst.msk [vmem:[#allocation4 + $0x230] sm:$0xff] %vm4894, %v4827
        %4910 = vst.msk [vmem:[#allocation4 + $0x258] sm:$0xff] %vm4894, %v4829
        %4911 = vst.msk [vmem:[#allocation4 + $0x280] sm:$0xff] %vm4894, %v4831
        %4912 = vst.msk [vmem:[#allocation4 + $0x2a8] sm:$0xff] %vm4894, %v4833
        %4913 = vst.msk [vmem:[#allocation4 + $0x2d0] sm:$0xff] %vm4894, %v4835
        %4914 = vst.msk [vmem:[#allocation4 + $0x2f8] sm:$0xff] %vm4894, %v4837
        %4915 = vst.msk [vmem:[#allocation4 + $0x320] sm:$0xff] %vm4894, %v4839
        %4916 = vst.msk [vmem:[#allocation4 + $0x348] sm:$0xff] %vm4894, %v4841
        %4917 = vst.msk [vmem:[#allocation4 + $0x370] sm:$0xff] %vm4894, %v4843
        %4918 = vst.msk [vmem:[#allocation4 + $0x398] sm:$0xff] %vm4894, %v4845
        %4919 = vst.msk [vmem:[#allocation4 + $0x3c0] sm:$0xff] %vm4894, %v4847
        %4920 = vst.msk [vmem:[#allocation4 + $0x3e8] sm:$0xff] %vm4894, %v4849
        %4921 = vst.msk [vmem:[#allocation4 + $0x410] sm:$0xff] %vm4894, %v4851
        %4922 = vst.msk [vmem:[#allocation4 + $0x438] sm:$0xff] %vm4894, %v4853
        %4923 = vst.msk [vmem:[#allocation4 + $0x460] sm:$0xff] %vm4894, %v4855
        %4924 = vst.msk [vmem:[#allocation4 + $0x488] sm:$0xff] %vm4894, %v4857
        %4925 = vst.msk [vmem:[#allocation4 + $0x4b0] sm:$0xff] %vm4894, %v4859
        %4926 = vst.msk [vmem:[#allocation4 + $0x4d8] sm:$0xff] %vm4894, %v4861
        %v4927 = vld [vmem:[#allocation3 + $0x9] sm:$0xff]
        %v4928 = vld [vmem:[#allocation3 + $0x11] sm:$0xff]
        %v4929 = vld [vmem:[#allocation3 + $0x29] sm:$0xff]
        %v4930 = vld [vmem:[#allocation3 + $0x31] sm:$0xff]
        %v4931 = vld [vmem:[#allocation3 + $0x49] sm:$0xff]
        %v4932 = vld [vmem:[#allocation3 + $0x51] sm:$0xff]
        %v4933 = vld [vmem:[#allocation3 + $0x69] sm:$0xff]
        %v4934 = vld [vmem:[#allocation3 + $0x71] sm:$0xff]
        %v4935 = vld [vmem:[#allocation3 + $0x89] sm:$0xff]
        %v4936 = vld [vmem:[#allocation3 + $0x91] sm:$0xff]
        %v4937 = vld [vmem:[#allocation3 + $0xa9] sm:$0xff]
        %v4938 = vld [vmem:[#allocation3 + $0xb1] sm:$0xff]
        %v4939 = vld [vmem:[#allocation3 + $0xc9] sm:$0xff]
        %v4940 = vld [vmem:[#allocation3 + $0xd1] sm:$0xff]
        %v4941 = vld [vmem:[#allocation3 + $0xe9] sm:$0xff]
        %v4942 = vld [vmem:[#allocation3 + $0xf1] sm:$0xff]
        %v4943 = vld [vmem:[#allocation3 + $0x109] sm:$0xff]
        %v4944 = vld [vmem:[#allocation3 + $0x111] sm:$0xff]
        %v4945 = vld [vmem:[#allocation3 + $0x129] sm:$0xff]
        %v4946 = vld [vmem:[#allocation3 + $0x131] sm:$0xff]
        %v4947 = vld [vmem:[#allocation3 + $0x149] sm:$0xff]
        %v4948 = vld [vmem:[#allocation3 + $0x151] sm:$0xff]
        %v4949 = vld [vmem:[#allocation3 + $0x169] sm:$0xff]
        %v4950 = vld [vmem:[#allocation3 + $0x171] sm:$0xff]
        %v4951 = vld [vmem:[#allocation3 + $0x189] sm:$0xff]
        %v4952 = vld [vmem:[#allocation3 + $0x191] sm:$0xff]
        %v4953 = vld [vmem:[#allocation3 + $0x1a9] sm:$0xff]
        %v4954 = vld [vmem:[#allocation3 + $0x1b1] sm:$0xff]
        %v4955 = vld [vmem:[#allocation3 + $0x1c9] sm:$0xff]
        %v4956 = vld [vmem:[#allocation3 + $0x1d1] sm:$0xff]
        %v4957 = vld [vmem:[#allocation3 + $0x1e9] sm:$0xff]
        %v4958 = vld [vmem:[#allocation3 + $0x1f1] sm:$0xff]
        %4959 = vst.msk [vmem:[#allocation4 + $0x8] sm:$0xff] %vm384, %v4927
        %4960 = vst.msk [vmem:[#allocation4 + $0x30] sm:$0xff] %vm384, %v4928
        %4961 = vst.msk [vmem:[#allocation4 + $0x58] sm:$0xff] %vm384, %v4929
        %4962 = vst.msk [vmem:[#allocation4 + $0x80] sm:$0xff] %vm384, %v4930
        %4963 = vst.msk [vmem:[#allocation4 + $0xa8] sm:$0xff] %vm384, %v4931
        %4964 = vst.msk [vmem:[#allocation4 + $0xd0] sm:$0xff] %vm384, %v4932
        %4965 = vst.msk [vmem:[#allocation4 + $0xf8] sm:$0xff] %vm384, %v4933
        %4966 = vst.msk [vmem:[#allocation4 + $0x120] sm:$0xff] %vm384, %v4934
        %4967 = vst.msk [vmem:[#allocation4 + $0x148] sm:$0xff] %vm384, %v4935
        %4968 = vst.msk [vmem:[#allocation4 + $0x170] sm:$0xff] %vm384, %v4936
        %4969 = vst.msk [vmem:[#allocation4 + $0x198] sm:$0xff] %vm384, %v4937
        %4970 = vst.msk [vmem:[#allocation4 + $0x1c0] sm:$0xff] %vm384, %v4938
        %4971 = vst.msk [vmem:[#allocation4 + $0x1e8] sm:$0xff] %vm384, %v4939
        %4972 = vst.msk [vmem:[#allocation4 + $0x210] sm:$0xff] %vm384, %v4940
        %4973 = vst.msk [vmem:[#allocation4 + $0x238] sm:$0xff] %vm384, %v4941
        %4974 = vst.msk [vmem:[#allocation4 + $0x260] sm:$0xff] %vm384, %v4942
        %4975 = vst.msk [vmem:[#allocation4 + $0x288] sm:$0xff] %vm384, %v4943
        %4976 = vst.msk [vmem:[#allocation4 + $0x2b0] sm:$0xff] %vm384, %v4944
        %4977 = vst.msk [vmem:[#allocation4 + $0x2d8] sm:$0xff] %vm384, %v4945
        %4978 = vst.msk [vmem:[#allocation4 + $0x300] sm:$0xff] %vm384, %v4946
        %4979 = vst.msk [vmem:[#allocation4 + $0x328] sm:$0xff] %vm384, %v4947
        %4980 = vst.msk [vmem:[#allocation4 + $0x350] sm:$0xff] %vm384, %v4948
        %4981 = vst.msk [vmem:[#allocation4 + $0x378] sm:$0xff] %vm384, %v4949
        %4982 = vst.msk [vmem:[#allocation4 + $0x3a0] sm:$0xff] %vm384, %v4950
        %4983 = vst.msk [vmem:[#allocation4 + $0x3c8] sm:$0xff] %vm384, %v4951
        %4984 = vst.msk [vmem:[#allocation4 + $0x3f0] sm:$0xff] %vm384, %v4952
        %4985 = vst.msk [vmem:[#allocation4 + $0x418] sm:$0xff] %vm384, %v4953
        %4986 = vst.msk [vmem:[#allocation4 + $0x440] sm:$0xff] %vm384, %v4954
        %4987 = vst.msk [vmem:[#allocation4 + $0x468] sm:$0xff] %vm384, %v4955
        %4988 = vst.msk [vmem:[#allocation4 + $0x490] sm:$0xff] %vm384, %v4956
        %4989 = vst.msk [vmem:[#allocation4 + $0x4b8] sm:$0xff] %vm384, %v4957
        %4990 = vst.msk [vmem:[#allocation4 + $0x4e0] sm:$0xff] %vm384, %v4958
        %v4991 = vld [vmem:[%s394 + $0x7] sm:$0xff]
        %v4992 = vld [vmem:[%s394 + $0xf] sm:$0xff]
        %v4993 = vld [vmem:[%s394 + $0x27] sm:$0xff]
        %v4994 = vld [vmem:[%s394 + $0x2f] sm:$0xff]
        %v4995 = vld [vmem:[%s394 + $0x47] sm:$0xff]
        %v4996 = vld [vmem:[%s394 + $0x4f] sm:$0xff]
        %v4997 = vld [vmem:[%s394 + $0x67] sm:$0xff]
        %v4998 = vld [vmem:[%s394 + $0x6f] sm:$0xff]
        %v4999 = vld [vmem:[%s394 + $0x87] sm:$0xff]
        %v5000 = vld [vmem:[%s394 + $0x8f] sm:$0xff]
        %v5001 = vld [vmem:[%s394 + $0xa7] sm:$0xff]
        %v5002 = vld [vmem:[%s394 + $0xaf] sm:$0xff]
        %v5003 = vld [vmem:[%s394 + $0xc7] sm:$0xff]
        %v5004 = vld [vmem:[%s394 + $0xcf] sm:$0xff]
        %v5005 = vld [vmem:[%s394 + $0xe7] sm:$0xff]
        %v5006 = vld [vmem:[%s394 + $0xef] sm:$0xff]
        %v5007 = vld [vmem:[%s394 + $0x107] sm:$0xff]
        %v5008 = vld [vmem:[%s394 + $0x10f] sm:$0xff]
        %v5009 = vld [vmem:[%s394 + $0x127] sm:$0xff]
        %v5010 = vld [vmem:[%s394 + $0x12f] sm:$0xff]
        %v5011 = vld [vmem:[%s394 + $0x147] sm:$0xff]
        %v5012 = vld [vmem:[%s394 + $0x14f] sm:$0xff]
        %v5013 = vld [vmem:[%s394 + $0x167] sm:$0xff]
        %v5014 = vld [vmem:[%s394 + $0x16f] sm:$0xff]
        %v5015 = vld [vmem:[%s394 + $0x187] sm:$0xff]
        %v5016 = vld [vmem:[%s394 + $0x18f] sm:$0xff]
        %v5017 = vld [vmem:[%s394 + $0x1a7] sm:$0xff]
        %v5018 = vld [vmem:[%s394 + $0x1af] sm:$0xff]
        %v5019 = vld [vmem:[%s394 + $0x1c7] sm:$0xff]
        %v5020 = vld [vmem:[%s394 + $0x1cf] sm:$0xff]
        %v5021 = vld [vmem:[%s394 + $0x1e7] sm:$0xff]
        %v5022 = vld [vmem:[%s394 + $0x1ef] sm:$0xff]
        %5055 = vrot.lane.b32.xlu0 %v4991, 64
        %v5056 = vpop.permute.xlu0 %5055
        %5057 = vrot.lane.b32.xlu0 %v4992, 64
        %v5058 = vpop.permute.xlu0 %5057
        %5059 = vrot.lane.b32.xlu0 %v4993, 64
        %v5060 = vpop.permute.xlu0 %5059
        %5061 = vrot.lane.b32.xlu0 %v4994, 64
        %v5062 = vpop.permute.xlu0 %5061
        %5063 = vrot.lane.b32.xlu0 %v4995, 64
        %v5064 = vpop.permute.xlu0 %5063
        %5065 = vrot.lane.b32.xlu0 %v4996, 64
        %v5066 = vpop.permute.xlu0 %5065
        %5067 = vrot.lane.b32.xlu0 %v4997, 64
        %v5068 = vpop.permute.xlu0 %5067
        %5069 = vrot.lane.b32.xlu0 %v4998, 64
        %v5070 = vpop.permute.xlu0 %5069
        %5071 = vrot.lane.b32.xlu0 %v4999, 64
        %v5072 = vpop.permute.xlu0 %5071
        %5073 = vrot.lane.b32.xlu0 %v5000, 64
        %v5074 = vpop.permute.xlu0 %5073
        %5075 = vrot.lane.b32.xlu0 %v5001, 64
        %v5076 = vpop.permute.xlu0 %5075
        %5077 = vrot.lane.b32.xlu0 %v5002, 64
        %v5078 = vpop.permute.xlu0 %5077
        %5079 = vrot.lane.b32.xlu0 %v5003, 64
        %v5080 = vpop.permute.xlu0 %5079
        %5081 = vrot.lane.b32.xlu0 %v5004, 64
        %v5082 = vpop.permute.xlu0 %5081
        %5083 = vrot.lane.b32.xlu0 %v5005, 64
        %v5084 = vpop.permute.xlu0 %5083
        %5085 = vrot.lane.b32.xlu0 %v5006, 64
        %v5086 = vpop.permute.xlu0 %5085
        %5087 = vrot.lane.b32.xlu0 %v5007, 64
        %v5088 = vpop.permute.xlu0 %5087
        %5089 = vrot.lane.b32.xlu0 %v5008, 64
        %v5090 = vpop.permute.xlu0 %5089
        %5091 = vrot.lane.b32.xlu0 %v5009, 64
        %v5092 = vpop.permute.xlu0 %5091
        %5093 = vrot.lane.b32.xlu0 %v5010, 64
        %v5094 = vpop.permute.xlu0 %5093
        %5095 = vrot.lane.b32.xlu0 %v5011, 64
        %v5096 = vpop.permute.xlu0 %5095
        %5097 = vrot.lane.b32.xlu0 %v5012, 64
        %v5098 = vpop.permute.xlu0 %5097
        %5099 = vrot.lane.b32.xlu0 %v5013, 64
        %v5100 = vpop.permute.xlu0 %5099
        %5101 = vrot.lane.b32.xlu0 %v5014, 64
        %v5102 = vpop.permute.xlu0 %5101
        %5103 = vrot.lane.b32.xlu0 %v5015, 64
        %v5104 = vpop.permute.xlu0 %5103
        %5105 = vrot.lane.b32.xlu0 %v5016, 64
        %v5106 = vpop.permute.xlu0 %5105
        %5107 = vrot.lane.b32.xlu0 %v5017, 64
        %v5108 = vpop.permute.xlu0 %5107
        %5109 = vrot.lane.b32.xlu0 %v5018, 64
        %v5110 = vpop.permute.xlu0 %5109
        %5111 = vrot.lane.b32.xlu0 %v5019, 64
        %v5112 = vpop.permute.xlu0 %5111
        %5113 = vrot.lane.b32.xlu0 %v5020, 64
        %v5114 = vpop.permute.xlu0 %5113
        %5115 = vrot.lane.b32.xlu0 %v5021, 64
        %v5116 = vpop.permute.xlu0 %5115
        %5117 = vrot.lane.b32.xlu0 %v5022, 64
        %v5118 = vpop.permute.xlu0 %5117
        %5151 = vst.msk [vmem:[#allocation4 + $0x8] sm:$0xff] %vm4894, %v5056
        %5152 = vst.msk [vmem:[#allocation4 + $0x30] sm:$0xff] %vm4894, %v5058
        %5153 = vst.msk [vmem:[#allocation4 + $0x58] sm:$0xff] %vm4894, %v5060
        %5154 = vst.msk [vmem:[#allocation4 + $0x80] sm:$0xff] %vm4894, %v5062
        %5155 = vst.msk [vmem:[#allocation4 + $0xa8] sm:$0xff] %vm4894, %v5064
        %5156 = vst.msk [vmem:[#allocation4 + $0xd0] sm:$0xff] %vm4894, %v5066
        %5157 = vst.msk [vmem:[#allocation4 + $0xf8] sm:$0xff] %vm4894, %v5068
        %5158 = vst.msk [vmem:[#allocation4 + $0x120] sm:$0xff] %vm4894, %v5070
        %5159 = vst.msk [vmem:[#allocation4 + $0x148] sm:$0xff] %vm4894, %v5072
        %5160 = vst.msk [vmem:[#allocation4 + $0x170] sm:$0xff] %vm4894, %v5074
        %5161 = vst.msk [vmem:[#allocation4 + $0x198] sm:$0xff] %vm4894, %v5076
        %5162 = vst.msk [vmem:[#allocation4 + $0x1c0] sm:$0xff] %vm4894, %v5078
        %5163 = vst.msk [vmem:[#allocation4 + $0x1e8] sm:$0xff] %vm4894, %v5080
        %5164 = vst.msk [vmem:[#allocation4 + $0x210] sm:$0xff] %vm4894, %v5082
        %5165 = vst.msk [vmem:[#allocation4 + $0x238] sm:$0xff] %vm4894, %v5084
        %5166 = vst.msk [vmem:[#allocation4 + $0x260] sm:$0xff] %vm4894, %v5086
        %5167 = vst.msk [vmem:[#allocation4 + $0x288] sm:$0xff] %vm4894, %v5088
        %5168 = vst.msk [vmem:[#allocation4 + $0x2b0] sm:$0xff] %vm4894, %v5090
        %5169 = vst.msk [vmem:[#allocation4 + $0x2d8] sm:$0xff] %vm4894, %v5092
        %5170 = vst.msk [vmem:[#allocation4 + $0x300] sm:$0xff] %vm4894, %v5094
        %5171 = vst.msk [vmem:[#allocation4 + $0x328] sm:$0xff] %vm4894, %v5096
        %5172 = vst.msk [vmem:[#allocation4 + $0x350] sm:$0xff] %vm4894, %v5098
        %5173 = vst.msk [vmem:[#allocation4 + $0x378] sm:$0xff] %vm4894, %v5100
        %5174 = vst.msk [vmem:[#allocation4 + $0x3a0] sm:$0xff] %vm4894, %v5102
        %5175 = vst.msk [vmem:[#allocation4 + $0x3c8] sm:$0xff] %vm4894, %v5104
        %5176 = vst.msk [vmem:[#allocation4 + $0x3f0] sm:$0xff] %vm4894, %v5106
        %5177 = vst.msk [vmem:[#allocation4 + $0x418] sm:$0xff] %vm4894, %v5108
        %5178 = vst.msk [vmem:[#allocation4 + $0x440] sm:$0xff] %vm4894, %v5110
        %5179 = vst.msk [vmem:[#allocation4 + $0x468] sm:$0xff] %vm4894, %v5112
        %5180 = vst.msk [vmem:[#allocation4 + $0x490] sm:$0xff] %vm4894, %v5114
        %5181 = vst.msk [vmem:[#allocation4 + $0x4b8] sm:$0xff] %vm4894, %v5116
        %5182 = vst.msk [vmem:[#allocation4 + $0x4e0] sm:$0xff] %vm4894, %v5118
        %v5183 = vld [vmem:[%s394 + $0x8] sm:$0xff]
        %v5184 = vld [vmem:[%s394 + $0x10] sm:$0xff]
        %v5185 = vld [vmem:[%s394 + $0x28] sm:$0xff]
        %v5186 = vld [vmem:[%s394 + $0x30] sm:$0xff]
        %v5187 = vld [vmem:[%s394 + $0x48] sm:$0xff]
        %v5188 = vld [vmem:[%s394 + $0x50] sm:$0xff]
        %v5189 = vld [vmem:[%s394 + $0x68] sm:$0xff]
        %v5190 = vld [vmem:[%s394 + $0x70] sm:$0xff]
        %v5191 = vld [vmem:[%s394 + $0x88] sm:$0xff]
        %v5192 = vld [vmem:[%s394 + $0x90] sm:$0xff]
        %v5193 = vld [vmem:[%s394 + $0xa8] sm:$0xff]
        %v5194 = vld [vmem:[%s394 + $0xb0] sm:$0xff]
        %v5195 = vld [vmem:[%s394 + $0xc8] sm:$0xff]
        %v5196 = vld [vmem:[%s394 + $0xd0] sm:$0xff]
        %v5197 = vld [vmem:[%s394 + $0xe8] sm:$0xff]
        %v5198 = vld [vmem:[%s394 + $0xf0] sm:$0xff]
        %v5199 = vld [vmem:[%s394 + $0x108] sm:$0xff]
        %v5200 = vld [vmem:[%s394 + $0x110] sm:$0xff]
        %v5201 = vld [vmem:[%s394 + $0x128] sm:$0xff]
        %v5202 = vld [vmem:[%s394 + $0x130] sm:$0xff]
        %v5203 = vld [vmem:[%s394 + $0x148] sm:$0xff]
        %v5204 = vld [vmem:[%s394 + $0x150] sm:$0xff]
        %v5205 = vld [vmem:[%s394 + $0x168] sm:$0xff]
        %v5206 = vld [vmem:[%s394 + $0x170] sm:$0xff]
        %v5207 = vld [vmem:[%s394 + $0x188] sm:$0xff]
        %v5208 = vld [vmem:[%s394 + $0x190] sm:$0xff]
        %v5209 = vld [vmem:[%s394 + $0x1a8] sm:$0xff]
        %v5210 = vld [vmem:[%s394 + $0x1b0] sm:$0xff]
        %v5211 = vld [vmem:[%s394 + $0x1c8] sm:$0xff]
        %v5212 = vld [vmem:[%s394 + $0x1d0] sm:$0xff]
        %v5213 = vld [vmem:[%s394 + $0x1e8] sm:$0xff]
        %v5214 = vld [vmem:[%s394 + $0x1f0] sm:$0xff]
        %5215 = vst.msk [vmem:[#allocation4 + $0x10] sm:$0xff] %vm384, %v5183
        %5216 = vst.msk [vmem:[#allocation4 + $0x38] sm:$0xff] %vm384, %v5184
        %5217 = vst.msk [vmem:[#allocation4 + $0x60] sm:$0xff] %vm384, %v5185
        %5218 = vst.msk [vmem:[#allocation4 + $0x88] sm:$0xff] %vm384, %v5186
        %5219 = vst.msk [vmem:[#allocation4 + $0xb0] sm:$0xff] %vm384, %v5187
        %5220 = vst.msk [vmem:[#allocation4 + $0xd8] sm:$0xff] %vm384, %v5188
        %5221 = vst.msk [vmem:[#allocation4 + $0x100] sm:$0xff] %vm384, %v5189
        %5222 = vst.msk [vmem:[#allocation4 + $0x128] sm:$0xff] %vm384, %v5190
        %5223 = vst.msk [vmem:[#allocation4 + $0x150] sm:$0xff] %vm384, %v5191
        %5224 = vst.msk [vmem:[#allocation4 + $0x178] sm:$0xff] %vm384, %v5192
        %5225 = vst.msk [vmem:[#allocation4 + $0x1a0] sm:$0xff] %vm384, %v5193
        %5226 = vst.msk [vmem:[#allocation4 + $0x1c8] sm:$0xff] %vm384, %v5194
        %5227 = vst.msk [vmem:[#allocation4 + $0x1f0] sm:$0xff] %vm384, %v5195
        %5228 = vst.msk [vmem:[#allocation4 + $0x218] sm:$0xff] %vm384, %v5196
        %5229 = vst.msk [vmem:[#allocation4 + $0x240] sm:$0xff] %vm384, %v5197
        %5230 = vst.msk [vmem:[#allocation4 + $0x268] sm:$0xff] %vm384, %v5198
        %5231 = vst.msk [vmem:[#allocation4 + $0x290] sm:$0xff] %vm384, %v5199
        %5232 = vst.msk [vmem:[#allocation4 + $0x2b8] sm:$0xff] %vm384, %v5200
        %5233 = vst.msk [vmem:[#allocation4 + $0x2e0] sm:$0xff] %vm384, %v5201
        %5234 = vst.msk [vmem:[#allocation4 + $0x308] sm:$0xff] %vm384, %v5202
        %5235 = vst.msk [vmem:[#allocation4 + $0x330] sm:$0xff] %vm384, %v5203
        %5236 = vst.msk [vmem:[#allocation4 + $0x358] sm:$0xff] %vm384, %v5204
        %5237 = vst.msk [vmem:[#allocation4 + $0x380] sm:$0xff] %vm384, %v5205
        %5238 = vst.msk [vmem:[#allocation4 + $0x3a8] sm:$0xff] %vm384, %v5206
        %5239 = vst.msk [vmem:[#allocation4 + $0x3d0] sm:$0xff] %vm384, %v5207
        %5240 = vst.msk [vmem:[#allocation4 + $0x3f8] sm:$0xff] %vm384, %v5208
        %5241 = vst.msk [vmem:[#allocation4 + $0x420] sm:$0xff] %vm384, %v5209
        %5242 = vst.msk [vmem:[#allocation4 + $0x448] sm:$0xff] %vm384, %v5210
        %5243 = vst.msk [vmem:[#allocation4 + $0x470] sm:$0xff] %vm384, %v5211
        %5244 = vst.msk [vmem:[#allocation4 + $0x498] sm:$0xff] %vm384, %v5212
        %5245 = vst.msk [vmem:[#allocation4 + $0x4c0] sm:$0xff] %vm384, %v5213
        %5246 = vst.msk [vmem:[#allocation4 + $0x4e8] sm:$0xff] %vm384, %v5214
        %v5247 = vld [vmem:[%s394 + $0x9] sm:$0xff]
        %v5248 = vld [vmem:[%s394 + $0x11] sm:$0xff]
        %v5249 = vld [vmem:[%s394 + $0x29] sm:$0xff]
        %v5250 = vld [vmem:[%s394 + $0x31] sm:$0xff]
        %v5251 = vld [vmem:[%s394 + $0x49] sm:$0xff]
        %v5252 = vld [vmem:[%s394 + $0x51] sm:$0xff]
        %v5253 = vld [vmem:[%s394 + $0x69] sm:$0xff]
        %v5254 = vld [vmem:[%s394 + $0x71] sm:$0xff]
        %v5255 = vld [vmem:[%s394 + $0x89] sm:$0xff]
        %v5256 = vld [vmem:[%s394 + $0x91] sm:$0xff]
        %v5257 = vld [vmem:[%s394 + $0xa9] sm:$0xff]
        %v5258 = vld [vmem:[%s394 + $0xb1] sm:$0xff]
        %v5259 = vld [vmem:[%s394 + $0xc9] sm:$0xff]
        %v5260 = vld [vmem:[%s394 + $0xd1] sm:$0xff]
        %v5261 = vld [vmem:[%s394 + $0xe9] sm:$0xff]
        %v5262 = vld [vmem:[%s394 + $0xf1] sm:$0xff]
        %v5263 = vld [vmem:[%s394 + $0x109] sm:$0xff]
        %v5264 = vld [vmem:[%s394 + $0x111] sm:$0xff]
        %v5265 = vld [vmem:[%s394 + $0x129] sm:$0xff]
        %v5266 = vld [vmem:[%s394 + $0x131] sm:$0xff]
        %v5267 = vld [vmem:[%s394 + $0x149] sm:$0xff]
        %v5268 = vld [vmem:[%s394 + $0x151] sm:$0xff]
        %v5269 = vld [vmem:[%s394 + $0x169] sm:$0xff]
        %v5270 = vld [vmem:[%s394 + $0x171] sm:$0xff]
        %v5271 = vld [vmem:[%s394 + $0x189] sm:$0xff]
        %v5272 = vld [vmem:[%s394 + $0x191] sm:$0xff]
        %v5273 = vld [vmem:[%s394 + $0x1a9] sm:$0xff]
        %v5274 = vld [vmem:[%s394 + $0x1b1] sm:$0xff]
        %v5275 = vld [vmem:[%s394 + $0x1c9] sm:$0xff]
        %v5276 = vld [vmem:[%s394 + $0x1d1] sm:$0xff]
        %v5277 = vld [vmem:[%s394 + $0x1e9] sm:$0xff]
        %v5278 = vld [vmem:[%s394 + $0x1f1] sm:$0xff]
        %5311 = vrot.lane.b32.xlu0 %v5247, 64
        %v5312 = vpop.permute.xlu0 %5311
        %5313 = vrot.lane.b32.xlu0 %v5248, 64
        %v5314 = vpop.permute.xlu0 %5313
        %5315 = vrot.lane.b32.xlu0 %v5249, 64
        %v5316 = vpop.permute.xlu0 %5315
        %5317 = vrot.lane.b32.xlu0 %v5250, 64
        %v5318 = vpop.permute.xlu0 %5317
        %5319 = vrot.lane.b32.xlu0 %v5251, 64
        %v5320 = vpop.permute.xlu0 %5319
        %5321 = vrot.lane.b32.xlu0 %v5252, 64
        %v5322 = vpop.permute.xlu0 %5321
        %5323 = vrot.lane.b32.xlu0 %v5253, 64
        %v5324 = vpop.permute.xlu0 %5323
        %5325 = vrot.lane.b32.xlu0 %v5254, 64
        %v5326 = vpop.permute.xlu0 %5325
        %5327 = vrot.lane.b32.xlu0 %v5255, 64
        %v5328 = vpop.permute.xlu0 %5327
        %5329 = vrot.lane.b32.xlu0 %v5256, 64
        %v5330 = vpop.permute.xlu0 %5329
        %5331 = vrot.lane.b32.xlu0 %v5257, 64
        %v5332 = vpop.permute.xlu0 %5331
        %5333 = vrot.lane.b32.xlu0 %v5258, 64
        %v5334 = vpop.permute.xlu0 %5333
        %5335 = vrot.lane.b32.xlu0 %v5259, 64
        %v5336 = vpop.permute.xlu0 %5335
        %5337 = vrot.lane.b32.xlu0 %v5260, 64
        %v5338 = vpop.permute.xlu0 %5337
        %5339 = vrot.lane.b32.xlu0 %v5261, 64
        %v5340 = vpop.permute.xlu0 %5339
        %5341 = vrot.lane.b32.xlu0 %v5262, 64
        %v5342 = vpop.permute.xlu0 %5341
        %5343 = vrot.lane.b32.xlu0 %v5263, 64
        %v5344 = vpop.permute.xlu0 %5343
        %5345 = vrot.lane.b32.xlu0 %v5264, 64
        %v5346 = vpop.permute.xlu0 %5345
        %5347 = vrot.lane.b32.xlu0 %v5265, 64
        %v5348 = vpop.permute.xlu0 %5347
        %5349 = vrot.lane.b32.xlu0 %v5266, 64
        %v5350 = vpop.permute.xlu0 %5349
        %5351 = vrot.lane.b32.xlu0 %v5267, 64
        %v5352 = vpop.permute.xlu0 %5351
        %5353 = vrot.lane.b32.xlu0 %v5268, 64
        %v5354 = vpop.permute.xlu0 %5353
        %5355 = vrot.lane.b32.xlu0 %v5269, 64
        %v5356 = vpop.permute.xlu0 %5355
        %5357 = vrot.lane.b32.xlu0 %v5270, 64
        %v5358 = vpop.permute.xlu0 %5357
        %5359 = vrot.lane.b32.xlu0 %v5271, 64
        %v5360 = vpop.permute.xlu0 %5359
        %5361 = vrot.lane.b32.xlu0 %v5272, 64
        %v5362 = vpop.permute.xlu0 %5361
        %5363 = vrot.lane.b32.xlu0 %v5273, 64
        %v5364 = vpop.permute.xlu0 %5363
        %5365 = vrot.lane.b32.xlu0 %v5274, 64
        %v5366 = vpop.permute.xlu0 %5365
        %5367 = vrot.lane.b32.xlu0 %v5275, 64
        %v5368 = vpop.permute.xlu0 %5367
        %5369 = vrot.lane.b32.xlu0 %v5276, 64
        %v5370 = vpop.permute.xlu0 %5369
        %5371 = vrot.lane.b32.xlu0 %v5277, 64
        %v5372 = vpop.permute.xlu0 %5371
        %5373 = vrot.lane.b32.xlu0 %v5278, 64
        %v5374 = vpop.permute.xlu0 %5373
        %5407 = vst.msk [vmem:[#allocation4 + $0x10] sm:$0xff] %vm4894, %v5312
        %5408 = vst.msk [vmem:[#allocation4 + $0x38] sm:$0xff] %vm4894, %v5314
        %5409 = vst.msk [vmem:[#allocation4 + $0x60] sm:$0xff] %vm4894, %v5316
        %5410 = vst.msk [vmem:[#allocation4 + $0x88] sm:$0xff] %vm4894, %v5318
        %5411 = vst.msk [vmem:[#allocation4 + $0xb0] sm:$0xff] %vm4894, %v5320
        %5412 = vst.msk [vmem:[#allocation4 + $0xd8] sm:$0xff] %vm4894, %v5322
        %5413 = vst.msk [vmem:[#allocation4 + $0x100] sm:$0xff] %vm4894, %v5324
        %5414 = vst.msk [vmem:[#allocation4 + $0x128] sm:$0xff] %vm4894, %v5326
        %5415 = vst.msk [vmem:[#allocation4 + $0x150] sm:$0xff] %vm4894, %v5328
        %5416 = vst.msk [vmem:[#allocation4 + $0x178] sm:$0xff] %vm4894, %v5330
        %5417 = vst.msk [vmem:[#allocation4 + $0x1a0] sm:$0xff] %vm4894, %v5332
        %5418 = vst.msk [vmem:[#allocation4 + $0x1c8] sm:$0xff] %vm4894, %v5334
        %5419 = vst.msk [vmem:[#allocation4 + $0x1f0] sm:$0xff] %vm4894, %v5336
        %5420 = vst.msk [vmem:[#allocation4 + $0x218] sm:$0xff] %vm4894, %v5338
        %5421 = vst.msk [vmem:[#allocation4 + $0x240] sm:$0xff] %vm4894, %v5340
        %5422 = vst.msk [vmem:[#allocation4 + $0x268] sm:$0xff] %vm4894, %v5342
        %5423 = vst.msk [vmem:[#allocation4 + $0x290] sm:$0xff] %vm4894, %v5344
        %5424 = vst.msk [vmem:[#allocation4 + $0x2b8] sm:$0xff] %vm4894, %v5346
        %5425 = vst.msk [vmem:[#allocation4 + $0x2e0] sm:$0xff] %vm4894, %v5348
        %5426 = vst.msk [vmem:[#allocation4 + $0x308] sm:$0xff] %vm4894, %v5350
        %5427 = vst.msk [vmem:[#allocation4 + $0x330] sm:$0xff] %vm4894, %v5352
        %5428 = vst.msk [vmem:[#allocation4 + $0x358] sm:$0xff] %vm4894, %v5354
        %5429 = vst.msk [vmem:[#allocation4 + $0x380] sm:$0xff] %vm4894, %v5356
        %5430 = vst.msk [vmem:[#allocation4 + $0x3a8] sm:$0xff] %vm4894, %v5358
        %5431 = vst.msk [vmem:[#allocation4 + $0x3d0] sm:$0xff] %vm4894, %v5360
        %5432 = vst.msk [vmem:[#allocation4 + $0x3f8] sm:$0xff] %vm4894, %v5362
        %5433 = vst.msk [vmem:[#allocation4 + $0x420] sm:$0xff] %vm4894, %v5364
        %5434 = vst.msk [vmem:[#allocation4 + $0x448] sm:$0xff] %vm4894, %v5366
        %5435 = vst.msk [vmem:[#allocation4 + $0x470] sm:$0xff] %vm4894, %v5368
        %5436 = vst.msk [vmem:[#allocation4 + $0x498] sm:$0xff] %vm4894, %v5370
        %5437 = vst.msk [vmem:[#allocation4 + $0x4c0] sm:$0xff] %vm4894, %v5372
        %5438 = vst.msk [vmem:[#allocation4 + $0x4e8] sm:$0xff] %vm4894, %v5374
        %s5439 = scalar_lea.vmem [#allocation3], 64
        %v5440 = vld [vmem:[%s5439 + $0x7] sm:$0xff]
        %v5441 = vld [vmem:[%s5439 + $0xf] sm:$0xff]
        %v5442 = vld [vmem:[%s5439 + $0x27] sm:$0xff]
        %v5443 = vld [vmem:[%s5439 + $0x2f] sm:$0xff]
        %v5444 = vld [vmem:[%s5439 + $0x47] sm:$0xff]
        %v5445 = vld [vmem:[%s5439 + $0x4f] sm:$0xff]
        %v5446 = vld [vmem:[%s5439 + $0x67] sm:$0xff]
        %v5447 = vld [vmem:[%s5439 + $0x6f] sm:$0xff]
        %v5448 = vld [vmem:[%s5439 + $0x87] sm:$0xff]
        %v5449 = vld [vmem:[%s5439 + $0x8f] sm:$0xff]
        %v5450 = vld [vmem:[%s5439 + $0xa7] sm:$0xff]
        %v5451 = vld [vmem:[%s5439 + $0xaf] sm:$0xff]
        %v5452 = vld [vmem:[%s5439 + $0xc7] sm:$0xff]
        %v5453 = vld [vmem:[%s5439 + $0xcf] sm:$0xff]
        %v5454 = vld [vmem:[%s5439 + $0xe7] sm:$0xff]
        %v5455 = vld [vmem:[%s5439 + $0xef] sm:$0xff]
        %v5456 = vld [vmem:[%s5439 + $0x107] sm:$0xff]
        %v5457 = vld [vmem:[%s5439 + $0x10f] sm:$0xff]
        %v5458 = vld [vmem:[%s5439 + $0x127] sm:$0xff]
        %v5459 = vld [vmem:[%s5439 + $0x12f] sm:$0xff]
        %v5460 = vld [vmem:[%s5439 + $0x147] sm:$0xff]
        %v5461 = vld [vmem:[%s5439 + $0x14f] sm:$0xff]
        %v5462 = vld [vmem:[%s5439 + $0x167] sm:$0xff]
        %v5463 = vld [vmem:[%s5439 + $0x16f] sm:$0xff]
        %v5464 = vld [vmem:[%s5439 + $0x187] sm:$0xff]
        %v5465 = vld [vmem:[%s5439 + $0x18f] sm:$0xff]
        %v5466 = vld [vmem:[%s5439 + $0x1a7] sm:$0xff]
        %v5467 = vld [vmem:[%s5439 + $0x1af] sm:$0xff]
        %v5468 = vld [vmem:[%s5439 + $0x1c7] sm:$0xff]
        %v5469 = vld [vmem:[%s5439 + $0x1cf] sm:$0xff]
        %v5470 = vld [vmem:[%s5439 + $0x1e7] sm:$0xff]
        %v5471 = vld [vmem:[%s5439 + $0x1ef] sm:$0xff]
        %5472 = vst.msk [vmem:[#allocation4 + $0x18] sm:$0xff] %vm384, %v5440
        %5473 = vst.msk [vmem:[#allocation4 + $0x40] sm:$0xff] %vm384, %v5441
        %5474 = vst.msk [vmem:[#allocation4 + $0x68] sm:$0xff] %vm384, %v5442
        %5475 = vst.msk [vmem:[#allocation4 + $0x90] sm:$0xff] %vm384, %v5443
        %5476 = vst.msk [vmem:[#allocation4 + $0xb8] sm:$0xff] %vm384, %v5444
        %5477 = vst.msk [vmem:[#allocation4 + $0xe0] sm:$0xff] %vm384, %v5445
        %5478 = vst.msk [vmem:[#allocation4 + $0x108] sm:$0xff] %vm384, %v5446
        %5479 = vst.msk [vmem:[#allocation4 + $0x130] sm:$0xff] %vm384, %v5447
        %5480 = vst.msk [vmem:[#allocation4 + $0x158] sm:$0xff] %vm384, %v5448
        %5481 = vst.msk [vmem:[#allocation4 + $0x180] sm:$0xff] %vm384, %v5449
        %5482 = vst.msk [vmem:[#allocation4 + $0x1a8] sm:$0xff] %vm384, %v5450
        %5483 = vst.msk [vmem:[#allocation4 + $0x1d0] sm:$0xff] %vm384, %v5451
        %5484 = vst.msk [vmem:[#allocation4 + $0x1f8] sm:$0xff] %vm384, %v5452
        %5485 = vst.msk [vmem:[#allocation4 + $0x220] sm:$0xff] %vm384, %v5453
        %5486 = vst.msk [vmem:[#allocation4 + $0x248] sm:$0xff] %vm384, %v5454
        %5487 = vst.msk [vmem:[#allocation4 + $0x270] sm:$0xff] %vm384, %v5455
        %5488 = vst.msk [vmem:[#allocation4 + $0x298] sm:$0xff] %vm384, %v5456
        %5489 = vst.msk [vmem:[#allocation4 + $0x2c0] sm:$0xff] %vm384, %v5457
        %5490 = vst.msk [vmem:[#allocation4 + $0x2e8] sm:$0xff] %vm384, %v5458
        %5491 = vst.msk [vmem:[#allocation4 + $0x310] sm:$0xff] %vm384, %v5459
        %5492 = vst.msk [vmem:[#allocation4 + $0x338] sm:$0xff] %vm384, %v5460
        %5493 = vst.msk [vmem:[#allocation4 + $0x360] sm:$0xff] %vm384, %v5461
        %5494 = vst.msk [vmem:[#allocation4 + $0x388] sm:$0xff] %vm384, %v5462
        %5495 = vst.msk [vmem:[#allocation4 + $0x3b0] sm:$0xff] %vm384, %v5463
        %5496 = vst.msk [vmem:[#allocation4 + $0x3d8] sm:$0xff] %vm384, %v5464
        %5497 = vst.msk [vmem:[#allocation4 + $0x400] sm:$0xff] %vm384, %v5465
        %5498 = vst.msk [vmem:[#allocation4 + $0x428] sm:$0xff] %vm384, %v5466
        %5499 = vst.msk [vmem:[#allocation4 + $0x450] sm:$0xff] %vm384, %v5467
        %5500 = vst.msk [vmem:[#allocation4 + $0x478] sm:$0xff] %vm384, %v5468
        %5501 = vst.msk [vmem:[#allocation4 + $0x4a0] sm:$0xff] %vm384, %v5469
        %5502 = vst.msk [vmem:[#allocation4 + $0x4c8] sm:$0xff] %vm384, %v5470
        %5503 = vst.msk [vmem:[#allocation4 + $0x4f0] sm:$0xff] %vm384, %v5471
        %v5504 = vld [vmem:[%s5439 + $0x8] sm:$0xff]
        %v5505 = vld [vmem:[%s5439 + $0x10] sm:$0xff]
        %v5506 = vld [vmem:[%s5439 + $0x28] sm:$0xff]
        %v5507 = vld [vmem:[%s5439 + $0x30] sm:$0xff]
        %v5508 = vld [vmem:[%s5439 + $0x48] sm:$0xff]
        %v5509 = vld [vmem:[%s5439 + $0x50] sm:$0xff]
        %v5510 = vld [vmem:[%s5439 + $0x68] sm:$0xff]
        %v5511 = vld [vmem:[%s5439 + $0x70] sm:$0xff]
        %v5512 = vld [vmem:[%s5439 + $0x88] sm:$0xff]
        %v5513 = vld [vmem:[%s5439 + $0x90] sm:$0xff]
        %v5514 = vld [vmem:[%s5439 + $0xa8] sm:$0xff]
        %v5515 = vld [vmem:[%s5439 + $0xb0] sm:$0xff]
        %v5516 = vld [vmem:[%s5439 + $0xc8] sm:$0xff]
        %v5517 = vld [vmem:[%s5439 + $0xd0] sm:$0xff]
        %v5518 = vld [vmem:[%s5439 + $0xe8] sm:$0xff]
        %v5519 = vld [vmem:[%s5439 + $0xf0] sm:$0xff]
        %v5520 = vld [vmem:[%s5439 + $0x108] sm:$0xff]
        %v5521 = vld [vmem:[%s5439 + $0x110] sm:$0xff]
        %v5522 = vld [vmem:[%s5439 + $0x128] sm:$0xff]
        %v5523 = vld [vmem:[%s5439 + $0x130] sm:$0xff]
        %v5524 = vld [vmem:[%s5439 + $0x148] sm:$0xff]
        %v5525 = vld [vmem:[%s5439 + $0x150] sm:$0xff]
        %v5526 = vld [vmem:[%s5439 + $0x168] sm:$0xff]
        %v5527 = vld [vmem:[%s5439 + $0x170] sm:$0xff]
        %v5528 = vld [vmem:[%s5439 + $0x188] sm:$0xff]
        %v5529 = vld [vmem:[%s5439 + $0x190] sm:$0xff]
        %v5530 = vld [vmem:[%s5439 + $0x1a8] sm:$0xff]
        %v5531 = vld [vmem:[%s5439 + $0x1b0] sm:$0xff]
        %v5532 = vld [vmem:[%s5439 + $0x1c8] sm:$0xff]
        %v5533 = vld [vmem:[%s5439 + $0x1d0] sm:$0xff]
        %v5534 = vld [vmem:[%s5439 + $0x1e8] sm:$0xff]
        %v5535 = vld [vmem:[%s5439 + $0x1f0] sm:$0xff]
        %5568 = vrot.lane.b32.xlu0 %v5504, 64
        %v5569 = vpop.permute.xlu0 %5568
        %5570 = vrot.lane.b32.xlu0 %v5505, 64
        %v5571 = vpop.permute.xlu0 %5570
        %5572 = vrot.lane.b32.xlu0 %v5506, 64
        %v5573 = vpop.permute.xlu0 %5572
        %5574 = vrot.lane.b32.xlu0 %v5507, 64
        %v5575 = vpop.permute.xlu0 %5574
        %5576 = vrot.lane.b32.xlu0 %v5508, 64
        %v5577 = vpop.permute.xlu0 %5576
        %5578 = vrot.lane.b32.xlu0 %v5509, 64
        %v5579 = vpop.permute.xlu0 %5578
        %5580 = vrot.lane.b32.xlu0 %v5510, 64
        %v5581 = vpop.permute.xlu0 %5580
        %5582 = vrot.lane.b32.xlu0 %v5511, 64
        %v5583 = vpop.permute.xlu0 %5582
        %5584 = vrot.lane.b32.xlu0 %v5512, 64
        %v5585 = vpop.permute.xlu0 %5584
        %5586 = vrot.lane.b32.xlu0 %v5513, 64
        %v5587 = vpop.permute.xlu0 %5586
        %5588 = vrot.lane.b32.xlu0 %v5514, 64
        %v5589 = vpop.permute.xlu0 %5588
        %5590 = vrot.lane.b32.xlu0 %v5515, 64
        %v5591 = vpop.permute.xlu0 %5590
        %5592 = vrot.lane.b32.xlu0 %v5516, 64
        %v5593 = vpop.permute.xlu0 %5592
        %5594 = vrot.lane.b32.xlu0 %v5517, 64
        %v5595 = vpop.permute.xlu0 %5594
        %5596 = vrot.lane.b32.xlu0 %v5518, 64
        %v5597 = vpop.permute.xlu0 %5596
        %5598 = vrot.lane.b32.xlu0 %v5519, 64
        %v5599 = vpop.permute.xlu0 %5598
        %5600 = vrot.lane.b32.xlu0 %v5520, 64
        %v5601 = vpop.permute.xlu0 %5600
        %5602 = vrot.lane.b32.xlu0 %v5521, 64
        %v5603 = vpop.permute.xlu0 %5602
        %5604 = vrot.lane.b32.xlu0 %v5522, 64
        %v5605 = vpop.permute.xlu0 %5604
        %5606 = vrot.lane.b32.xlu0 %v5523, 64
        %v5607 = vpop.permute.xlu0 %5606
        %5608 = vrot.lane.b32.xlu0 %v5524, 64
        %v5609 = vpop.permute.xlu0 %5608
        %5610 = vrot.lane.b32.xlu0 %v5525, 64
        %v5611 = vpop.permute.xlu0 %5610
        %5612 = vrot.lane.b32.xlu0 %v5526, 64
        %v5613 = vpop.permute.xlu0 %5612
        %5614 = vrot.lane.b32.xlu0 %v5527, 64
        %v5615 = vpop.permute.xlu0 %5614
        %5616 = vrot.lane.b32.xlu0 %v5528, 64
        %v5617 = vpop.permute.xlu0 %5616
        %5618 = vrot.lane.b32.xlu0 %v5529, 64
        %v5619 = vpop.permute.xlu0 %5618
        %5620 = vrot.lane.b32.xlu0 %v5530, 64
        %v5621 = vpop.permute.xlu0 %5620
        %5622 = vrot.lane.b32.xlu0 %v5531, 64
        %v5623 = vpop.permute.xlu0 %5622
        %5624 = vrot.lane.b32.xlu0 %v5532, 64
        %v5625 = vpop.permute.xlu0 %5624
        %5626 = vrot.lane.b32.xlu0 %v5533, 64
        %v5627 = vpop.permute.xlu0 %5626
        %5628 = vrot.lane.b32.xlu0 %v5534, 64
        %v5629 = vpop.permute.xlu0 %5628
        %5630 = vrot.lane.b32.xlu0 %v5535, 64
        %v5631 = vpop.permute.xlu0 %5630
        %5664 = vst.msk [vmem:[#allocation4 + $0x18] sm:$0xff] %vm4894, %v5569
        %5665 = vst.msk [vmem:[#allocation4 + $0x40] sm:$0xff] %vm4894, %v5571
        %5666 = vst.msk [vmem:[#allocation4 + $0x68] sm:$0xff] %vm4894, %v5573
        %5667 = vst.msk [vmem:[#allocation4 + $0x90] sm:$0xff] %vm4894, %v5575
        %5668 = vst.msk [vmem:[#allocation4 + $0xb8] sm:$0xff] %vm4894, %v5577
        %5669 = vst.msk [vmem:[#allocation4 + $0xe0] sm:$0xff] %vm4894, %v5579
        %5670 = vst.msk [vmem:[#allocation4 + $0x108] sm:$0xff] %vm4894, %v5581
        %5671 = vst.msk [vmem:[#allocation4 + $0x130] sm:$0xff] %vm4894, %v5583
        %5672 = vst.msk [vmem:[#allocation4 + $0x158] sm:$0xff] %vm4894, %v5585
        %5673 = vst.msk [vmem:[#allocation4 + $0x180] sm:$0xff] %vm4894, %v5587
        %5674 = vst.msk [vmem:[#allocation4 + $0x1a8] sm:$0xff] %vm4894, %v5589
        %5675 = vst.msk [vmem:[#allocation4 + $0x1d0] sm:$0xff] %vm4894, %v5591
        %5676 = vst.msk [vmem:[#allocation4 + $0x1f8] sm:$0xff] %vm4894, %v5593
        %5677 = vst.msk [vmem:[#allocation4 + $0x220] sm:$0xff] %vm4894, %v5595
        %5678 = vst.msk [vmem:[#allocation4 + $0x248] sm:$0xff] %vm4894, %v5597
        %5679 = vst.msk [vmem:[#allocation4 + $0x270] sm:$0xff] %vm4894, %v5599
        %5680 = vst.msk [vmem:[#allocation4 + $0x298] sm:$0xff] %vm4894, %v5601
        %5681 = vst.msk [vmem:[#allocation4 + $0x2c0] sm:$0xff] %vm4894, %v5603
        %5682 = vst.msk [vmem:[#allocation4 + $0x2e8] sm:$0xff] %vm4894, %v5605
        %5683 = vst.msk [vmem:[#allocation4 + $0x310] sm:$0xff] %vm4894, %v5607
        %5684 = vst.msk [vmem:[#allocation4 + $0x338] sm:$0xff] %vm4894, %v5609
        %5685 = vst.msk [vmem:[#allocation4 + $0x360] sm:$0xff] %vm4894, %v5611
        %5686 = vst.msk [vmem:[#allocation4 + $0x388] sm:$0xff] %vm4894, %v5613
        %5687 = vst.msk [vmem:[#allocation4 + $0x3b0] sm:$0xff] %vm4894, %v5615
        %5688 = vst.msk [vmem:[#allocation4 + $0x3d8] sm:$0xff] %vm4894, %v5617
        %5689 = vst.msk [vmem:[#allocation4 + $0x400] sm:$0xff] %vm4894, %v5619
        %5690 = vst.msk [vmem:[#allocation4 + $0x428] sm:$0xff] %vm4894, %v5621
        %5691 = vst.msk [vmem:[#allocation4 + $0x450] sm:$0xff] %vm4894, %v5623
        %5692 = vst.msk [vmem:[#allocation4 + $0x478] sm:$0xff] %vm4894, %v5625
        %5693 = vst.msk [vmem:[#allocation4 + $0x4a0] sm:$0xff] %vm4894, %v5627
        %5694 = vst.msk [vmem:[#allocation4 + $0x4c8] sm:$0xff] %vm4894, %v5629
        %5695 = vst.msk [vmem:[#allocation4 + $0x4f0] sm:$0xff] %vm4894, %v5631
        %v5696 = vld [vmem:[%s5439 + $0x9] sm:$0xff]
        %v5697 = vld [vmem:[%s5439 + $0x11] sm:$0xff]
        %v5698 = vld [vmem:[%s5439 + $0x29] sm:$0xff]
        %v5699 = vld [vmem:[%s5439 + $0x31] sm:$0xff]
        %v5700 = vld [vmem:[%s5439 + $0x49] sm:$0xff]
        %v5701 = vld [vmem:[%s5439 + $0x51] sm:$0xff]
        %v5702 = vld [vmem:[%s5439 + $0x69] sm:$0xff]
        %v5703 = vld [vmem:[%s5439 + $0x71] sm:$0xff]
        %v5704 = vld [vmem:[%s5439 + $0x89] sm:$0xff]
        %v5705 = vld [vmem:[%s5439 + $0x91] sm:$0xff]
        %v5706 = vld [vmem:[%s5439 + $0xa9] sm:$0xff]
        %v5707 = vld [vmem:[%s5439 + $0xb1] sm:$0xff]
        %v5708 = vld [vmem:[%s5439 + $0xc9] sm:$0xff]
        %v5709 = vld [vmem:[%s5439 + $0xd1] sm:$0xff]
        %v5710 = vld [vmem:[%s5439 + $0xe9] sm:$0xff]
        %v5711 = vld [vmem:[%s5439 + $0xf1] sm:$0xff]
        %v5712 = vld [vmem:[%s5439 + $0x109] sm:$0xff]
        %v5713 = vld [vmem:[%s5439 + $0x111] sm:$0xff]
        %v5714 = vld [vmem:[%s5439 + $0x129] sm:$0xff]
        %v5715 = vld [vmem:[%s5439 + $0x131] sm:$0xff]
        %v5716 = vld [vmem:[%s5439 + $0x149] sm:$0xff]
        %v5717 = vld [vmem:[%s5439 + $0x151] sm:$0xff]
        %v5718 = vld [vmem:[%s5439 + $0x169] sm:$0xff]
        %v5719 = vld [vmem:[%s5439 + $0x171] sm:$0xff]
        %v5720 = vld [vmem:[%s5439 + $0x189] sm:$0xff]
        %v5721 = vld [vmem:[%s5439 + $0x191] sm:$0xff]
        %v5722 = vld [vmem:[%s5439 + $0x1a9] sm:$0xff]
        %v5723 = vld [vmem:[%s5439 + $0x1b1] sm:$0xff]
        %v5724 = vld [vmem:[%s5439 + $0x1c9] sm:$0xff]
        %v5725 = vld [vmem:[%s5439 + $0x1d1] sm:$0xff]
        %v5726 = vld [vmem:[%s5439 + $0x1e9] sm:$0xff]
        %v5727 = vld [vmem:[%s5439 + $0x1f1] sm:$0xff]
        %5728 = vst.msk [vmem:[#allocation4 + $0x20] sm:$0xff] %vm384, %v5696
        %5729 = vst.msk [vmem:[#allocation4 + $0x48] sm:$0xff] %vm384, %v5697
        %5730 = vst.msk [vmem:[#allocation4 + $0x70] sm:$0xff] %vm384, %v5698
        %5731 = vst.msk [vmem:[#allocation4 + $0x98] sm:$0xff] %vm384, %v5699
        %5732 = vst.msk [vmem:[#allocation4 + $0xc0] sm:$0xff] %vm384, %v5700
        %5733 = vst.msk [vmem:[#allocation4 + $0xe8] sm:$0xff] %vm384, %v5701
        %5734 = vst.msk [vmem:[#allocation4 + $0x110] sm:$0xff] %vm384, %v5702
        %5735 = vst.msk [vmem:[#allocation4 + $0x138] sm:$0xff] %vm384, %v5703
        %5736 = vst.msk [vmem:[#allocation4 + $0x160] sm:$0xff] %vm384, %v5704
        %5737 = vst.msk [vmem:[#allocation4 + $0x188] sm:$0xff] %vm384, %v5705
        %5738 = vst.msk [vmem:[#allocation4 + $0x1b0] sm:$0xff] %vm384, %v5706
        %5739 = vst.msk [vmem:[#allocation4 + $0x1d8] sm:$0xff] %vm384, %v5707
        %5740 = vst.msk [vmem:[#allocation4 + $0x200] sm:$0xff] %vm384, %v5708
        %5741 = vst.msk [vmem:[#allocation4 + $0x228] sm:$0xff] %vm384, %v5709
        %5742 = vst.msk [vmem:[#allocation4 + $0x250] sm:$0xff] %vm384, %v5710
        %5743 = vst.msk [vmem:[#allocation4 + $0x278] sm:$0xff] %vm384, %v5711
        %5744 = vst.msk [vmem:[#allocation4 + $0x2a0] sm:$0xff] %vm384, %v5712
        %5745 = vst.msk [vmem:[#allocation4 + $0x2c8] sm:$0xff] %vm384, %v5713
        %5746 = vst.msk [vmem:[#allocation4 + $0x2f0] sm:$0xff] %vm384, %v5714
        %5747 = vst.msk [vmem:[#allocation4 + $0x318] sm:$0xff] %vm384, %v5715
        %5748 = vst.msk [vmem:[#allocation4 + $0x340] sm:$0xff] %vm384, %v5716
        %5749 = vst.msk [vmem:[#allocation4 + $0x368] sm:$0xff] %vm384, %v5717
        %5750 = vst.msk [vmem:[#allocation4 + $0x390] sm:$0xff] %vm384, %v5718
        %5751 = vst.msk [vmem:[#allocation4 + $0x3b8] sm:$0xff] %vm384, %v5719
        %5752 = vst.msk [vmem:[#allocation4 + $0x3e0] sm:$0xff] %vm384, %v5720
        %5753 = vst.msk [vmem:[#allocation4 + $0x408] sm:$0xff] %vm384, %v5721
        %5754 = vst.msk [vmem:[#allocation4 + $0x430] sm:$0xff] %vm384, %v5722
        %5755 = vst.msk [vmem:[#allocation4 + $0x458] sm:$0xff] %vm384, %v5723
        %5756 = vst.msk [vmem:[#allocation4 + $0x480] sm:$0xff] %vm384, %v5724
        %5757 = vst.msk [vmem:[#allocation4 + $0x4a8] sm:$0xff] %vm384, %v5725
        %5758 = vst.msk [vmem:[#allocation4 + $0x4d0] sm:$0xff] %vm384, %v5726
        %5759 = vst.msk [vmem:[#allocation4 + $0x4f8] sm:$0xff] %vm384, %v5727
        %v5760 = vld [vmem:[#allocation4] sm:$0xff]
        %v5761 = vld [vmem:[#allocation4 + $0x8] sm:$0xff]
        %v5762 = vld [vmem:[#allocation4 + $0x10] sm:$0xff]
        %v5763 = vld [vmem:[#allocation4 + $0x18] sm:$0xff]
        %v5764 = vld [vmem:[#allocation4 + $0x20] sm:$0xff]
        %v5765 = vld [vmem:[#allocation4 + $0x28] sm:$0xff]
        %v5766 = vld [vmem:[#allocation4 + $0x30] sm:$0xff]
        %v5767 = vld [vmem:[#allocation4 + $0x38] sm:$0xff]
        %v5768 = vld [vmem:[#allocation4 + $0x40] sm:$0xff]
        %v5769 = vld [vmem:[#allocation4 + $0x48] sm:$0xff]
        %v5770 = vld [vmem:[#allocation4 + $0x50] sm:$0xff]
        %v5771 = vld [vmem:[#allocation4 + $0x58] sm:$0xff]
        %v5772 = vld [vmem:[#allocation4 + $0x60] sm:$0xff]
        %v5773 = vld [vmem:[#allocation4 + $0x68] sm:$0xff]
        %v5774 = vld [vmem:[#allocation4 + $0x70] sm:$0xff]
        %v5775 = vld [vmem:[#allocation4 + $0x78] sm:$0xff]
        %v5776 = vld [vmem:[#allocation4 + $0x80] sm:$0xff]
        %v5777 = vld [vmem:[#allocation4 + $0x88] sm:$0xff]
        %v5778 = vld [vmem:[#allocation4 + $0x90] sm:$0xff]
        %v5779 = vld [vmem:[#allocation4 + $0x98] sm:$0xff]
        %v5780 = vld [vmem:[#allocation4 + $0xa0] sm:$0xff]
        %v5781 = vld [vmem:[#allocation4 + $0xa8] sm:$0xff]
        %v5782 = vld [vmem:[#allocation4 + $0xb0] sm:$0xff]
        %v5783 = vld [vmem:[#allocation4 + $0xb8] sm:$0xff]
        %v5784 = vld [vmem:[#allocation4 + $0xc0] sm:$0xff]
        %v5785 = vld [vmem:[#allocation4 + $0xc8] sm:$0xff]
        %v5786 = vld [vmem:[#allocation4 + $0xd0] sm:$0xff]
        %v5787 = vld [vmem:[#allocation4 + $0xd8] sm:$0xff]
        %v5788 = vld [vmem:[#allocation4 + $0xe0] sm:$0xff]
        %v5789 = vld [vmem:[#allocation4 + $0xe8] sm:$0xff]
        %v5790 = vld [vmem:[#allocation4 + $0xf0] sm:$0xff]
        %v5791 = vld [vmem:[#allocation4 + $0xf8] sm:$0xff]
        %v5792 = vld [vmem:[#allocation4 + $0x100] sm:$0xff]
        %v5793 = vld [vmem:[#allocation4 + $0x108] sm:$0xff]
        %v5794 = vld [vmem:[#allocation4 + $0x110] sm:$0xff]
        %v5795 = vld [vmem:[#allocation4 + $0x118] sm:$0xff]
        %v5796 = vld [vmem:[#allocation4 + $0x120] sm:$0xff]
        %v5797 = vld [vmem:[#allocation4 + $0x128] sm:$0xff]
        %v5798 = vld [vmem:[#allocation4 + $0x130] sm:$0xff]
        %v5799 = vld [vmem:[#allocation4 + $0x138] sm:$0xff]
        %v5800 = vld [vmem:[#allocation4 + $0x140] sm:$0xff]
        %v5801 = vld [vmem:[#allocation4 + $0x148] sm:$0xff]
        %v5802 = vld [vmem:[#allocation4 + $0x150] sm:$0xff]
        %v5803 = vld [vmem:[#allocation4 + $0x158] sm:$0xff]
        %v5804 = vld [vmem:[#allocation4 + $0x160] sm:$0xff]
        %v5805 = vld [vmem:[#allocation4 + $0x168] sm:$0xff]
        %v5806 = vld [vmem:[#allocation4 + $0x170] sm:$0xff]
        %v5807 = vld [vmem:[#allocation4 + $0x178] sm:$0xff]
        %v5808 = vld [vmem:[#allocation4 + $0x180] sm:$0xff]
        %v5809 = vld [vmem:[#allocation4 + $0x188] sm:$0xff]
        %v5810 = vld [vmem:[#allocation4 + $0x190] sm:$0xff]
        %v5811 = vld [vmem:[#allocation4 + $0x198] sm:$0xff]
        %v5812 = vld [vmem:[#allocation4 + $0x1a0] sm:$0xff]
        %v5813 = vld [vmem:[#allocation4 + $0x1a8] sm:$0xff]
        %v5814 = vld [vmem:[#allocation4 + $0x1b0] sm:$0xff]
        %v5815 = vld [vmem:[#allocation4 + $0x1b8] sm:$0xff]
        %v5816 = vld [vmem:[#allocation4 + $0x1c0] sm:$0xff]
        %v5817 = vld [vmem:[#allocation4 + $0x1c8] sm:$0xff]
        %v5818 = vld [vmem:[#allocation4 + $0x1d0] sm:$0xff]
        %v5819 = vld [vmem:[#allocation4 + $0x1d8] sm:$0xff]
        %v5820 = vld [vmem:[#allocation4 + $0x1e0] sm:$0xff]
        %v5821 = vld [vmem:[#allocation4 + $0x1e8] sm:$0xff]
        %v5822 = vld [vmem:[#allocation4 + $0x1f0] sm:$0xff]
        %v5823 = vld [vmem:[#allocation4 + $0x1f8] sm:$0xff]
        %v5824 = vld [vmem:[#allocation4 + $0x200] sm:$0xff]
        %v5825 = vld [vmem:[#allocation4 + $0x208] sm:$0xff]
        %v5826 = vld [vmem:[#allocation4 + $0x210] sm:$0xff]
        %v5827 = vld [vmem:[#allocation4 + $0x218] sm:$0xff]
        %v5828 = vld [vmem:[#allocation4 + $0x220] sm:$0xff]
        %v5829 = vld [vmem:[#allocation4 + $0x228] sm:$0xff]
        %v5830 = vld [vmem:[#allocation4 + $0x230] sm:$0xff]
        %v5831 = vld [vmem:[#allocation4 + $0x238] sm:$0xff]
        %v5832 = vld [vmem:[#allocation4 + $0x240] sm:$0xff]
        %v5833 = vld [vmem:[#allocation4 + $0x248] sm:$0xff]
        %v5834 = vld [vmem:[#allocation4 + $0x250] sm:$0xff]
        %v5835 = vld [vmem:[#allocation4 + $0x258] sm:$0xff]
        %v5836 = vld [vmem:[#allocation4 + $0x260] sm:$0xff]
        %v5837 = vld [vmem:[#allocation4 + $0x268] sm:$0xff]
        %v5838 = vld [vmem:[#allocation4 + $0x270] sm:$0xff]
        %v5839 = vld [vmem:[#allocation4 + $0x278] sm:$0xff]
        %v5840 = vld [vmem:[#allocation4 + $0x280] sm:$0xff]
        %v5841 = vld [vmem:[#allocation4 + $0x288] sm:$0xff]
        %v5842 = vld [vmem:[#allocation4 + $0x290] sm:$0xff]
        %v5843 = vld [vmem:[#allocation4 + $0x298] sm:$0xff]
        %v5844 = vld [vmem:[#allocation4 + $0x2a0] sm:$0xff]
        %v5845 = vld [vmem:[#allocation4 + $0x2a8] sm:$0xff]
        %v5846 = vld [vmem:[#allocation4 + $0x2b0] sm:$0xff]
        %v5847 = vld [vmem:[#allocation4 + $0x2b8] sm:$0xff]
        %v5848 = vld [vmem:[#allocation4 + $0x2c0] sm:$0xff]
        %v5849 = vld [vmem:[#allocation4 + $0x2c8] sm:$0xff]
        %v5850 = vld [vmem:[#allocation4 + $0x2d0] sm:$0xff]
        %v5851 = vld [vmem:[#allocation4 + $0x2d8] sm:$0xff]
        %v5852 = vld [vmem:[#allocation4 + $0x2e0] sm:$0xff]
        %v5853 = vld [vmem:[#allocation4 + $0x2e8] sm:$0xff]
        %v5854 = vld [vmem:[#allocation4 + $0x2f0] sm:$0xff]
        %v5855 = vld [vmem:[#allocation4 + $0x2f8] sm:$0xff]
        %v5856 = vld [vmem:[#allocation4 + $0x300] sm:$0xff]
        %v5857 = vld [vmem:[#allocation4 + $0x308] sm:$0xff]
        %v5858 = vld [vmem:[#allocation4 + $0x310] sm:$0xff]
        %v5859 = vld [vmem:[#allocation4 + $0x318] sm:$0xff]
        %v5860 = vld [vmem:[#allocation4 + $0x320] sm:$0xff]
        %v5861 = vld [vmem:[#allocation4 + $0x328] sm:$0xff]
        %v5862 = vld [vmem:[#allocation4 + $0x330] sm:$0xff]
        %v5863 = vld [vmem:[#allocation4 + $0x338] sm:$0xff]
        %v5864 = vld [vmem:[#allocation4 + $0x340] sm:$0xff]
        %v5865 = vld [vmem:[#allocation4 + $0x348] sm:$0xff]
        %v5866 = vld [vmem:[#allocation4 + $0x350] sm:$0xff]
        %v5867 = vld [vmem:[#allocation4 + $0x358] sm:$0xff]
        %v5868 = vld [vmem:[#allocation4 + $0x360] sm:$0xff]
        %v5869 = vld [vmem:[#allocation4 + $0x368] sm:$0xff]
        %v5870 = vld [vmem:[#allocation4 + $0x370] sm:$0xff]
        %v5871 = vld [vmem:[#allocation4 + $0x378] sm:$0xff]
        %v5872 = vld [vmem:[#allocation4 + $0x380] sm:$0xff]
        %v5873 = vld [vmem:[#allocation4 + $0x388] sm:$0xff]
        %v5874 = vld [vmem:[#allocation4 + $0x390] sm:$0xff]
        %v5875 = vld [vmem:[#allocation4 + $0x398] sm:$0xff]
        %v5876 = vld [vmem:[#allocation4 + $0x3a0] sm:$0xff]
        %v5877 = vld [vmem:[#allocation4 + $0x3a8] sm:$0xff]
        %v5878 = vld [vmem:[#allocation4 + $0x3b0] sm:$0xff]
        %v5879 = vld [vmem:[#allocation4 + $0x3b8] sm:$0xff]
        %v5880 = vld [vmem:[#allocation4 + $0x3c0] sm:$0xff]
        %v5881 = vld [vmem:[#allocation4 + $0x3c8] sm:$0xff]
        %v5882 = vld [vmem:[#allocation4 + $0x3d0] sm:$0xff]
        %v5883 = vld [vmem:[#allocation4 + $0x3d8] sm:$0xff]
        %v5884 = vld [vmem:[#allocation4 + $0x3e0] sm:$0xff]
        %v5885 = vld [vmem:[#allocation4 + $0x3e8] sm:$0xff]
        %v5886 = vld [vmem:[#allocation4 + $0x3f0] sm:$0xff]
        %v5887 = vld [vmem:[#allocation4 + $0x3f8] sm:$0xff]
        %v5888 = vld [vmem:[#allocation4 + $0x400] sm:$0xff]
        %v5889 = vld [vmem:[#allocation4 + $0x408] sm:$0xff]
        %v5890 = vld [vmem:[#allocation4 + $0x410] sm:$0xff]
        %v5891 = vld [vmem:[#allocation4 + $0x418] sm:$0xff]
        %v5892 = vld [vmem:[#allocation4 + $0x420] sm:$0xff]
        %v5893 = vld [vmem:[#allocation4 + $0x428] sm:$0xff]
        %v5894 = vld [vmem:[#allocation4 + $0x430] sm:$0xff]
        %v5895 = vld [vmem:[#allocation4 + $0x438] sm:$0xff]
        %v5896 = vld [vmem:[#allocation4 + $0x440] sm:$0xff]
        %v5897 = vld [vmem:[#allocation4 + $0x448] sm:$0xff]
        %v5898 = vld [vmem:[#allocation4 + $0x450] sm:$0xff]
        %v5899 = vld [vmem:[#allocation4 + $0x458] sm:$0xff]
        %v5900 = vld [vmem:[#allocation4 + $0x460] sm:$0xff]
        %v5901 = vld [vmem:[#allocation4 + $0x468] sm:$0xff]
        %v5902 = vld [vmem:[#allocation4 + $0x470] sm:$0xff]
        %v5903 = vld [vmem:[#allocation4 + $0x478] sm:$0xff]
        %v5904 = vld [vmem:[#allocation4 + $0x480] sm:$0xff]
        %v5905 = vld [vmem:[#allocation4 + $0x488] sm:$0xff]
        %v5906 = vld [vmem:[#allocation4 + $0x490] sm:$0xff]
        %v5907 = vld [vmem:[#allocation4 + $0x498] sm:$0xff]
        %v5908 = vld [vmem:[#allocation4 + $0x4a0] sm:$0xff]
        %v5909 = vld [vmem:[#allocation4 + $0x4a8] sm:$0xff]
        %v5910 = vld [vmem:[#allocation4 + $0x4b0] sm:$0xff]
        %v5911 = vld [vmem:[#allocation4 + $0x4b8] sm:$0xff]
        %v5912 = vld [vmem:[#allocation4 + $0x4c0] sm:$0xff]
        %v5913 = vld [vmem:[#allocation4 + $0x4c8] sm:$0xff]
        %v5914 = vld [vmem:[#allocation4 + $0x4d0] sm:$0xff]
        %v5915 = vld [vmem:[#allocation4 + $0x4d8] sm:$0xff]
        %v5916 = vld [vmem:[#allocation4 + $0x4e0] sm:$0xff]
        %v5917 = vld [vmem:[#allocation4 + $0x4e8] sm:$0xff]
        %v5918 = vld [vmem:[#allocation4 + $0x4f0] sm:$0xff]
        %v5919 = vld [vmem:[#allocation4 + $0x4f8] sm:$0xff]
        %v5920 = vld [vmem:[%s3] sm:$0xff]
        %v5921 = vld [vmem:[%s3 + $0x8] sm:$0xff]
        %v5922 = vld [vmem:[%s3 + $0x10] sm:$0xff]
        %v5923 = vld [vmem:[%s3 + $0x18] sm:$0xff]
        %v5924 = vld [vmem:[%s3 + $0x20] sm:$0xff]
        %v5925 = vld [vmem:[%s3 + $0x28] sm:$0xff]
        %v5926 = vld [vmem:[%s3 + $0x30] sm:$0xff]
        %v5927 = vld [vmem:[%s3 + $0x38] sm:$0xff]
        %v5928 = vld [vmem:[%s3 + $0x40] sm:$0xff]
        %v5929 = vld [vmem:[%s3 + $0x48] sm:$0xff]
        %v5930 = vld [vmem:[%s3 + $0x50] sm:$0xff]
        %v5931 = vld [vmem:[%s3 + $0x58] sm:$0xff]
        %v5932 = vld [vmem:[%s3 + $0x60] sm:$0xff]
        %v5933 = vld [vmem:[%s3 + $0x68] sm:$0xff]
        %v5934 = vld [vmem:[%s3 + $0x70] sm:$0xff]
        %v5935 = vld [vmem:[%s3 + $0x78] sm:$0xff]
        %v5936 = vld [vmem:[%s3 + $0x80] sm:$0xff]
        %v5937 = vld [vmem:[%s3 + $0x88] sm:$0xff]
        %v5938 = vld [vmem:[%s3 + $0x90] sm:$0xff]
        %v5939 = vld [vmem:[%s3 + $0x98] sm:$0xff]
        %v5940 = vld [vmem:[%s3 + $0xa0] sm:$0xff]
        %v5941 = vld [vmem:[%s3 + $0xa8] sm:$0xff]
        %v5942 = vld [vmem:[%s3 + $0xb0] sm:$0xff]
        %v5943 = vld [vmem:[%s3 + $0xb8] sm:$0xff]
        %v5944 = vld [vmem:[%s3 + $0xc0] sm:$0xff]
        %v5945 = vld [vmem:[%s3 + $0xc8] sm:$0xff]
        %v5946 = vld [vmem:[%s3 + $0xd0] sm:$0xff]
        %v5947 = vld [vmem:[%s3 + $0xd8] sm:$0xff]
        %v5948 = vld [vmem:[%s3 + $0xe0] sm:$0xff]
        %v5949 = vld [vmem:[%s3 + $0xe8] sm:$0xff]
        %v5950 = vld [vmem:[%s3 + $0xf0] sm:$0xff]
        %v5951 = vld [vmem:[%s3 + $0xf8] sm:$0xff]
        %v5952 = vld [vmem:[%s3 + $0x100] sm:$0xff]
        %v5953 = vld [vmem:[%s3 + $0x108] sm:$0xff]
        %v5954 = vld [vmem:[%s3 + $0x110] sm:$0xff]
        %v5955 = vld [vmem:[%s3 + $0x118] sm:$0xff]
        %v5956 = vld [vmem:[%s3 + $0x120] sm:$0xff]
        %v5957 = vld [vmem:[%s3 + $0x128] sm:$0xff]
        %v5958 = vld [vmem:[%s3 + $0x130] sm:$0xff]
        %v5959 = vld [vmem:[%s3 + $0x138] sm:$0xff]
        %v5960 = vld [vmem:[%s3 + $0x140] sm:$0xff]
        %v5961 = vld [vmem:[%s3 + $0x148] sm:$0xff]
        %v5962 = vld [vmem:[%s3 + $0x150] sm:$0xff]
        %v5963 = vld [vmem:[%s3 + $0x158] sm:$0xff]
        %v5964 = vld [vmem:[%s3 + $0x160] sm:$0xff]
        %v5965 = vld [vmem:[%s3 + $0x168] sm:$0xff]
        %v5966 = vld [vmem:[%s3 + $0x170] sm:$0xff]
        %v5967 = vld [vmem:[%s3 + $0x178] sm:$0xff]
        %v5968 = vld [vmem:[%s3 + $0x180] sm:$0xff]
        %v5969 = vld [vmem:[%s3 + $0x188] sm:$0xff]
        %v5970 = vld [vmem:[%s3 + $0x190] sm:$0xff]
        %v5971 = vld [vmem:[%s3 + $0x198] sm:$0xff]
        %v5972 = vld [vmem:[%s3 + $0x1a0] sm:$0xff]
        %v5973 = vld [vmem:[%s3 + $0x1a8] sm:$0xff]
        %v5974 = vld [vmem:[%s3 + $0x1b0] sm:$0xff]
        %v5975 = vld [vmem:[%s3 + $0x1b8] sm:$0xff]
        %v5976 = vld [vmem:[%s3 + $0x1c0] sm:$0xff]
        %v5977 = vld [vmem:[%s3 + $0x1c8] sm:$0xff]
        %v5978 = vld [vmem:[%s3 + $0x1d0] sm:$0xff]
        %v5979 = vld [vmem:[%s3 + $0x1d8] sm:$0xff]
        %v5980 = vld [vmem:[%s3 + $0x1e0] sm:$0xff]
        %v5981 = vld [vmem:[%s3 + $0x1e8] sm:$0xff]
        %v5982 = vld [vmem:[%s3 + $0x1f0] sm:$0xff]
        %v5983 = vld [vmem:[%s3 + $0x1f8] sm:$0xff]
        %v5984 = vld [vmem:[%s3 + $0x200] sm:$0xff]
        %v5985 = vld [vmem:[%s3 + $0x208] sm:$0xff]
        %v5986 = vld [vmem:[%s3 + $0x210] sm:$0xff]
        %v5987 = vld [vmem:[%s3 + $0x218] sm:$0xff]
        %v5988 = vld [vmem:[%s3 + $0x220] sm:$0xff]
        %v5989 = vld [vmem:[%s3 + $0x228] sm:$0xff]
        %v5990 = vld [vmem:[%s3 + $0x230] sm:$0xff]
        %v5991 = vld [vmem:[%s3 + $0x238] sm:$0xff]
        %v5992 = vld [vmem:[%s4] sm:$0x1]
        %v5994 = vperm.slane %v5992, 0
        %v5997 = vsel %vm384, %v5764, 0
        %v6000 = vsel %vm384, %v5769, 0
        %v6003 = vsel %vm384, %v5774, 0
        %v6006 = vsel %vm384, %v5779, 0
        %v6009 = vsel %vm384, %v5784, 0
        %v6012 = vsel %vm384, %v5789, 0
        %v6015 = vsel %vm384, %v5794, 0
        %v6018 = vsel %vm384, %v5799, 0
        %v6021 = vsel %vm384, %v5804, 0
        %v6024 = vsel %vm384, %v5809, 0
        %v6027 = vsel %vm384, %v5814, 0
        %v6030 = vsel %vm384, %v5819, 0
        %v6033 = vsel %vm384, %v5824, 0
        %v6036 = vsel %vm384, %v5829, 0
        %v6039 = vsel %vm384, %v5834, 0
        %v6042 = vsel %vm384, %v5839, 0
        %v6045 = vsel %vm384, %v5844, 0
        %v6048 = vsel %vm384, %v5849, 0
        %v6051 = vsel %vm384, %v5854, 0
        %v6054 = vsel %vm384, %v5859, 0
        %v6057 = vsel %vm384, %v5864, 0
        %v6060 = vsel %vm384, %v5869, 0
        %v6063 = vsel %vm384, %v5874, 0
        %v6066 = vsel %vm384, %v5879, 0
        %v6069 = vsel %vm384, %v5884, 0
        %v6072 = vsel %vm384, %v5889, 0
        %v6075 = vsel %vm384, %v5894, 0
        %v6078 = vsel %vm384, %v5899, 0
        %v6081 = vsel %vm384, %v5904, 0
        %v6084 = vsel %vm384, %v5909, 0
        %v6087 = vsel %vm384, %v5914, 0
        %v6090 = vsel %vm384, %v5919, 0
        %6092 = vmatpush.msra.mxu0 %v5935
        %6093 = vmatpush.msra.mxu0 %v5934
        %6094 = vmatpush.msra.mxu0 %v5933
        %6095 = vmatpush.msra.mxu0 %v5932
        %6096 = vmatpush.msra.mxu0 %v5931
        %6097 = vmatpush.msra.mxu0 %v5930
        %6098 = vmatpush.msra.mxu0 %v5929
        %6099 = vmatpush.msra.mxu0 %v5928
        %6100 = vmatpush.msra.mxu0 %v5927
        %6101 = vmatpush.msra.mxu0 %v5926
        %6102 = vmatpush.msra.mxu0 %v5925
        %6103 = vmatpush.msra.mxu0 %v5924
        %6104 = vmatpush.msra.mxu0 %v5923
        %6105 = vmatpush.msra.mxu0 %v5922
        %6106 = vmatpush.msra.mxu0 %v5921
        %6107 = vmatpush.msra.mxu0 %v5920
        %6108 = vmatmul.f32.gmra.mxu0 %v5760
        %v6109 = vpop.f32.mrf.mxu0
        %v6110 = vadd.f32 %v5994, %v6109
        %6111 = vmatmul.f32.gmra.mxu0 %v5765
        %v6112 = vpop.f32.mrf.mxu0
        %v6113 = vadd.f32 %v5994, %v6112
        %6114 = vmatmul.f32.gmra.mxu0 %v5770
        %v6115 = vpop.f32.mrf.mxu0
        %v6116 = vadd.f32 %v5994, %v6115
        %6117 = vmatmul.f32.gmra.mxu0 %v5775
        %v6118 = vpop.f32.mrf.mxu0
        %v6119 = vadd.f32 %v5994, %v6118
        %6120 = vmatmul.f32.gmra.mxu0 %v5780
        %v6121 = vpop.f32.mrf.mxu0
        %v6122 = vadd.f32 %v5994, %v6121
        %6123 = vmatmul.f32.gmra.mxu0 %v5785
        %v6124 = vpop.f32.mrf.mxu0
        %v6125 = vadd.f32 %v5994, %v6124
        %6126 = vmatmul.f32.gmra.mxu0 %v5790
        %v6127 = vpop.f32.mrf.mxu0
        %v6128 = vadd.f32 %v5994, %v6127
        %6129 = vmatmul.f32.gmra.mxu0 %v5795
        %v6130 = vpop.f32.mrf.mxu0
        %v6131 = vadd.f32 %v5994, %v6130
        %6132 = vmatmul.f32.gmra.mxu0 %v5800
        %v6133 = vpop.f32.mrf.mxu0
        %v6134 = vadd.f32 %v5994, %v6133
        %6135 = vmatmul.f32.gmra.mxu0 %v5805
        %v6136 = vpop.f32.mrf.mxu0
        %v6137 = vadd.f32 %v5994, %v6136
        %6138 = vmatmul.f32.gmra.mxu0 %v5810
        %v6139 = vpop.f32.mrf.mxu0
        %v6140 = vadd.f32 %v5994, %v6139
        %6141 = vmatmul.f32.gmra.mxu0 %v5815
        %v6142 = vpop.f32.mrf.mxu0
        %v6143 = vadd.f32 %v5994, %v6142
        %6144 = vmatmul.f32.gmra.mxu0 %v5820
        %v6145 = vpop.f32.mrf.mxu0
        %v6146 = vadd.f32 %v5994, %v6145
        %6147 = vmatmul.f32.gmra.mxu0 %v5825
        %v6148 = vpop.f32.mrf.mxu0
        %v6149 = vadd.f32 %v5994, %v6148
        %6150 = vmatmul.f32.gmra.mxu0 %v5830
        %v6151 = vpop.f32.mrf.mxu0
        %v6152 = vadd.f32 %v5994, %v6151
        %6153 = vmatmul.f32.gmra.mxu0 %v5835
        %v6154 = vpop.f32.mrf.mxu0
        %v6155 = vadd.f32 %v5994, %v6154
        %6156 = vmatmul.f32.gmra.mxu0 %v5840
        %v6157 = vpop.f32.mrf.mxu0
        %v6158 = vadd.f32 %v5994, %v6157
        %6159 = vmatmul.f32.gmra.mxu0 %v5845
        %v6160 = vpop.f32.mrf.mxu0
        %v6161 = vadd.f32 %v5994, %v6160
        %6162 = vmatmul.f32.gmra.mxu0 %v5850
        %v6163 = vpop.f32.mrf.mxu0
        %v6164 = vadd.f32 %v5994, %v6163
        %6165 = vmatmul.f32.gmra.mxu0 %v5855
        %v6166 = vpop.f32.mrf.mxu0
        %v6167 = vadd.f32 %v5994, %v6166
        %6168 = vmatmul.f32.gmra.mxu0 %v5860
        %v6169 = vpop.f32.mrf.mxu0
        %v6170 = vadd.f32 %v5994, %v6169
        %6171 = vmatmul.f32.gmra.mxu0 %v5865
        %v6172 = vpop.f32.mrf.mxu0
        %v6173 = vadd.f32 %v5994, %v6172
        %6174 = vmatmul.f32.gmra.mxu0 %v5870
        %v6175 = vpop.f32.mrf.mxu0
        %v6176 = vadd.f32 %v5994, %v6175
        %6177 = vmatmul.f32.gmra.mxu0 %v5875
        %v6178 = vpop.f32.mrf.mxu0
        %v6179 = vadd.f32 %v5994, %v6178
        %6180 = vmatmul.f32.gmra.mxu0 %v5880
        %v6181 = vpop.f32.mrf.mxu0
        %v6182 = vadd.f32 %v5994, %v6181
        %6183 = vmatmul.f32.gmra.mxu0 %v5885
        %v6184 = vpop.f32.mrf.mxu0
        %v6185 = vadd.f32 %v5994, %v6184
        %6186 = vmatmul.f32.gmra.mxu0 %v5890
        %v6187 = vpop.f32.mrf.mxu0
        %v6188 = vadd.f32 %v5994, %v6187
        %6189 = vmatmul.f32.gmra.mxu0 %v5895
        %v6190 = vpop.f32.mrf.mxu0
        %v6191 = vadd.f32 %v5994, %v6190
        %6192 = vmatmul.f32.gmra.mxu0 %v5900
        %v6193 = vpop.f32.mrf.mxu0
        %v6194 = vadd.f32 %v5994, %v6193
        %6195 = vmatmul.f32.gmra.mxu0 %v5905
        %v6196 = vpop.f32.mrf.mxu0
        %v6197 = vadd.f32 %v5994, %v6196
        %6198 = vmatmul.f32.gmra.mxu0 %v5910
        %v6199 = vpop.f32.mrf.mxu0
        %v6200 = vadd.f32 %v5994, %v6199
        %6201 = vmatmul.f32.gmra.mxu0 %v5915
        %v6202 = vpop.f32.mrf.mxu0
        %v6203 = vadd.f32 %v5994, %v6202
        %6204 = vdwg.mxu0
        %6205 = vmatpush.msra.mxu0 %v5951
        %6206 = vmatpush.msra.mxu0 %v5950
        %6207 = vmatpush.msra.mxu0 %v5949
        %6208 = vmatpush.msra.mxu0 %v5948
        %6209 = vmatpush.msra.mxu0 %v5947
        %6210 = vmatpush.msra.mxu0 %v5946
        %6211 = vmatpush.msra.mxu0 %v5945
        %6212 = vmatpush.msra.mxu0 %v5944
        %6213 = vmatpush.msra.mxu0 %v5943
        %6214 = vmatpush.msra.mxu0 %v5942
        %6215 = vmatpush.msra.mxu0 %v5941
        %6216 = vmatpush.msra.mxu0 %v5940
        %6217 = vmatpush.msra.mxu0 %v5939
        %6218 = vmatpush.msra.mxu0 %v5938
        %6219 = vmatpush.msra.mxu0 %v5937
        %6220 = vmatpush.msra.mxu0 %v5936
        %6221 = vmatmul.f32.gmra.mxu0 %v5761
        %v6222 = vpop.f32.mrf.mxu0
        %v6223 = vadd.f32 %v6110, %v6222
        %6224 = vmatmul.f32.gmra.mxu0 %v5766
        %v6225 = vpop.f32.mrf.mxu0
        %v6226 = vadd.f32 %v6113, %v6225
        %6227 = vmatmul.f32.gmra.mxu0 %v5771
        %v6228 = vpop.f32.mrf.mxu0
        %v6229 = vadd.f32 %v6116, %v6228
        %6230 = vmatmul.f32.gmra.mxu0 %v5776
        %v6231 = vpop.f32.mrf.mxu0
        %v6232 = vadd.f32 %v6119, %v6231
        %6233 = vmatmul.f32.gmra.mxu0 %v5781
        %v6234 = vpop.f32.mrf.mxu0
        %v6235 = vadd.f32 %v6122, %v6234
        %6236 = vmatmul.f32.gmra.mxu0 %v5786
        %v6237 = vpop.f32.mrf.mxu0
        %v6238 = vadd.f32 %v6125, %v6237
        %6239 = vmatmul.f32.gmra.mxu0 %v5791
        %v6240 = vpop.f32.mrf.mxu0
        %v6241 = vadd.f32 %v6128, %v6240
        %6242 = vmatmul.f32.gmra.mxu0 %v5796
        %v6243 = vpop.f32.mrf.mxu0
        %v6244 = vadd.f32 %v6131, %v6243
        %6245 = vmatmul.f32.gmra.mxu0 %v5801
        %v6246 = vpop.f32.mrf.mxu0
        %v6247 = vadd.f32 %v6134, %v6246
        %6248 = vmatmul.f32.gmra.mxu0 %v5806
        %v6249 = vpop.f32.mrf.mxu0
        %v6250 = vadd.f32 %v6137, %v6249
        %6251 = vmatmul.f32.gmra.mxu0 %v5811
        %v6252 = vpop.f32.mrf.mxu0
        %v6253 = vadd.f32 %v6140, %v6252
        %6254 = vmatmul.f32.gmra.mxu0 %v5816
        %v6255 = vpop.f32.mrf.mxu0
        %v6256 = vadd.f32 %v6143, %v6255
        %6257 = vmatmul.f32.gmra.mxu0 %v5821
        %v6258 = vpop.f32.mrf.mxu0
        %v6259 = vadd.f32 %v6146, %v6258
        %6260 = vmatmul.f32.gmra.mxu0 %v5826
        %v6261 = vpop.f32.mrf.mxu0
        %v6262 = vadd.f32 %v6149, %v6261
        %6263 = vmatmul.f32.gmra.mxu0 %v5831
        %v6264 = vpop.f32.mrf.mxu0
        %v6265 = vadd.f32 %v6152, %v6264
        %6266 = vmatmul.f32.gmra.mxu0 %v5836
        %v6267 = vpop.f32.mrf.mxu0
        %v6268 = vadd.f32 %v6155, %v6267
        %6269 = vmatmul.f32.gmra.mxu0 %v5841
        %v6270 = vpop.f32.mrf.mxu0
        %v6271 = vadd.f32 %v6158, %v6270
        %6272 = vmatmul.f32.gmra.mxu0 %v5846
        %v6273 = vpop.f32.mrf.mxu0
        %v6274 = vadd.f32 %v6161, %v6273
        %6275 = vmatmul.f32.gmra.mxu0 %v5851
        %v6276 = vpop.f32.mrf.mxu0
        %v6277 = vadd.f32 %v6164, %v6276
        %6278 = vmatmul.f32.gmra.mxu0 %v5856
        %v6279 = vpop.f32.mrf.mxu0
        %v6280 = vadd.f32 %v6167, %v6279
        %6281 = vmatmul.f32.gmra.mxu0 %v5861
        %v6282 = vpop.f32.mrf.mxu0
        %v6283 = vadd.f32 %v6170, %v6282
        %6284 = vmatmul.f32.gmra.mxu0 %v5866
        %v6285 = vpop.f32.mrf.mxu0
        %v6286 = vadd.f32 %v6173, %v6285
        %6287 = vmatmul.f32.gmra.mxu0 %v5871
        %v6288 = vpop.f32.mrf.mxu0
        %v6289 = vadd.f32 %v6176, %v6288
        %6290 = vmatmul.f32.gmra.mxu0 %v5876
        %v6291 = vpop.f32.mrf.mxu0
        %v6292 = vadd.f32 %v6179, %v6291
        %6293 = vmatmul.f32.gmra.mxu0 %v5881
        %v6294 = vpop.f32.mrf.mxu0
        %v6295 = vadd.f32 %v6182, %v6294
        %6296 = vmatmul.f32.gmra.mxu0 %v5886
        %v6297 = vpop.f32.mrf.mxu0
        %v6298 = vadd.f32 %v6185, %v6297
        %6299 = vmatmul.f32.gmra.mxu0 %v5891
        %v6300 = vpop.f32.mrf.mxu0
        %v6301 = vadd.f32 %v6188, %v6300
        %6302 = vmatmul.f32.gmra.mxu0 %v5896
        %v6303 = vpop.f32.mrf.mxu0
        %v6304 = vadd.f32 %v6191, %v6303
        %6305 = vmatmul.f32.gmra.mxu0 %v5901
        %v6306 = vpop.f32.mrf.mxu0
        %v6307 = vadd.f32 %v6194, %v6306
        %6308 = vmatmul.f32.gmra.mxu0 %v5906
        %v6309 = vpop.f32.mrf.mxu0
        %v6310 = vadd.f32 %v6197, %v6309
        %6311 = vmatmul.f32.gmra.mxu0 %v5911
        %v6312 = vpop.f32.mrf.mxu0
        %v6313 = vadd.f32 %v6200, %v6312
        %6314 = vmatmul.f32.gmra.mxu0 %v5916
        %v6315 = vpop.f32.mrf.mxu0
        %v6316 = vadd.f32 %v6203, %v6315
        %6317 = vdwg.mxu0
        %6318 = vmatpush.msra.mxu0 %v5967
        %6319 = vmatpush.msra.mxu0 %v5966
        %6320 = vmatpush.msra.mxu0 %v5965
        %6321 = vmatpush.msra.mxu0 %v5964
        %6322 = vmatpush.msra.mxu0 %v5963
        %6323 = vmatpush.msra.mxu0 %v5962
        %6324 = vmatpush.msra.mxu0 %v5961
        %6325 = vmatpush.msra.mxu0 %v5960
        %6326 = vmatpush.msra.mxu0 %v5959
        %6327 = vmatpush.msra.mxu0 %v5958
        %6328 = vmatpush.msra.mxu0 %v5957
        %6329 = vmatpush.msra.mxu0 %v5956
        %6330 = vmatpush.msra.mxu0 %v5955
        %6331 = vmatpush.msra.mxu0 %v5954
        %6332 = vmatpush.msra.mxu0 %v5953
        %6333 = vmatpush.msra.mxu0 %v5952
        %6334 = vmatmul.f32.gmra.mxu0 %v5762
        %v6335 = vpop.f32.mrf.mxu0
        %v6336 = vadd.f32 %v6223, %v6335
        %6337 = vmatmul.f32.gmra.mxu0 %v5767
        %v6338 = vpop.f32.mrf.mxu0
        %v6339 = vadd.f32 %v6226, %v6338
        %6340 = vmatmul.f32.gmra.mxu0 %v5772
        %v6341 = vpop.f32.mrf.mxu0
        %v6342 = vadd.f32 %v6229, %v6341
        %6343 = vmatmul.f32.gmra.mxu0 %v5777
        %v6344 = vpop.f32.mrf.mxu0
        %v6345 = vadd.f32 %v6232, %v6344
        %6346 = vmatmul.f32.gmra.mxu0 %v5782
        %v6347 = vpop.f32.mrf.mxu0
        %v6348 = vadd.f32 %v6235, %v6347
        %6349 = vmatmul.f32.gmra.mxu0 %v5787
        %v6350 = vpop.f32.mrf.mxu0
        %v6351 = vadd.f32 %v6238, %v6350
        %6352 = vmatmul.f32.gmra.mxu0 %v5792
        %v6353 = vpop.f32.mrf.mxu0
        %v6354 = vadd.f32 %v6241, %v6353
        %6355 = vmatmul.f32.gmra.mxu0 %v5797
        %v6356 = vpop.f32.mrf.mxu0
        %v6357 = vadd.f32 %v6244, %v6356
        %6358 = vmatmul.f32.gmra.mxu0 %v5802
        %v6359 = vpop.f32.mrf.mxu0
        %v6360 = vadd.f32 %v6247, %v6359
        %6361 = vmatmul.f32.gmra.mxu0 %v5807
        %v6362 = vpop.f32.mrf.mxu0
        %v6363 = vadd.f32 %v6250, %v6362
        %6364 = vmatmul.f32.gmra.mxu0 %v5812
        %v6365 = vpop.f32.mrf.mxu0
        %v6366 = vadd.f32 %v6253, %v6365
        %6367 = vmatmul.f32.gmra.mxu0 %v5817
        %v6368 = vpop.f32.mrf.mxu0
        %v6369 = vadd.f32 %v6256, %v6368
        %6370 = vmatmul.f32.gmra.mxu0 %v5822
        %v6371 = vpop.f32.mrf.mxu0
        %v6372 = vadd.f32 %v6259, %v6371
        %6373 = vmatmul.f32.gmra.mxu0 %v5827
        %v6374 = vpop.f32.mrf.mxu0
        %v6375 = vadd.f32 %v6262, %v6374
        %6376 = vmatmul.f32.gmra.mxu0 %v5832
        %v6377 = vpop.f32.mrf.mxu0
        %v6378 = vadd.f32 %v6265, %v6377
        %6379 = vmatmul.f32.gmra.mxu0 %v5837
        %v6380 = vpop.f32.mrf.mxu0
        %v6381 = vadd.f32 %v6268, %v6380
        %6382 = vmatmul.f32.gmra.mxu0 %v5842
        %v6383 = vpop.f32.mrf.mxu0
        %v6384 = vadd.f32 %v6271, %v6383
        %6385 = vmatmul.f32.gmra.mxu0 %v5847
        %v6386 = vpop.f32.mrf.mxu0
        %v6387 = vadd.f32 %v6274, %v6386
        %6388 = vmatmul.f32.gmra.mxu0 %v5852
        %v6389 = vpop.f32.mrf.mxu0
        %v6390 = vadd.f32 %v6277, %v6389
        %6391 = vmatmul.f32.gmra.mxu0 %v5857
        %v6392 = vpop.f32.mrf.mxu0
        %v6393 = vadd.f32 %v6280, %v6392
        %6394 = vmatmul.f32.gmra.mxu0 %v5862
        %v6395 = vpop.f32.mrf.mxu0
        %v6396 = vadd.f32 %v6283, %v6395
        %6397 = vmatmul.f32.gmra.mxu0 %v5867
        %v6398 = vpop.f32.mrf.mxu0
        %v6399 = vadd.f32 %v6286, %v6398
        %6400 = vmatmul.f32.gmra.mxu0 %v5872
        %v6401 = vpop.f32.mrf.mxu0
        %v6402 = vadd.f32 %v6289, %v6401
        %6403 = vmatmul.f32.gmra.mxu0 %v5877
        %v6404 = vpop.f32.mrf.mxu0
        %v6405 = vadd.f32 %v6292, %v6404
        %6406 = vmatmul.f32.gmra.mxu0 %v5882
        %v6407 = vpop.f32.mrf.mxu0
        %v6408 = vadd.f32 %v6295, %v6407
        %6409 = vmatmul.f32.gmra.mxu0 %v5887
        %v6410 = vpop.f32.mrf.mxu0
        %v6411 = vadd.f32 %v6298, %v6410
        %6412 = vmatmul.f32.gmra.mxu0 %v5892
        %v6413 = vpop.f32.mrf.mxu0
        %v6414 = vadd.f32 %v6301, %v6413
        %6415 = vmatmul.f32.gmra.mxu0 %v5897
        %v6416 = vpop.f32.mrf.mxu0
        %v6417 = vadd.f32 %v6304, %v6416
        %6418 = vmatmul.f32.gmra.mxu0 %v5902
        %v6419 = vpop.f32.mrf.mxu0
        %v6420 = vadd.f32 %v6307, %v6419
        %6421 = vmatmul.f32.gmra.mxu0 %v5907
        %v6422 = vpop.f32.mrf.mxu0
        %v6423 = vadd.f32 %v6310, %v6422
        %6424 = vmatmul.f32.gmra.mxu0 %v5912
        %v6425 = vpop.f32.mrf.mxu0
        %v6426 = vadd.f32 %v6313, %v6425
        %6427 = vmatmul.f32.gmra.mxu0 %v5917
        %v6428 = vpop.f32.mrf.mxu0
        %v6429 = vadd.f32 %v6316, %v6428
        %6430 = vdwg.mxu0
        %6431 = vmatpush.msra.mxu0 %v5983
        %6432 = vmatpush.msra.mxu0 %v5982
        %6433 = vmatpush.msra.mxu0 %v5981
        %6434 = vmatpush.msra.mxu0 %v5980
        %6435 = vmatpush.msra.mxu0 %v5979
        %6436 = vmatpush.msra.mxu0 %v5978
        %6437 = vmatpush.msra.mxu0 %v5977
        %6438 = vmatpush.msra.mxu0 %v5976
        %6439 = vmatpush.msra.mxu0 %v5975
        %6440 = vmatpush.msra.mxu0 %v5974
        %6441 = vmatpush.msra.mxu0 %v5973
        %6442 = vmatpush.msra.mxu0 %v5972
        %6443 = vmatpush.msra.mxu0 %v5971
        %6444 = vmatpush.msra.mxu0 %v5970
        %6445 = vmatpush.msra.mxu0 %v5969
        %6446 = vmatpush.msra.mxu0 %v5968
        %6447 = vmatmul.f32.gmra.mxu0 %v5763
        %v6448 = vpop.f32.mrf.mxu0
        %v6449 = vadd.f32 %v6336, %v6448
        %6450 = vmatmul.f32.gmra.mxu0 %v5768
        %v6451 = vpop.f32.mrf.mxu0
        %v6452 = vadd.f32 %v6339, %v6451
        %6453 = vmatmul.f32.gmra.mxu0 %v5773
        %v6454 = vpop.f32.mrf.mxu0
        %v6455 = vadd.f32 %v6342, %v6454
        %6456 = vmatmul.f32.gmra.mxu0 %v5778
        %v6457 = vpop.f32.mrf.mxu0
        %v6458 = vadd.f32 %v6345, %v6457
        %6459 = vmatmul.f32.gmra.mxu0 %v5783
        %v6460 = vpop.f32.mrf.mxu0
        %v6461 = vadd.f32 %v6348, %v6460
        %6462 = vmatmul.f32.gmra.mxu0 %v5788
        %v6463 = vpop.f32.mrf.mxu0
        %v6464 = vadd.f32 %v6351, %v6463
        %6465 = vmatmul.f32.gmra.mxu0 %v5793
        %v6466 = vpop.f32.mrf.mxu0
        %v6467 = vadd.f32 %v6354, %v6466
        %6468 = vmatmul.f32.gmra.mxu0 %v5798
        %v6469 = vpop.f32.mrf.mxu0
        %v6470 = vadd.f32 %v6357, %v6469
        %6471 = vmatmul.f32.gmra.mxu0 %v5803
        %v6472 = vpop.f32.mrf.mxu0
        %v6473 = vadd.f32 %v6360, %v6472
        %6474 = vmatmul.f32.gmra.mxu0 %v5808
        %v6475 = vpop.f32.mrf.mxu0
        %v6476 = vadd.f32 %v6363, %v6475
        %6477 = vmatmul.f32.gmra.mxu0 %v5813
        %v6478 = vpop.f32.mrf.mxu0
        %v6479 = vadd.f32 %v6366, %v6478
        %6480 = vmatmul.f32.gmra.mxu0 %v5818
        %v6481 = vpop.f32.mrf.mxu0
        %v6482 = vadd.f32 %v6369, %v6481
        %6483 = vmatmul.f32.gmra.mxu0 %v5823
        %v6484 = vpop.f32.mrf.mxu0
        %v6485 = vadd.f32 %v6372, %v6484
        %6486 = vmatmul.f32.gmra.mxu0 %v5828
        %v6487 = vpop.f32.mrf.mxu0
        %v6488 = vadd.f32 %v6375, %v6487
        %6489 = vmatmul.f32.gmra.mxu0 %v5833
        %v6490 = vpop.f32.mrf.mxu0
        %v6491 = vadd.f32 %v6378, %v6490
        %6492 = vmatmul.f32.gmra.mxu0 %v5838
        %v6493 = vpop.f32.mrf.mxu0
        %v6494 = vadd.f32 %v6381, %v6493
        %6495 = vmatmul.f32.gmra.mxu0 %v5843
        %v6496 = vpop.f32.mrf.mxu0
        %v6497 = vadd.f32 %v6384, %v6496
        %6498 = vmatmul.f32.gmra.mxu0 %v5848
        %v6499 = vpop.f32.mrf.mxu0
        %v6500 = vadd.f32 %v6387, %v6499
        %6501 = vmatmul.f32.gmra.mxu0 %v5853
        %v6502 = vpop.f32.mrf.mxu0
        %v6503 = vadd.f32 %v6390, %v6502
        %6504 = vmatmul.f32.gmra.mxu0 %v5858
        %v6505 = vpop.f32.mrf.mxu0
        %v6506 = vadd.f32 %v6393, %v6505
        %6507 = vmatmul.f32.gmra.mxu0 %v5863
        %v6508 = vpop.f32.mrf.mxu0
        %v6509 = vadd.f32 %v6396, %v6508
        %6510 = vmatmul.f32.gmra.mxu0 %v5868
        %v6511 = vpop.f32.mrf.mxu0
        %v6512 = vadd.f32 %v6399, %v6511
        %6513 = vmatmul.f32.gmra.mxu0 %v5873
        %v6514 = vpop.f32.mrf.mxu0
        %v6515 = vadd.f32 %v6402, %v6514
        %6516 = vmatmul.f32.gmra.mxu0 %v5878
        %v6517 = vpop.f32.mrf.mxu0
        %v6518 = vadd.f32 %v6405, %v6517
        %6519 = vmatmul.f32.gmra.mxu0 %v5883
        %v6520 = vpop.f32.mrf.mxu0
        %v6521 = vadd.f32 %v6408, %v6520
        %6522 = vmatmul.f32.gmra.mxu0 %v5888
        %v6523 = vpop.f32.mrf.mxu0
        %v6524 = vadd.f32 %v6411, %v6523
        %6525 = vmatmul.f32.gmra.mxu0 %v5893
        %v6526 = vpop.f32.mrf.mxu0
        %v6527 = vadd.f32 %v6414, %v6526
        %6528 = vmatmul.f32.gmra.mxu0 %v5898
        %v6529 = vpop.f32.mrf.mxu0
        %v6530 = vadd.f32 %v6417, %v6529
        %6531 = vmatmul.f32.gmra.mxu0 %v5903
        %v6532 = vpop.f32.mrf.mxu0
        %v6533 = vadd.f32 %v6420, %v6532
        %6534 = vmatmul.f32.gmra.mxu0 %v5908
        %v6535 = vpop.f32.mrf.mxu0
        %v6536 = vadd.f32 %v6423, %v6535
        %6537 = vmatmul.f32.gmra.mxu0 %v5913
        %v6538 = vpop.f32.mrf.mxu0
        %v6539 = vadd.f32 %v6426, %v6538
        %6540 = vmatmul.f32.gmra.mxu0 %v5918
        %v6541 = vpop.f32.mrf.mxu0
        %v6542 = vadd.f32 %v6429, %v6541
        %6543 = vdwg.mxu0
        %6544 = vmatpush.msra.mxu0 0.0
        %6545 = vmatpush.msra.mxu0 0.0
        %6546 = vmatpush.msra.mxu0 0.0
        %6547 = vmatpush.msra.mxu0 0.0
        %6548 = vmatpush.msra.mxu0 0.0
        %6549 = vmatpush.msra.mxu0 0.0
        %6550 = vmatpush.msra.mxu0 0.0
        %6551 = vmatpush.msra.mxu0 0.0
        %6552 = vmatpush.msra.mxu0 %v5991
        %6553 = vmatpush.msra.mxu0 %v5990
        %6554 = vmatpush.msra.mxu0 %v5989
        %6555 = vmatpush.msra.mxu0 %v5988
        %6556 = vmatpush.msra.mxu0 %v5987
        %6557 = vmatpush.msra.mxu0 %v5986
        %6558 = vmatpush.msra.mxu0 %v5985
        %6559 = vmatpush.msra.mxu0 %v5984
        %6560 = vmatmul.f32.gmra.mxu0 %v5997
        %v6561 = vpop.f32.mrf.mxu0
        %v6562 = vadd.f32 %v6449, %v6561
        %6563 = vmatmul.f32.gmra.mxu0 %v6000
        %v6564 = vpop.f32.mrf.mxu0
        %v6565 = vadd.f32 %v6452, %v6564
        %6566 = vmatmul.f32.gmra.mxu0 %v6003
        %v6567 = vpop.f32.mrf.mxu0
        %v6568 = vadd.f32 %v6455, %v6567
        %6569 = vmatmul.f32.gmra.mxu0 %v6006
        %v6570 = vpop.f32.mrf.mxu0
        %v6571 = vadd.f32 %v6458, %v6570
        %6572 = vmatmul.f32.gmra.mxu0 %v6009
        %v6573 = vpop.f32.mrf.mxu0
        %v6574 = vadd.f32 %v6461, %v6573
        %6575 = vmatmul.f32.gmra.mxu0 %v6012
        %v6576 = vpop.f32.mrf.mxu0
        %v6577 = vadd.f32 %v6464, %v6576
        %6578 = vmatmul.f32.gmra.mxu0 %v6015
        %v6579 = vpop.f32.mrf.mxu0
        %v6580 = vadd.f32 %v6467, %v6579
        %6581 = vmatmul.f32.gmra.mxu0 %v6018
        %v6582 = vpop.f32.mrf.mxu0
        %v6583 = vadd.f32 %v6470, %v6582
        %6584 = vmatmul.f32.gmra.mxu0 %v6021
        %v6585 = vpop.f32.mrf.mxu0
        %v6586 = vadd.f32 %v6473, %v6585
        %6587 = vmatmul.f32.gmra.mxu0 %v6024
        %v6588 = vpop.f32.mrf.mxu0
        %v6589 = vadd.f32 %v6476, %v6588
        %6590 = vmatmul.f32.gmra.mxu0 %v6027
        %v6591 = vpop.f32.mrf.mxu0
        %v6592 = vadd.f32 %v6479, %v6591
        %6593 = vmatmul.f32.gmra.mxu0 %v6030
        %v6594 = vpop.f32.mrf.mxu0
        %v6595 = vadd.f32 %v6482, %v6594
        %6596 = vmatmul.f32.gmra.mxu0 %v6033
        %v6597 = vpop.f32.mrf.mxu0
        %v6598 = vadd.f32 %v6485, %v6597
        %6599 = vmatmul.f32.gmra.mxu0 %v6036
        %v6600 = vpop.f32.mrf.mxu0
        %v6601 = vadd.f32 %v6488, %v6600
        %6602 = vmatmul.f32.gmra.mxu0 %v6039
        %v6603 = vpop.f32.mrf.mxu0
        %v6604 = vadd.f32 %v6491, %v6603
        %6605 = vmatmul.f32.gmra.mxu0 %v6042
        %v6606 = vpop.f32.mrf.mxu0
        %v6607 = vadd.f32 %v6494, %v6606
        %6608 = vmatmul.f32.gmra.mxu0 %v6045
        %v6609 = vpop.f32.mrf.mxu0
        %v6610 = vadd.f32 %v6497, %v6609
        %6611 = vmatmul.f32.gmra.mxu0 %v6048
        %v6612 = vpop.f32.mrf.mxu0
        %v6613 = vadd.f32 %v6500, %v6612
        %6614 = vmatmul.f32.gmra.mxu0 %v6051
        %v6615 = vpop.f32.mrf.mxu0
        %v6616 = vadd.f32 %v6503, %v6615
        %6617 = vmatmul.f32.gmra.mxu0 %v6054
        %v6618 = vpop.f32.mrf.mxu0
        %v6619 = vadd.f32 %v6506, %v6618
        %6620 = vmatmul.f32.gmra.mxu0 %v6057
        %v6621 = vpop.f32.mrf.mxu0
        %v6622 = vadd.f32 %v6509, %v6621
        %6623 = vmatmul.f32.gmra.mxu0 %v6060
        %v6624 = vpop.f32.mrf.mxu0
        %v6625 = vadd.f32 %v6512, %v6624
        %6626 = vmatmul.f32.gmra.mxu0 %v6063
        %v6627 = vpop.f32.mrf.mxu0
        %v6628 = vadd.f32 %v6515, %v6627
        %6629 = vmatmul.f32.gmra.mxu0 %v6066
        %v6630 = vpop.f32.mrf.mxu0
        %v6631 = vadd.f32 %v6518, %v6630
        %6632 = vmatmul.f32.gmra.mxu0 %v6069
        %v6633 = vpop.f32.mrf.mxu0
        %v6634 = vadd.f32 %v6521, %v6633
        %6635 = vmatmul.f32.gmra.mxu0 %v6072
        %v6636 = vpop.f32.mrf.mxu0
        %v6637 = vadd.f32 %v6524, %v6636
        %6638 = vmatmul.f32.gmra.mxu0 %v6075
        %v6639 = vpop.f32.mrf.mxu0
        %v6640 = vadd.f32 %v6527, %v6639
        %6641 = vmatmul.f32.gmra.mxu0 %v6078
        %v6642 = vpop.f32.mrf.mxu0
        %v6643 = vadd.f32 %v6530, %v6642
        %6644 = vmatmul.f32.gmra.mxu0 %v6081
        %v6645 = vpop.f32.mrf.mxu0
        %v6646 = vadd.f32 %v6533, %v6645
        %6647 = vmatmul.f32.gmra.mxu0 %v6084
        %v6648 = vpop.f32.mrf.mxu0
        %v6649 = vadd.f32 %v6536, %v6648
        %6650 = vmatmul.f32.gmra.mxu0 %v6087
        %v6651 = vpop.f32.mrf.mxu0
        %v6652 = vadd.f32 %v6539, %v6651
        %6653 = vmatmul.f32.gmra.mxu0 %v6090
        %v6654 = vpop.f32.mrf.mxu0
        %v6655 = vadd.f32 %v6542, %v6654
        %6656 = vdwg.mxu0
        %v6657 = vmax.f32 %v6562, 0.0
        %v6658 = vmax.f32 %v6565, 0.0
        %v6659 = vmax.f32 %v6568, 0.0
        %v6660 = vmax.f32 %v6571, 0.0
        %v6661 = vmax.f32 %v6574, 0.0
        %v6662 = vmax.f32 %v6577, 0.0
        %v6663 = vmax.f32 %v6580, 0.0
        %v6664 = vmax.f32 %v6583, 0.0
        %v6665 = vmax.f32 %v6586, 0.0
        %v6666 = vmax.f32 %v6589, 0.0
        %v6667 = vmax.f32 %v6592, 0.0
        %v6668 = vmax.f32 %v6595, 0.0
        %v6669 = vmax.f32 %v6598, 0.0
        %v6670 = vmax.f32 %v6601, 0.0
        %v6671 = vmax.f32 %v6604, 0.0
        %v6672 = vmax.f32 %v6607, 0.0
        %v6673 = vmax.f32 %v6610, 0.0
        %v6674 = vmax.f32 %v6613, 0.0
        %v6675 = vmax.f32 %v6616, 0.0
        %v6676 = vmax.f32 %v6619, 0.0
        %v6677 = vmax.f32 %v6622, 0.0
        %v6678 = vmax.f32 %v6625, 0.0
        %v6679 = vmax.f32 %v6628, 0.0
        %v6680 = vmax.f32 %v6631, 0.0
        %v6681 = vmax.f32 %v6634, 0.0
        %v6682 = vmax.f32 %v6637, 0.0
        %v6683 = vmax.f32 %v6640, 0.0
        %v6684 = vmax.f32 %v6643, 0.0
        %v6685 = vmax.f32 %v6646, 0.0
        %v6686 = vmax.f32 %v6649, 0.0
        %v6687 = vmax.f32 %v6652, 0.0
        %v6688 = vmax.f32 %v6655, 0.0
        %6689 = vst [vmem:[#allocation5] sm:$0xff] %v6657
        %6690 = vst [vmem:[#allocation5 + $0x8] sm:$0xff] %v6658
        %6691 = vst [vmem:[#allocation5 + $0x10] sm:$0xff] %v6659
        %6692 = vst [vmem:[#allocation5 + $0x18] sm:$0xff] %v6660
        %6693 = vst [vmem:[#allocation5 + $0x20] sm:$0xff] %v6661
        %6694 = vst [vmem:[#allocation5 + $0x28] sm:$0xff] %v6662
        %6695 = vst [vmem:[#allocation5 + $0x30] sm:$0xff] %v6663
        %6696 = vst [vmem:[#allocation5 + $0x38] sm:$0xff] %v6664
        %6697 = vst [vmem:[#allocation5 + $0x40] sm:$0xff] %v6665
        %6698 = vst [vmem:[#allocation5 + $0x48] sm:$0xff] %v6666
        %6699 = vst [vmem:[#allocation5 + $0x50] sm:$0xff] %v6667
        %6700 = vst [vmem:[#allocation5 + $0x58] sm:$0xff] %v6668
        %6701 = vst [vmem:[#allocation5 + $0x60] sm:$0xff] %v6669
        %6702 = vst [vmem:[#allocation5 + $0x68] sm:$0xff] %v6670
        %6703 = vst [vmem:[#allocation5 + $0x70] sm:$0xff] %v6671
        %6704 = vst [vmem:[#allocation5 + $0x78] sm:$0xff] %v6672
        %6705 = vst [vmem:[#allocation5 + $0x80] sm:$0xff] %v6673
        %6706 = vst [vmem:[#allocation5 + $0x88] sm:$0xff] %v6674
        %6707 = vst [vmem:[#allocation5 + $0x90] sm:$0xff] %v6675
        %6708 = vst [vmem:[#allocation5 + $0x98] sm:$0xff] %v6676
        %6709 = vst [vmem:[#allocation5 + $0xa0] sm:$0xff] %v6677
        %6710 = vst [vmem:[#allocation5 + $0xa8] sm:$0xff] %v6678
        %6711 = vst [vmem:[#allocation5 + $0xb0] sm:$0xff] %v6679
        %6712 = vst [vmem:[#allocation5 + $0xb8] sm:$0xff] %v6680
        %6713 = vst [vmem:[#allocation5 + $0xc0] sm:$0xff] %v6681
        %6714 = vst [vmem:[#allocation5 + $0xc8] sm:$0xff] %v6682
        %6715 = vst [vmem:[#allocation5 + $0xd0] sm:$0xff] %v6683
        %6716 = vst [vmem:[#allocation5 + $0xd8] sm:$0xff] %v6684
        %6717 = vst [vmem:[#allocation5 + $0xe0] sm:$0xff] %v6685
        %6718 = vst [vmem:[#allocation5 + $0xe8] sm:$0xff] %v6686
        %6719 = vst [vmem:[#allocation5 + $0xf0] sm:$0xff] %v6687
        %6720 = vst [vmem:[#allocation5 + $0xf8] sm:$0xff] %v6688
        %v6721 = vld [vmem:[#allocation5] sm:$0xff]
        %v6722 = vld [vmem:[#allocation5 + $0x8] sm:$0xff]
        %v6723 = vld [vmem:[#allocation5 + $0x20] sm:$0xff]
        %v6724 = vld [vmem:[#allocation5 + $0x28] sm:$0xff]
        %v6725 = vld [vmem:[#allocation5 + $0x40] sm:$0xff]
        %v6726 = vld [vmem:[#allocation5 + $0x48] sm:$0xff]
        %v6727 = vld [vmem:[#allocation5 + $0x60] sm:$0xff]
        %v6728 = vld [vmem:[#allocation5 + $0x68] sm:$0xff]
        %v6729 = vld [vmem:[#allocation5 + $0x80] sm:$0xff]
        %v6730 = vld [vmem:[#allocation5 + $0x88] sm:$0xff]
        %v6731 = vld [vmem:[#allocation5 + $0xa0] sm:$0xff]
        %v6732 = vld [vmem:[#allocation5 + $0xa8] sm:$0xff]
        %v6733 = vld [vmem:[#allocation5 + $0xc0] sm:$0xff]
        %v6734 = vld [vmem:[#allocation5 + $0xc8] sm:$0xff]
        %v6735 = vld [vmem:[#allocation5 + $0xe0] sm:$0xff]
        %v6736 = vld [vmem:[#allocation5 + $0xe8] sm:$0xff]
        %s6737 = scalar_lea.vmem [#allocation5], 16
        %v6738 = vld [vmem:[%s6737] sm:$0xff]
        %v6739 = vld [vmem:[%s6737 + $0x8] sm:$0xff]
        %v6740 = vld [vmem:[%s6737 + $0x20] sm:$0xff]
        %v6741 = vld [vmem:[%s6737 + $0x28] sm:$0xff]
        %v6742 = vld [vmem:[%s6737 + $0x40] sm:$0xff]
        %v6743 = vld [vmem:[%s6737 + $0x48] sm:$0xff]
        %v6744 = vld [vmem:[%s6737 + $0x60] sm:$0xff]
        %v6745 = vld [vmem:[%s6737 + $0x68] sm:$0xff]
        %v6746 = vld [vmem:[%s6737 + $0x80] sm:$0xff]
        %v6747 = vld [vmem:[%s6737 + $0x88] sm:$0xff]
        %v6748 = vld [vmem:[%s6737 + $0xa0] sm:$0xff]
        %v6749 = vld [vmem:[%s6737 + $0xa8] sm:$0xff]
        %v6750 = vld [vmem:[%s6737 + $0xc0] sm:$0xff]
        %v6751 = vld [vmem:[%s6737 + $0xc8] sm:$0xff]
        %v6752 = vld [vmem:[%s6737 + $0xe0] sm:$0xff]
        %v6753 = vld [vmem:[%s6737 + $0xe8] sm:$0xff]
        %v6754 = vmax.f32 %v6721, %v6738
        %v6755 = vmax.f32 %v6722, %v6739
        %v6756 = vmax.f32 %v6723, %v6740
        %v6757 = vmax.f32 %v6724, %v6741
        %v6758 = vmax.f32 %v6725, %v6742
        %v6759 = vmax.f32 %v6726, %v6743
        %v6760 = vmax.f32 %v6727, %v6744
        %v6761 = vmax.f32 %v6728, %v6745
        %v6762 = vmax.f32 %v6729, %v6746
        %v6763 = vmax.f32 %v6730, %v6747
        %v6764 = vmax.f32 %v6731, %v6748
        %v6765 = vmax.f32 %v6732, %v6749
        %v6766 = vmax.f32 %v6733, %v6750
        %v6767 = vmax.f32 %v6734, %v6751
        %v6768 = vmax.f32 %v6735, %v6752
        %v6769 = vmax.f32 %v6736, %v6753
        %v6786 = vrot.slane %v6754, 2
        %v6787 = vrot.slane %v6754, 4
        %v6788 = vrot.slane %v6754, 6
        %v6789 = vrot.slane %v6755, 2
        %v6790 = vrot.slane %v6755, 4
        %v6791 = vrot.slane %v6755, 6
        %v6792 = vrot.slane %v6756, 2
        %v6793 = vrot.slane %v6756, 4
        %v6794 = vrot.slane %v6756, 6
        %v6795 = vrot.slane %v6757, 2
        %v6796 = vrot.slane %v6757, 4
        %v6797 = vrot.slane %v6757, 6
        %v6798 = vrot.slane %v6758, 2
        %v6799 = vrot.slane %v6758, 4
        %v6800 = vrot.slane %v6758, 6
        %v6801 = vrot.slane %v6759, 2
        %v6802 = vrot.slane %v6759, 4
        %v6803 = vrot.slane %v6759, 6
        %v6804 = vrot.slane %v6760, 2
        %v6805 = vrot.slane %v6760, 4
        %v6806 = vrot.slane %v6760, 6
        %v6807 = vrot.slane %v6761, 2
        %v6808 = vrot.slane %v6761, 4
        %v6809 = vrot.slane %v6761, 6
        %v6810 = vrot.slane %v6762, 2
        %v6811 = vrot.slane %v6762, 4
        %v6812 = vrot.slane %v6762, 6
        %v6813 = vrot.slane %v6763, 2
        %v6814 = vrot.slane %v6763, 4
        %v6815 = vrot.slane %v6763, 6
        %v6816 = vrot.slane %v6764, 2
        %v6817 = vrot.slane %v6764, 4
        %v6818 = vrot.slane %v6764, 6
        %v6819 = vrot.slane %v6765, 2
        %v6820 = vrot.slane %v6765, 4
        %v6821 = vrot.slane %v6765, 6
        %v6822 = vrot.slane %v6766, 2
        %v6823 = vrot.slane %v6766, 4
        %v6824 = vrot.slane %v6766, 6
        %v6825 = vrot.slane %v6767, 2
        %v6826 = vrot.slane %v6767, 4
        %v6827 = vrot.slane %v6767, 6
        %v6828 = vrot.slane %v6768, 2
        %v6829 = vrot.slane %v6768, 4
        %v6830 = vrot.slane %v6768, 6
        %v6831 = vrot.slane %v6769, 2
        %v6832 = vrot.slane %v6769, 4
        %v6833 = vrot.slane %v6769, 6
        %vm6882 = vcmask 1041408
        %v6883 = vsel %vm6882, %v6754, -inf
        %v6884 = vrot.slane %v6883, 4
        %v6885 = vmax.f32 %v6883, %v6884
        %v6886 = vrot.slane %v6885, 2
        %v6887 = vmax.f32 %v6885, %v6886
        %v6888 = vrot.slane %v6887, 1
        %v6889 = vmax.f32 %v6887, %v6888
        %v6890 = vsel %vm6882, %v6786, -inf
        %v6891 = vrot.slane %v6890, 4
        %v6892 = vmax.f32 %v6890, %v6891
        %v6893 = vrot.slane %v6892, 2
        %v6894 = vmax.f32 %v6892, %v6893
        %v6895 = vrot.slane %v6894, 1
        %v6896 = vmax.f32 %v6894, %v6895
        %v6897 = vsel %vm6882, %v6787, -inf
        %v6898 = vrot.slane %v6897, 4
        %v6899 = vmax.f32 %v6897, %v6898
        %v6900 = vrot.slane %v6899, 2
        %v6901 = vmax.f32 %v6899, %v6900
        %v6902 = vrot.slane %v6901, 1
        %v6903 = vmax.f32 %v6901, %v6902
        %v6904 = vsel %vm6882, %v6788, -inf
        %v6905 = vrot.slane %v6904, 4
        %v6906 = vmax.f32 %v6904, %v6905
        %v6907 = vrot.slane %v6906, 2
        %v6908 = vmax.f32 %v6906, %v6907
        %v6909 = vrot.slane %v6908, 1
        %v6910 = vmax.f32 %v6908, %v6909
        %v6911 = vsel %vm6882, %v6755, -inf
        %v6912 = vrot.slane %v6911, 4
        %v6913 = vmax.f32 %v6911, %v6912
        %v6914 = vrot.slane %v6913, 2
        %v6915 = vmax.f32 %v6913, %v6914
        %v6916 = vrot.slane %v6915, 1
        %v6917 = vmax.f32 %v6915, %v6916
        %v6918 = vsel %vm6882, %v6789, -inf
        %v6919 = vrot.slane %v6918, 4
        %v6920 = vmax.f32 %v6918, %v6919
        %v6921 = vrot.slane %v6920, 2
        %v6922 = vmax.f32 %v6920, %v6921
        %v6923 = vrot.slane %v6922, 1
        %v6924 = vmax.f32 %v6922, %v6923
        %v6925 = vsel %vm6882, %v6790, -inf
        %v6926 = vrot.slane %v6925, 4
        %v6927 = vmax.f32 %v6925, %v6926
        %v6928 = vrot.slane %v6927, 2
        %v6929 = vmax.f32 %v6927, %v6928
        %v6930 = vrot.slane %v6929, 1
        %v6931 = vmax.f32 %v6929, %v6930
        %v6932 = vsel %vm6882, %v6791, -inf
        %v6933 = vrot.slane %v6932, 4
        %v6934 = vmax.f32 %v6932, %v6933
        %v6935 = vrot.slane %v6934, 2
        %v6936 = vmax.f32 %v6934, %v6935
        %v6937 = vrot.slane %v6936, 1
        %v6938 = vmax.f32 %v6936, %v6937
        %v6939 = vsel %vm6882, %v6756, -inf
        %v6940 = vrot.slane %v6939, 4
        %v6941 = vmax.f32 %v6939, %v6940
        %v6942 = vrot.slane %v6941, 2
        %v6943 = vmax.f32 %v6941, %v6942
        %v6944 = vrot.slane %v6943, 1
        %v6945 = vmax.f32 %v6943, %v6944
        %v6946 = vsel %vm6882, %v6792, -inf
        %v6947 = vrot.slane %v6946, 4
        %v6948 = vmax.f32 %v6946, %v6947
        %v6949 = vrot.slane %v6948, 2
        %v6950 = vmax.f32 %v6948, %v6949
        %v6951 = vrot.slane %v6950, 1
        %v6952 = vmax.f32 %v6950, %v6951
        %v6953 = vsel %vm6882, %v6793, -inf
        %v6954 = vrot.slane %v6953, 4
        %v6955 = vmax.f32 %v6953, %v6954
        %v6956 = vrot.slane %v6955, 2
        %v6957 = vmax.f32 %v6955, %v6956
        %v6958 = vrot.slane %v6957, 1
        %v6959 = vmax.f32 %v6957, %v6958
        %v6960 = vsel %vm6882, %v6794, -inf
        %v6961 = vrot.slane %v6960, 4
        %v6962 = vmax.f32 %v6960, %v6961
        %v6963 = vrot.slane %v6962, 2
        %v6964 = vmax.f32 %v6962, %v6963
        %v6965 = vrot.slane %v6964, 1
        %v6966 = vmax.f32 %v6964, %v6965
        %v6967 = vsel %vm6882, %v6757, -inf
        %v6968 = vrot.slane %v6967, 4
        %v6969 = vmax.f32 %v6967, %v6968
        %v6970 = vrot.slane %v6969, 2
        %v6971 = vmax.f32 %v6969, %v6970
        %v6972 = vrot.slane %v6971, 1
        %v6973 = vmax.f32 %v6971, %v6972
        %v6974 = vsel %vm6882, %v6795, -inf
        %v6975 = vrot.slane %v6974, 4
        %v6976 = vmax.f32 %v6974, %v6975
        %v6977 = vrot.slane %v6976, 2
        %v6978 = vmax.f32 %v6976, %v6977
        %v6979 = vrot.slane %v6978, 1
        %v6980 = vmax.f32 %v6978, %v6979
        %v6981 = vsel %vm6882, %v6796, -inf
        %v6982 = vrot.slane %v6981, 4
        %v6983 = vmax.f32 %v6981, %v6982
        %v6984 = vrot.slane %v6983, 2
        %v6985 = vmax.f32 %v6983, %v6984
        %v6986 = vrot.slane %v6985, 1
        %v6987 = vmax.f32 %v6985, %v6986
        %v6988 = vsel %vm6882, %v6797, -inf
        %v6989 = vrot.slane %v6988, 4
        %v6990 = vmax.f32 %v6988, %v6989
        %v6991 = vrot.slane %v6990, 2
        %v6992 = vmax.f32 %v6990, %v6991
        %v6993 = vrot.slane %v6992, 1
        %v6994 = vmax.f32 %v6992, %v6993
        %v6995 = vsel %vm6882, %v6758, -inf
        %v6996 = vrot.slane %v6995, 4
        %v6997 = vmax.f32 %v6995, %v6996
        %v6998 = vrot.slane %v6997, 2
        %v6999 = vmax.f32 %v6997, %v6998
        %v7000 = vrot.slane %v6999, 1
        %v7001 = vmax.f32 %v6999, %v7000
        %v7002 = vsel %vm6882, %v6798, -inf
        %v7003 = vrot.slane %v7002, 4
        %v7004 = vmax.f32 %v7002, %v7003
        %v7005 = vrot.slane %v7004, 2
        %v7006 = vmax.f32 %v7004, %v7005
        %v7007 = vrot.slane %v7006, 1
        %v7008 = vmax.f32 %v7006, %v7007
        %v7009 = vsel %vm6882, %v6799, -inf
        %v7010 = vrot.slane %v7009, 4
        %v7011 = vmax.f32 %v7009, %v7010
        %v7012 = vrot.slane %v7011, 2
        %v7013 = vmax.f32 %v7011, %v7012
        %v7014 = vrot.slane %v7013, 1
        %v7015 = vmax.f32 %v7013, %v7014
        %v7016 = vsel %vm6882, %v6800, -inf
        %v7017 = vrot.slane %v7016, 4
        %v7018 = vmax.f32 %v7016, %v7017
        %v7019 = vrot.slane %v7018, 2
        %v7020 = vmax.f32 %v7018, %v7019
        %v7021 = vrot.slane %v7020, 1
        %v7022 = vmax.f32 %v7020, %v7021
        %v7023 = vsel %vm6882, %v6759, -inf
        %v7024 = vrot.slane %v7023, 4
        %v7025 = vmax.f32 %v7023, %v7024
        %v7026 = vrot.slane %v7025, 2
        %v7027 = vmax.f32 %v7025, %v7026
        %v7028 = vrot.slane %v7027, 1
        %v7029 = vmax.f32 %v7027, %v7028
        %v7030 = vsel %vm6882, %v6801, -inf
        %v7031 = vrot.slane %v7030, 4
        %v7032 = vmax.f32 %v7030, %v7031
        %v7033 = vrot.slane %v7032, 2
        %v7034 = vmax.f32 %v7032, %v7033
        %v7035 = vrot.slane %v7034, 1
        %v7036 = vmax.f32 %v7034, %v7035
        %v7037 = vsel %vm6882, %v6802, -inf
        %v7038 = vrot.slane %v7037, 4
        %v7039 = vmax.f32 %v7037, %v7038
        %v7040 = vrot.slane %v7039, 2
        %v7041 = vmax.f32 %v7039, %v7040
        %v7042 = vrot.slane %v7041, 1
        %v7043 = vmax.f32 %v7041, %v7042
        %v7044 = vsel %vm6882, %v6803, -inf
        %v7045 = vrot.slane %v7044, 4
        %v7046 = vmax.f32 %v7044, %v7045
        %v7047 = vrot.slane %v7046, 2
        %v7048 = vmax.f32 %v7046, %v7047
        %v7049 = vrot.slane %v7048, 1
        %v7050 = vmax.f32 %v7048, %v7049
        %v7051 = vsel %vm6882, %v6760, -inf
        %v7052 = vrot.slane %v7051, 4
        %v7053 = vmax.f32 %v7051, %v7052
        %v7054 = vrot.slane %v7053, 2
        %v7055 = vmax.f32 %v7053, %v7054
        %v7056 = vrot.slane %v7055, 1
        %v7057 = vmax.f32 %v7055, %v7056
        %v7058 = vsel %vm6882, %v6804, -inf
        %v7059 = vrot.slane %v7058, 4
        %v7060 = vmax.f32 %v7058, %v7059
        %v7061 = vrot.slane %v7060, 2
        %v7062 = vmax.f32 %v7060, %v7061
        %v7063 = vrot.slane %v7062, 1
        %v7064 = vmax.f32 %v7062, %v7063
        %v7065 = vsel %vm6882, %v6805, -inf
        %v7066 = vrot.slane %v7065, 4
        %v7067 = vmax.f32 %v7065, %v7066
        %v7068 = vrot.slane %v7067, 2
        %v7069 = vmax.f32 %v7067, %v7068
        %v7070 = vrot.slane %v7069, 1
        %v7071 = vmax.f32 %v7069, %v7070
        %v7072 = vsel %vm6882, %v6806, -inf
        %v7073 = vrot.slane %v7072, 4
        %v7074 = vmax.f32 %v7072, %v7073
        %v7075 = vrot.slane %v7074, 2
        %v7076 = vmax.f32 %v7074, %v7075
        %v7077 = vrot.slane %v7076, 1
        %v7078 = vmax.f32 %v7076, %v7077
        %v7079 = vsel %vm6882, %v6761, -inf
        %v7080 = vrot.slane %v7079, 4
        %v7081 = vmax.f32 %v7079, %v7080
        %v7082 = vrot.slane %v7081, 2
        %v7083 = vmax.f32 %v7081, %v7082
        %v7084 = vrot.slane %v7083, 1
        %v7085 = vmax.f32 %v7083, %v7084
        %v7086 = vsel %vm6882, %v6807, -inf
        %v7087 = vrot.slane %v7086, 4
        %v7088 = vmax.f32 %v7086, %v7087
        %v7089 = vrot.slane %v7088, 2
        %v7090 = vmax.f32 %v7088, %v7089
        %v7091 = vrot.slane %v7090, 1
        %v7092 = vmax.f32 %v7090, %v7091
        %v7093 = vsel %vm6882, %v6808, -inf
        %v7094 = vrot.slane %v7093, 4
        %v7095 = vmax.f32 %v7093, %v7094
        %v7096 = vrot.slane %v7095, 2
        %v7097 = vmax.f32 %v7095, %v7096
        %v7098 = vrot.slane %v7097, 1
        %v7099 = vmax.f32 %v7097, %v7098
        %v7100 = vsel %vm6882, %v6809, -inf
        %v7101 = vrot.slane %v7100, 4
        %v7102 = vmax.f32 %v7100, %v7101
        %v7103 = vrot.slane %v7102, 2
        %v7104 = vmax.f32 %v7102, %v7103
        %v7105 = vrot.slane %v7104, 1
        %v7106 = vmax.f32 %v7104, %v7105
        %v7107 = vsel %vm6882, %v6762, -inf
        %v7108 = vrot.slane %v7107, 4
        %v7109 = vmax.f32 %v7107, %v7108
        %v7110 = vrot.slane %v7109, 2
        %v7111 = vmax.f32 %v7109, %v7110
        %v7112 = vrot.slane %v7111, 1
        %v7113 = vmax.f32 %v7111, %v7112
        %v7114 = vsel %vm6882, %v6810, -inf
        %v7115 = vrot.slane %v7114, 4
        %v7116 = vmax.f32 %v7114, %v7115
        %v7117 = vrot.slane %v7116, 2
        %v7118 = vmax.f32 %v7116, %v7117
        %v7119 = vrot.slane %v7118, 1
        %v7120 = vmax.f32 %v7118, %v7119
        %v7121 = vsel %vm6882, %v6811, -inf
        %v7122 = vrot.slane %v7121, 4
        %v7123 = vmax.f32 %v7121, %v7122
        %v7124 = vrot.slane %v7123, 2
        %v7125 = vmax.f32 %v7123, %v7124
        %v7126 = vrot.slane %v7125, 1
        %v7127 = vmax.f32 %v7125, %v7126
        %v7128 = vsel %vm6882, %v6812, -inf
        %v7129 = vrot.slane %v7128, 4
        %v7130 = vmax.f32 %v7128, %v7129
        %v7131 = vrot.slane %v7130, 2
        %v7132 = vmax.f32 %v7130, %v7131
        %v7133 = vrot.slane %v7132, 1
        %v7134 = vmax.f32 %v7132, %v7133
        %v7135 = vsel %vm6882, %v6763, -inf
        %v7136 = vrot.slane %v7135, 4
        %v7137 = vmax.f32 %v7135, %v7136
        %v7138 = vrot.slane %v7137, 2
        %v7139 = vmax.f32 %v7137, %v7138
        %v7140 = vrot.slane %v7139, 1
        %v7141 = vmax.f32 %v7139, %v7140
        %v7142 = vsel %vm6882, %v6813, -inf
        %v7143 = vrot.slane %v7142, 4
        %v7144 = vmax.f32 %v7142, %v7143
        %v7145 = vrot.slane %v7144, 2
        %v7146 = vmax.f32 %v7144, %v7145
        %v7147 = vrot.slane %v7146, 1
        %v7148 = vmax.f32 %v7146, %v7147
        %v7149 = vsel %vm6882, %v6814, -inf
        %v7150 = vrot.slane %v7149, 4
        %v7151 = vmax.f32 %v7149, %v7150
        %v7152 = vrot.slane %v7151, 2
        %v7153 = vmax.f32 %v7151, %v7152
        %v7154 = vrot.slane %v7153, 1
        %v7155 = vmax.f32 %v7153, %v7154
        %v7156 = vsel %vm6882, %v6815, -inf
        %v7157 = vrot.slane %v7156, 4
        %v7158 = vmax.f32 %v7156, %v7157
        %v7159 = vrot.slane %v7158, 2
        %v7160 = vmax.f32 %v7158, %v7159
        %v7161 = vrot.slane %v7160, 1
        %v7162 = vmax.f32 %v7160, %v7161
        %v7163 = vsel %vm6882, %v6764, -inf
        %v7164 = vrot.slane %v7163, 4
        %v7165 = vmax.f32 %v7163, %v7164
        %v7166 = vrot.slane %v7165, 2
        %v7167 = vmax.f32 %v7165, %v7166
        %v7168 = vrot.slane %v7167, 1
        %v7169 = vmax.f32 %v7167, %v7168
        %v7170 = vsel %vm6882, %v6816, -inf
        %v7171 = vrot.slane %v7170, 4
        %v7172 = vmax.f32 %v7170, %v7171
        %v7173 = vrot.slane %v7172, 2
        %v7174 = vmax.f32 %v7172, %v7173
        %v7175 = vrot.slane %v7174, 1
        %v7176 = vmax.f32 %v7174, %v7175
        %v7177 = vsel %vm6882, %v6817, -inf
        %v7178 = vrot.slane %v7177, 4
        %v7179 = vmax.f32 %v7177, %v7178
        %v7180 = vrot.slane %v7179, 2
        %v7181 = vmax.f32 %v7179, %v7180
        %v7182 = vrot.slane %v7181, 1
        %v7183 = vmax.f32 %v7181, %v7182
        %v7184 = vsel %vm6882, %v6818, -inf
        %v7185 = vrot.slane %v7184, 4
        %v7186 = vmax.f32 %v7184, %v7185
        %v7187 = vrot.slane %v7186, 2
        %v7188 = vmax.f32 %v7186, %v7187
        %v7189 = vrot.slane %v7188, 1
        %v7190 = vmax.f32 %v7188, %v7189
        %v7191 = vsel %vm6882, %v6765, -inf
        %v7192 = vrot.slane %v7191, 4
        %v7193 = vmax.f32 %v7191, %v7192
        %v7194 = vrot.slane %v7193, 2
        %v7195 = vmax.f32 %v7193, %v7194
        %v7196 = vrot.slane %v7195, 1
        %v7197 = vmax.f32 %v7195, %v7196
        %v7198 = vsel %vm6882, %v6819, -inf
        %v7199 = vrot.slane %v7198, 4
        %v7200 = vmax.f32 %v7198, %v7199
        %v7201 = vrot.slane %v7200, 2
        %v7202 = vmax.f32 %v7200, %v7201
        %v7203 = vrot.slane %v7202, 1
        %v7204 = vmax.f32 %v7202, %v7203
        %v7205 = vsel %vm6882, %v6820, -inf
        %v7206 = vrot.slane %v7205, 4
        %v7207 = vmax.f32 %v7205, %v7206
        %v7208 = vrot.slane %v7207, 2
        %v7209 = vmax.f32 %v7207, %v7208
        %v7210 = vrot.slane %v7209, 1
        %v7211 = vmax.f32 %v7209, %v7210
        %v7212 = vsel %vm6882, %v6821, -inf
        %v7213 = vrot.slane %v7212, 4
        %v7214 = vmax.f32 %v7212, %v7213
        %v7215 = vrot.slane %v7214, 2
        %v7216 = vmax.f32 %v7214, %v7215
        %v7217 = vrot.slane %v7216, 1
        %v7218 = vmax.f32 %v7216, %v7217
        %v7219 = vsel %vm6882, %v6766, -inf
        %v7220 = vrot.slane %v7219, 4
        %v7221 = vmax.f32 %v7219, %v7220
        %v7222 = vrot.slane %v7221, 2
        %v7223 = vmax.f32 %v7221, %v7222
        %v7224 = vrot.slane %v7223, 1
        %v7225 = vmax.f32 %v7223, %v7224
        %v7226 = vsel %vm6882, %v6822, -inf
        %v7227 = vrot.slane %v7226, 4
        %v7228 = vmax.f32 %v7226, %v7227
        %v7229 = vrot.slane %v7228, 2
        %v7230 = vmax.f32 %v7228, %v7229
        %v7231 = vrot.slane %v7230, 1
        %v7232 = vmax.f32 %v7230, %v7231
        %v7233 = vsel %vm6882, %v6823, -inf
        %v7234 = vrot.slane %v7233, 4
        %v7235 = vmax.f32 %v7233, %v7234
        %v7236 = vrot.slane %v7235, 2
        %v7237 = vmax.f32 %v7235, %v7236
        %v7238 = vrot.slane %v7237, 1
        %v7239 = vmax.f32 %v7237, %v7238
        %v7240 = vsel %vm6882, %v6824, -inf
        %v7241 = vrot.slane %v7240, 4
        %v7242 = vmax.f32 %v7240, %v7241
        %v7243 = vrot.slane %v7242, 2
        %v7244 = vmax.f32 %v7242, %v7243
        %v7245 = vrot.slane %v7244, 1
        %v7246 = vmax.f32 %v7244, %v7245
        %v7247 = vsel %vm6882, %v6767, -inf
        %v7248 = vrot.slane %v7247, 4
        %v7249 = vmax.f32 %v7247, %v7248
        %v7250 = vrot.slane %v7249, 2
        %v7251 = vmax.f32 %v7249, %v7250
        %v7252 = vrot.slane %v7251, 1
        %v7253 = vmax.f32 %v7251, %v7252
        %v7254 = vsel %vm6882, %v6825, -inf
        %v7255 = vrot.slane %v7254, 4
        %v7256 = vmax.f32 %v7254, %v7255
        %v7257 = vrot.slane %v7256, 2
        %v7258 = vmax.f32 %v7256, %v7257
        %v7259 = vrot.slane %v7258, 1
        %v7260 = vmax.f32 %v7258, %v7259
        %v7261 = vsel %vm6882, %v6826, -inf
        %v7262 = vrot.slane %v7261, 4
        %v7263 = vmax.f32 %v7261, %v7262
        %v7264 = vrot.slane %v7263, 2
        %v7265 = vmax.f32 %v7263, %v7264
        %v7266 = vrot.slane %v7265, 1
        %v7267 = vmax.f32 %v7265, %v7266
        %v7268 = vsel %vm6882, %v6827, -inf
        %v7269 = vrot.slane %v7268, 4
        %v7270 = vmax.f32 %v7268, %v7269
        %v7271 = vrot.slane %v7270, 2
        %v7272 = vmax.f32 %v7270, %v7271
        %v7273 = vrot.slane %v7272, 1
        %v7274 = vmax.f32 %v7272, %v7273
        %v7275 = vsel %vm6882, %v6768, -inf
        %v7276 = vrot.slane %v7275, 4
        %v7277 = vmax.f32 %v7275, %v7276
        %v7278 = vrot.slane %v7277, 2
        %v7279 = vmax.f32 %v7277, %v7278
        %v7280 = vrot.slane %v7279, 1
        %v7281 = vmax.f32 %v7279, %v7280
        %v7282 = vsel %vm6882, %v6828, -inf
        %v7283 = vrot.slane %v7282, 4
        %v7284 = vmax.f32 %v7282, %v7283
        %v7285 = vrot.slane %v7284, 2
        %v7286 = vmax.f32 %v7284, %v7285
        %v7287 = vrot.slane %v7286, 1
        %v7288 = vmax.f32 %v7286, %v7287
        %v7289 = vsel %vm6882, %v6829, -inf
        %v7290 = vrot.slane %v7289, 4
        %v7291 = vmax.f32 %v7289, %v7290
        %v7292 = vrot.slane %v7291, 2
        %v7293 = vmax.f32 %v7291, %v7292
        %v7294 = vrot.slane %v7293, 1
        %v7295 = vmax.f32 %v7293, %v7294
        %v7296 = vsel %vm6882, %v6830, -inf
        %v7297 = vrot.slane %v7296, 4
        %v7298 = vmax.f32 %v7296, %v7297
        %v7299 = vrot.slane %v7298, 2
        %v7300 = vmax.f32 %v7298, %v7299
        %v7301 = vrot.slane %v7300, 1
        %v7302 = vmax.f32 %v7300, %v7301
        %v7303 = vsel %vm6882, %v6769, -inf
        %v7304 = vrot.slane %v7303, 4
        %v7305 = vmax.f32 %v7303, %v7304
        %v7306 = vrot.slane %v7305, 2
        %v7307 = vmax.f32 %v7305, %v7306
        %v7308 = vrot.slane %v7307, 1
        %v7309 = vmax.f32 %v7307, %v7308
        %v7310 = vsel %vm6882, %v6831, -inf
        %v7311 = vrot.slane %v7310, 4
        %v7312 = vmax.f32 %v7310, %v7311
        %v7313 = vrot.slane %v7312, 2
        %v7314 = vmax.f32 %v7312, %v7313
        %v7315 = vrot.slane %v7314, 1
        %v7316 = vmax.f32 %v7314, %v7315
        %v7317 = vsel %vm6882, %v6832, -inf
        %v7318 = vrot.slane %v7317, 4
        %v7319 = vmax.f32 %v7317, %v7318
        %v7320 = vrot.slane %v7319, 2
        %v7321 = vmax.f32 %v7319, %v7320
        %v7322 = vrot.slane %v7321, 1
        %v7323 = vmax.f32 %v7321, %v7322
        %v7324 = vsel %vm6882, %v6833, -inf
        %v7325 = vrot.slane %v7324, 4
        %v7326 = vmax.f32 %v7324, %v7325
        %v7327 = vrot.slane %v7326, 2
        %v7328 = vmax.f32 %v7326, %v7327
        %v7329 = vrot.slane %v7328, 1
        %v7330 = vmax.f32 %v7328, %v7329
        %v7395 = vsel %vm1441, %v6896, %v6889
        %v7396 = vsel %vm1443, %v6903, %v7395
        %v7397 = vsel %vm1445, %v6910, %v7396
        %v7398 = vsel %vm1447, %v6917, %v7397
        %v7399 = vsel %vm1449, %v6924, %v7398
        %v7400 = vsel %vm1451, %v6931, %v7399
        %v7401 = vsel %vm1453, %v6938, %v7400
        %v7402 = vsel %vm1441, %v6952, %v6945
        %v7403 = vsel %vm1443, %v6959, %v7402
        %v7404 = vsel %vm1445, %v6966, %v7403
        %v7405 = vsel %vm1447, %v6973, %v7404
        %v7406 = vsel %vm1449, %v6980, %v7405
        %v7407 = vsel %vm1451, %v6987, %v7406
        %v7408 = vsel %vm1453, %v6994, %v7407
        %v7409 = vsel %vm1441, %v7008, %v7001
        %v7410 = vsel %vm1443, %v7015, %v7409
        %v7411 = vsel %vm1445, %v7022, %v7410
        %v7412 = vsel %vm1447, %v7029, %v7411
        %v7413 = vsel %vm1449, %v7036, %v7412
        %v7414 = vsel %vm1451, %v7043, %v7413
        %v7415 = vsel %vm1453, %v7050, %v7414
        %v7416 = vsel %vm1441, %v7064, %v7057
        %v7417 = vsel %vm1443, %v7071, %v7416
        %v7418 = vsel %vm1445, %v7078, %v7417
        %v7419 = vsel %vm1447, %v7085, %v7418
        %v7420 = vsel %vm1449, %v7092, %v7419
        %v7421 = vsel %vm1451, %v7099, %v7420
        %v7422 = vsel %vm1453, %v7106, %v7421
        %v7423 = vsel %vm1441, %v7120, %v7113
        %v7424 = vsel %vm1443, %v7127, %v7423
        %v7425 = vsel %vm1445, %v7134, %v7424
        %v7426 = vsel %vm1447, %v7141, %v7425
        %v7427 = vsel %vm1449, %v7148, %v7426
        %v7428 = vsel %vm1451, %v7155, %v7427
        %v7429 = vsel %vm1453, %v7162, %v7428
        %v7430 = vsel %vm1441, %v7176, %v7169
        %v7431 = vsel %vm1443, %v7183, %v7430
        %v7432 = vsel %vm1445, %v7190, %v7431
        %v7433 = vsel %vm1447, %v7197, %v7432
        %v7434 = vsel %vm1449, %v7204, %v7433
        %v7435 = vsel %vm1451, %v7211, %v7434
        %v7436 = vsel %vm1453, %v7218, %v7435
        %v7437 = vsel %vm1441, %v7232, %v7225
        %v7438 = vsel %vm1443, %v7239, %v7437
        %v7439 = vsel %vm1445, %v7246, %v7438
        %v7440 = vsel %vm1447, %v7253, %v7439
        %v7441 = vsel %vm1449, %v7260, %v7440
        %v7442 = vsel %vm1451, %v7267, %v7441
        %v7443 = vsel %vm1453, %v7274, %v7442
        %v7444 = vsel %vm1441, %v7288, %v7281
        %v7445 = vsel %vm1443, %v7295, %v7444
        %v7446 = vsel %vm1445, %v7302, %v7445
        %v7447 = vsel %vm1447, %v7309, %v7446
        %v7448 = vsel %vm1449, %v7316, %v7447
        %v7449 = vsel %vm1451, %v7323, %v7448
        %v7450 = vsel %vm1453, %v7330, %v7449
        %7459 = vst [vmem:[%s434 + $0x8] sm:$0xff] %v7401
        %7460 = vst [vmem:[%s434 + $0x20] sm:$0xff] %v7408
        %7461 = vst [vmem:[%s434 + $0x38] sm:$0xff] %v7415
        %7462 = vst [vmem:[%s434 + $0x50] sm:$0xff] %v7422
        %7463 = vst [vmem:[%s434 + $0x68] sm:$0xff] %v7429
        %7464 = vst [vmem:[%s434 + $0x80] sm:$0xff] %v7436
        %7465 = vst [vmem:[%s434 + $0x98] sm:$0xff] %v7443
        %7466 = vst [vmem:[%s434 + $0xb0] sm:$0xff] %v7450
        %v7467 = vld [vmem:[#allocation6 + $0x7] sm:$0xff]
        %v7468 = vld [vmem:[#allocation6 + $0x1f] sm:$0xff]
        %v7469 = vld [vmem:[#allocation6 + $0x37] sm:$0xff]
        %v7470 = vld [vmem:[#allocation6 + $0x4f] sm:$0xff]
        %v7471 = vld [vmem:[#allocation6 + $0x67] sm:$0xff]
        %v7472 = vld [vmem:[#allocation6 + $0x7f] sm:$0xff]
        %v7473 = vld [vmem:[#allocation6 + $0x97] sm:$0xff]
        %v7474 = vld [vmem:[#allocation6 + $0xaf] sm:$0xff]
        %7475 = vst [vmem:[#allocation7] sm:$0xff] %v7467
        %7476 = vst [vmem:[#allocation7 + $0x48] sm:$0xff] %v7468
        %7477 = vst [vmem:[#allocation7 + $0x90] sm:$0xff] %v7469
        %7478 = vst [vmem:[#allocation7 + $0xd8] sm:$0xff] %v7470
        %7479 = vst [vmem:[#allocation7 + $0x120] sm:$0xff] %v7471
        %7480 = vst [vmem:[#allocation7 + $0x168] sm:$0xff] %v7472
        %7481 = vst [vmem:[#allocation7 + $0x1b0] sm:$0xff] %v7473
        %7482 = vst [vmem:[#allocation7 + $0x1f8] sm:$0xff] %v7474
        %v7483 = vld [vmem:[#allocation6 + $0x8] sm:$0xff]
        %v7484 = vld [vmem:[#allocation6 + $0x20] sm:$0xff]
        %v7485 = vld [vmem:[#allocation6 + $0x38] sm:$0xff]
        %v7486 = vld [vmem:[#allocation6 + $0x50] sm:$0xff]
        %v7487 = vld [vmem:[#allocation6 + $0x68] sm:$0xff]
        %v7488 = vld [vmem:[#allocation6 + $0x80] sm:$0xff]
        %v7489 = vld [vmem:[#allocation6 + $0x98] sm:$0xff]
        %v7490 = vld [vmem:[#allocation6 + $0xb0] sm:$0xff]
        %7491 = vst [vmem:[#allocation7 + $0x8] sm:$0xff] %v7483
        %7492 = vst [vmem:[#allocation7 + $0x50] sm:$0xff] %v7484
        %7493 = vst [vmem:[#allocation7 + $0x98] sm:$0xff] %v7485
        %7494 = vst [vmem:[#allocation7 + $0xe0] sm:$0xff] %v7486
        %7495 = vst [vmem:[#allocation7 + $0x128] sm:$0xff] %v7487
        %7496 = vst [vmem:[#allocation7 + $0x170] sm:$0xff] %v7488
        %7497 = vst [vmem:[#allocation7 + $0x1b8] sm:$0xff] %v7489
        %7498 = vst [vmem:[#allocation7 + $0x200] sm:$0xff] %v7490
        %v7499 = vld [vmem:[#allocation6 + $0x9] sm:$0xff]
        %v7500 = vld [vmem:[#allocation6 + $0x21] sm:$0xff]
        %v7501 = vld [vmem:[#allocation6 + $0x39] sm:$0xff]
        %v7502 = vld [vmem:[#allocation6 + $0x51] sm:$0xff]
        %v7503 = vld [vmem:[#allocation6 + $0x69] sm:$0xff]
        %v7504 = vld [vmem:[#allocation6 + $0x81] sm:$0xff]
        %v7505 = vld [vmem:[#allocation6 + $0x99] sm:$0xff]
        %v7506 = vld [vmem:[#allocation6 + $0xb1] sm:$0xff]
        %7507 = vst [vmem:[#allocation7 + $0x10] sm:$0xff] %v7499
        %7508 = vst [vmem:[#allocation7 + $0x58] sm:$0xff] %v7500
        %7509 = vst [vmem:[#allocation7 + $0xa0] sm:$0xff] %v7501
        %7510 = vst [vmem:[#allocation7 + $0xe8] sm:$0xff] %v7502
        %7511 = vst [vmem:[#allocation7 + $0x130] sm:$0xff] %v7503
        %7512 = vst [vmem:[#allocation7 + $0x178] sm:$0xff] %v7504
        %7513 = vst [vmem:[#allocation7 + $0x1c0] sm:$0xff] %v7505
        %7514 = vst [vmem:[#allocation7 + $0x208] sm:$0xff] %v7506
        %v7515 = vld [vmem:[%s434 + $0x7] sm:$0xff]
        %v7516 = vld [vmem:[%s434 + $0x1f] sm:$0xff]
        %v7517 = vld [vmem:[%s434 + $0x37] sm:$0xff]
        %v7518 = vld [vmem:[%s434 + $0x4f] sm:$0xff]
        %v7519 = vld [vmem:[%s434 + $0x67] sm:$0xff]
        %v7520 = vld [vmem:[%s434 + $0x7f] sm:$0xff]
        %v7521 = vld [vmem:[%s434 + $0x97] sm:$0xff]
        %v7522 = vld [vmem:[%s434 + $0xaf] sm:$0xff]
        %7523 = vst [vmem:[#allocation7 + $0x18] sm:$0xff] %v7515
        %7524 = vst [vmem:[#allocation7 + $0x60] sm:$0xff] %v7516
        %7525 = vst [vmem:[#allocation7 + $0xa8] sm:$0xff] %v7517
        %7526 = vst [vmem:[#allocation7 + $0xf0] sm:$0xff] %v7518
        %7527 = vst [vmem:[#allocation7 + $0x138] sm:$0xff] %v7519
        %7528 = vst [vmem:[#allocation7 + $0x180] sm:$0xff] %v7520
        %7529 = vst [vmem:[#allocation7 + $0x1c8] sm:$0xff] %v7521
        %7530 = vst [vmem:[#allocation7 + $0x210] sm:$0xff] %v7522
        %v7531 = vld [vmem:[%s434 + $0x8] sm:$0xff]
        %v7532 = vld [vmem:[%s434 + $0x20] sm:$0xff]
        %v7533 = vld [vmem:[%s434 + $0x38] sm:$0xff]
        %v7534 = vld [vmem:[%s434 + $0x50] sm:$0xff]
        %v7535 = vld [vmem:[%s434 + $0x68] sm:$0xff]
        %v7536 = vld [vmem:[%s434 + $0x80] sm:$0xff]
        %v7537 = vld [vmem:[%s434 + $0x98] sm:$0xff]
        %v7538 = vld [vmem:[%s434 + $0xb0] sm:$0xff]
        %7539 = vst [vmem:[#allocation7 + $0x20] sm:$0xff] %v7531
        %7540 = vst [vmem:[#allocation7 + $0x68] sm:$0xff] %v7532
        %7541 = vst [vmem:[#allocation7 + $0xb0] sm:$0xff] %v7533
        %7542 = vst [vmem:[#allocation7 + $0xf8] sm:$0xff] %v7534
        %7543 = vst [vmem:[#allocation7 + $0x140] sm:$0xff] %v7535
        %7544 = vst [vmem:[#allocation7 + $0x188] sm:$0xff] %v7536
        %7545 = vst [vmem:[#allocation7 + $0x1d0] sm:$0xff] %v7537
        %7546 = vst [vmem:[#allocation7 + $0x218] sm:$0xff] %v7538
        %v7547 = vld [vmem:[%s434 + $0x9] sm:$0xff]
        %v7548 = vld [vmem:[%s434 + $0x21] sm:$0xff]
        %v7549 = vld [vmem:[%s434 + $0x39] sm:$0xff]
        %v7550 = vld [vmem:[%s434 + $0x51] sm:$0xff]
        %v7551 = vld [vmem:[%s434 + $0x69] sm:$0xff]
        %v7552 = vld [vmem:[%s434 + $0x81] sm:$0xff]
        %v7553 = vld [vmem:[%s434 + $0x99] sm:$0xff]
        %v7554 = vld [vmem:[%s434 + $0xb1] sm:$0xff]
        %7555 = vst [vmem:[#allocation7 + $0x28] sm:$0xff] %v7547
        %7556 = vst [vmem:[#allocation7 + $0x70] sm:$0xff] %v7548
        %7557 = vst [vmem:[#allocation7 + $0xb8] sm:$0xff] %v7549
        %7558 = vst [vmem:[#allocation7 + $0x100] sm:$0xff] %v7550
        %7559 = vst [vmem:[#allocation7 + $0x148] sm:$0xff] %v7551
        %7560 = vst [vmem:[#allocation7 + $0x190] sm:$0xff] %v7552
        %7561 = vst [vmem:[#allocation7 + $0x1d8] sm:$0xff] %v7553
        %7562 = vst [vmem:[#allocation7 + $0x220] sm:$0xff] %v7554
        %s7563 = scalar_lea.vmem [#allocation6], 48
        %v7564 = vld [vmem:[%s7563 + $0x7] sm:$0xff]
        %v7565 = vld [vmem:[%s7563 + $0x1f] sm:$0xff]
        %v7566 = vld [vmem:[%s7563 + $0x37] sm:$0xff]
        %v7567 = vld [vmem:[%s7563 + $0x4f] sm:$0xff]
        %v7568 = vld [vmem:[%s7563 + $0x67] sm:$0xff]
        %v7569 = vld [vmem:[%s7563 + $0x7f] sm:$0xff]
        %v7570 = vld [vmem:[%s7563 + $0x97] sm:$0xff]
        %v7571 = vld [vmem:[%s7563 + $0xaf] sm:$0xff]
        %7572 = vst [vmem:[#allocation7 + $0x30] sm:$0xff] %v7564
        %7573 = vst [vmem:[#allocation7 + $0x78] sm:$0xff] %v7565
        %7574 = vst [vmem:[#allocation7 + $0xc0] sm:$0xff] %v7566
        %7575 = vst [vmem:[#allocation7 + $0x108] sm:$0xff] %v7567
        %7576 = vst [vmem:[#allocation7 + $0x150] sm:$0xff] %v7568
        %7577 = vst [vmem:[#allocation7 + $0x198] sm:$0xff] %v7569
        %7578 = vst [vmem:[#allocation7 + $0x1e0] sm:$0xff] %v7570
        %7579 = vst [vmem:[#allocation7 + $0x228] sm:$0xff] %v7571
        %v7580 = vld [vmem:[%s7563 + $0x8] sm:$0xff]
        %v7581 = vld [vmem:[%s7563 + $0x20] sm:$0xff]
        %v7582 = vld [vmem:[%s7563 + $0x38] sm:$0xff]
        %v7583 = vld [vmem:[%s7563 + $0x50] sm:$0xff]
        %v7584 = vld [vmem:[%s7563 + $0x68] sm:$0xff]
        %v7585 = vld [vmem:[%s7563 + $0x80] sm:$0xff]
        %v7586 = vld [vmem:[%s7563 + $0x98] sm:$0xff]
        %v7587 = vld [vmem:[%s7563 + $0xb0] sm:$0xff]
        %7588 = vst [vmem:[#allocation7 + $0x38] sm:$0xff] %v7580
        %7589 = vst [vmem:[#allocation7 + $0x80] sm:$0xff] %v7581
        %7590 = vst [vmem:[#allocation7 + $0xc8] sm:$0xff] %v7582
        %7591 = vst [vmem:[#allocation7 + $0x110] sm:$0xff] %v7583
        %7592 = vst [vmem:[#allocation7 + $0x158] sm:$0xff] %v7584
        %7593 = vst [vmem:[#allocation7 + $0x1a0] sm:$0xff] %v7585
        %7594 = vst [vmem:[#allocation7 + $0x1e8] sm:$0xff] %v7586
        %7595 = vst [vmem:[#allocation7 + $0x230] sm:$0xff] %v7587
        %v7596 = vld [vmem:[%s7563 + $0x9] sm:$0xff]
        %v7597 = vld [vmem:[%s7563 + $0x21] sm:$0xff]
        %v7598 = vld [vmem:[%s7563 + $0x39] sm:$0xff]
        %v7599 = vld [vmem:[%s7563 + $0x51] sm:$0xff]
        %v7600 = vld [vmem:[%s7563 + $0x69] sm:$0xff]
        %v7601 = vld [vmem:[%s7563 + $0x81] sm:$0xff]
        %v7602 = vld [vmem:[%s7563 + $0x99] sm:$0xff]
        %v7603 = vld [vmem:[%s7563 + $0xb1] sm:$0xff]
        %7604 = vst [vmem:[#allocation7 + $0x40] sm:$0xff] %v7596
        %7605 = vst [vmem:[#allocation7 + $0x88] sm:$0xff] %v7597
        %7606 = vst [vmem:[#allocation7 + $0xd0] sm:$0xff] %v7598
        %7607 = vst [vmem:[#allocation7 + $0x118] sm:$0xff] %v7599
        %7608 = vst [vmem:[#allocation7 + $0x160] sm:$0xff] %v7600
        %7609 = vst [vmem:[#allocation7 + $0x1a8] sm:$0xff] %v7601
        %7610 = vst [vmem:[#allocation7 + $0x1f0] sm:$0xff] %v7602
        %7611 = vst [vmem:[#allocation7 + $0x238] sm:$0xff] %v7603
        %v7612 = vld [vmem:[#allocation7] sm:$0xff]
        %v7613 = vld [vmem:[#allocation7 + $0x8] sm:$0xff]
        %v7614 = vld [vmem:[#allocation7 + $0x10] sm:$0xff]
        %v7615 = vld [vmem:[#allocation7 + $0x18] sm:$0xff]
        %v7616 = vld [vmem:[#allocation7 + $0x20] sm:$0xff]
        %v7617 = vld [vmem:[#allocation7 + $0x28] sm:$0xff]
        %v7618 = vld [vmem:[#allocation7 + $0x30] sm:$0xff]
        %v7619 = vld [vmem:[#allocation7 + $0x38] sm:$0xff]
        %v7620 = vld [vmem:[#allocation7 + $0x40] sm:$0xff]
        %v7621 = vld [vmem:[#allocation7 + $0x48] sm:$0xff]
        %v7622 = vld [vmem:[#allocation7 + $0x50] sm:$0xff]
        %v7623 = vld [vmem:[#allocation7 + $0x58] sm:$0xff]
        %v7624 = vld [vmem:[#allocation7 + $0x60] sm:$0xff]
        %v7625 = vld [vmem:[#allocation7 + $0x68] sm:$0xff]
        %v7626 = vld [vmem:[#allocation7 + $0x70] sm:$0xff]
        %v7627 = vld [vmem:[#allocation7 + $0x78] sm:$0xff]
        %v7628 = vld [vmem:[#allocation7 + $0x80] sm:$0xff]
        %v7629 = vld [vmem:[#allocation7 + $0x88] sm:$0xff]
        %v7630 = vld [vmem:[#allocation7 + $0x90] sm:$0xff]
        %v7631 = vld [vmem:[#allocation7 + $0x98] sm:$0xff]
        %v7632 = vld [vmem:[#allocation7 + $0xa0] sm:$0xff]
        %v7633 = vld [vmem:[#allocation7 + $0xa8] sm:$0xff]
        %v7634 = vld [vmem:[#allocation7 + $0xb0] sm:$0xff]
        %v7635 = vld [vmem:[#allocation7 + $0xb8] sm:$0xff]
        %v7636 = vld [vmem:[#allocation7 + $0xc0] sm:$0xff]
        %v7637 = vld [vmem:[#allocation7 + $0xc8] sm:$0xff]
        %v7638 = vld [vmem:[#allocation7 + $0xd0] sm:$0xff]
        %v7639 = vld [vmem:[#allocation7 + $0xd8] sm:$0xff]
        %v7640 = vld [vmem:[#allocation7 + $0xe0] sm:$0xff]
        %v7641 = vld [vmem:[#allocation7 + $0xe8] sm:$0xff]
        %v7642 = vld [vmem:[#allocation7 + $0xf0] sm:$0xff]
        %v7643 = vld [vmem:[#allocation7 + $0xf8] sm:$0xff]
        %v7644 = vld [vmem:[#allocation7 + $0x100] sm:$0xff]
        %v7645 = vld [vmem:[#allocation7 + $0x108] sm:$0xff]
        %v7646 = vld [vmem:[#allocation7 + $0x110] sm:$0xff]
        %v7647 = vld [vmem:[#allocation7 + $0x118] sm:$0xff]
        %v7648 = vld [vmem:[#allocation7 + $0x120] sm:$0xff]
        %v7649 = vld [vmem:[#allocation7 + $0x128] sm:$0xff]
        %v7650 = vld [vmem:[#allocation7 + $0x130] sm:$0xff]
        %v7651 = vld [vmem:[#allocation7 + $0x138] sm:$0xff]
        %v7652 = vld [vmem:[#allocation7 + $0x140] sm:$0xff]
        %v7653 = vld [vmem:[#allocation7 + $0x148] sm:$0xff]
        %v7654 = vld [vmem:[#allocation7 + $0x150] sm:$0xff]
        %v7655 = vld [vmem:[#allocation7 + $0x158] sm:$0xff]
        %v7656 = vld [vmem:[#allocation7 + $0x160] sm:$0xff]
        %v7657 = vld [vmem:[#allocation7 + $0x168] sm:$0xff]
        %v7658 = vld [vmem:[#allocation7 + $0x170] sm:$0xff]
        %v7659 = vld [vmem:[#allocation7 + $0x178] sm:$0xff]
        %v7660 = vld [vmem:[#allocation7 + $0x180] sm:$0xff]
        %v7661 = vld [vmem:[#allocation7 + $0x188] sm:$0xff]
        %v7662 = vld [vmem:[#allocation7 + $0x190] sm:$0xff]
        %v7663 = vld [vmem:[#allocation7 + $0x198] sm:$0xff]
        %v7664 = vld [vmem:[#allocation7 + $0x1a0] sm:$0xff]
        %v7665 = vld [vmem:[#allocation7 + $0x1a8] sm:$0xff]
        %v7666 = vld [vmem:[#allocation7 + $0x1b0] sm:$0xff]
        %v7667 = vld [vmem:[#allocation7 + $0x1b8] sm:$0xff]
        %v7668 = vld [vmem:[#allocation7 + $0x1c0] sm:$0xff]
        %v7669 = vld [vmem:[#allocation7 + $0x1c8] sm:$0xff]
        %v7670 = vld [vmem:[#allocation7 + $0x1d0] sm:$0xff]
        %v7671 = vld [vmem:[#allocation7 + $0x1d8] sm:$0xff]
        %v7672 = vld [vmem:[#allocation7 + $0x1e0] sm:$0xff]
        %v7673 = vld [vmem:[#allocation7 + $0x1e8] sm:$0xff]
        %v7674 = vld [vmem:[#allocation7 + $0x1f0] sm:$0xff]
        %v7675 = vld [vmem:[#allocation7 + $0x1f8] sm:$0xff]
        %v7676 = vld [vmem:[#allocation7 + $0x200] sm:$0xff]
        %v7677 = vld [vmem:[#allocation7 + $0x208] sm:$0xff]
        %v7678 = vld [vmem:[#allocation7 + $0x210] sm:$0xff]
        %v7679 = vld [vmem:[#allocation7 + $0x218] sm:$0xff]
        %v7680 = vld [vmem:[#allocation7 + $0x220] sm:$0xff]
        %v7681 = vld [vmem:[#allocation7 + $0x228] sm:$0xff]
        %v7682 = vld [vmem:[#allocation7 + $0x230] sm:$0xff]
        %v7683 = vld [vmem:[#allocation7 + $0x238] sm:$0xff]
        %v7684 = vld [vmem:[%s5] sm:$0xff]
        %v7685 = vld [vmem:[%s5 + $0x8] sm:$0xff]
        %v7686 = vld [vmem:[%s5 + $0x10] sm:$0xff]
        %v7687 = vld [vmem:[%s5 + $0x18] sm:$0xff]
        %v7688 = vld [vmem:[%s5 + $0x20] sm:$0xff]
        %v7689 = vld [vmem:[%s5 + $0x28] sm:$0xff]
        %v7690 = vld [vmem:[%s5 + $0x30] sm:$0xff]
        %v7691 = vld [vmem:[%s5 + $0x38] sm:$0xff]
        %v7692 = vld [vmem:[%s5 + $0x40] sm:$0xff]
        %v7693 = vld [vmem:[%s5 + $0x48] sm:$0xff]
        %v7694 = vld [vmem:[%s5 + $0x50] sm:$0xff]
        %v7695 = vld [vmem:[%s5 + $0x58] sm:$0xff]
        %v7696 = vld [vmem:[%s5 + $0x60] sm:$0xff]
        %v7697 = vld [vmem:[%s5 + $0x68] sm:$0xff]
        %v7698 = vld [vmem:[%s5 + $0x70] sm:$0xff]
        %v7699 = vld [vmem:[%s5 + $0x78] sm:$0xff]
        %v7700 = vld [vmem:[%s5 + $0x80] sm:$0xff]
        %v7701 = vld [vmem:[%s5 + $0x88] sm:$0xff]
        %v7702 = vld [vmem:[%s5 + $0x90] sm:$0xff]
        %v7703 = vld [vmem:[%s5 + $0x98] sm:$0xff]
        %v7704 = vld [vmem:[%s5 + $0xa0] sm:$0xff]
        %v7705 = vld [vmem:[%s5 + $0xa8] sm:$0xff]
        %v7706 = vld [vmem:[%s5 + $0xb0] sm:$0xff]
        %v7707 = vld [vmem:[%s5 + $0xb8] sm:$0xff]
        %v7708 = vld [vmem:[%s5 + $0xc0] sm:$0xff]
        %v7709 = vld [vmem:[%s5 + $0xc8] sm:$0xff]
        %v7710 = vld [vmem:[%s5 + $0xd0] sm:$0xff]
        %v7711 = vld [vmem:[%s5 + $0xd8] sm:$0xff]
        %v7712 = vld [vmem:[%s5 + $0xe0] sm:$0xff]
        %v7713 = vld [vmem:[%s5 + $0xe8] sm:$0xff]
        %v7714 = vld [vmem:[%s5 + $0xf0] sm:$0xff]
        %v7715 = vld [vmem:[%s5 + $0xf8] sm:$0xff]
        %v7716 = vld [vmem:[%s5 + $0x100] sm:$0xff]
        %v7717 = vld [vmem:[%s5 + $0x108] sm:$0xff]
        %v7718 = vld [vmem:[%s5 + $0x110] sm:$0xff]
        %v7719 = vld [vmem:[%s5 + $0x118] sm:$0xff]
        %v7720 = vld [vmem:[%s5 + $0x120] sm:$0xff]
        %v7721 = vld [vmem:[%s5 + $0x128] sm:$0xff]
        %v7722 = vld [vmem:[%s5 + $0x130] sm:$0xff]
        %v7723 = vld [vmem:[%s5 + $0x138] sm:$0xff]
        %v7724 = vld [vmem:[%s5 + $0x140] sm:$0xff]
        %v7725 = vld [vmem:[%s5 + $0x148] sm:$0xff]
        %v7726 = vld [vmem:[%s5 + $0x150] sm:$0xff]
        %v7727 = vld [vmem:[%s5 + $0x158] sm:$0xff]
        %v7728 = vld [vmem:[%s5 + $0x160] sm:$0xff]
        %v7729 = vld [vmem:[%s5 + $0x168] sm:$0xff]
        %v7730 = vld [vmem:[%s5 + $0x170] sm:$0xff]
        %v7731 = vld [vmem:[%s5 + $0x178] sm:$0xff]
        %v7732 = vld [vmem:[%s5 + $0x180] sm:$0xff]
        %v7733 = vld [vmem:[%s5 + $0x188] sm:$0xff]
        %v7734 = vld [vmem:[%s5 + $0x190] sm:$0xff]
        %v7735 = vld [vmem:[%s5 + $0x198] sm:$0xff]
        %v7736 = vld [vmem:[%s5 + $0x1a0] sm:$0xff]
        %v7737 = vld [vmem:[%s5 + $0x1a8] sm:$0xff]
        %v7738 = vld [vmem:[%s5 + $0x1b0] sm:$0xff]
        %v7739 = vld [vmem:[%s5 + $0x1b8] sm:$0xff]
        %v7740 = vld [vmem:[%s5 + $0x1c0] sm:$0xff]
        %v7741 = vld [vmem:[%s5 + $0x1c8] sm:$0xff]
        %v7742 = vld [vmem:[%s5 + $0x1d0] sm:$0xff]
        %v7743 = vld [vmem:[%s5 + $0x1d8] sm:$0xff]
        %v7744 = vld [vmem:[%s5 + $0x1e0] sm:$0xff]
        %v7745 = vld [vmem:[%s5 + $0x1e8] sm:$0xff]
        %v7746 = vld [vmem:[%s5 + $0x1f0] sm:$0xff]
        %v7747 = vld [vmem:[%s5 + $0x1f8] sm:$0xff]
        %v7748 = vld [vmem:[%s5 + $0x200] sm:$0xff]
        %v7749 = vld [vmem:[%s5 + $0x208] sm:$0xff]
        %v7750 = vld [vmem:[%s5 + $0x210] sm:$0xff]
        %v7751 = vld [vmem:[%s5 + $0x218] sm:$0xff]
        %v7752 = vld [vmem:[%s5 + $0x220] sm:$0xff]
        %v7753 = vld [vmem:[%s5 + $0x228] sm:$0xff]
        %v7754 = vld [vmem:[%s5 + $0x230] sm:$0xff]
        %v7755 = vld [vmem:[%s5 + $0x238] sm:$0xff]
        %v7756 = vld [vmem:[%s5 + $0x240] sm:$0xff]
        %v7757 = vld [vmem:[%s5 + $0x248] sm:$0xff]
        %v7758 = vld [vmem:[%s5 + $0x250] sm:$0xff]
        %v7759 = vld [vmem:[%s5 + $0x258] sm:$0xff]
        %v7760 = vld [vmem:[%s5 + $0x260] sm:$0xff]
        %v7761 = vld [vmem:[%s5 + $0x268] sm:$0xff]
        %v7762 = vld [vmem:[%s5 + $0x270] sm:$0xff]
        %v7763 = vld [vmem:[%s5 + $0x278] sm:$0xff]
        %v7764 = vld [vmem:[%s5 + $0x280] sm:$0xff]
        %v7765 = vld [vmem:[%s5 + $0x288] sm:$0xff]
        %v7766 = vld [vmem:[%s5 + $0x290] sm:$0xff]
        %v7767 = vld [vmem:[%s5 + $0x298] sm:$0xff]
        %v7768 = vld [vmem:[%s5 + $0x2a0] sm:$0xff]
        %v7769 = vld [vmem:[%s5 + $0x2a8] sm:$0xff]
        %v7770 = vld [vmem:[%s5 + $0x2b0] sm:$0xff]
        %v7771 = vld [vmem:[%s5 + $0x2b8] sm:$0xff]
        %v7772 = vld [vmem:[%s5 + $0x2c0] sm:$0xff]
        %v7773 = vld [vmem:[%s5 + $0x2c8] sm:$0xff]
        %v7774 = vld [vmem:[%s5 + $0x2d0] sm:$0xff]
        %v7775 = vld [vmem:[%s5 + $0x2d8] sm:$0xff]
        %v7776 = vld [vmem:[%s5 + $0x2e0] sm:$0xff]
        %v7777 = vld [vmem:[%s5 + $0x2e8] sm:$0xff]
        %v7778 = vld [vmem:[%s5 + $0x2f0] sm:$0xff]
        %v7779 = vld [vmem:[%s5 + $0x2f8] sm:$0xff]
        %v7780 = vld [vmem:[%s5 + $0x300] sm:$0xff]
        %v7781 = vld [vmem:[%s5 + $0x308] sm:$0xff]
        %v7782 = vld [vmem:[%s5 + $0x310] sm:$0xff]
        %v7783 = vld [vmem:[%s5 + $0x318] sm:$0xff]
        %v7784 = vld [vmem:[%s5 + $0x320] sm:$0xff]
        %v7785 = vld [vmem:[%s5 + $0x328] sm:$0xff]
        %v7786 = vld [vmem:[%s5 + $0x330] sm:$0xff]
        %v7787 = vld [vmem:[%s5 + $0x338] sm:$0xff]
        %v7788 = vld [vmem:[%s5 + $0x340] sm:$0xff]
        %v7789 = vld [vmem:[%s5 + $0x348] sm:$0xff]
        %v7790 = vld [vmem:[%s5 + $0x350] sm:$0xff]
        %v7791 = vld [vmem:[%s5 + $0x358] sm:$0xff]
        %v7792 = vld [vmem:[%s5 + $0x360] sm:$0xff]
        %v7793 = vld [vmem:[%s5 + $0x368] sm:$0xff]
        %v7794 = vld [vmem:[%s5 + $0x370] sm:$0xff]
        %v7795 = vld [vmem:[%s5 + $0x378] sm:$0xff]
        %v7796 = vld [vmem:[%s5 + $0x380] sm:$0xff]
        %v7797 = vld [vmem:[%s5 + $0x388] sm:$0xff]
        %v7798 = vld [vmem:[%s5 + $0x390] sm:$0xff]
        %v7799 = vld [vmem:[%s5 + $0x398] sm:$0xff]
        %v7800 = vld [vmem:[%s5 + $0x3a0] sm:$0xff]
        %v7801 = vld [vmem:[%s5 + $0x3a8] sm:$0xff]
        %v7802 = vld [vmem:[%s5 + $0x3b0] sm:$0xff]
        %v7803 = vld [vmem:[%s5 + $0x3b8] sm:$0xff]
        %v7804 = vld [vmem:[%s5 + $0x3c0] sm:$0xff]
        %v7805 = vld [vmem:[%s5 + $0x3c8] sm:$0xff]
        %v7806 = vld [vmem:[%s5 + $0x3d0] sm:$0xff]
        %v7807 = vld [vmem:[%s5 + $0x3d8] sm:$0xff]
        %v7808 = vld [vmem:[%s5 + $0x3e0] sm:$0xff]
        %v7809 = vld [vmem:[%s5 + $0x3e8] sm:$0xff]
        %v7810 = vld [vmem:[%s5 + $0x3f0] sm:$0xff]
        %v7811 = vld [vmem:[%s5 + $0x3f8] sm:$0xff]
        %v7812 = vld [vmem:[%s5 + $0x400] sm:$0xff]
        %v7813 = vld [vmem:[%s5 + $0x408] sm:$0xff]
        %v7814 = vld [vmem:[%s5 + $0x410] sm:$0xff]
        %v7815 = vld [vmem:[%s5 + $0x418] sm:$0xff]
        %v7816 = vld [vmem:[%s5 + $0x420] sm:$0xff]
        %v7817 = vld [vmem:[%s5 + $0x428] sm:$0xff]
        %v7818 = vld [vmem:[%s5 + $0x430] sm:$0xff]
        %v7819 = vld [vmem:[%s5 + $0x438] sm:$0xff]
        %v7820 = vld [vmem:[%s5 + $0x440] sm:$0xff]
        %v7821 = vld [vmem:[%s5 + $0x448] sm:$0xff]
        %v7822 = vld [vmem:[%s5 + $0x450] sm:$0xff]
        %v7823 = vld [vmem:[%s5 + $0x458] sm:$0xff]
        %v7824 = vld [vmem:[%s5 + $0x460] sm:$0xff]
        %v7825 = vld [vmem:[%s5 + $0x468] sm:$0xff]
        %v7826 = vld [vmem:[%s5 + $0x470] sm:$0xff]
        %v7827 = vld [vmem:[%s5 + $0x478] sm:$0xff]
        %v7828 = vld [vmem:[%s6] sm:$0x1]
        %v7830 = vperm.slane %v7828, 0
        %7832 = vmatpush.msra.mxu0 %v7699
        %7833 = vmatpush.msra.mxu0 %v7698
        %7834 = vmatpush.msra.mxu0 %v7697
        %7835 = vmatpush.msra.mxu0 %v7696
        %7836 = vmatpush.msra.mxu0 %v7695
        %7837 = vmatpush.msra.mxu0 %v7694
        %7838 = vmatpush.msra.mxu0 %v7693
        %7839 = vmatpush.msra.mxu0 %v7692
        %7840 = vmatpush.msra.mxu0 %v7691
        %7841 = vmatpush.msra.mxu0 %v7690
        %7842 = vmatpush.msra.mxu0 %v7689
        %7843 = vmatpush.msra.mxu0 %v7688
        %7844 = vmatpush.msra.mxu0 %v7687
        %7845 = vmatpush.msra.mxu0 %v7686
        %7846 = vmatpush.msra.mxu0 %v7685
        %7847 = vmatpush.msra.mxu0 %v7684
        %7848 = vmatmul.f32.gmra.mxu0 %v7612
        %v7849 = vpop.f32.mrf.mxu0
        %v7850 = vadd.f32 %v7830, %v7849
        %7851 = vmatmul.f32.gmra.mxu0 %v7621
        %v7852 = vpop.f32.mrf.mxu0
        %v7853 = vadd.f32 %v7830, %v7852
        %7854 = vmatmul.f32.gmra.mxu0 %v7630
        %v7855 = vpop.f32.mrf.mxu0
        %v7856 = vadd.f32 %v7830, %v7855
        %7857 = vmatmul.f32.gmra.mxu0 %v7639
        %v7858 = vpop.f32.mrf.mxu0
        %v7859 = vadd.f32 %v7830, %v7858
        %7860 = vmatmul.f32.gmra.mxu0 %v7648
        %v7861 = vpop.f32.mrf.mxu0
        %v7862 = vadd.f32 %v7830, %v7861
        %7863 = vmatmul.f32.gmra.mxu0 %v7657
        %v7864 = vpop.f32.mrf.mxu0
        %v7865 = vadd.f32 %v7830, %v7864
        %7866 = vmatmul.f32.gmra.mxu0 %v7666
        %v7867 = vpop.f32.mrf.mxu0
        %v7868 = vadd.f32 %v7830, %v7867
        %7869 = vmatmul.f32.gmra.mxu0 %v7675
        %v7870 = vpop.f32.mrf.mxu0
        %v7871 = vadd.f32 %v7830, %v7870
        %7872 = vdwg.mxu0
        %7873 = vmatpush.msra.mxu0 %v7715
        %7874 = vmatpush.msra.mxu0 %v7714
        %7875 = vmatpush.msra.mxu0 %v7713
        %7876 = vmatpush.msra.mxu0 %v7712
        %7877 = vmatpush.msra.mxu0 %v7711
        %7878 = vmatpush.msra.mxu0 %v7710
        %7879 = vmatpush.msra.mxu0 %v7709
        %7880 = vmatpush.msra.mxu0 %v7708
        %7881 = vmatpush.msra.mxu0 %v7707
        %7882 = vmatpush.msra.mxu0 %v7706
        %7883 = vmatpush.msra.mxu0 %v7705
        %7884 = vmatpush.msra.mxu0 %v7704
        %7885 = vmatpush.msra.mxu0 %v7703
        %7886 = vmatpush.msra.mxu0 %v7702
        %7887 = vmatpush.msra.mxu0 %v7701
        %7888 = vmatpush.msra.mxu0 %v7700
        %7889 = vmatmul.f32.gmra.mxu0 %v7613
        %v7890 = vpop.f32.mrf.mxu0
        %v7891 = vadd.f32 %v7850, %v7890
        %7892 = vmatmul.f32.gmra.mxu0 %v7622
        %v7893 = vpop.f32.mrf.mxu0
        %v7894 = vadd.f32 %v7853, %v7893
        %7895 = vmatmul.f32.gmra.mxu0 %v7631
        %v7896 = vpop.f32.mrf.mxu0
        %v7897 = vadd.f32 %v7856, %v7896
        %7898 = vmatmul.f32.gmra.mxu0 %v7640
        %v7899 = vpop.f32.mrf.mxu0
        %v7900 = vadd.f32 %v7859, %v7899
        %7901 = vmatmul.f32.gmra.mxu0 %v7649
        %v7902 = vpop.f32.mrf.mxu0
        %v7903 = vadd.f32 %v7862, %v7902
        %7904 = vmatmul.f32.gmra.mxu0 %v7658
        %v7905 = vpop.f32.mrf.mxu0
        %v7906 = vadd.f32 %v7865, %v7905
        %7907 = vmatmul.f32.gmra.mxu0 %v7667
        %v7908 = vpop.f32.mrf.mxu0
        %v7909 = vadd.f32 %v7868, %v7908
        %7910 = vmatmul.f32.gmra.mxu0 %v7676
        %v7911 = vpop.f32.mrf.mxu0
        %v7912 = vadd.f32 %v7871, %v7911
        %7913 = vdwg.mxu0
        %7914 = vmatpush.msra.mxu0 %v7731
        %7915 = vmatpush.msra.mxu0 %v7730
        %7916 = vmatpush.msra.mxu0 %v7729
        %7917 = vmatpush.msra.mxu0 %v7728
        %7918 = vmatpush.msra.mxu0 %v7727
        %7919 = vmatpush.msra.mxu0 %v7726
        %7920 = vmatpush.msra.mxu0 %v7725
        %7921 = vmatpush.msra.mxu0 %v7724
        %7922 = vmatpush.msra.mxu0 %v7723
        %7923 = vmatpush.msra.mxu0 %v7722
        %7924 = vmatpush.msra.mxu0 %v7721
        %7925 = vmatpush.msra.mxu0 %v7720
        %7926 = vmatpush.msra.mxu0 %v7719
        %7927 = vmatpush.msra.mxu0 %v7718
        %7928 = vmatpush.msra.mxu0 %v7717
        %7929 = vmatpush.msra.mxu0 %v7716
        %7930 = vmatmul.f32.gmra.mxu0 %v7614
        %v7931 = vpop.f32.mrf.mxu0
        %v7932 = vadd.f32 %v7891, %v7931
        %7933 = vmatmul.f32.gmra.mxu0 %v7623
        %v7934 = vpop.f32.mrf.mxu0
        %v7935 = vadd.f32 %v7894, %v7934
        %7936 = vmatmul.f32.gmra.mxu0 %v7632
        %v7937 = vpop.f32.mrf.mxu0
        %v7938 = vadd.f32 %v7897, %v7937
        %7939 = vmatmul.f32.gmra.mxu0 %v7641
        %v7940 = vpop.f32.mrf.mxu0
        %v7941 = vadd.f32 %v7900, %v7940
        %7942 = vmatmul.f32.gmra.mxu0 %v7650
        %v7943 = vpop.f32.mrf.mxu0
        %v7944 = vadd.f32 %v7903, %v7943
        %7945 = vmatmul.f32.gmra.mxu0 %v7659
        %v7946 = vpop.f32.mrf.mxu0
        %v7947 = vadd.f32 %v7906, %v7946
        %7948 = vmatmul.f32.gmra.mxu0 %v7668
        %v7949 = vpop.f32.mrf.mxu0
        %v7950 = vadd.f32 %v7909, %v7949
        %7951 = vmatmul.f32.gmra.mxu0 %v7677
        %v7952 = vpop.f32.mrf.mxu0
        %v7953 = vadd.f32 %v7912, %v7952
        %7954 = vdwg.mxu0
        %7955 = vmatpush.msra.mxu0 %v7747
        %7956 = vmatpush.msra.mxu0 %v7746
        %7957 = vmatpush.msra.mxu0 %v7745
        %7958 = vmatpush.msra.mxu0 %v7744
        %7959 = vmatpush.msra.mxu0 %v7743
        %7960 = vmatpush.msra.mxu0 %v7742
        %7961 = vmatpush.msra.mxu0 %v7741
        %7962 = vmatpush.msra.mxu0 %v7740
        %7963 = vmatpush.msra.mxu0 %v7739
        %7964 = vmatpush.msra.mxu0 %v7738
        %7965 = vmatpush.msra.mxu0 %v7737
        %7966 = vmatpush.msra.mxu0 %v7736
        %7967 = vmatpush.msra.mxu0 %v7735
        %7968 = vmatpush.msra.mxu0 %v7734
        %7969 = vmatpush.msra.mxu0 %v7733
        %7970 = vmatpush.msra.mxu0 %v7732
        %7971 = vmatmul.f32.gmra.mxu0 %v7615
        %v7972 = vpop.f32.mrf.mxu0
        %v7973 = vadd.f32 %v7932, %v7972
        %7974 = vmatmul.f32.gmra.mxu0 %v7624
        %v7975 = vpop.f32.mrf.mxu0
        %v7976 = vadd.f32 %v7935, %v7975
        %7977 = vmatmul.f32.gmra.mxu0 %v7633
        %v7978 = vpop.f32.mrf.mxu0
        %v7979 = vadd.f32 %v7938, %v7978
        %7980 = vmatmul.f32.gmra.mxu0 %v7642
        %v7981 = vpop.f32.mrf.mxu0
        %v7982 = vadd.f32 %v7941, %v7981
        %7983 = vmatmul.f32.gmra.mxu0 %v7651
        %v7984 = vpop.f32.mrf.mxu0
        %v7985 = vadd.f32 %v7944, %v7984
        %7986 = vmatmul.f32.gmra.mxu0 %v7660
        %v7987 = vpop.f32.mrf.mxu0
        %v7988 = vadd.f32 %v7947, %v7987
        %7989 = vmatmul.f32.gmra.mxu0 %v7669
        %v7990 = vpop.f32.mrf.mxu0
        %v7991 = vadd.f32 %v7950, %v7990
        %7992 = vmatmul.f32.gmra.mxu0 %v7678
        %v7993 = vpop.f32.mrf.mxu0
        %v7994 = vadd.f32 %v7953, %v7993
        %7995 = vdwg.mxu0
        %7996 = vmatpush.msra.mxu0 %v7763
        %7997 = vmatpush.msra.mxu0 %v7762
        %7998 = vmatpush.msra.mxu0 %v7761
        %7999 = vmatpush.msra.mxu0 %v7760
        %8000 = vmatpush.msra.mxu0 %v7759
        %8001 = vmatpush.msra.mxu0 %v7758
        %8002 = vmatpush.msra.mxu0 %v7757
        %8003 = vmatpush.msra.mxu0 %v7756
        %8004 = vmatpush.msra.mxu0 %v7755
        %8005 = vmatpush.msra.mxu0 %v7754
        %8006 = vmatpush.msra.mxu0 %v7753
        %8007 = vmatpush.msra.mxu0 %v7752
        %8008 = vmatpush.msra.mxu0 %v7751
        %8009 = vmatpush.msra.mxu0 %v7750
        %8010 = vmatpush.msra.mxu0 %v7749
        %8011 = vmatpush.msra.mxu0 %v7748
        %8012 = vmatmul.f32.gmra.mxu0 %v7616
        %v8013 = vpop.f32.mrf.mxu0
        %v8014 = vadd.f32 %v7973, %v8013
        %8015 = vmatmul.f32.gmra.mxu0 %v7625
        %v8016 = vpop.f32.mrf.mxu0
        %v8017 = vadd.f32 %v7976, %v8016
        %8018 = vmatmul.f32.gmra.mxu0 %v7634
        %v8019 = vpop.f32.mrf.mxu0
        %v8020 = vadd.f32 %v7979, %v8019
        %8021 = vmatmul.f32.gmra.mxu0 %v7643
        %v8022 = vpop.f32.mrf.mxu0
        %v8023 = vadd.f32 %v7982, %v8022
        %8024 = vmatmul.f32.gmra.mxu0 %v7652
        %v8025 = vpop.f32.mrf.mxu0
        %v8026 = vadd.f32 %v7985, %v8025
        %8027 = vmatmul.f32.gmra.mxu0 %v7661
        %v8028 = vpop.f32.mrf.mxu0
        %v8029 = vadd.f32 %v7988, %v8028
        %8030 = vmatmul.f32.gmra.mxu0 %v7670
        %v8031 = vpop.f32.mrf.mxu0
        %v8032 = vadd.f32 %v7991, %v8031
        %8033 = vmatmul.f32.gmra.mxu0 %v7679
        %v8034 = vpop.f32.mrf.mxu0
        %v8035 = vadd.f32 %v7994, %v8034
        %8036 = vdwg.mxu0
        %8037 = vmatpush.msra.mxu0 %v7779
        %8038 = vmatpush.msra.mxu0 %v7778
        %8039 = vmatpush.msra.mxu0 %v7777
        %8040 = vmatpush.msra.mxu0 %v7776
        %8041 = vmatpush.msra.mxu0 %v7775
        %8042 = vmatpush.msra.mxu0 %v7774
        %8043 = vmatpush.msra.mxu0 %v7773
        %8044 = vmatpush.msra.mxu0 %v7772
        %8045 = vmatpush.msra.mxu0 %v7771
        %8046 = vmatpush.msra.mxu0 %v7770
        %8047 = vmatpush.msra.mxu0 %v7769
        %8048 = vmatpush.msra.mxu0 %v7768
        %8049 = vmatpush.msra.mxu0 %v7767
        %8050 = vmatpush.msra.mxu0 %v7766
        %8051 = vmatpush.msra.mxu0 %v7765
        %8052 = vmatpush.msra.mxu0 %v7764
        %8053 = vmatmul.f32.gmra.mxu0 %v7617
        %v8054 = vpop.f32.mrf.mxu0
        %v8055 = vadd.f32 %v8014, %v8054
        %8056 = vmatmul.f32.gmra.mxu0 %v7626
        %v8057 = vpop.f32.mrf.mxu0
        %v8058 = vadd.f32 %v8017, %v8057
        %8059 = vmatmul.f32.gmra.mxu0 %v7635
        %v8060 = vpop.f32.mrf.mxu0
        %v8061 = vadd.f32 %v8020, %v8060
        %8062 = vmatmul.f32.gmra.mxu0 %v7644
        %v8063 = vpop.f32.mrf.mxu0
        %v8064 = vadd.f32 %v8023, %v8063
        %8065 = vmatmul.f32.gmra.mxu0 %v7653
        %v8066 = vpop.f32.mrf.mxu0
        %v8067 = vadd.f32 %v8026, %v8066
        %8068 = vmatmul.f32.gmra.mxu0 %v7662
        %v8069 = vpop.f32.mrf.mxu0
        %v8070 = vadd.f32 %v8029, %v8069
        %8071 = vmatmul.f32.gmra.mxu0 %v7671
        %v8072 = vpop.f32.mrf.mxu0
        %v8073 = vadd.f32 %v8032, %v8072
        %8074 = vmatmul.f32.gmra.mxu0 %v7680
        %v8075 = vpop.f32.mrf.mxu0
        %v8076 = vadd.f32 %v8035, %v8075
        %8077 = vdwg.mxu0
        %8078 = vmatpush.msra.mxu0 %v7795
        %8079 = vmatpush.msra.mxu0 %v7794
        %8080 = vmatpush.msra.mxu0 %v7793
        %8081 = vmatpush.msra.mxu0 %v7792
        %8082 = vmatpush.msra.mxu0 %v7791
        %8083 = vmatpush.msra.mxu0 %v7790
        %8084 = vmatpush.msra.mxu0 %v7789
        %8085 = vmatpush.msra.mxu0 %v7788
        %8086 = vmatpush.msra.mxu0 %v7787
        %8087 = vmatpush.msra.mxu0 %v7786
        %8088 = vmatpush.msra.mxu0 %v7785
        %8089 = vmatpush.msra.mxu0 %v7784
        %8090 = vmatpush.msra.mxu0 %v7783
        %8091 = vmatpush.msra.mxu0 %v7782
        %8092 = vmatpush.msra.mxu0 %v7781
        %8093 = vmatpush.msra.mxu0 %v7780
        %8094 = vmatmul.f32.gmra.mxu0 %v7618
        %v8095 = vpop.f32.mrf.mxu0
        %v8096 = vadd.f32 %v8055, %v8095
        %8097 = vmatmul.f32.gmra.mxu0 %v7627
        %v8098 = vpop.f32.mrf.mxu0
        %v8099 = vadd.f32 %v8058, %v8098
        %8100 = vmatmul.f32.gmra.mxu0 %v7636
        %v8101 = vpop.f32.mrf.mxu0
        %v8102 = vadd.f32 %v8061, %v8101
        %8103 = vmatmul.f32.gmra.mxu0 %v7645
        %v8104 = vpop.f32.mrf.mxu0
        %v8105 = vadd.f32 %v8064, %v8104
        %8106 = vmatmul.f32.gmra.mxu0 %v7654
        %v8107 = vpop.f32.mrf.mxu0
        %v8108 = vadd.f32 %v8067, %v8107
        %8109 = vmatmul.f32.gmra.mxu0 %v7663
        %v8110 = vpop.f32.mrf.mxu0
        %v8111 = vadd.f32 %v8070, %v8110
        %8112 = vmatmul.f32.gmra.mxu0 %v7672
        %v8113 = vpop.f32.mrf.mxu0
        %v8114 = vadd.f32 %v8073, %v8113
        %8115 = vmatmul.f32.gmra.mxu0 %v7681
        %v8116 = vpop.f32.mrf.mxu0
        %v8117 = vadd.f32 %v8076, %v8116
        %8118 = vdwg.mxu0
        %8119 = vmatpush.msra.mxu0 %v7811
        %8120 = vmatpush.msra.mxu0 %v7810
        %8121 = vmatpush.msra.mxu0 %v7809
        %8122 = vmatpush.msra.mxu0 %v7808
        %8123 = vmatpush.msra.mxu0 %v7807
        %8124 = vmatpush.msra.mxu0 %v7806
        %8125 = vmatpush.msra.mxu0 %v7805
        %8126 = vmatpush.msra.mxu0 %v7804
        %8127 = vmatpush.msra.mxu0 %v7803
        %8128 = vmatpush.msra.mxu0 %v7802
        %8129 = vmatpush.msra.mxu0 %v7801
        %8130 = vmatpush.msra.mxu0 %v7800
        %8131 = vmatpush.msra.mxu0 %v7799
        %8132 = vmatpush.msra.mxu0 %v7798
        %8133 = vmatpush.msra.mxu0 %v7797
        %8134 = vmatpush.msra.mxu0 %v7796
        %8135 = vmatmul.f32.gmra.mxu0 %v7619
        %v8136 = vpop.f32.mrf.mxu0
        %v8137 = vadd.f32 %v8096, %v8136
        %8138 = vmatmul.f32.gmra.mxu0 %v7628
        %v8139 = vpop.f32.mrf.mxu0
        %v8140 = vadd.f32 %v8099, %v8139
        %8141 = vmatmul.f32.gmra.mxu0 %v7637
        %v8142 = vpop.f32.mrf.mxu0
        %v8143 = vadd.f32 %v8102, %v8142
        %8144 = vmatmul.f32.gmra.mxu0 %v7646
        %v8145 = vpop.f32.mrf.mxu0
        %v8146 = vadd.f32 %v8105, %v8145
        %8147 = vmatmul.f32.gmra.mxu0 %v7655
        %v8148 = vpop.f32.mrf.mxu0
        %v8149 = vadd.f32 %v8108, %v8148
        %8150 = vmatmul.f32.gmra.mxu0 %v7664
        %v8151 = vpop.f32.mrf.mxu0
        %v8152 = vadd.f32 %v8111, %v8151
        %8153 = vmatmul.f32.gmra.mxu0 %v7673
        %v8154 = vpop.f32.mrf.mxu0
        %v8155 = vadd.f32 %v8114, %v8154
        %8156 = vmatmul.f32.gmra.mxu0 %v7682
        %v8157 = vpop.f32.mrf.mxu0
        %v8158 = vadd.f32 %v8117, %v8157
        %8159 = vdwg.mxu0
        %8160 = vmatpush.msra.mxu0 %v7827
        %8161 = vmatpush.msra.mxu0 %v7826
        %8162 = vmatpush.msra.mxu0 %v7825
        %8163 = vmatpush.msra.mxu0 %v7824
        %8164 = vmatpush.msra.mxu0 %v7823
        %8165 = vmatpush.msra.mxu0 %v7822
        %8166 = vmatpush.msra.mxu0 %v7821
        %8167 = vmatpush.msra.mxu0 %v7820
        %8168 = vmatpush.msra.mxu0 %v7819
        %8169 = vmatpush.msra.mxu0 %v7818
        %8170 = vmatpush.msra.mxu0 %v7817
        %8171 = vmatpush.msra.mxu0 %v7816
        %8172 = vmatpush.msra.mxu0 %v7815
        %8173 = vmatpush.msra.mxu0 %v7814
        %8174 = vmatpush.msra.mxu0 %v7813
        %8175 = vmatpush.msra.mxu0 %v7812
        %8176 = vmatmul.f32.gmra.mxu0 %v7620
        %v8177 = vpop.f32.mrf.mxu0
        %v8178 = vadd.f32 %v8137, %v8177
        %8179 = vmatmul.f32.gmra.mxu0 %v7629
        %v8180 = vpop.f32.mrf.mxu0
        %v8181 = vadd.f32 %v8140, %v8180
        %8182 = vmatmul.f32.gmra.mxu0 %v7638
        %v8183 = vpop.f32.mrf.mxu0
        %v8184 = vadd.f32 %v8143, %v8183
        %8185 = vmatmul.f32.gmra.mxu0 %v7647
        %v8186 = vpop.f32.mrf.mxu0
        %v8187 = vadd.f32 %v8146, %v8186
        %8188 = vmatmul.f32.gmra.mxu0 %v7656
        %v8189 = vpop.f32.mrf.mxu0
        %v8190 = vadd.f32 %v8149, %v8189
        %8191 = vmatmul.f32.gmra.mxu0 %v7665
        %v8192 = vpop.f32.mrf.mxu0
        %v8193 = vadd.f32 %v8152, %v8192
        %8194 = vmatmul.f32.gmra.mxu0 %v7674
        %v8195 = vpop.f32.mrf.mxu0
        %v8196 = vadd.f32 %v8155, %v8195
        %8197 = vmatmul.f32.gmra.mxu0 %v7683
        %v8198 = vpop.f32.mrf.mxu0
        %v8199 = vadd.f32 %v8158, %v8198
        %8200 = vdwg.mxu0
        %v8201 = vmax.f32 %v8178, 0.0
        %v8202 = vmax.f32 %v8181, 0.0
        %v8203 = vmax.f32 %v8184, 0.0
        %v8204 = vmax.f32 %v8187, 0.0
        %v8205 = vmax.f32 %v8190, 0.0
        %v8206 = vmax.f32 %v8193, 0.0
        %v8207 = vmax.f32 %v8196, 0.0
        %v8208 = vmax.f32 %v8199, 0.0
        %8209 = vst.msk [vmem:[#allocation8] sm:$0xff] %vm384, %v8201
        %8210 = vst.msk [vmem:[#allocation8 + $0x8] sm:$0xff] %vm384, %v8202
        %8211 = vst.msk [vmem:[#allocation8 + $0x10] sm:$0xff] %vm384, %v8203
        %8212 = vst.msk [vmem:[#allocation8 + $0x18] sm:$0xff] %vm384, %v8204
        %8213 = vst.msk [vmem:[#allocation8 + $0x20] sm:$0xff] %vm384, %v8205
        %8214 = vst.msk [vmem:[#allocation8 + $0x28] sm:$0xff] %vm384, %v8206
        %8215 = vst.msk [vmem:[#allocation8 + $0x30] sm:$0xff] %vm384, %v8207
        %8216 = vst.msk [vmem:[#allocation8 + $0x38] sm:$0xff] %vm384, %v8208
        %v8217 = vld [vmem:[#allocation8] sm:$0xff]
        %v8218 = vld [vmem:[#allocation8 + $0x10] sm:$0xff]
        %v8219 = vld [vmem:[#allocation8 + $0x20] sm:$0xff]
        %v8220 = vld [vmem:[#allocation8 + $0x30] sm:$0xff]
        %s8221 = scalar_lea.vmem [#allocation8], 8
        %v8222 = vld [vmem:[%s8221] sm:$0xff]
        %v8223 = vld [vmem:[%s8221 + $0x10] sm:$0xff]
        %v8224 = vld [vmem:[%s8221 + $0x20] sm:$0xff]
        %v8225 = vld [vmem:[%s8221 + $0x30] sm:$0xff]
        %v8226 = vmax.f32 %v8217, %v8222
        %v8227 = vmax.f32 %v8218, %v8223
        %v8228 = vmax.f32 %v8219, %v8224
        %v8229 = vmax.f32 %v8220, %v8225
        %v8234 = vrot.slane %v8226, 2
        %v8235 = vrot.slane %v8226, 4
        %v8236 = vrot.slane %v8226, 6
        %v8237 = vrot.slane %v8227, 2
        %v8238 = vrot.slane %v8227, 4
        %v8239 = vrot.slane %v8227, 6
        %v8240 = vrot.slane %v8228, 2
        %v8241 = vrot.slane %v8228, 4
        %v8242 = vrot.slane %v8228, 6
        %v8243 = vrot.slane %v8229, 2
        %v8244 = vrot.slane %v8229, 4
        %v8245 = vrot.slane %v8229, 6
        %v8258 = vsel %vm928, %v8226, -inf
        %v8259 = vrot.slane %v8258, 4
        %v8260 = vmax.f32 %v8258, %v8259
        %v8261 = vrot.slane %v8260, 2
        %v8262 = vmax.f32 %v8260, %v8261
        %v8263 = vrot.slane %v8262, 1
        %v8264 = vmax.f32 %v8262, %v8263
        %v8265 = vsel %vm928, %v8234, -inf
        %v8266 = vrot.slane %v8265, 4
        %v8267 = vmax.f32 %v8265, %v8266
        %v8268 = vrot.slane %v8267, 2
        %v8269 = vmax.f32 %v8267, %v8268
        %v8270 = vrot.slane %v8269, 1
        %v8271 = vmax.f32 %v8269, %v8270
        %v8272 = vsel %vm928, %v8235, -inf
        %v8273 = vrot.slane %v8272, 4
        %v8274 = vmax.f32 %v8272, %v8273
        %v8275 = vrot.slane %v8274, 2
        %v8276 = vmax.f32 %v8274, %v8275
        %v8277 = vrot.slane %v8276, 1
        %v8278 = vmax.f32 %v8276, %v8277
        %v8279 = vsel %vm928, %v8236, -inf
        %v8280 = vrot.slane %v8279, 4
        %v8281 = vmax.f32 %v8279, %v8280
        %v8282 = vrot.slane %v8281, 2
        %v8283 = vmax.f32 %v8281, %v8282
        %v8284 = vrot.slane %v8283, 1
        %v8285 = vmax.f32 %v8283, %v8284
        %v8286 = vsel %vm928, %v8227, -inf
        %v8287 = vrot.slane %v8286, 4
        %v8288 = vmax.f32 %v8286, %v8287
        %v8289 = vrot.slane %v8288, 2
        %v8290 = vmax.f32 %v8288, %v8289
        %v8291 = vrot.slane %v8290, 1
        %v8292 = vmax.f32 %v8290, %v8291
        %v8293 = vsel %vm928, %v8237, -inf
        %v8294 = vrot.slane %v8293, 4
        %v8295 = vmax.f32 %v8293, %v8294
        %v8296 = vrot.slane %v8295, 2
        %v8297 = vmax.f32 %v8295, %v8296
        %v8298 = vrot.slane %v8297, 1
        %v8299 = vmax.f32 %v8297, %v8298
        %v8300 = vsel %vm928, %v8238, -inf
        %v8301 = vrot.slane %v8300, 4
        %v8302 = vmax.f32 %v8300, %v8301
        %v8303 = vrot.slane %v8302, 2
        %v8304 = vmax.f32 %v8302, %v8303
        %v8305 = vrot.slane %v8304, 1
        %v8306 = vmax.f32 %v8304, %v8305
        %v8307 = vsel %vm928, %v8239, -inf
        %v8308 = vrot.slane %v8307, 4
        %v8309 = vmax.f32 %v8307, %v8308
        %v8310 = vrot.slane %v8309, 2
        %v8311 = vmax.f32 %v8309, %v8310
        %v8312 = vrot.slane %v8311, 1
        %v8313 = vmax.f32 %v8311, %v8312
        %v8314 = vsel %vm928, %v8228, -inf
        %v8315 = vrot.slane %v8314, 4
        %v8316 = vmax.f32 %v8314, %v8315
        %v8317 = vrot.slane %v8316, 2
        %v8318 = vmax.f32 %v8316, %v8317
        %v8319 = vrot.slane %v8318, 1
        %v8320 = vmax.f32 %v8318, %v8319
        %v8321 = vsel %vm928, %v8240, -inf
        %v8322 = vrot.slane %v8321, 4
        %v8323 = vmax.f32 %v8321, %v8322
        %v8324 = vrot.slane %v8323, 2
        %v8325 = vmax.f32 %v8323, %v8324
        %v8326 = vrot.slane %v8325, 1
        %v8327 = vmax.f32 %v8325, %v8326
        %v8328 = vsel %vm928, %v8241, -inf
        %v8329 = vrot.slane %v8328, 4
        %v8330 = vmax.f32 %v8328, %v8329
        %v8331 = vrot.slane %v8330, 2
        %v8332 = vmax.f32 %v8330, %v8331
        %v8333 = vrot.slane %v8332, 1
        %v8334 = vmax.f32 %v8332, %v8333
        %v8335 = vsel %vm928, %v8242, -inf
        %v8336 = vrot.slane %v8335, 4
        %v8337 = vmax.f32 %v8335, %v8336
        %v8338 = vrot.slane %v8337, 2
        %v8339 = vmax.f32 %v8337, %v8338
        %v8340 = vrot.slane %v8339, 1
        %v8341 = vmax.f32 %v8339, %v8340
        %v8342 = vsel %vm928, %v8229, -inf
        %v8343 = vrot.slane %v8342, 4
        %v8344 = vmax.f32 %v8342, %v8343
        %v8345 = vrot.slane %v8344, 2
        %v8346 = vmax.f32 %v8344, %v8345
        %v8347 = vrot.slane %v8346, 1
        %v8348 = vmax.f32 %v8346, %v8347
        %v8349 = vsel %vm928, %v8243, -inf
        %v8350 = vrot.slane %v8349, 4
        %v8351 = vmax.f32 %v8349, %v8350
        %v8352 = vrot.slane %v8351, 2
        %v8353 = vmax.f32 %v8351, %v8352
        %v8354 = vrot.slane %v8353, 1
        %v8355 = vmax.f32 %v8353, %v8354
        %v8356 = vsel %vm928, %v8244, -inf
        %v8357 = vrot.slane %v8356, 4
        %v8358 = vmax.f32 %v8356, %v8357
        %v8359 = vrot.slane %v8358, 2
        %v8360 = vmax.f32 %v8358, %v8359
        %v8361 = vrot.slane %v8360, 1
        %v8362 = vmax.f32 %v8360, %v8361
        %v8363 = vsel %vm928, %v8245, -inf
        %v8364 = vrot.slane %v8363, 4
        %v8365 = vmax.f32 %v8363, %v8364
        %v8366 = vrot.slane %v8365, 2
        %v8367 = vmax.f32 %v8365, %v8366
        %v8368 = vrot.slane %v8367, 1
        %v8369 = vmax.f32 %v8367, %v8368
        %v8370 = vld [vmem:[%s8] sm:$0x1]
        %v8371 = vld [vmem:[%s7] sm:$0xff]
        %v8372 = vld [vmem:[%s7 + $0x8] sm:$0xff]
        %v8373 = vld [vmem:[%s7 + $0x10] sm:$0xff]
        %v8374 = vld [vmem:[%s7 + $0x18] sm:$0xff]
        %v8375 = vld [vmem:[%s7 + $0x20] sm:$0xff]
        %v8376 = vld [vmem:[%s7 + $0x28] sm:$0xff]
        %v8377 = vld [vmem:[%s7 + $0x30] sm:$0xff]
        %v8378 = vld [vmem:[%s7 + $0x38] sm:$0xff]
        %v8380 = vsel %vm384, %v8264, 0
        %8382 = vmatpush.msra.mxu0 0.0
        %8383 = vmatpush.msra.mxu0 0.0
        %8384 = vmatpush.msra.mxu0 0.0
        %8385 = vmatpush.msra.mxu0 0.0
        %8386 = vmatpush.msra.mxu0 0.0
        %8387 = vmatpush.msra.mxu0 0.0
        %8388 = vmatpush.msra.mxu0 0.0
        %8389 = vmatpush.msra.mxu0 0.0
        %8390 = vmatpush.msra.mxu0 %v8378
        %8391 = vmatpush.msra.mxu0 %v8377
        %8392 = vmatpush.msra.mxu0 %v8376
        %8393 = vmatpush.msra.mxu0 %v8375
        %8394 = vmatpush.msra.mxu0 %v8374
        %8395 = vmatpush.msra.mxu0 %v8373
        %8396 = vmatpush.msra.mxu0 %v8372
        %8397 = vmatpush.msra.mxu0 %v8371
        %8398 = vmatmul.f32.gmra.mxu0 %v8380
        %v8399 = vpop.f32.mrf.mxu0
        %v8400 = vadd.f32 0.0, %v8399
        %8401 = vdwg.mxu0
        %v8402 = vadd.f32 %v8370, %v8400
        %s8403 = scalar_lea.vmem %s7, 64
        %v8404 = vld [vmem:[%s8403] sm:$0xff]
        %v8405 = vld [vmem:[%s8403 + $0x8] sm:$0xff]
        %v8406 = vld [vmem:[%s8403 + $0x10] sm:$0xff]
        %v8407 = vld [vmem:[%s8403 + $0x18] sm:$0xff]
        %v8408 = vld [vmem:[%s8403 + $0x20] sm:$0xff]
        %v8409 = vld [vmem:[%s8403 + $0x28] sm:$0xff]
        %v8410 = vld [vmem:[%s8403 + $0x30] sm:$0xff]
        %v8411 = vld [vmem:[%s8403 + $0x38] sm:$0xff]
        %v8413 = vsel %vm384, %v8271, 0
        %8415 = vmatpush.msra.mxu0 0.0
        %8416 = vmatpush.msra.mxu0 0.0
        %8417 = vmatpush.msra.mxu0 0.0
        %8418 = vmatpush.msra.mxu0 0.0
        %8419 = vmatpush.msra.mxu0 0.0
        %8420 = vmatpush.msra.mxu0 0.0
        %8421 = vmatpush.msra.mxu0 0.0
        %8422 = vmatpush.msra.mxu0 0.0
        %8423 = vmatpush.msra.mxu0 %v8411
        %8424 = vmatpush.msra.mxu0 %v8410
        %8425 = vmatpush.msra.mxu0 %v8409
        %8426 = vmatpush.msra.mxu0 %v8408
        %8427 = vmatpush.msra.mxu0 %v8407
        %8428 = vmatpush.msra.mxu0 %v8406
        %8429 = vmatpush.msra.mxu0 %v8405
        %8430 = vmatpush.msra.mxu0 %v8404
        %8431 = vmatmul.f32.gmra.mxu0 %v8413
        %v8432 = vpop.f32.mrf.mxu0
        %v8433 = vadd.f32 0.0, %v8432
        %8434 = vdwg.mxu0
        %v8435 = vadd.f32 %v8402, %v8433
        %s8436 = scalar_lea.vmem %s7, 128
        %v8437 = vld [vmem:[%s8436] sm:$0xff]
        %v8438 = vld [vmem:[%s8436 + $0x8] sm:$0xff]
        %v8439 = vld [vmem:[%s8436 + $0x10] sm:$0xff]
        %v8440 = vld [vmem:[%s8436 + $0x18] sm:$0xff]
        %v8441 = vld [vmem:[%s8436 + $0x20] sm:$0xff]
        %v8442 = vld [vmem:[%s8436 + $0x28] sm:$0xff]
        %v8443 = vld [vmem:[%s8436 + $0x30] sm:$0xff]
        %v8444 = vld [vmem:[%s8436 + $0x38] sm:$0xff]
        %v8446 = vsel %vm384, %v8278, 0
        %8448 = vmatpush.msra.mxu0 0.0
        %8449 = vmatpush.msra.mxu0 0.0
        %8450 = vmatpush.msra.mxu0 0.0
        %8451 = vmatpush.msra.mxu0 0.0
        %8452 = vmatpush.msra.mxu0 0.0
        %8453 = vmatpush.msra.mxu0 0.0
        %8454 = vmatpush.msra.mxu0 0.0
        %8455 = vmatpush.msra.mxu0 0.0
        %8456 = vmatpush.msra.mxu0 %v8444
        %8457 = vmatpush.msra.mxu0 %v8443
        %8458 = vmatpush.msra.mxu0 %v8442
        %8459 = vmatpush.msra.mxu0 %v8441
        %8460 = vmatpush.msra.mxu0 %v8440
        %8461 = vmatpush.msra.mxu0 %v8439
        %8462 = vmatpush.msra.mxu0 %v8438
        %8463 = vmatpush.msra.mxu0 %v8437
        %8464 = vmatmul.f32.gmra.mxu0 %v8446
        %v8465 = vpop.f32.mrf.mxu0
        %v8466 = vadd.f32 0.0, %v8465
        %8467 = vdwg.mxu0
        %v8468 = vadd.f32 %v8435, %v8466
        %s8469 = scalar_lea.vmem %s7, 192
        %v8470 = vld [vmem:[%s8469] sm:$0xff]
        %v8471 = vld [vmem:[%s8469 + $0x8] sm:$0xff]
        %v8472 = vld [vmem:[%s8469 + $0x10] sm:$0xff]
        %v8473 = vld [vmem:[%s8469 + $0x18] sm:$0xff]
        %v8474 = vld [vmem:[%s8469 + $0x20] sm:$0xff]
        %v8475 = vld [vmem:[%s8469 + $0x28] sm:$0xff]
        %v8476 = vld [vmem:[%s8469 + $0x30] sm:$0xff]
        %v8477 = vld [vmem:[%s8469 + $0x38] sm:$0xff]
        %v8479 = vsel %vm384, %v8285, 0
        %8481 = vmatpush.msra.mxu0 0.0
        %8482 = vmatpush.msra.mxu0 0.0
        %8483 = vmatpush.msra.mxu0 0.0
        %8484 = vmatpush.msra.mxu0 0.0
        %8485 = vmatpush.msra.mxu0 0.0
        %8486 = vmatpush.msra.mxu0 0.0
        %8487 = vmatpush.msra.mxu0 0.0
        %8488 = vmatpush.msra.mxu0 0.0
        %8489 = vmatpush.msra.mxu0 %v8477
        %8490 = vmatpush.msra.mxu0 %v8476
        %8491 = vmatpush.msra.mxu0 %v8475
        %8492 = vmatpush.msra.mxu0 %v8474
        %8493 = vmatpush.msra.mxu0 %v8473
        %8494 = vmatpush.msra.mxu0 %v8472
        %8495 = vmatpush.msra.mxu0 %v8471
        %8496 = vmatpush.msra.mxu0 %v8470
        %8497 = vmatmul.f32.gmra.mxu0 %v8479
        %v8498 = vpop.f32.mrf.mxu0
        %v8499 = vadd.f32 0.0, %v8498
        %8500 = vdwg.mxu0
        %v8501 = vadd.f32 %v8468, %v8499
        %s8502 = scalar_lea.vmem %s7, 256
        %v8503 = vld [vmem:[%s8502] sm:$0xff]
        %v8504 = vld [vmem:[%s8502 + $0x8] sm:$0xff]
        %v8505 = vld [vmem:[%s8502 + $0x10] sm:$0xff]
        %v8506 = vld [vmem:[%s8502 + $0x18] sm:$0xff]
        %v8507 = vld [vmem:[%s8502 + $0x20] sm:$0xff]
        %v8508 = vld [vmem:[%s8502 + $0x28] sm:$0xff]
        %v8509 = vld [vmem:[%s8502 + $0x30] sm:$0xff]
        %v8510 = vld [vmem:[%s8502 + $0x38] sm:$0xff]
        %v8512 = vsel %vm384, %v8292, 0
        %8514 = vmatpush.msra.mxu0 0.0
        %8515 = vmatpush.msra.mxu0 0.0
        %8516 = vmatpush.msra.mxu0 0.0
        %8517 = vmatpush.msra.mxu0 0.0
        %8518 = vmatpush.msra.mxu0 0.0
        %8519 = vmatpush.msra.mxu0 0.0
        %8520 = vmatpush.msra.mxu0 0.0
        %8521 = vmatpush.msra.mxu0 0.0
        %8522 = vmatpush.msra.mxu0 %v8510
        %8523 = vmatpush.msra.mxu0 %v8509
        %8524 = vmatpush.msra.mxu0 %v8508
        %8525 = vmatpush.msra.mxu0 %v8507
        %8526 = vmatpush.msra.mxu0 %v8506
        %8527 = vmatpush.msra.mxu0 %v8505
        %8528 = vmatpush.msra.mxu0 %v8504
        %8529 = vmatpush.msra.mxu0 %v8503
        %8530 = vmatmul.f32.gmra.mxu0 %v8512
        %v8531 = vpop.f32.mrf.mxu0
        %v8532 = vadd.f32 0.0, %v8531
        %8533 = vdwg.mxu0
        %v8534 = vadd.f32 %v8501, %v8532
        %s8535 = scalar_lea.vmem %s7, 320
        %v8536 = vld [vmem:[%s8535] sm:$0xff]
        %v8537 = vld [vmem:[%s8535 + $0x8] sm:$0xff]
        %v8538 = vld [vmem:[%s8535 + $0x10] sm:$0xff]
        %v8539 = vld [vmem:[%s8535 + $0x18] sm:$0xff]
        %v8540 = vld [vmem:[%s8535 + $0x20] sm:$0xff]
        %v8541 = vld [vmem:[%s8535 + $0x28] sm:$0xff]
        %v8542 = vld [vmem:[%s8535 + $0x30] sm:$0xff]
        %v8543 = vld [vmem:[%s8535 + $0x38] sm:$0xff]
        %v8545 = vsel %vm384, %v8299, 0
        %8547 = vmatpush.msra.mxu0 0.0
        %8548 = vmatpush.msra.mxu0 0.0
        %8549 = vmatpush.msra.mxu0 0.0
        %8550 = vmatpush.msra.mxu0 0.0
        %8551 = vmatpush.msra.mxu0 0.0
        %8552 = vmatpush.msra.mxu0 0.0
        %8553 = vmatpush.msra.mxu0 0.0
        %8554 = vmatpush.msra.mxu0 0.0
        %8555 = vmatpush.msra.mxu0 %v8543
        %8556 = vmatpush.msra.mxu0 %v8542
        %8557 = vmatpush.msra.mxu0 %v8541
        %8558 = vmatpush.msra.mxu0 %v8540
        %8559 = vmatpush.msra.mxu0 %v8539
        %8560 = vmatpush.msra.mxu0 %v8538
        %8561 = vmatpush.msra.mxu0 %v8537
        %8562 = vmatpush.msra.mxu0 %v8536
        %8563 = vmatmul.f32.gmra.mxu0 %v8545
        %v8564 = vpop.f32.mrf.mxu0
        %v8565 = vadd.f32 0.0, %v8564
        %8566 = vdwg.mxu0
        %v8567 = vadd.f32 %v8534, %v8565
        %s8568 = scalar_lea.vmem %s7, 384
        %v8569 = vld [vmem:[%s8568] sm:$0xff]
        %v8570 = vld [vmem:[%s8568 + $0x8] sm:$0xff]
        %v8571 = vld [vmem:[%s8568 + $0x10] sm:$0xff]
        %v8572 = vld [vmem:[%s8568 + $0x18] sm:$0xff]
        %v8573 = vld [vmem:[%s8568 + $0x20] sm:$0xff]
        %v8574 = vld [vmem:[%s8568 + $0x28] sm:$0xff]
        %v8575 = vld [vmem:[%s8568 + $0x30] sm:$0xff]
        %v8576 = vld [vmem:[%s8568 + $0x38] sm:$0xff]
        %v8578 = vsel %vm384, %v8306, 0
        %8580 = vmatpush.msra.mxu0 0.0
        %8581 = vmatpush.msra.mxu0 0.0
        %8582 = vmatpush.msra.mxu0 0.0
        %8583 = vmatpush.msra.mxu0 0.0
        %8584 = vmatpush.msra.mxu0 0.0
        %8585 = vmatpush.msra.mxu0 0.0
        %8586 = vmatpush.msra.mxu0 0.0
        %8587 = vmatpush.msra.mxu0 0.0
        %8588 = vmatpush.msra.mxu0 %v8576
        %8589 = vmatpush.msra.mxu0 %v8575
        %8590 = vmatpush.msra.mxu0 %v8574
        %8591 = vmatpush.msra.mxu0 %v8573
        %8592 = vmatpush.msra.mxu0 %v8572
        %8593 = vmatpush.msra.mxu0 %v8571
        %8594 = vmatpush.msra.mxu0 %v8570
        %8595 = vmatpush.msra.mxu0 %v8569
        %8596 = vmatmul.f32.gmra.mxu0 %v8578
        %v8597 = vpop.f32.mrf.mxu0
        %v8598 = vadd.f32 0.0, %v8597
        %8599 = vdwg.mxu0
        %v8600 = vadd.f32 %v8567, %v8598
        %s8601 = scalar_lea.vmem %s7, 448
        %v8602 = vld [vmem:[%s8601] sm:$0xff]
        %v8603 = vld [vmem:[%s8601 + $0x8] sm:$0xff]
        %v8604 = vld [vmem:[%s8601 + $0x10] sm:$0xff]
        %v8605 = vld [vmem:[%s8601 + $0x18] sm:$0xff]
        %v8606 = vld [vmem:[%s8601 + $0x20] sm:$0xff]
        %v8607 = vld [vmem:[%s8601 + $0x28] sm:$0xff]
        %v8608 = vld [vmem:[%s8601 + $0x30] sm:$0xff]
        %v8609 = vld [vmem:[%s8601 + $0x38] sm:$0xff]
        %v8611 = vsel %vm384, %v8313, 0
        %8613 = vmatpush.msra.mxu0 0.0
        %8614 = vmatpush.msra.mxu0 0.0
        %8615 = vmatpush.msra.mxu0 0.0
        %8616 = vmatpush.msra.mxu0 0.0
        %8617 = vmatpush.msra.mxu0 0.0
        %8618 = vmatpush.msra.mxu0 0.0
        %8619 = vmatpush.msra.mxu0 0.0
        %8620 = vmatpush.msra.mxu0 0.0
        %8621 = vmatpush.msra.mxu0 %v8609
        %8622 = vmatpush.msra.mxu0 %v8608
        %8623 = vmatpush.msra.mxu0 %v8607
        %8624 = vmatpush.msra.mxu0 %v8606
        %8625 = vmatpush.msra.mxu0 %v8605
        %8626 = vmatpush.msra.mxu0 %v8604
        %8627 = vmatpush.msra.mxu0 %v8603
        %8628 = vmatpush.msra.mxu0 %v8602
        %8629 = vmatmul.f32.gmra.mxu0 %v8611
        %v8630 = vpop.f32.mrf.mxu0
        %v8631 = vadd.f32 0.0, %v8630
        %8632 = vdwg.mxu0
        %v8633 = vadd.f32 %v8600, %v8631
        %s8634 = scalar_lea.vmem %s7, 512
        %v8635 = vld [vmem:[%s8634] sm:$0xff]
        %v8636 = vld [vmem:[%s8634 + $0x8] sm:$0xff]
        %v8637 = vld [vmem:[%s8634 + $0x10] sm:$0xff]
        %v8638 = vld [vmem:[%s8634 + $0x18] sm:$0xff]
        %v8639 = vld [vmem:[%s8634 + $0x20] sm:$0xff]
        %v8640 = vld [vmem:[%s8634 + $0x28] sm:$0xff]
        %v8641 = vld [vmem:[%s8634 + $0x30] sm:$0xff]
        %v8642 = vld [vmem:[%s8634 + $0x38] sm:$0xff]
        %v8644 = vsel %vm384, %v8320, 0
        %8646 = vmatpush.msra.mxu0 0.0
        %8647 = vmatpush.msra.mxu0 0.0
        %8648 = vmatpush.msra.mxu0 0.0
        %8649 = vmatpush.msra.mxu0 0.0
        %8650 = vmatpush.msra.mxu0 0.0
        %8651 = vmatpush.msra.mxu0 0.0
        %8652 = vmatpush.msra.mxu0 0.0
        %8653 = vmatpush.msra.mxu0 0.0
        %8654 = vmatpush.msra.mxu0 %v8642
        %8655 = vmatpush.msra.mxu0 %v8641
        %8656 = vmatpush.msra.mxu0 %v8640
        %8657 = vmatpush.msra.mxu0 %v8639
        %8658 = vmatpush.msra.mxu0 %v8638
        %8659 = vmatpush.msra.mxu0 %v8637
        %8660 = vmatpush.msra.mxu0 %v8636
        %8661 = vmatpush.msra.mxu0 %v8635
        %8662 = vmatmul.f32.gmra.mxu0 %v8644
        %v8663 = vpop.f32.mrf.mxu0
        %v8664 = vadd.f32 0.0, %v8663
        %8665 = vdwg.mxu0
        %v8666 = vadd.f32 %v8633, %v8664
        %s8667 = scalar_lea.vmem %s7, 576
        %v8668 = vld [vmem:[%s8667] sm:$0xff]
        %v8669 = vld [vmem:[%s8667 + $0x8] sm:$0xff]
        %v8670 = vld [vmem:[%s8667 + $0x10] sm:$0xff]
        %v8671 = vld [vmem:[%s8667 + $0x18] sm:$0xff]
        %v8672 = vld [vmem:[%s8667 + $0x20] sm:$0xff]
        %v8673 = vld [vmem:[%s8667 + $0x28] sm:$0xff]
        %v8674 = vld [vmem:[%s8667 + $0x30] sm:$0xff]
        %v8675 = vld [vmem:[%s8667 + $0x38] sm:$0xff]
        %v8677 = vsel %vm384, %v8327, 0
        %8679 = vmatpush.msra.mxu0 0.0
        %8680 = vmatpush.msra.mxu0 0.0
        %8681 = vmatpush.msra.mxu0 0.0
        %8682 = vmatpush.msra.mxu0 0.0
        %8683 = vmatpush.msra.mxu0 0.0
        %8684 = vmatpush.msra.mxu0 0.0
        %8685 = vmatpush.msra.mxu0 0.0
        %8686 = vmatpush.msra.mxu0 0.0
        %8687 = vmatpush.msra.mxu0 %v8675
        %8688 = vmatpush.msra.mxu0 %v8674
        %8689 = vmatpush.msra.mxu0 %v8673
        %8690 = vmatpush.msra.mxu0 %v8672
        %8691 = vmatpush.msra.mxu0 %v8671
        %8692 = vmatpush.msra.mxu0 %v8670
        %8693 = vmatpush.msra.mxu0 %v8669
        %8694 = vmatpush.msra.mxu0 %v8668
        %8695 = vmatmul.f32.gmra.mxu0 %v8677
        %v8696 = vpop.f32.mrf.mxu0
        %v8697 = vadd.f32 0.0, %v8696
        %8698 = vdwg.mxu0
        %v8699 = vadd.f32 %v8666, %v8697
        %s8700 = scalar_lea.vmem %s7, 640
        %v8701 = vld [vmem:[%s8700] sm:$0xff]
        %v8702 = vld [vmem:[%s8700 + $0x8] sm:$0xff]
        %v8703 = vld [vmem:[%s8700 + $0x10] sm:$0xff]
        %v8704 = vld [vmem:[%s8700 + $0x18] sm:$0xff]
        %v8705 = vld [vmem:[%s8700 + $0x20] sm:$0xff]
        %v8706 = vld [vmem:[%s8700 + $0x28] sm:$0xff]
        %v8707 = vld [vmem:[%s8700 + $0x30] sm:$0xff]
        %v8708 = vld [vmem:[%s8700 + $0x38] sm:$0xff]
        %v8710 = vsel %vm384, %v8334, 0
        %8712 = vmatpush.msra.mxu0 0.0
        %8713 = vmatpush.msra.mxu0 0.0
        %8714 = vmatpush.msra.mxu0 0.0
        %8715 = vmatpush.msra.mxu0 0.0
        %8716 = vmatpush.msra.mxu0 0.0
        %8717 = vmatpush.msra.mxu0 0.0
        %8718 = vmatpush.msra.mxu0 0.0
        %8719 = vmatpush.msra.mxu0 0.0
        %8720 = vmatpush.msra.mxu0 %v8708
        %8721 = vmatpush.msra.mxu0 %v8707
        %8722 = vmatpush.msra.mxu0 %v8706
        %8723 = vmatpush.msra.mxu0 %v8705
        %8724 = vmatpush.msra.mxu0 %v8704
        %8725 = vmatpush.msra.mxu0 %v8703
        %8726 = vmatpush.msra.mxu0 %v8702
        %8727 = vmatpush.msra.mxu0 %v8701
        %8728 = vmatmul.f32.gmra.mxu0 %v8710
        %v8729 = vpop.f32.mrf.mxu0
        %v8730 = vadd.f32 0.0, %v8729
        %8731 = vdwg.mxu0
        %v8732 = vadd.f32 %v8699, %v8730
        %s8733 = scalar_lea.vmem %s7, 704
        %v8734 = vld [vmem:[%s8733] sm:$0xff]
        %v8735 = vld [vmem:[%s8733 + $0x8] sm:$0xff]
        %v8736 = vld [vmem:[%s8733 + $0x10] sm:$0xff]
        %v8737 = vld [vmem:[%s8733 + $0x18] sm:$0xff]
        %v8738 = vld [vmem:[%s8733 + $0x20] sm:$0xff]
        %v8739 = vld [vmem:[%s8733 + $0x28] sm:$0xff]
        %v8740 = vld [vmem:[%s8733 + $0x30] sm:$0xff]
        %v8741 = vld [vmem:[%s8733 + $0x38] sm:$0xff]
        %v8743 = vsel %vm384, %v8341, 0
        %8745 = vmatpush.msra.mxu0 0.0
        %8746 = vmatpush.msra.mxu0 0.0
        %8747 = vmatpush.msra.mxu0 0.0
        %8748 = vmatpush.msra.mxu0 0.0
        %8749 = vmatpush.msra.mxu0 0.0
        %8750 = vmatpush.msra.mxu0 0.0
        %8751 = vmatpush.msra.mxu0 0.0
        %8752 = vmatpush.msra.mxu0 0.0
        %8753 = vmatpush.msra.mxu0 %v8741
        %8754 = vmatpush.msra.mxu0 %v8740
        %8755 = vmatpush.msra.mxu0 %v8739
        %8756 = vmatpush.msra.mxu0 %v8738
        %8757 = vmatpush.msra.mxu0 %v8737
        %8758 = vmatpush.msra.mxu0 %v8736
        %8759 = vmatpush.msra.mxu0 %v8735
        %8760 = vmatpush.msra.mxu0 %v8734
        %8761 = vmatmul.f32.gmra.mxu0 %v8743
        %v8762 = vpop.f32.mrf.mxu0
        %v8763 = vadd.f32 0.0, %v8762
        %8764 = vdwg.mxu0
        %v8765 = vadd.f32 %v8732, %v8763
        %s8766 = scalar_lea.vmem %s7, 768
        %v8767 = vld [vmem:[%s8766] sm:$0xff]
        %v8768 = vld [vmem:[%s8766 + $0x8] sm:$0xff]
        %v8769 = vld [vmem:[%s8766 + $0x10] sm:$0xff]
        %v8770 = vld [vmem:[%s8766 + $0x18] sm:$0xff]
        %v8771 = vld [vmem:[%s8766 + $0x20] sm:$0xff]
        %v8772 = vld [vmem:[%s8766 + $0x28] sm:$0xff]
        %v8773 = vld [vmem:[%s8766 + $0x30] sm:$0xff]
        %v8774 = vld [vmem:[%s8766 + $0x38] sm:$0xff]
        %v8776 = vsel %vm384, %v8348, 0
        %8778 = vmatpush.msra.mxu0 0.0
        %8779 = vmatpush.msra.mxu0 0.0
        %8780 = vmatpush.msra.mxu0 0.0
        %8781 = vmatpush.msra.mxu0 0.0
        %8782 = vmatpush.msra.mxu0 0.0
        %8783 = vmatpush.msra.mxu0 0.0
        %8784 = vmatpush.msra.mxu0 0.0
        %8785 = vmatpush.msra.mxu0 0.0
        %8786 = vmatpush.msra.mxu0 %v8774
        %8787 = vmatpush.msra.mxu0 %v8773
        %8788 = vmatpush.msra.mxu0 %v8772
        %8789 = vmatpush.msra.mxu0 %v8771
        %8790 = vmatpush.msra.mxu0 %v8770
        %8791 = vmatpush.msra.mxu0 %v8769
        %8792 = vmatpush.msra.mxu0 %v8768
        %8793 = vmatpush.msra.mxu0 %v8767
        %8794 = vmatmul.f32.gmra.mxu0 %v8776
        %v8795 = vpop.f32.mrf.mxu0
        %v8796 = vadd.f32 0.0, %v8795
        %8797 = vdwg.mxu0
        %v8798 = vadd.f32 %v8765, %v8796
        %s8799 = scalar_lea.vmem %s7, 832
        %v8800 = vld [vmem:[%s8799] sm:$0xff]
        %v8801 = vld [vmem:[%s8799 + $0x8] sm:$0xff]
        %v8802 = vld [vmem:[%s8799 + $0x10] sm:$0xff]
        %v8803 = vld [vmem:[%s8799 + $0x18] sm:$0xff]
        %v8804 = vld [vmem:[%s8799 + $0x20] sm:$0xff]
        %v8805 = vld [vmem:[%s8799 + $0x28] sm:$0xff]
        %v8806 = vld [vmem:[%s8799 + $0x30] sm:$0xff]
        %v8807 = vld [vmem:[%s8799 + $0x38] sm:$0xff]
        %v8809 = vsel %vm384, %v8355, 0
        %8811 = vmatpush.msra.mxu0 0.0
        %8812 = vmatpush.msra.mxu0 0.0
        %8813 = vmatpush.msra.mxu0 0.0
        %8814 = vmatpush.msra.mxu0 0.0
        %8815 = vmatpush.msra.mxu0 0.0
        %8816 = vmatpush.msra.mxu0 0.0
        %8817 = vmatpush.msra.mxu0 0.0
        %8818 = vmatpush.msra.mxu0 0.0
        %8819 = vmatpush.msra.mxu0 %v8807
        %8820 = vmatpush.msra.mxu0 %v8806
        %8821 = vmatpush.msra.mxu0 %v8805
        %8822 = vmatpush.msra.mxu0 %v8804
        %8823 = vmatpush.msra.mxu0 %v8803
        %8824 = vmatpush.msra.mxu0 %v8802
        %8825 = vmatpush.msra.mxu0 %v8801
        %8826 = vmatpush.msra.mxu0 %v8800
        %8827 = vmatmul.f32.gmra.mxu0 %v8809
        %v8828 = vpop.f32.mrf.mxu0
        %v8829 = vadd.f32 0.0, %v8828
        %8830 = vdwg.mxu0
        %v8831 = vadd.f32 %v8798, %v8829
        %s8832 = scalar_lea.vmem %s7, 896
        %v8833 = vld [vmem:[%s8832] sm:$0xff]
        %v8834 = vld [vmem:[%s8832 + $0x8] sm:$0xff]
        %v8835 = vld [vmem:[%s8832 + $0x10] sm:$0xff]
        %v8836 = vld [vmem:[%s8832 + $0x18] sm:$0xff]
        %v8837 = vld [vmem:[%s8832 + $0x20] sm:$0xff]
        %v8838 = vld [vmem:[%s8832 + $0x28] sm:$0xff]
        %v8839 = vld [vmem:[%s8832 + $0x30] sm:$0xff]
        %v8840 = vld [vmem:[%s8832 + $0x38] sm:$0xff]
        %v8842 = vsel %vm384, %v8362, 0
        %8844 = vmatpush.msra.mxu0 0.0
        %8845 = vmatpush.msra.mxu0 0.0
        %8846 = vmatpush.msra.mxu0 0.0
        %8847 = vmatpush.msra.mxu0 0.0
        %8848 = vmatpush.msra.mxu0 0.0
        %8849 = vmatpush.msra.mxu0 0.0
        %8850 = vmatpush.msra.mxu0 0.0
        %8851 = vmatpush.msra.mxu0 0.0
        %8852 = vmatpush.msra.mxu0 %v8840
        %8853 = vmatpush.msra.mxu0 %v8839
        %8854 = vmatpush.msra.mxu0 %v8838
        %8855 = vmatpush.msra.mxu0 %v8837
        %8856 = vmatpush.msra.mxu0 %v8836
        %8857 = vmatpush.msra.mxu0 %v8835
        %8858 = vmatpush.msra.mxu0 %v8834
        %8859 = vmatpush.msra.mxu0 %v8833
        %8860 = vmatmul.f32.gmra.mxu0 %v8842
        %v8861 = vpop.f32.mrf.mxu0
        %v8862 = vadd.f32 0.0, %v8861
        %8863 = vdwg.mxu0
        %v8864 = vadd.f32 %v8831, %v8862
        %s8865 = scalar_lea.vmem %s7, 960
        %v8866 = vld [vmem:[%s8865] sm:$0xff]
        %v8867 = vld [vmem:[%s8865 + $0x8] sm:$0xff]
        %v8868 = vld [vmem:[%s8865 + $0x10] sm:$0xff]
        %v8869 = vld [vmem:[%s8865 + $0x18] sm:$0xff]
        %v8870 = vld [vmem:[%s8865 + $0x20] sm:$0xff]
        %v8871 = vld [vmem:[%s8865 + $0x28] sm:$0xff]
        %v8872 = vld [vmem:[%s8865 + $0x30] sm:$0xff]
        %v8873 = vld [vmem:[%s8865 + $0x38] sm:$0xff]
        %v8875 = vsel %vm384, %v8369, 0
        %8877 = vmatpush.msra.mxu0 0.0
        %8878 = vmatpush.msra.mxu0 0.0
        %8879 = vmatpush.msra.mxu0 0.0
        %8880 = vmatpush.msra.mxu0 0.0
        %8881 = vmatpush.msra.mxu0 0.0
        %8882 = vmatpush.msra.mxu0 0.0
        %8883 = vmatpush.msra.mxu0 0.0
        %8884 = vmatpush.msra.mxu0 0.0
        %8885 = vmatpush.msra.mxu0 %v8873
        %8886 = vmatpush.msra.mxu0 %v8872
        %8887 = vmatpush.msra.mxu0 %v8871
        %8888 = vmatpush.msra.mxu0 %v8870
        %8889 = vmatpush.msra.mxu0 %v8869
        %8890 = vmatpush.msra.mxu0 %v8868
        %8891 = vmatpush.msra.mxu0 %v8867
        %8892 = vmatpush.msra.mxu0 %v8866
        %8893 = vmatmul.f32.gmra.mxu0 %v8875
        %v8894 = vpop.f32.mrf.mxu0
        %v8895 = vadd.f32 0.0, %v8894
        %8896 = vdwg.mxu0
        %v8897 = vadd.f32 %v8864, %v8895
        %v8898 = vld [vmem:[%s9] sm:$0xff]
        %v8899 = vld [vmem:[%s9 + $0x8] sm:$0xff]
        %v8900 = vld [vmem:[%s9 + $0x10] sm:$0xf]
        %v8901 = vld [vmem:[%s10] sm:$0x1]
        %vm8902 = vcmask 162816
        %v8904 = vsel %vm8902, %v8897, 0
        %vm8906 = vcmask 1043456
        %v8908 = vsel %vm8906, %v8900, 0
        %8910 = vmatpush.msra.mxu0 0.0
        %8911 = vmatpush.msra.mxu0 0.0
        %8912 = vmatpush.msra.mxu0 0.0
        %8913 = vmatpush.msra.mxu0 0.0
        %8914 = vmatpush.msra.mxu0 0.0
        %8915 = vmatpush.msra.mxu0 0.0
        %8916 = vmatpush.msra.mxu0 0.0
        %8917 = vmatpush.msra.mxu0 0.0
        %8918 = vmatpush.msra.mxu0 0.0
        %8919 = vmatpush.msra.mxu0 0.0
        %8920 = vmatpush.msra.mxu0 0.0
        %8921 = vmatpush.msra.mxu0 0.0
        %8922 = vmatpush.msra.mxu0 0.0
        %8923 = vmatpush.msra.mxu0 %v8908
        %8924 = vmatpush.msra.mxu0 %v8899
        %8925 = vmatpush.msra.mxu0 %v8898
        %8926 = vmatmul.f32.gmra.mxu0 %v8904
        %v8927 = vpop.f32.mrf.mxu0
        %v8928 = vadd.f32 %v8901, %v8927
        %8929 = vdwg.mxu0
        %vm8930 = vcmask 73728
        %8931 = vst.msk [vmem:[%s378] sm:$0x1] %vm8930, %v8928
        %s8932 = sand.u32 %s269, 1
        %s8933 = scalar_lea.sflag [#allocation10], %s8932
        %s8934 = sand.u32 %s269, 1
        %s8935 = scalar_lea.vmem [#allocation9], %s8934
        // Predicated region
        $region65: #{cnn_forward.1} parent=63 // pred_check
          %p8936 = pneg %p279
        $region66: #{cnn_forward.1} parent=63 // pred_check_branch
          %8938 = sbr.rel (%p8936) target = $region68
        $region67: #{cnn_forward.1} parent=63 // pred_region
          %8940 = vsyncadd %s8933, 0
          %s8941 = scalar_lea.hbm %s11, %s25
          %s8943 = sshll.u32 %s8935, 4
          %s8944 = int_to_ptr.vmem [resolvable:$true] %s8943
          %s8945 = sshll.u32 %s8941, 4
          %s8946 = int_to_ptr.hbm [resolvable:$true] %s8945
          %8948 = dma.vmem_to_hbm [thread:$0]  %s8944, 16, %s8946, %s8933
        $region68: #{cnn_forward.1} parent=63 // pred_fallthru
          _
      $region64: #{cnn_forward.1} parent=5 // pred_fallthru
        _
      %p8949 = scmp.le.s32.totalorder 2, %s20
      // Predicated region
      $region69: #{cnn_forward.1} parent=5 // pred_check
        %p8950 = pneg %p8949
      $region70: #{cnn_forward.1} parent=5 // pred_check_branch
        %8952 = sbr.rel (%p8950) target = $region72
      $region71: #{cnn_forward.1} parent=5 // pred_region
        %s8953 = ssub.s32 %s20, 2
        // Predicated region
        $region73: #{cnn_forward.1} parent=71 // pred_check
          %p8954 = pneg %p285
        $region74: #{cnn_forward.1} parent=71 // pred_check_branch
          %8956 = sbr.rel (%p8954) target = $region76
        $region75: #{cnn_forward.1} parent=71 // pred_region
          %s8957 = sand.u32 %s270, 1
          %s8958 = scalar_lea.sflag [#allocation10], %s8957
          %s8959 = sand.u32 %s270, 1
          %s8960 = scalar_lea.vmem [#allocation9], %s8959
          %8962 = dma.done %s8958, 16
        $region76: #{cnn_forward.1} parent=71 // pred_fallthru
          _
      $region72: #{cnn_forward.1} parent=5 // pred_fallthru
        _
    $region6: #{cnn_forward.1} parent=1 // loop_footer
      %s24 = sadd.s32 1, %s20
    $region7: #{cnn_forward.1} parent=1 // loop_footer_branch
      %19 = sbr.rel target = $region3
    $region8: #{cnn_forward.1} parent=1 // loop_exit
      _
    %8963 = vsyncpa [#allocation10], 1
    %s8964 = scalar_lea.sflag [#allocation10], 1
    %8965 = vsyncpa %s8964, 1

</llo_original>
